<compile_context>
chip_gen: v6e
topology: v6e:2x2x1
jax: 0.10.0
libtpu: 0.0.40
codegen_flags: <defaults>
</compile_context>

<pallas_src>
import jax
import jax.numpy as jnp
from jax import lax
from jax.experimental import pallas as pl
from jax.experimental.pallas import tpu as pltpu

EPS = 1e-5   # eps of InstanceNorm2d / BatchNorm2d defaults
LANE = 128   # TPU lane width


def _basic_block_ibn_kernel(x_ref, w1_ref, w2_ref, pp_ref, out_ref,
                            pad_ref, patch_ref):
    H, W, Cp = x_ref.shape[1], x_ref.shape[2], x_ref.shape[3]
    HW = H * W

    # Zero only the 1-pixel spatial border of the shared padded scratch (the
    # interior is fully overwritten before each conv). Done every step with 4
    # thin strip stores -- cheap, and stays correct even when the "parallel"
    # batch axis is sharded across TensorCores (a zero-once-at-program-0 trick
    # would leave the other core's scratch uninitialized).
    zrow = jnp.zeros((1, W + 2, Cp), jnp.float32)
    zcol = jnp.zeros((H, 1, Cp), jnp.float32)
    pad_ref[0:1, :, :] = zrow
    pad_ref[H + 1:H + 2, :, :] = zrow
    pad_ref[1:H + 1, 0:1, :] = zcol
    pad_ref[1:H + 1, W + 1:W + 2, :] = zcol

    x = x_ref[0]                                             # (H, W, Cp) f32
    pp = pp_ref[...]                                         # (8, Cp) packed params

    def conv3x3(w_ref, interior):
        # One 3x3 'SAME' conv as im2col + a single MXU matmul:
        #   (HW, 9*Cp) @ (9*Cp, Cp) with K = 9*Cp, N = Cp (lane/MXU dense).
        # Taps are sliced directly from the padded VMEM scratch so the full
        # (H+2, W+2, Cp) plane never has to live in vregs at once.
        pad_ref[pl.ds(1, H), pl.ds(1, W), :] = interior
        for k in range(9):
            dy, dx = divmod(k, 3)
            patch_ref[:, k * Cp:(k + 1) * Cp] = (
                pad_ref[dy:dy + H, dx:dx + W, :].reshape(HW, Cp))
        return jnp.dot(patch_ref[...], w_ref[...],
                       preferred_element_type=jnp.float32)

    # ---- conv1 (3x3, pad=1, no bias); bn1 affine pre-folded into w1 / row 0 ----
    y1 = conv3x3(w1_ref, x) + pp[0:1, :]                     # (HW, Cp)

    # ---- IBN: InstanceNorm (per-sample, biased var, affine) on the first
    #      `half` channels, blended in via a precomputed 0/1 channel mask.
    #      The BatchNorm half is already folded into w1/bias. ----
    mu = jnp.mean(y1, axis=0, keepdims=True)                 # (1, Cp)
    var = jnp.mean((y1 - mu) ** 2, axis=0, keepdims=True)    # biased, as PyTorch
    in_n = (y1 - mu) * lax.rsqrt(var + EPS) * pp[1:2, :] + pp[2:3, :]
    mid = jnp.maximum(y1 + pp[3:4, :] * (in_n - y1), 0.0)    # relu

    # ---- conv2 (3x3, pad=1, no bias); bn2 affine pre-folded into w2 / row 4 ----
    y2 = conv3x3(w2_ref, mid.reshape(H, W, Cp)) + pp[4:5, :]

    # ---- residual add + relu; Cp multiple of 128 -> unmasked lane-dense store ----
    out_ref[0] = jnp.maximum(y2.reshape(H, W, Cp) + x, 0.0)


def basic_block_ibn(x_nchw, params):
    """BasicBlockIBN forward. NCHW in / NCHW out. Grid is parallel over batch."""
    x_nchw = x_nchw.astype(jnp.float32)
    N, C, H, W = x_nchw.shape
    w1 = params["w1"].astype(jnp.float32)        # (3, 3, Cin, Cout) HWIO
    w2 = params["w2"].astype(jnp.float32)
    assert w1.shape[2] == C and w1.shape[3] == C, \
        "stride=1 / downsample=None requires inplanes == planes"
    half = C // 2
    Cp = ((C + LANE - 1) // LANE) * LANE         # lane-dense channel width

    # NCHW -> NHWC with zero channel padding (one fused XLA copy; x enters the
    # kernel exactly once -- the residual is taken from the same VMEM block).
    x = jnp.transpose(x_nchw, (0, 2, 3, 1))
    x = jnp.pad(x, ((0, 0), (0, 0), (0, 0), (0, Cp - C)))

    # ---- fold the (inference-mode) BN affines into conv weights + biases ----
    s1 = params["bn1_gamma"] / jnp.sqrt(params["bn1_var"] + EPS)
    b1 = params["bn1_beta"] - params["bn1_mean"] * s1
    scale1 = jnp.concatenate([jnp.ones((half,), jnp.float32), s1])   # IN half untouched
    bias1 = jnp.concatenate([jnp.zeros((half,), jnp.float32), b1])
    s2 = params["bn2_gamma"] / jnp.sqrt(params["bn2_var"] + EPS)
    bias2 = params["bn2_beta"] - params["bn2_mean"] * s2

    def pack_weight(w, out_scale):
        w = w * out_scale[None, None, None, :]
        wp = jnp.zeros((3, 3, Cp, Cp), jnp.float32).at[:, :, :C, :C].set(w)
        return wp.reshape(9 * Cp, Cp)            # rows ordered (dy, dx, cin) = im2col

    w1r = pack_weight(w1, scale1)
    w2r = pack_weight(w2, s2)

    def pad_c(v):
        return jnp.pad(v.astype(jnp.float32), (0, Cp - v.shape[0]))

    # Single packed per-channel parameter array (one small DMA instead of ten):
    # row 0: bias1 (folded bn1), 1: in_gamma, 2: in_beta, 3: IN channel mask,
    # row 4: bias2 (folded bn2); rows 5-7 unused.
    pp = jnp.zeros((8, Cp), jnp.float32)
    pp = pp.at[0].set(pad_c(bias1))
    pp = pp.at[1].set(pad_c(params["in_gamma"]))
    pp = pp.at[2].set(pad_c(params["in_beta"]))
    pp = pp.at[3].set((jnp.arange(Cp) < half).astype(jnp.float32))
    pp = pp.at[4].set(pad_c(bias2))

    grid_spec = pltpu.PrefetchScalarGridSpec(
        num_scalar_prefetch=0,
        grid=(N,),
        in_specs=[
            pl.BlockSpec((1, H, W, Cp), lambda n: (n, 0, 0, 0)),   # x (NHWC, padded C)
            pl.BlockSpec((9 * Cp, Cp), lambda n: (0, 0)),          # w1 (im2col layout)
            pl.BlockSpec((9 * Cp, Cp), lambda n: (0, 0)),          # w2 (im2col layout)
            pl.BlockSpec((8, Cp), lambda n: (0, 0)),               # packed params
        ],
        out_specs=pl.BlockSpec((1, H, W, Cp), lambda n: (n, 0, 0, 0)),
        scratch_shapes=[
            pltpu.VMEM((H + 2, W + 2, Cp), jnp.float32),   # shared padded plane
            pltpu.VMEM((H * W, 9 * Cp), jnp.float32),      # im2col patch matrix
        ],
    )

    cost = pl.CostEstimate(
        flops=2 * 2 * N * H * W * 9 * Cp * Cp,                    # two convs
        transcendentals=N * Cp,                                   # rsqrt per channel
        bytes_accessed=4 * (2 * N * H * W * Cp + 2 * 9 * Cp * Cp + 8 * Cp),
    )

    out = pl.pallas_call(
        _basic_block_ibn_kernel,
        out_shape=jax.ShapeDtypeStruct((N, H, W, Cp), jnp.float32),
        grid_spec=grid_spec,
        compiler_params=pltpu.CompilerParams(
            dimension_semantics=("parallel",),
            vmem_limit_bytes=64 * 1024 * 1024,
        ),
        cost_estimate=cost,
    )(x, w1r, w2r, pp)

    return jnp.transpose(out[..., :C], (0, 3, 1, 2))              # back to NCHW


def reference_forward(x_nchw, params):
    """Pure-JAX reference (same semantics) for correctness checking."""
    x = jnp.transpose(x_nchw, (0, 2, 3, 1)).astype(jnp.float32)
    dn = ("NHWC", "HWIO", "NHWC")
    y = lax.conv_general_dilated(x, params["w1"], (1, 1), "SAME", dimension_numbers=dn)
    half = params["in_gamma"].shape[0]
    yin = y[..., :half]
    mu = jnp.mean(yin, axis=(1, 2), keepdims=True)
    var = jnp.var(yin, axis=(1, 2), keepdims=True)
    yin = (yin - mu) / jnp.sqrt(var + EPS) * params["in_gamma"] + params["in_beta"]
    ybn = ((y[..., half:] - params["bn1_mean"]) / jnp.sqrt(params["bn1_var"] + EPS)
           * params["bn1_gamma"] + params["bn1_beta"])
    y = jnp.maximum(jnp.concatenate([yin, ybn], axis=-1), 0.0)
    y = lax.conv_general_dilated(y, params["w2"], (1, 1), "SAME", dimension_numbers=dn)
    y = ((y - params["bn2_mean"]) / jnp.sqrt(params["bn2_var"] + EPS)
         * params["bn2_gamma"] + params["bn2_beta"])
    y = jnp.maximum(y + x, 0.0)
    return jnp.transpose(y, (0, 3, 1, 2))


if __name__ == "__main__":
    N, C, H, W = 2, 4, 16, 16        # batch, channels (inplanes=planes), spatial
    half = C // 2

    key = jax.random.PRNGKey(0)
    ks = jax.random.split(key, 16)
    params = dict(
        w1=0.2 * jax.random.normal(ks[0], (3, 3, C, C), jnp.float32),
        w2=0.2 * jax.random.normal(ks[1], (3, 3, C, C), jnp.float32),
        in_gamma=1.0 + 0.1 * jax.random.normal(ks[2], (half,), jnp.float32),
        in_beta=0.1 * jax.random.normal(ks[3], (half,), jnp.float32),
        bn1_gamma=1.0 + 0.1 * jax.random.normal(ks[4], (C - half,), jnp.float32),
        bn1_beta=0.1 * jax.random.normal(ks[5], (C - half,), jnp.float32),
        bn1_mean=0.1 * jax.random.normal(ks[6], (C - half,), jnp.float32),
        bn1_var=1.0 + 0.1 * jnp.abs(jax.random.normal(ks[7], (C - half,), jnp.float32)),
        bn2_gamma=1.0 + 0.1 * jax.random.normal(ks[8], (C,), jnp.float32),
        bn2_beta=0.1 * jax.random.normal(ks[9], (C,), jnp.float32),
        bn2_mean=0.1 * jax.random.normal(ks[10], (C,), jnp.float32),
        bn2_var=1.0 + 0.1 * jnp.abs(jax.random.normal(ks[11], (C,), jnp.float32)),
    )
    x = jax.random.normal(ks[12], (N, C, H, W), jnp.float32)   # NCHW like PyTorch

    y = basic_block_ibn(x, params)
    jax.block_until_ready(y)

    y_ref = reference_forward(x, params)
    if not jnp.allclose(y, y_ref, rtol=1e-4, atol=1e-4):
        raise AssertionError("Pallas kernel does not match JAX reference")
    print("KERNEL_OK")
</pallas_src>

<mosaic_0001>
module attributes {stable_mosaic.version = 11 : i64} {
  func.func @_basic_block_ibn_kernel(%arg0: i32, %arg1: memref<1x16x16x128xf32, #tpu.memory_space<vmem>>, %arg2: memref<1152x128xf32, #tpu.memory_space<vmem>>, %arg3: memref<1152x128xf32, #tpu.memory_space<vmem>>, %arg4: memref<8x128xf32, #tpu.memory_space<vmem>>, %arg5: memref<1x16x16x128xf32, #tpu.memory_space<vmem>>, %arg6: memref<18x18x128xf32, #tpu.memory_space<vmem>>, %arg7: memref<256x1152xf32, #tpu.memory_space<vmem>>) attributes {dimension_semantics = [#tpu.dimension_semantics<parallel>], iteration_bounds = array<i64: 2>, scalar_prefetch = 0 : i64, scratch_operands = 2 : i64, tpu.core_type = #tpu.core_type<tc>, window_params = [{transform_indices = @transform_0, window_bounds = array<i64: 1, 16, 16, 128>}, {pipeline_mode = #tpu.pipeline_mode<synchronous>, transform_indices = @transform_1, window_bounds = array<i64: 1152, 128>}, {pipeline_mode = #tpu.pipeline_mode<synchronous>, transform_indices = @transform_2, window_bounds = array<i64: 1152, 128>}, {pipeline_mode = #tpu.pipeline_mode<synchronous>, transform_indices = @transform_3, window_bounds = array<i64: 8, 128>}, {transform_indices = @transform_4, window_bounds = array<i64: 1, 16, 16, 128>}]} {
    %cst = arith.constant 0.000000e+00 : f32
    %0 = vector.broadcast %cst : f32 to vector<1x18x128xf32>
    %cst_0 = arith.constant 0.000000e+00 : f32
    %1 = vector.broadcast %cst_0 : f32 to vector<16x1x128xf32>
    %c0 = arith.constant 0 : index
    %c0_1 = arith.constant 0 : index
    %c0_2 = arith.constant 0 : index
    %2 = vector.load %arg6[%c0, %c0_1, %c0_2] : memref<18x18x128xf32, #tpu.memory_space<vmem>>, vector<1x18x128xf32>
    tpu.vector_store %arg6[%c0, %c0_1, %c0_2], %0 {strides = array<i32>} : memref<18x18x128xf32, #tpu.memory_space<vmem>>, vector<1x18x128xf32>,
    %c17 = arith.constant 17 : index
    %c0_3 = arith.constant 0 : index
    %c0_4 = arith.constant 0 : index
    %3 = vector.load %arg6[%c17, %c0_3, %c0_4] : memref<18x18x128xf32, #tpu.memory_space<vmem>>, vector<1x18x128xf32>
    tpu.vector_store %arg6[%c17, %c0_3, %c0_4], %0 {strides = array<i32>} : memref<18x18x128xf32, #tpu.memory_space<vmem>>, vector<1x18x128xf32>,
    %c1 = arith.constant 1 : index
    %c0_5 = arith.constant 0 : index
    %c0_6 = arith.constant 0 : index
    %4 = vector.load %arg6[%c1, %c0_5, %c0_6] : memref<18x18x128xf32, #tpu.memory_space<vmem>>, vector<16x1x128xf32>
    tpu.vector_store %arg6[%c1, %c0_5, %c0_6], %1 {strides = array<i32>} : memref<18x18x128xf32, #tpu.memory_space<vmem>>, vector<16x1x128xf32>,
    %c1_7 = arith.constant 1 : index
    %c17_8 = arith.constant 17 : index
    %c0_9 = arith.constant 0 : index
    %5 = vector.load %arg6[%c1_7, %c17_8, %c0_9] : memref<18x18x128xf32, #tpu.memory_space<vmem>>, vector<16x1x128xf32>
    tpu.vector_store %arg6[%c1_7, %c17_8, %c0_9], %1 {strides = array<i32>} : memref<18x18x128xf32, #tpu.memory_space<vmem>>, vector<16x1x128xf32>,
    %c0_10 = arith.constant 0 : index
    %c0_11 = arith.constant 0 : index
    %c0_12 = arith.constant 0 : index
    %c0_13 = arith.constant 0 : index
    %6 = vector.load %arg1[%c0_10, %c0_11, %c0_12, %c0_13] : memref<1x16x16x128xf32, #tpu.memory_space<vmem>>, vector<1x16x16x128xf32>
    %7 = vector.shape_cast %6 : vector<1x16x16x128xf32> to vector<16x16x128xf32>
    %c0_14 = arith.constant 0 : index
    %c0_15 = arith.constant 0 : index
    %8 = vector.load %arg4[%c0_14, %c0_15] : memref<8x128xf32, #tpu.memory_space<vmem>>, vector<8x128xf32>
    %c1_16 = arith.constant 1 : index
    %c1_17 = arith.constant 1 : index
    %c0_18 = arith.constant 0 : index
    %9 = vector.load %arg6[%c1_16, %c1_17, %c0_18] : memref<18x18x128xf32, #tpu.memory_space<vmem>>, vector<16x16x128xf32>
    tpu.vector_store %arg6[%c1_16, %c1_17, %c0_18], %7 {strides = array<i32>} : memref<18x18x128xf32, #tpu.memory_space<vmem>>, vector<16x16x128xf32>,
    %c0_19 = arith.constant 0 : index
    %c0_20 = arith.constant 0 : index
    %c0_21 = arith.constant 0 : index
    %10 = vector.load %arg6[%c0_19, %c0_20, %c0_21] : memref<18x18x128xf32, #tpu.memory_space<vmem>>, vector<16x16x128xf32>
    %11 = vector.shape_cast %10 : vector<16x16x128xf32> to vector<256x128xf32>
    %c0_22 = arith.constant 0 : index
    %c0_23 = arith.constant 0 : index
    %12 = vector.load %arg7[%c0_22, %c0_23] : memref<256x1152xf32, #tpu.memory_space<vmem>>, vector<256x128xf32>
    tpu.vector_store %arg7[%c0_22, %c0_23], %11 {strides = array<i32>} : memref<256x1152xf32, #tpu.memory_space<vmem>>, vector<256x128xf32>,
    %c0_24 = arith.constant 0 : index
    %c1_25 = arith.constant 1 : index
    %c0_26 = arith.constant 0 : index
    %13 = vector.load %arg6[%c0_24, %c1_25, %c0_26] : memref<18x18x128xf32, #tpu.memory_space<vmem>>, vector<16x16x128xf32>
    %14 = vector.shape_cast %13 : vector<16x16x128xf32> to vector<256x128xf32>
    %c0_27 = arith.constant 0 : index
    %c128 = arith.constant 128 : index
    %15 = vector.load %arg7[%c0_27, %c128] : memref<256x1152xf32, #tpu.memory_space<vmem>>, vector<256x128xf32>
    tpu.vector_store %arg7[%c0_27, %c128], %14 {strides = array<i32>} : memref<256x1152xf32, #tpu.memory_space<vmem>>, vector<256x128xf32>,
    %c0_28 = arith.constant 0 : index
    %c2 = arith.constant 2 : index
    %c0_29 = arith.constant 0 : index
    %16 = vector.load %arg6[%c0_28, %c2, %c0_29] : memref<18x18x128xf32, #tpu.memory_space<vmem>>, vector<16x16x128xf32>
    %17 = vector.shape_cast %16 : vector<16x16x128xf32> to vector<256x128xf32>
    %c0_30 = arith.constant 0 : index
    %c256 = arith.constant 256 : index
    %18 = vector.load %arg7[%c0_30, %c256] : memref<256x1152xf32, #tpu.memory_space<vmem>>, vector<256x128xf32>
    tpu.vector_store %arg7[%c0_30, %c256], %17 {strides = array<i32>} : memref<256x1152xf32, #tpu.memory_space<vmem>>, vector<256x128xf32>,
    %c1_31 = arith.constant 1 : index
    %c0_32 = arith.constant 0 : index
    %c0_33 = arith.constant 0 : index
    %19 = vector.load %arg6[%c1_31, %c0_32, %c0_33] : memref<18x18x128xf32, #tpu.memory_space<vmem>>, vector<16x16x128xf32>
    %20 = vector.shape_cast %19 : vector<16x16x128xf32> to vector<256x128xf32>
    %c0_34 = arith.constant 0 : index
    %c384 = arith.constant 384 : index
    %21 = vector.load %arg7[%c0_34, %c384] : memref<256x1152xf32, #tpu.memory_space<vmem>>, vector<256x128xf32>
    tpu.vector_store %arg7[%c0_34, %c384], %20 {strides = array<i32>} : memref<256x1152xf32, #tpu.memory_space<vmem>>, vector<256x128xf32>,
    %c1_35 = arith.constant 1 : index
    %c1_36 = arith.constant 1 : index
    %c0_37 = arith.constant 0 : index
    %22 = vector.load %arg6[%c1_35, %c1_36, %c0_37] : memref<18x18x128xf32, #tpu.memory_space<vmem>>, vector<16x16x128xf32>
    %23 = vector.shape_cast %22 : vector<16x16x128xf32> to vector<256x128xf32>
    %c0_38 = arith.constant 0 : index
    %c512 = arith.constant 512 : index
    %24 = vector.load %arg7[%c0_38, %c512] : memref<256x1152xf32, #tpu.memory_space<vmem>>, vector<256x128xf32>
    tpu.vector_store %arg7[%c0_38, %c512], %23 {strides = array<i32>} : memref<256x1152xf32, #tpu.memory_space<vmem>>, vector<256x128xf32>,
    %c1_39 = arith.constant 1 : index
    %c2_40 = arith.constant 2 : index
    %c0_41 = arith.constant 0 : index
    %25 = vector.load %arg6[%c1_39, %c2_40, %c0_41] : memref<18x18x128xf32, #tpu.memory_space<vmem>>, vector<16x16x128xf32>
    %26 = vector.shape_cast %25 : vector<16x16x128xf32> to vector<256x128xf32>
    %c0_42 = arith.constant 0 : index
    %c640 = arith.constant 640 : index
    %27 = vector.load %arg7[%c0_42, %c640] : memref<256x1152xf32, #tpu.memory_space<vmem>>, vector<256x128xf32>
    tpu.vector_store %arg7[%c0_42, %c640], %26 {strides = array<i32>} : memref<256x1152xf32, #tpu.memory_space<vmem>>, vector<256x128xf32>,
    %c2_43 = arith.constant 2 : index
    %c0_44 = arith.constant 0 : index
    %c0_45 = arith.constant 0 : index
    %28 = vector.load %arg6[%c2_43, %c0_44, %c0_45] : memref<18x18x128xf32, #tpu.memory_space<vmem>>, vector<16x16x128xf32>
    %29 = vector.shape_cast %28 : vector<16x16x128xf32> to vector<256x128xf32>
    %c0_46 = arith.constant 0 : index
    %c768 = arith.constant 768 : index
    %30 = vector.load %arg7[%c0_46, %c768] : memref<256x1152xf32, #tpu.memory_space<vmem>>, vector<256x128xf32>
    tpu.vector_store %arg7[%c0_46, %c768], %29 {strides = array<i32>} : memref<256x1152xf32, #tpu.memory_space<vmem>>, vector<256x128xf32>,
    %c2_47 = arith.constant 2 : index
    %c1_48 = arith.constant 1 : index
    %c0_49 = arith.constant 0 : index
    %31 = vector.load %arg6[%c2_47, %c1_48, %c0_49] : memref<18x18x128xf32, #tpu.memory_space<vmem>>, vector<16x16x128xf32>
    %32 = vector.shape_cast %31 : vector<16x16x128xf32> to vector<256x128xf32>
    %c0_50 = arith.constant 0 : index
    %c896 = arith.constant 896 : index
    %33 = vector.load %arg7[%c0_50, %c896] : memref<256x1152xf32, #tpu.memory_space<vmem>>, vector<256x128xf32>
    tpu.vector_store %arg7[%c0_50, %c896], %32 {strides = array<i32>} : memref<256x1152xf32, #tpu.memory_space<vmem>>, vector<256x128xf32>,
    %c2_51 = arith.constant 2 : index
    %c2_52 = arith.constant 2 : index
    %c0_53 = arith.constant 0 : index
    %34 = vector.load %arg6[%c2_51, %c2_52, %c0_53] : memref<18x18x128xf32, #tpu.memory_space<vmem>>, vector<16x16x128xf32>
    %35 = vector.shape_cast %34 : vector<16x16x128xf32> to vector<256x128xf32>
    %c0_54 = arith.constant 0 : index
    %c1024 = arith.constant 1024 : index
    %36 = vector.load %arg7[%c0_54, %c1024] : memref<256x1152xf32, #tpu.memory_space<vmem>>, vector<256x128xf32>
    tpu.vector_store %arg7[%c0_54, %c1024], %35 {strides = array<i32>} : memref<256x1152xf32, #tpu.memory_space<vmem>>, vector<256x128xf32>,
    %c0_55 = arith.constant 0 : index
    %c0_56 = arith.constant 0 : index
    %37 = vector.load %arg7[%c0_55, %c0_56] : memref<256x1152xf32, #tpu.memory_space<vmem>>, vector<256x1152xf32>
    %c0_57 = arith.constant 0 : index
    %c0_58 = arith.constant 0 : index
    %38 = vector.load %arg2[%c0_57, %c0_58] : memref<1152x128xf32, #tpu.memory_space<vmem>>, vector<1152x128xf32>
    %cst_59 = arith.constant dense<0.000000e+00> : vector<256x128xf32>
    %39 = tpu.matmul %37, %38, %cst_59 {dimension_numbers = #tpu.dot_dimension_numbers<[1], [0], [0], [1], [0, 0, 1, 1], [], []>} : vector<256x1152xf32>, vector<1152x128xf32>, vector<256x128xf32> -> vector<256x128xf32>
    %40 = vector.extract_strided_slice %8 {offsets = [0, 0], sizes = [1, 128], strides = [1, 1]} : vector<8x128xf32> to vector<1x128xf32>
    %41 = vector.broadcast %40 : vector<1x128xf32> to vector<256x128xf32>
    %42 = arith.addf %39, %41 : vector<256x128xf32>
    %cst_60 = arith.constant dense<0.000000e+00> : vector<128xf32>
    %43 = vector.multi_reduction <add>, %42, %cst_60 [0] : vector<256x128xf32> to vector<128xf32>
    %44 = vector.shape_cast %43 : vector<128xf32> to vector<1x128xf32>
    %cst_61 = arith.constant 2.560000e+02 : f32
    %45 = vector.broadcast %cst_61 : f32 to vector<1x128xf32>
    %46 = arith.divf %44, %45 : vector<1x128xf32>
    %47 = vector.broadcast %46 : vector<1x128xf32> to vector<256x128xf32>
    %48 = arith.subf %42, %47 : vector<256x128xf32>
    %49 = arith.mulf %48, %48 : vector<256x128xf32>
    %cst_62 = arith.constant dense<0.000000e+00> : vector<128xf32>
    %50 = vector.multi_reduction <add>, %49, %cst_62 [0] : vector<256x128xf32> to vector<128xf32>
    %51 = vector.shape_cast %50 : vector<128xf32> to vector<1x128xf32>
    %cst_63 = arith.constant 2.560000e+02 : f32
    %52 = vector.broadcast %cst_63 : f32 to vector<1x128xf32>
    %53 = arith.divf %51, %52 : vector<1x128xf32>
    %54 = vector.broadcast %46 : vector<1x128xf32> to vector<256x128xf32>
    %55 = arith.subf %42, %54 : vector<256x128xf32>
    %cst_64 = arith.constant 9.99999974E-6 : f32
    %56 = vector.broadcast %cst_64 : f32 to vector<1x128xf32>
    %57 = arith.addf %53, %56 : vector<1x128xf32>
    %58 = math.rsqrt %57 : vector<1x128xf32>
    %59 = vector.broadcast %58 : vector<1x128xf32> to vector<256x128xf32>
    %60 = arith.mulf %55, %59 : vector<256x128xf32>
    %61 = vector.extract_strided_slice %8 {offsets = [1, 0], sizes = [1, 128], strides = [1, 1]} : vector<8x128xf32> to vector<1x128xf32>
    %62 = vector.broadcast %61 : vector<1x128xf32> to vector<256x128xf32>
    %63 = arith.mulf %60, %62 : vector<256x128xf32>
    %64 = vector.extract_strided_slice %8 {offsets = [2, 0], sizes = [1, 128], strides = [1, 1]} : vector<8x128xf32> to vector<1x128xf32>
    %65 = vector.broadcast %64 : vector<1x128xf32> to vector<256x128xf32>
    %66 = arith.addf %63, %65 : vector<256x128xf32>
    %67 = vector.extract_strided_slice %8 {offsets = [3, 0], sizes = [1, 128], strides = [1, 1]} : vector<8x128xf32> to vector<1x128xf32>
    %68 = arith.subf %66, %42 : vector<256x128xf32>
    %69 = vector.broadcast %67 : vector<1x128xf32> to vector<256x128xf32>
    %70 = arith.mulf %69, %68 : vector<256x128xf32>
    %71 = arith.addf %42, %70 : vector<256x128xf32>
    %cst_65 = arith.constant 0.000000e+00 : f32
    %72 = vector.broadcast %cst_65 : f32 to vector<256x128xf32>
    %73 = arith.maximumf %71, %72 : vector<256x128xf32>
    %74 = vector.shape_cast %73 : vector<256x128xf32> to vector<16x16x128xf32>
    %c1_66 = arith.constant 1 : index
    %c1_67 = arith.constant 1 : index
    %c0_68 = arith.constant 0 : index
    %75 = vector.load %arg6[%c1_66, %c1_67, %c0_68] : memref<18x18x128xf32, #tpu.memory_space<vmem>>, vector<16x16x128xf32>
    tpu.vector_store %arg6[%c1_66, %c1_67, %c0_68], %74 {strides = array<i32>} : memref<18x18x128xf32, #tpu.memory_space<vmem>>, vector<16x16x128xf32>,
    %c0_69 = arith.constant 0 : index
    %c0_70 = arith.constant 0 : index
    %c0_71 = arith.constant 0 : index
    %76 = vector.load %arg6[%c0_69, %c0_70, %c0_71] : memref<18x18x128xf32, #tpu.memory_space<vmem>>, vector<16x16x128xf32>
    %77 = vector.shape_cast %76 : vector<16x16x128xf32> to vector<256x128xf32>
    %c0_72 = arith.constant 0 : index
    %c0_73 = arith.constant 0 : index
    %78 = vector.load %arg7[%c0_72, %c0_73] : memref<256x1152xf32, #tpu.memory_space<vmem>>, vector<256x128xf32>
    tpu.vector_store %arg7[%c0_72, %c0_73], %77 {strides = array<i32>} : memref<256x1152xf32, #tpu.memory_space<vmem>>, vector<256x128xf32>,
    %c0_74 = arith.constant 0 : index
    %c1_75 = arith.constant 1 : index
    %c0_76 = arith.constant 0 : index
    %79 = vector.load %arg6[%c0_74, %c1_75, %c0_76] : memref<18x18x128xf32, #tpu.memory_space<vmem>>, vector<16x16x128xf32>
    %80 = vector.shape_cast %79 : vector<16x16x128xf32> to vector<256x128xf32>
    %c0_77 = arith.constant 0 : index
    %c128_78 = arith.constant 128 : index
    %81 = vector.load %arg7[%c0_77, %c128_78] : memref<256x1152xf32, #tpu.memory_space<vmem>>, vector<256x128xf32>
    tpu.vector_store %arg7[%c0_77, %c128_78], %80 {strides = array<i32>} : memref<256x1152xf32, #tpu.memory_space<vmem>>, vector<256x128xf32>,
    %c0_79 = arith.constant 0 : index
    %c2_80 = arith.constant 2 : index
    %c0_81 = arith.constant 0 : index
    %82 = vector.load %arg6[%c0_79, %c2_80, %c0_81] : memref<18x18x128xf32, #tpu.memory_space<vmem>>, vector<16x16x128xf32>
    %83 = vector.shape_cast %82 : vector<16x16x128xf32> to vector<256x128xf32>
    %c0_82 = arith.constant 0 : index
    %c256_83 = arith.constant 256 : index
    %84 = vector.load %arg7[%c0_82, %c256_83] : memref<256x1152xf32, #tpu.memory_space<vmem>>, vector<256x128xf32>
    tpu.vector_store %arg7[%c0_82, %c256_83], %83 {strides = array<i32>} : memref<256x1152xf32, #tpu.memory_space<vmem>>, vector<256x128xf32>,
    %c1_84 = arith.constant 1 : index
    %c0_85 = arith.constant 0 : index
    %c0_86 = arith.constant 0 : index
    %85 = vector.load %arg6[%c1_84, %c0_85, %c0_86] : memref<18x18x128xf32, #tpu.memory_space<vmem>>, vector<16x16x128xf32>
    %86 = vector.shape_cast %85 : vector<16x16x128xf32> to vector<256x128xf32>
    %c0_87 = arith.constant 0 : index
    %c384_88 = arith.constant 384 : index
    %87 = vector.load %arg7[%c0_87, %c384_88] : memref<256x1152xf32, #tpu.memory_space<vmem>>, vector<256x128xf32>
    tpu.vector_store %arg7[%c0_87, %c384_88], %86 {strides = array<i32>} : memref<256x1152xf32, #tpu.memory_space<vmem>>, vector<256x128xf32>,
    %c1_89 = arith.constant 1 : index
    %c1_90 = arith.constant 1 : index
    %c0_91 = arith.constant 0 : index
    %88 = vector.load %arg6[%c1_89, %c1_90, %c0_91] : memref<18x18x128xf32, #tpu.memory_space<vmem>>, vector<16x16x128xf32>
    %89 = vector.shape_cast %88 : vector<16x16x128xf32> to vector<256x128xf32>
    %c0_92 = arith.constant 0 : index
    %c512_93 = arith.constant 512 : index
    %90 = vector.load %arg7[%c0_92, %c512_93] : memref<256x1152xf32, #tpu.memory_space<vmem>>, vector<256x128xf32>
    tpu.vector_store %arg7[%c0_92, %c512_93], %89 {strides = array<i32>} : memref<256x1152xf32, #tpu.memory_space<vmem>>, vector<256x128xf32>,
    %c1_94 = arith.constant 1 : index
    %c2_95 = arith.constant 2 : index
    %c0_96 = arith.constant 0 : index
    %91 = vector.load %arg6[%c1_94, %c2_95, %c0_96] : memref<18x18x128xf32, #tpu.memory_space<vmem>>, vector<16x16x128xf32>
    %92 = vector.shape_cast %91 : vector<16x16x128xf32> to vector<256x128xf32>
    %c0_97 = arith.constant 0 : index
    %c640_98 = arith.constant 640 : index
    %93 = vector.load %arg7[%c0_97, %c640_98] : memref<256x1152xf32, #tpu.memory_space<vmem>>, vector<256x128xf32>
    tpu.vector_store %arg7[%c0_97, %c640_98], %92 {strides = array<i32>} : memref<256x1152xf32, #tpu.memory_space<vmem>>, vector<256x128xf32>,
    %c2_99 = arith.constant 2 : index
    %c0_100 = arith.constant 0 : index
    %c0_101 = arith.constant 0 : index
    %94 = vector.load %arg6[%c2_99, %c0_100, %c0_101] : memref<18x18x128xf32, #tpu.memory_space<vmem>>, vector<16x16x128xf32>
    %95 = vector.shape_cast %94 : vector<16x16x128xf32> to vector<256x128xf32>
    %c0_102 = arith.constant 0 : index
    %c768_103 = arith.constant 768 : index
    %96 = vector.load %arg7[%c0_102, %c768_103] : memref<256x1152xf32, #tpu.memory_space<vmem>>, vector<256x128xf32>
    tpu.vector_store %arg7[%c0_102, %c768_103], %95 {strides = array<i32>} : memref<256x1152xf32, #tpu.memory_space<vmem>>, vector<256x128xf32>,
    %c2_104 = arith.constant 2 : index
    %c1_105 = arith.constant 1 : index
    %c0_106 = arith.constant 0 : index
    %97 = vector.load %arg6[%c2_104, %c1_105, %c0_106] : memref<18x18x128xf32, #tpu.memory_space<vmem>>, vector<16x16x128xf32>
    %98 = vector.shape_cast %97 : vector<16x16x128xf32> to vector<256x128xf32>
    %c0_107 = arith.constant 0 : index
    %c896_108 = arith.constant 896 : index
    %99 = vector.load %arg7[%c0_107, %c896_108] : memref<256x1152xf32, #tpu.memory_space<vmem>>, vector<256x128xf32>
    tpu.vector_store %arg7[%c0_107, %c896_108], %98 {strides = array<i32>} : memref<256x1152xf32, #tpu.memory_space<vmem>>, vector<256x128xf32>,
    %c2_109 = arith.constant 2 : index
    %c2_110 = arith.constant 2 : index
    %c0_111 = arith.constant 0 : index
    %100 = vector.load %arg6[%c2_109, %c2_110, %c0_111] : memref<18x18x128xf32, #tpu.memory_space<vmem>>, vector<16x16x128xf32>
    %101 = vector.shape_cast %100 : vector<16x16x128xf32> to vector<256x128xf32>
    %c0_112 = arith.constant 0 : index
    %c1024_113 = arith.constant 1024 : index
    %102 = vector.load %arg7[%c0_112, %c1024_113] : memref<256x1152xf32, #tpu.memory_space<vmem>>, vector<256x128xf32>
    tpu.vector_store %arg7[%c0_112, %c1024_113], %101 {strides = array<i32>} : memref<256x1152xf32, #tpu.memory_space<vmem>>, vector<256x128xf32>,
    %c0_114 = arith.constant 0 : index
    %c0_115 = arith.constant 0 : index
    %103 = vector.load %arg7[%c0_114, %c0_115] : memref<256x1152xf32, #tpu.memory_space<vmem>>, vector<256x1152xf32>
    %c0_116 = arith.constant 0 : index
    %c0_117 = arith.constant 0 : index
    %104 = vector.load %arg3[%c0_116, %c0_117] : memref<1152x128xf32, #tpu.memory_space<vmem>>, vector<1152x128xf32>
    %cst_118 = arith.constant dense<0.000000e+00> : vector<256x128xf32>
    %105 = tpu.matmul %103, %104, %cst_118 {dimension_numbers = #tpu.dot_dimension_numbers<[1], [0], [0], [1], [0, 0, 1, 1], [], []>} : vector<256x1152xf32>, vector<1152x128xf32>, vector<256x128xf32> -> vector<256x128xf32>
    %106 = vector.extract_strided_slice %8 {offsets = [4, 0], sizes = [1, 128], strides = [1, 1]} : vector<8x128xf32> to vector<1x128xf32>
    %107 = vector.broadcast %106 : vector<1x128xf32> to vector<256x128xf32>
    %108 = arith.addf %105, %107 : vector<256x128xf32>
    %109 = vector.shape_cast %108 : vector<256x128xf32> to vector<16x16x128xf32>
    %110 = arith.addf %109, %7 : vector<16x16x128xf32>
    %cst_119 = arith.constant 0.000000e+00 : f32
    %111 = vector.broadcast %cst_119 : f32 to vector<16x16x128xf32>
    %112 = arith.maximumf %110, %111 : vector<16x16x128xf32>
    %c0_120 = arith.constant 0 : index
    %c0_121 = arith.constant 0 : index
    %c0_122 = arith.constant 0 : index
    %c0_123 = arith.constant 0 : index
    %113 = vector.load %arg5[%c0_120, %c0_121, %c0_122, %c0_123] : memref<1x16x16x128xf32, #tpu.memory_space<vmem>>, vector<1x16x16x128xf32>
    %114 = vector.shape_cast %113 : vector<1x16x16x128xf32> to vector<16x16x128xf32>
    %115 = vector.shape_cast %112 : vector<16x16x128xf32> to vector<1x16x16x128xf32>
    tpu.vector_store %arg5[%c0_120, %c0_121, %c0_122, %c0_123], %115 {strides = array<i32>} : memref<1x16x16x128xf32, #tpu.memory_space<vmem>>, vector<1x16x16x128xf32>,
    return
  }
  func.func @transform_0(%arg0: i32) -> (i32, i32, i32, i32) {
    %c0_i32 = arith.constant 0 : i32
    %c0_i32_0 = arith.constant 0 : i32
    %c0_i32_1 = arith.constant 0 : i32
    %c0_i32_2 = arith.constant 0 : i32
    return %arg0, %c0_i32, %c0_i32_0, %c0_i32_1 : i32, i32, i32, i32
  }
  func.func @transform_1(%arg0: i32) -> (i32, i32) {
    %c0_i32 = arith.constant 0 : i32
    %c0_i32_0 = arith.constant 0 : i32
    %c0_i32_1 = arith.constant 0 : i32
    return %c0_i32, %c0_i32_0 : i32, i32
  }
  func.func @transform_2(%arg0: i32) -> (i32, i32) {
    %c0_i32 = arith.constant 0 : i32
    %c0_i32_0 = arith.constant 0 : i32
    %c0_i32_1 = arith.constant 0 : i32
    return %c0_i32, %c0_i32_0 : i32, i32
  }
  func.func @transform_3(%arg0: i32) -> (i32, i32) {
    %c0_i32 = arith.constant 0 : i32
    %c0_i32_0 = arith.constant 0 : i32
    %c0_i32_1 = arith.constant 0 : i32
    return %c0_i32, %c0_i32_0 : i32, i32
  }
  func.func @transform_4(%arg0: i32) -> (i32, i32, i32, i32) {
    %c0_i32 = arith.constant 0 : i32
    %c0_i32_0 = arith.constant 0 : i32
    %c0_i32_1 = arith.constant 0 : i32
    %c0_i32_2 = arith.constant 0 : i32
    return %arg0, %c0_i32, %c0_i32_0, %c0_i32_1 : i32, i32, i32, i32
  }
}

</mosaic_0001>

<llo_original>
// kernel: tpu_custom_call.1
$region0: #{tpu_custom_call.1}
  #allocation0 [shape = 'u32[]', space=smem, size = 0x4, offset = 0x4, fixed_abs, tag = 'smem constant byte address 0x4 - core index']
  #allocation1 [shape = 'u32[144,128]{1,0:T(1,128)}', space=vmem, size = 0x12000, scoped, tag = 'internal scratch']
  #allocation2 [shape = 'f32[18,18,128]{2,1,0:T(8,128)}', space=vmem, size = 0x36000, scoped, tag = 'scratch operand']
  #allocation3 [shape = 'f32[256,1152]{1,0:T(8,128)}', space=vmem, size = 0x120000, scoped, tag = 'scratch operand']
  %s0 = inlined_call_operand.hbm [shape: f32[2,16,16,128], index: 0, kind: input, shape index: {}]
  %s1 = inlined_call_operand.hbm [shape: f32[1152,128], index: 1, kind: input, shape index: {}]
  %s2 = inlined_call_operand.hbm [shape: f32[1152,128], index: 2, kind: input, shape index: {}]
  %s3 = inlined_call_operand.hbm [shape: f32[8,128], index: 3, kind: input, shape index: {}]
  %s4 = inlined_call_operand.hbm [shape: f32[2,16,16,128], index: 4, kind: output, shape index: {}]
  %s5 = sld [smem:[#allocation0]]
  $region65: #{tpu_custom_call.1} parent=0
    _
  %s7 = ssub.s32 1, %s5
  %s8 = scalar_select 0, %s7, %s5
  $region1: #{tpu_custom_call.1} parent=0
    #allocation4 [shape = 'u8[262144]{0}', space=vmem, size = 0x40000, scoped, tag = 'input window, operand 0']
    #allocation5 [shape = 's32[2]{0}', space=sflag, size = 0x8, scoped, tag = 'scoped memory for tpu_custom_call.1']
    #allocation6 [shape = 's32[2]{0}', space=sflag, size = 0x8, scoped, tag = 'scoped memory for tpu_custom_call.1']
    #allocation7 [shape = 'u8[589824]{0}', space=vmem, size = 0x90000, scoped, tag = 'input window, operand 1, single buffered']
    #allocation8 [shape = 's32[1]{0}', space=sflag, size = 0x4, scoped, tag = 'scoped memory for tpu_custom_call.1']
    #allocation9 [shape = 'u8[589824]{0}', space=vmem, size = 0x90000, scoped, tag = 'input window, operand 2, single buffered']
    #allocation10 [shape = 'u8[4096]{0}', space=vmem, size = 0x1000, scoped, tag = 'input window, operand 3, single buffered']
    #allocation11 [shape = 's32[1]{0}', space=sflag, size = 0x4, scoped, tag = 'scoped memory for tpu_custom_call.1']
    #allocation12 [shape = 'u8[262144]{0}', space=vmem, size = 0x40000, scoped, tag = 'output window, operand 0']
    %9 = vsyncpa [#allocation5], 0
    %s10 = scalar_lea.sflag [#allocation5], 1
    %11 = vsyncpa %s10, 0
    %12 = vsyncpa [#allocation8], 0
    %13 = vsyncpa [#allocation11], 0
    %14 = vsyncpa [#allocation6], 0
    %s15 = scalar_lea.sflag [#allocation6], 1
    %16 = vsyncpa %s15, 0
    loop: start=0, step=1, limit=4
    $region2: #{tpu_custom_call.1} parent=1 // loop_pre_header
      _
    $region3: #{tpu_custom_call.1} parent=1 // loop_header
      %s18 = sphi 0, %s22
      %p19 = scmp.ge.s32.totalorder %s18, 4
      %s28 = sphi 0, %s30
      %s31 = sphi 0, %s28
      %s32 = sphi 0, %s31
      %s48 = sphi 0, %s32
      %s52 = sphi 0, %s52
      %s54 = sphi 0, %s52
      %s55 = sphi 0, %s54
      %s69 = sphi 0, %s55
      %s73 = sphi 0, %s73
      %s75 = sphi 0, %s73
      %s76 = sphi 0, %s75
      %s90 = sphi 0, %s76
      %s94 = sphi 0, %s94
      %s96 = sphi 0, %s94
      %s97 = sphi 0, %s96
      %s111 = sphi 0, %s97
      %s117 = sphi 0, %s119
      %s120 = sphi 0, %s117
      %s121 = sphi 0, %s120
      %s137 = sphi 0, %s121
    $region4: #{tpu_custom_call.1} parent=1 // loop_header_branch
      %21 = sbr.rel (%p19) target = $region8
    $region5: #{tpu_custom_call.1} parent=1 // loop_body
      %s23 = ssub.s32 %s18, 1
      %s24 = ssub.s32 %s18, 2
      %s25 = sadd.s32 %s18, 1
      %s26 = ssub.s32 %s18, %s25
      %p27 = scmp.eq.s32.totalorder %s26, 0
      %s29 = sadd.s32 %s28, 1
      %s30 = scalar_select %p27, %s28, %s29
      %p33 = pneg %p27
      %p34 = scmp.eq.s32.totalorder %s18, 1
      %p35 = por %p33, %p34
      %p36 = scmp.ne.s32.totalorder %s28, %s31
      %p37 = scmp.eq.s32.totalorder %s18, 0
      %p38 = por %p36, %p37
      %p39 = scmp.ne.s32.totalorder %s28, %s31
      %p40 = scmp.eq.s32.totalorder %s23, 1
      %p41 = por %p39, %p40
      %p42 = scmp.ne.s32.totalorder %s31, %s32
      %p43 = scmp.eq.s32.totalorder %s23, 0
      %p44 = por %p42, %p43
      %p45 = scmp.ne.s32.totalorder %s31, %s32
      %p46 = scmp.eq.s32.totalorder %s24, 1
      %p47 = por %p45, %p46
      %p49 = scmp.ne.s32.totalorder %s32, %s48
      %p50 = scmp.eq.s32.totalorder %s24, 0
      %p51 = por %p49, %p50
      %s53 = sadd.s32 %s52, 1
      %p56 = scmp.eq.s32.totalorder %s18, 1
      %p57 = scmp.ne.s32.totalorder %s52, %s54
      %p58 = scmp.eq.s32.totalorder %s18, 0
      %p59 = por %p57, %p58
      %p60 = scmp.ne.s32.totalorder %s52, %s54
      %p61 = scmp.eq.s32.totalorder %s23, 1
      %p62 = por %p60, %p61
      %p63 = scmp.ne.s32.totalorder %s54, %s55
      %p64 = scmp.eq.s32.totalorder %s23, 0
      %p65 = por %p63, %p64
      %p66 = scmp.ne.s32.totalorder %s54, %s55
      %p67 = scmp.eq.s32.totalorder %s24, 1
      %p68 = por %p66, %p67
      %p70 = scmp.ne.s32.totalorder %s55, %s69
      %p71 = scmp.eq.s32.totalorder %s24, 0
      %p72 = por %p70, %p71
      %s74 = sadd.s32 %s73, 1
      %p77 = scmp.eq.s32.totalorder %s18, 1
      %p78 = scmp.ne.s32.totalorder %s73, %s75
      %p79 = scmp.eq.s32.totalorder %s18, 0
      %p80 = por %p78, %p79
      %p81 = scmp.ne.s32.totalorder %s73, %s75
      %p82 = scmp.eq.s32.totalorder %s23, 1
      %p83 = por %p81, %p82
      %p84 = scmp.ne.s32.totalorder %s75, %s76
      %p85 = scmp.eq.s32.totalorder %s23, 0
      %p86 = por %p84, %p85
      %p87 = scmp.ne.s32.totalorder %s75, %s76
      %p88 = scmp.eq.s32.totalorder %s24, 1
      %p89 = por %p87, %p88
      %p91 = scmp.ne.s32.totalorder %s76, %s90
      %p92 = scmp.eq.s32.totalorder %s24, 0
      %p93 = por %p91, %p92
      %s95 = sadd.s32 %s94, 1
      %p98 = scmp.eq.s32.totalorder %s18, 1
      %p99 = scmp.ne.s32.totalorder %s94, %s96
      %p100 = scmp.eq.s32.totalorder %s18, 0
      %p101 = por %p99, %p100
      %p102 = scmp.ne.s32.totalorder %s94, %s96
      %p103 = scmp.eq.s32.totalorder %s23, 1
      %p104 = por %p102, %p103
      %p105 = scmp.ne.s32.totalorder %s96, %s97
      %p106 = scmp.eq.s32.totalorder %s23, 0
      %p107 = por %p105, %p106
      %p108 = scmp.ne.s32.totalorder %s96, %s97
      %p109 = scmp.eq.s32.totalorder %s24, 1
      %p110 = por %p108, %p109
      %p112 = scmp.ne.s32.totalorder %s97, %s111
      %p113 = scmp.eq.s32.totalorder %s24, 0
      %p114 = por %p112, %p113
      %s115 = ssub.s32 %s18, %s25
      %p116 = scmp.eq.s32.totalorder %s115, 0
      %s118 = sadd.s32 %s117, 1
      %s119 = scalar_select %p116, %s117, %s118
      %p122 = pneg %p116
      %p123 = scmp.eq.s32.totalorder %s18, 1
      %p124 = por %p122, %p123
      %p125 = scmp.ne.s32.totalorder %s117, %s120
      %p126 = scmp.eq.s32.totalorder %s18, 0
      %p127 = por %p125, %p126
      %p128 = scmp.ne.s32.totalorder %s117, %s120
      %p129 = scmp.eq.s32.totalorder %s23, 1
      %p130 = por %p128, %p129
      %p131 = scmp.ne.s32.totalorder %s120, %s121
      %p132 = scmp.eq.s32.totalorder %s23, 0
      %p133 = por %p131, %p132
      %p134 = scmp.ne.s32.totalorder %s120, %s121
      %p135 = scmp.eq.s32.totalorder %s24, 1
      %p136 = por %p134, %p135
      %p138 = scmp.ne.s32.totalorder %s121, %s137
      %p139 = scmp.eq.s32.totalorder %s24, 0
      %p140 = por %p138, %p139
      %p141 = scmp.le.s32.totalorder 1, %s18
      %p142 = scmp.lt.s32.totalorder %s18, 3
      %p143 = pnand %p141, %p142
      %p144 = pneg %p143
      // Predicated region
      $region9: #{tpu_custom_call.1} parent=5 // pred_check
        _
      $region10: #{tpu_custom_call.1} parent=5 // pred_check_branch
        %146 = sbr.rel (%p143) target = $region12
      $region11: #{tpu_custom_call.1} parent=5 // pred_region
        %s147 = ssub.s32 %s18, 1
        // Predicated region
        $region13: #{tpu_custom_call.1} parent=11 // pred_check
          %p148 = pneg %p65
        $region14: #{tpu_custom_call.1} parent=11 // pred_check_branch
          %150 = sbr.rel (%p148) target = $region16
        $region15: #{tpu_custom_call.1} parent=11 // pred_region
          %s152 = ssub.s32 18432, 18432
          %153 = vsyncadd [#allocation8], %s152
          %s154 = sshll.u32 [#allocation7], 4
          %s155 = int_to_ptr.vmem [resolvable:$true] %s154
          %160 = dma.hbm_to_vmem [thread:$0]  %s1, 18432, %s155, [#allocation8], 128, 128, 8
        $region16: #{tpu_custom_call.1} parent=11 // pred_fallthru
          _
        // Predicated region
        $region17: #{tpu_custom_call.1} parent=11 // pred_check
          %p161 = pneg %p86
        $region18: #{tpu_custom_call.1} parent=11 // pred_check_branch
          %163 = sbr.rel (%p161) target = $region20
        $region19: #{tpu_custom_call.1} parent=11 // pred_region
          %s165 = ssub.s32 18432, 18432
          %166 = vsyncadd [#allocation8], %s165
          %s167 = sshll.u32 [#allocation9], 4
          %s168 = int_to_ptr.vmem [resolvable:$true] %s167
          %173 = dma.hbm_to_vmem [thread:$0]  %s2, 18432, %s168, [#allocation8], 128, 128, 8
        $region20: #{tpu_custom_call.1} parent=11 // pred_fallthru
          _
        // Predicated region
        $region21: #{tpu_custom_call.1} parent=11 // pred_check
          %p174 = pneg %p107
        $region22: #{tpu_custom_call.1} parent=11 // pred_check_branch
          %176 = sbr.rel (%p174) target = $region24
        $region23: #{tpu_custom_call.1} parent=11 // pred_region
          %s178 = ssub.s32 128, 128
          %179 = vsyncadd [#allocation11], %s178
          %s181 = sshll.u32 [#allocation10], 4
          %s182 = int_to_ptr.vmem [resolvable:$true] %s181
          %184 = dma.hbm_to_vmem [thread:$0]  %s3, 128, %s182, [#allocation11]
        $region24: #{tpu_custom_call.1} parent=11 // pred_fallthru
          _
      $region12: #{tpu_custom_call.1} parent=5 // pred_fallthru
        _
      %p185 = scmp.lt.s32.totalorder %s18, 2
      // Predicated region
      $region25: #{tpu_custom_call.1} parent=5 // pred_check
        %p186 = pneg %p185
      $region26: #{tpu_custom_call.1} parent=5 // pred_check_branch
        %188 = sbr.rel (%p186) target = $region28
      $region27: #{tpu_custom_call.1} parent=5 // pred_region
        // Predicated region
        $region29: #{tpu_custom_call.1} parent=27 // pred_check
          %p189 = pneg %p38
        $region30: #{tpu_custom_call.1} parent=27 // pred_check_branch
          %191 = sbr.rel (%p189) target = $region32
        $region31: #{tpu_custom_call.1} parent=27 // pred_region
          %s192 = sand.u32 %s28, 1
          %s193 = scalar_lea.sflag [#allocation5], %s192
          %s194 = sand.u32 %s28, 1
          %s195 = smul.addr %s194, 256
          %s196 = scalar_lea.vmem [#allocation4], %s195
          %s198 = ssub.s32 4096, 4096
          %199 = vsyncadd %s193, %s198
          %s200 = smul.addr %s18, 32
          %s201 = smul.addr %s200, 128
          %s202 = scalar_lea.hbm %s0, %s201
          %s203 = sshll.u32 %s196, 4
          %s204 = int_to_ptr.vmem [resolvable:$true] %s203
          %209 = dma.hbm_to_vmem [thread:$0]  %s202, 4096, %s204, %s193, 128, 128, 8
        $region32: #{tpu_custom_call.1} parent=27 // pred_fallthru
          _
      $region28: #{tpu_custom_call.1} parent=5 // pred_fallthru
        _
      %p210 = scmp.le.s32.totalorder 1, %s18
      %p211 = scmp.lt.s32.totalorder %s18, 3
      %p212 = pnand %p210, %p211
      %p213 = pneg %p212
      // Predicated region
      $region33: #{tpu_custom_call.1} parent=5 // pred_check
        _
      $region34: #{tpu_custom_call.1} parent=5 // pred_check_branch
        %215 = sbr.rel (%p212) target = $region36
      $region35: #{tpu_custom_call.1} parent=5 // pred_region
        %s216 = ssub.s32 %s18, 1
        %s217 = sand.u32 %s31, 1
        %s218 = scalar_lea.sflag [#allocation5], %s217
        %s219 = sand.u32 %s31, 1
        %s220 = smul.addr %s219, 256
        %s221 = scalar_lea.vmem [#allocation4], %s220
        // Predicated region
        $region37: #{tpu_custom_call.1} parent=35 // pred_check
          %p222 = pneg %p44
        $region38: #{tpu_custom_call.1} parent=35 // pred_check_branch
          %224 = sbr.rel (%p222) target = $region40
        $region39: #{tpu_custom_call.1} parent=35 // pred_region
          %225 = dma.done %s218, 4096
        $region40: #{tpu_custom_call.1} parent=35 // pred_fallthru
          _
        // Predicated region
        $region41: #{tpu_custom_call.1} parent=35 // pred_check
          %p226 = pneg %p65
        $region42: #{tpu_custom_call.1} parent=35 // pred_check_branch
          %228 = sbr.rel (%p226) target = $region44
        $region43: #{tpu_custom_call.1} parent=35 // pred_region
          %229 = dma.done [#allocation8], 18432
        $region44: #{tpu_custom_call.1} parent=35 // pred_fallthru
          _
        // Predicated region
        $region45: #{tpu_custom_call.1} parent=35 // pred_check
          %p230 = pneg %p86
        $region46: #{tpu_custom_call.1} parent=35 // pred_check_branch
          %232 = sbr.rel (%p230) target = $region48
        $region47: #{tpu_custom_call.1} parent=35 // pred_region
          %233 = dma.done [#allocation8], 18432
        $region48: #{tpu_custom_call.1} parent=35 // pred_fallthru
          _
        // Predicated region
        $region49: #{tpu_custom_call.1} parent=35 // pred_check
          %p234 = pneg %p107
        $region50: #{tpu_custom_call.1} parent=35 // pred_check_branch
          %236 = sbr.rel (%p234) target = $region52
        $region51: #{tpu_custom_call.1} parent=35 // pred_region
          %237 = dma.done [#allocation11], 128
        $region52: #{tpu_custom_call.1} parent=35 // pred_fallthru
          _
        %s238 = sand.u32 %s31, 1
        %s239 = scalar_lea.sflag [#allocation5], %s238
        %s240 = sand.u32 %s31, 1
        %s241 = smul.addr %s240, 256
        %s242 = scalar_lea.vmem [#allocation4], %s241
        %p243 = pneg %p44
        %p244 = pneg %p41
        %p245 = pneg %p65
        %p246 = pneg %p62
        %p247 = pneg %p86
        %p248 = pneg %p83
        %p249 = pneg %p107
        %p250 = pneg %p104
        %p251 = pneg %p133
        %p252 = pneg %p130
        %s253 = sand.u32 %s120, 1
        %s254 = scalar_lea.sflag [#allocation6], %s253
        %s255 = sand.u32 %s120, 1
        %s256 = smul.addr %s255, 256
        %s257 = scalar_lea.vmem [#allocation12], %s256
        %258 = vst [vmem:[#allocation2] sm:$0xff] 0.0
        %259 = vst [vmem:[#allocation2 + $0x8] sm:$0xff] 0.0
        %260 = vst [vmem:[#allocation2 + $0x10] sm:$0x3] 0.0
        %s261 = scalar_lea.vmem [#allocation2], 408
        %262 = vst [vmem:[%s261] sm:$0xff] 0.0
        %263 = vst [vmem:[%s261 + $0x8] sm:$0xff] 0.0
        %264 = vst [vmem:[%s261 + $0x10] sm:$0x3] 0.0
        %s265 = scalar_lea.vmem [#allocation2], 24
        %266 = vst [vmem:[%s265] sm:$0x1] 0.0
        %267 = vst [vmem:[%s265 + $0x18] sm:$0x1] 0.0
        %268 = vst [vmem:[%s265 + $0x30] sm:$0x1] 0.0
        %269 = vst [vmem:[%s265 + $0x48] sm:$0x1] 0.0
        %270 = vst [vmem:[%s265 + $0x60] sm:$0x1] 0.0
        %271 = vst [vmem:[%s265 + $0x78] sm:$0x1] 0.0
        %272 = vst [vmem:[%s265 + $0x90] sm:$0x1] 0.0
        %273 = vst [vmem:[%s265 + $0xa8] sm:$0x1] 0.0
        %274 = vst [vmem:[%s265 + $0xc0] sm:$0x1] 0.0
        %275 = vst [vmem:[%s265 + $0xd8] sm:$0x1] 0.0
        %276 = vst [vmem:[%s265 + $0xf0] sm:$0x1] 0.0
        %277 = vst [vmem:[%s265 + $0x108] sm:$0x1] 0.0
        %278 = vst [vmem:[%s265 + $0x120] sm:$0x1] 0.0
        %279 = vst [vmem:[%s265 + $0x138] sm:$0x1] 0.0
        %280 = vst [vmem:[%s265 + $0x150] sm:$0x1] 0.0
        %281 = vst [vmem:[%s265 + $0x168] sm:$0x1] 0.0
        %282 = vst [vmem:[%s265 + $0x11] sm:$0x1] 0.0
        %283 = vst [vmem:[%s265 + $0x29] sm:$0x1] 0.0
        %284 = vst [vmem:[%s265 + $0x41] sm:$0x1] 0.0
        %285 = vst [vmem:[%s265 + $0x59] sm:$0x1] 0.0
        %286 = vst [vmem:[%s265 + $0x71] sm:$0x1] 0.0
        %287 = vst [vmem:[%s265 + $0x89] sm:$0x1] 0.0
        %288 = vst [vmem:[%s265 + $0xa1] sm:$0x1] 0.0
        %289 = vst [vmem:[%s265 + $0xb9] sm:$0x1] 0.0
        %290 = vst [vmem:[%s265 + $0xd1] sm:$0x1] 0.0
        %291 = vst [vmem:[%s265 + $0xe9] sm:$0x1] 0.0
        %292 = vst [vmem:[%s265 + $0x101] sm:$0x1] 0.0
        %293 = vst [vmem:[%s265 + $0x119] sm:$0x1] 0.0
        %294 = vst [vmem:[%s265 + $0x131] sm:$0x1] 0.0
        %295 = vst [vmem:[%s265 + $0x149] sm:$0x1] 0.0
        %296 = vst [vmem:[%s265 + $0x161] sm:$0x1] 0.0
        %297 = vst [vmem:[%s265 + $0x179] sm:$0x1] 0.0
        %v298 = vld [vmem:[%s221] sm:$0xff]
        %v299 = vld [vmem:[%s221 + $0x8] sm:$0xff]
        %v300 = vld [vmem:[%s221 + $0x10] sm:$0xff]
        %v301 = vld [vmem:[%s221 + $0x18] sm:$0xff]
        %v302 = vld [vmem:[%s221 + $0x20] sm:$0xff]
        %v303 = vld [vmem:[%s221 + $0x28] sm:$0xff]
        %v304 = vld [vmem:[%s221 + $0x30] sm:$0xff]
        %v305 = vld [vmem:[%s221 + $0x38] sm:$0xff]
        %v306 = vld [vmem:[%s221 + $0x40] sm:$0xff]
        %v307 = vld [vmem:[%s221 + $0x48] sm:$0xff]
        %v308 = vld [vmem:[%s221 + $0x50] sm:$0xff]
        %v309 = vld [vmem:[%s221 + $0x58] sm:$0xff]
        %v310 = vld [vmem:[%s221 + $0x60] sm:$0xff]
        %v311 = vld [vmem:[%s221 + $0x68] sm:$0xff]
        %v312 = vld [vmem:[%s221 + $0x70] sm:$0xff]
        %v313 = vld [vmem:[%s221 + $0x78] sm:$0xff]
        %v314 = vld [vmem:[%s221 + $0x80] sm:$0xff]
        %v315 = vld [vmem:[%s221 + $0x88] sm:$0xff]
        %v316 = vld [vmem:[%s221 + $0x90] sm:$0xff]
        %v317 = vld [vmem:[%s221 + $0x98] sm:$0xff]
        %v318 = vld [vmem:[%s221 + $0xa0] sm:$0xff]
        %v319 = vld [vmem:[%s221 + $0xa8] sm:$0xff]
        %v320 = vld [vmem:[%s221 + $0xb0] sm:$0xff]
        %v321 = vld [vmem:[%s221 + $0xb8] sm:$0xff]
        %v322 = vld [vmem:[%s221 + $0xc0] sm:$0xff]
        %v323 = vld [vmem:[%s221 + $0xc8] sm:$0xff]
        %v324 = vld [vmem:[%s221 + $0xd0] sm:$0xff]
        %v325 = vld [vmem:[%s221 + $0xd8] sm:$0xff]
        %v326 = vld [vmem:[%s221 + $0xe0] sm:$0xff]
        %v327 = vld [vmem:[%s221 + $0xe8] sm:$0xff]
        %v328 = vld [vmem:[%s221 + $0xf0] sm:$0xff]
        %v329 = vld [vmem:[%s221 + $0xf8] sm:$0xff]
        %v330 = vld [vmem:[#allocation10] sm:$0xff]
        %331 = vst [vmem:[%s265 + $0x1] sm:$0xff] %v298
        %332 = vst [vmem:[%s265 + $0x9] sm:$0xff] %v299
        %333 = vst [vmem:[%s265 + $0x19] sm:$0xff] %v300
        %334 = vst [vmem:[%s265 + $0x21] sm:$0xff] %v301
        %335 = vst [vmem:[%s265 + $0x31] sm:$0xff] %v302
        %336 = vst [vmem:[%s265 + $0x39] sm:$0xff] %v303
        %337 = vst [vmem:[%s265 + $0x49] sm:$0xff] %v304
        %338 = vst [vmem:[%s265 + $0x51] sm:$0xff] %v305
        %339 = vst [vmem:[%s265 + $0x61] sm:$0xff] %v306
        %340 = vst [vmem:[%s265 + $0x69] sm:$0xff] %v307
        %341 = vst [vmem:[%s265 + $0x79] sm:$0xff] %v308
        %342 = vst [vmem:[%s265 + $0x81] sm:$0xff] %v309
        %343 = vst [vmem:[%s265 + $0x91] sm:$0xff] %v310
        %344 = vst [vmem:[%s265 + $0x99] sm:$0xff] %v311
        %345 = vst [vmem:[%s265 + $0xa9] sm:$0xff] %v312
        %346 = vst [vmem:[%s265 + $0xb1] sm:$0xff] %v313
        %347 = vst [vmem:[%s265 + $0xc1] sm:$0xff] %v314
        %348 = vst [vmem:[%s265 + $0xc9] sm:$0xff] %v315
        %349 = vst [vmem:[%s265 + $0xd9] sm:$0xff] %v316
        %350 = vst [vmem:[%s265 + $0xe1] sm:$0xff] %v317
        %351 = vst [vmem:[%s265 + $0xf1] sm:$0xff] %v318
        %352 = vst [vmem:[%s265 + $0xf9] sm:$0xff] %v319
        %353 = vst [vmem:[%s265 + $0x109] sm:$0xff] %v320
        %354 = vst [vmem:[%s265 + $0x111] sm:$0xff] %v321
        %355 = vst [vmem:[%s265 + $0x121] sm:$0xff] %v322
        %356 = vst [vmem:[%s265 + $0x129] sm:$0xff] %v323
        %357 = vst [vmem:[%s265 + $0x139] sm:$0xff] %v324
        %358 = vst [vmem:[%s265 + $0x141] sm:$0xff] %v325
        %359 = vst [vmem:[%s265 + $0x151] sm:$0xff] %v326
        %360 = vst [vmem:[%s265 + $0x159] sm:$0xff] %v327
        %361 = vst [vmem:[%s265 + $0x169] sm:$0xff] %v328
        %362 = vst [vmem:[%s265 + $0x171] sm:$0xff] %v329
        %v363 = vld [vmem:[#allocation2] sm:$0xff]
        %v364 = vld [vmem:[#allocation2 + $0x8] sm:$0xff]
        %v365 = vld [vmem:[#allocation2 + $0x18] sm:$0xff]
        %v366 = vld [vmem:[#allocation2 + $0x20] sm:$0xff]
        %v367 = vld [vmem:[#allocation2 + $0x30] sm:$0xff]
        %v368 = vld [vmem:[#allocation2 + $0x38] sm:$0xff]
        %v369 = vld [vmem:[#allocation2 + $0x48] sm:$0xff]
        %v370 = vld [vmem:[#allocation2 + $0x50] sm:$0xff]
        %v371 = vld [vmem:[#allocation2 + $0x60] sm:$0xff]
        %v372 = vld [vmem:[#allocation2 + $0x68] sm:$0xff]
        %v373 = vld [vmem:[#allocation2 + $0x78] sm:$0xff]
        %v374 = vld [vmem:[#allocation2 + $0x80] sm:$0xff]
        %v375 = vld [vmem:[#allocation2 + $0x90] sm:$0xff]
        %v376 = vld [vmem:[#allocation2 + $0x98] sm:$0xff]
        %v377 = vld [vmem:[#allocation2 + $0xa8] sm:$0xff]
        %v378 = vld [vmem:[#allocation2 + $0xb0] sm:$0xff]
        %v379 = vld [vmem:[#allocation2 + $0xc0] sm:$0xff]
        %v380 = vld [vmem:[#allocation2 + $0xc8] sm:$0xff]
        %v381 = vld [vmem:[#allocation2 + $0xd8] sm:$0xff]
        %v382 = vld [vmem:[#allocation2 + $0xe0] sm:$0xff]
        %v383 = vld [vmem:[#allocation2 + $0xf0] sm:$0xff]
        %v384 = vld [vmem:[#allocation2 + $0xf8] sm:$0xff]
        %v385 = vld [vmem:[#allocation2 + $0x108] sm:$0xff]
        %v386 = vld [vmem:[#allocation2 + $0x110] sm:$0xff]
        %v387 = vld [vmem:[#allocation2 + $0x120] sm:$0xff]
        %v388 = vld [vmem:[#allocation2 + $0x128] sm:$0xff]
        %v389 = vld [vmem:[#allocation2 + $0x138] sm:$0xff]
        %v390 = vld [vmem:[#allocation2 + $0x140] sm:$0xff]
        %v391 = vld [vmem:[#allocation2 + $0x150] sm:$0xff]
        %v392 = vld [vmem:[#allocation2 + $0x158] sm:$0xff]
        %v393 = vld [vmem:[#allocation2 + $0x168] sm:$0xff]
        %v394 = vld [vmem:[#allocation2 + $0x170] sm:$0xff]
        %395 = vst [vmem:[#allocation3] sm:$0xff] %v363
        %396 = vst [vmem:[#allocation3 + $0x48] sm:$0xff] %v364
        %397 = vst [vmem:[#allocation3 + $0x90] sm:$0xff] %v365
        %398 = vst [vmem:[#allocation3 + $0xd8] sm:$0xff] %v366
        %399 = vst [vmem:[#allocation3 + $0x120] sm:$0xff] %v367
        %400 = vst [vmem:[#allocation3 + $0x168] sm:$0xff] %v368
        %401 = vst [vmem:[#allocation3 + $0x1b0] sm:$0xff] %v369
        %402 = vst [vmem:[#allocation3 + $0x1f8] sm:$0xff] %v370
        %403 = vst [vmem:[#allocation3 + $0x240] sm:$0xff] %v371
        %404 = vst [vmem:[#allocation3 + $0x288] sm:$0xff] %v372
        %405 = vst [vmem:[#allocation3 + $0x2d0] sm:$0xff] %v373
        %406 = vst [vmem:[#allocation3 + $0x318] sm:$0xff] %v374
        %407 = vst [vmem:[#allocation3 + $0x360] sm:$0xff] %v375
        %408 = vst [vmem:[#allocation3 + $0x3a8] sm:$0xff] %v376
        %409 = vst [vmem:[#allocation3 + $0x3f0] sm:$0xff] %v377
        %410 = vst [vmem:[#allocation3 + $0x438] sm:$0xff] %v378
        %411 = vst [vmem:[#allocation3 + $0x480] sm:$0xff] %v379
        %412 = vst [vmem:[#allocation3 + $0x4c8] sm:$0xff] %v380
        %413 = vst [vmem:[#allocation3 + $0x510] sm:$0xff] %v381
        %414 = vst [vmem:[#allocation3 + $0x558] sm:$0xff] %v382
        %415 = vst [vmem:[#allocation3 + $0x5a0] sm:$0xff] %v383
        %416 = vst [vmem:[#allocation3 + $0x5e8] sm:$0xff] %v384
        %417 = vst [vmem:[#allocation3 + $0x630] sm:$0xff] %v385
        %418 = vst [vmem:[#allocation3 + $0x678] sm:$0xff] %v386
        %419 = vst [vmem:[#allocation3 + $0x6c0] sm:$0xff] %v387
        %420 = vst [vmem:[#allocation3 + $0x708] sm:$0xff] %v388
        %421 = vst [vmem:[#allocation3 + $0x750] sm:$0xff] %v389
        %422 = vst [vmem:[#allocation3 + $0x798] sm:$0xff] %v390
        %423 = vst [vmem:[#allocation3 + $0x7e0] sm:$0xff] %v391
        %424 = vst [vmem:[#allocation3 + $0x828] sm:$0xff] %v392
        %425 = vst [vmem:[#allocation3 + $0x870] sm:$0xff] %v393
        %426 = vst [vmem:[#allocation3 + $0x8b8] sm:$0xff] %v394
        %v427 = vld [vmem:[#allocation2 + $0x1] sm:$0xff]
        %v428 = vld [vmem:[#allocation2 + $0x9] sm:$0xff]
        %v429 = vld [vmem:[#allocation2 + $0x19] sm:$0xff]
        %v430 = vld [vmem:[#allocation2 + $0x21] sm:$0xff]
        %v431 = vld [vmem:[#allocation2 + $0x31] sm:$0xff]
        %v432 = vld [vmem:[#allocation2 + $0x39] sm:$0xff]
        %v433 = vld [vmem:[#allocation2 + $0x49] sm:$0xff]
        %v434 = vld [vmem:[#allocation2 + $0x51] sm:$0xff]
        %v435 = vld [vmem:[#allocation2 + $0x61] sm:$0xff]
        %v436 = vld [vmem:[#allocation2 + $0x69] sm:$0xff]
        %v437 = vld [vmem:[#allocation2 + $0x79] sm:$0xff]
        %v438 = vld [vmem:[#allocation2 + $0x81] sm:$0xff]
        %v439 = vld [vmem:[#allocation2 + $0x91] sm:$0xff]
        %v440 = vld [vmem:[#allocation2 + $0x99] sm:$0xff]
        %v441 = vld [vmem:[#allocation2 + $0xa9] sm:$0xff]
        %v442 = vld [vmem:[#allocation2 + $0xb1] sm:$0xff]
        %v443 = vld [vmem:[#allocation2 + $0xc1] sm:$0xff]
        %v444 = vld [vmem:[#allocation2 + $0xc9] sm:$0xff]
        %v445 = vld [vmem:[#allocation2 + $0xd9] sm:$0xff]
        %v446 = vld [vmem:[#allocation2 + $0xe1] sm:$0xff]
        %v447 = vld [vmem:[#allocation2 + $0xf1] sm:$0xff]
        %v448 = vld [vmem:[#allocation2 + $0xf9] sm:$0xff]
        %v449 = vld [vmem:[#allocation2 + $0x109] sm:$0xff]
        %v450 = vld [vmem:[#allocation2 + $0x111] sm:$0xff]
        %v451 = vld [vmem:[#allocation2 + $0x121] sm:$0xff]
        %v452 = vld [vmem:[#allocation2 + $0x129] sm:$0xff]
        %v453 = vld [vmem:[#allocation2 + $0x139] sm:$0xff]
        %v454 = vld [vmem:[#allocation2 + $0x141] sm:$0xff]
        %v455 = vld [vmem:[#allocation2 + $0x151] sm:$0xff]
        %v456 = vld [vmem:[#allocation2 + $0x159] sm:$0xff]
        %v457 = vld [vmem:[#allocation2 + $0x169] sm:$0xff]
        %v458 = vld [vmem:[#allocation2 + $0x171] sm:$0xff]
        %459 = vst [vmem:[#allocation3 + $0x8] sm:$0xff] %v427
        %460 = vst [vmem:[#allocation3 + $0x50] sm:$0xff] %v428
        %461 = vst [vmem:[#allocation3 + $0x98] sm:$0xff] %v429
        %462 = vst [vmem:[#allocation3 + $0xe0] sm:$0xff] %v430
        %463 = vst [vmem:[#allocation3 + $0x128] sm:$0xff] %v431
        %464 = vst [vmem:[#allocation3 + $0x170] sm:$0xff] %v432
        %465 = vst [vmem:[#allocation3 + $0x1b8] sm:$0xff] %v433
        %466 = vst [vmem:[#allocation3 + $0x200] sm:$0xff] %v434
        %467 = vst [vmem:[#allocation3 + $0x248] sm:$0xff] %v435
        %468 = vst [vmem:[#allocation3 + $0x290] sm:$0xff] %v436
        %469 = vst [vmem:[#allocation3 + $0x2d8] sm:$0xff] %v437
        %470 = vst [vmem:[#allocation3 + $0x320] sm:$0xff] %v438
        %471 = vst [vmem:[#allocation3 + $0x368] sm:$0xff] %v439
        %472 = vst [vmem:[#allocation3 + $0x3b0] sm:$0xff] %v440
        %473 = vst [vmem:[#allocation3 + $0x3f8] sm:$0xff] %v441
        %474 = vst [vmem:[#allocation3 + $0x440] sm:$0xff] %v442
        %475 = vst [vmem:[#allocation3 + $0x488] sm:$0xff] %v443
        %476 = vst [vmem:[#allocation3 + $0x4d0] sm:$0xff] %v444
        %477 = vst [vmem:[#allocation3 + $0x518] sm:$0xff] %v445
        %478 = vst [vmem:[#allocation3 + $0x560] sm:$0xff] %v446
        %479 = vst [vmem:[#allocation3 + $0x5a8] sm:$0xff] %v447
        %480 = vst [vmem:[#allocation3 + $0x5f0] sm:$0xff] %v448
        %481 = vst [vmem:[#allocation3 + $0x638] sm:$0xff] %v449
        %482 = vst [vmem:[#allocation3 + $0x680] sm:$0xff] %v450
        %483 = vst [vmem:[#allocation3 + $0x6c8] sm:$0xff] %v451
        %484 = vst [vmem:[#allocation3 + $0x710] sm:$0xff] %v452
        %485 = vst [vmem:[#allocation3 + $0x758] sm:$0xff] %v453
        %486 = vst [vmem:[#allocation3 + $0x7a0] sm:$0xff] %v454
        %487 = vst [vmem:[#allocation3 + $0x7e8] sm:$0xff] %v455
        %488 = vst [vmem:[#allocation3 + $0x830] sm:$0xff] %v456
        %489 = vst [vmem:[#allocation3 + $0x878] sm:$0xff] %v457
        %490 = vst [vmem:[#allocation3 + $0x8c0] sm:$0xff] %v458
        %v491 = vld [vmem:[#allocation2 + $0x2] sm:$0xff]
        %v492 = vld [vmem:[#allocation2 + $0xa] sm:$0xff]
        %v493 = vld [vmem:[#allocation2 + $0x1a] sm:$0xff]
        %v494 = vld [vmem:[#allocation2 + $0x22] sm:$0xff]
        %v495 = vld [vmem:[#allocation2 + $0x32] sm:$0xff]
        %v496 = vld [vmem:[#allocation2 + $0x3a] sm:$0xff]
        %v497 = vld [vmem:[#allocation2 + $0x4a] sm:$0xff]
        %v498 = vld [vmem:[#allocation2 + $0x52] sm:$0xff]
        %v499 = vld [vmem:[#allocation2 + $0x62] sm:$0xff]
        %v500 = vld [vmem:[#allocation2 + $0x6a] sm:$0xff]
        %v501 = vld [vmem:[#allocation2 + $0x7a] sm:$0xff]
        %v502 = vld [vmem:[#allocation2 + $0x82] sm:$0xff]
        %v503 = vld [vmem:[#allocation2 + $0x92] sm:$0xff]
        %v504 = vld [vmem:[#allocation2 + $0x9a] sm:$0xff]
        %v505 = vld [vmem:[#allocation2 + $0xaa] sm:$0xff]
        %v506 = vld [vmem:[#allocation2 + $0xb2] sm:$0xff]
        %v507 = vld [vmem:[#allocation2 + $0xc2] sm:$0xff]
        %v508 = vld [vmem:[#allocation2 + $0xca] sm:$0xff]
        %v509 = vld [vmem:[#allocation2 + $0xda] sm:$0xff]
        %v510 = vld [vmem:[#allocation2 + $0xe2] sm:$0xff]
        %v511 = vld [vmem:[#allocation2 + $0xf2] sm:$0xff]
        %v512 = vld [vmem:[#allocation2 + $0xfa] sm:$0xff]
        %v513 = vld [vmem:[#allocation2 + $0x10a] sm:$0xff]
        %v514 = vld [vmem:[#allocation2 + $0x112] sm:$0xff]
        %v515 = vld [vmem:[#allocation2 + $0x122] sm:$0xff]
        %v516 = vld [vmem:[#allocation2 + $0x12a] sm:$0xff]
        %v517 = vld [vmem:[#allocation2 + $0x13a] sm:$0xff]
        %v518 = vld [vmem:[#allocation2 + $0x142] sm:$0xff]
        %v519 = vld [vmem:[#allocation2 + $0x152] sm:$0xff]
        %v520 = vld [vmem:[#allocation2 + $0x15a] sm:$0xff]
        %v521 = vld [vmem:[#allocation2 + $0x16a] sm:$0xff]
        %v522 = vld [vmem:[#allocation2 + $0x172] sm:$0xff]
        %523 = vst [vmem:[#allocation3 + $0x10] sm:$0xff] %v491
        %524 = vst [vmem:[#allocation3 + $0x58] sm:$0xff] %v492
        %525 = vst [vmem:[#allocation3 + $0xa0] sm:$0xff] %v493
        %526 = vst [vmem:[#allocation3 + $0xe8] sm:$0xff] %v494
        %527 = vst [vmem:[#allocation3 + $0x130] sm:$0xff] %v495
        %528 = vst [vmem:[#allocation3 + $0x178] sm:$0xff] %v496
        %529 = vst [vmem:[#allocation3 + $0x1c0] sm:$0xff] %v497
        %530 = vst [vmem:[#allocation3 + $0x208] sm:$0xff] %v498
        %531 = vst [vmem:[#allocation3 + $0x250] sm:$0xff] %v499
        %532 = vst [vmem:[#allocation3 + $0x298] sm:$0xff] %v500
        %533 = vst [vmem:[#allocation3 + $0x2e0] sm:$0xff] %v501
        %534 = vst [vmem:[#allocation3 + $0x328] sm:$0xff] %v502
        %535 = vst [vmem:[#allocation3 + $0x370] sm:$0xff] %v503
        %536 = vst [vmem:[#allocation3 + $0x3b8] sm:$0xff] %v504
        %537 = vst [vmem:[#allocation3 + $0x400] sm:$0xff] %v505
        %538 = vst [vmem:[#allocation3 + $0x448] sm:$0xff] %v506
        %539 = vst [vmem:[#allocation3 + $0x490] sm:$0xff] %v507
        %540 = vst [vmem:[#allocation3 + $0x4d8] sm:$0xff] %v508
        %541 = vst [vmem:[#allocation3 + $0x520] sm:$0xff] %v509
        %542 = vst [vmem:[#allocation3 + $0x568] sm:$0xff] %v510
        %543 = vst [vmem:[#allocation3 + $0x5b0] sm:$0xff] %v511
        %544 = vst [vmem:[#allocation3 + $0x5f8] sm:$0xff] %v512
        %545 = vst [vmem:[#allocation3 + $0x640] sm:$0xff] %v513
        %546 = vst [vmem:[#allocation3 + $0x688] sm:$0xff] %v514
        %547 = vst [vmem:[#allocation3 + $0x6d0] sm:$0xff] %v515
        %548 = vst [vmem:[#allocation3 + $0x718] sm:$0xff] %v516
        %549 = vst [vmem:[#allocation3 + $0x760] sm:$0xff] %v517
        %550 = vst [vmem:[#allocation3 + $0x7a8] sm:$0xff] %v518
        %551 = vst [vmem:[#allocation3 + $0x7f0] sm:$0xff] %v519
        %552 = vst [vmem:[#allocation3 + $0x838] sm:$0xff] %v520
        %553 = vst [vmem:[#allocation3 + $0x880] sm:$0xff] %v521
        %554 = vst [vmem:[#allocation3 + $0x8c8] sm:$0xff] %v522
        %v555 = vld [vmem:[%s265] sm:$0xff]
        %v556 = vld [vmem:[%s265 + $0x8] sm:$0xff]
        %v557 = vld [vmem:[%s265 + $0x18] sm:$0xff]
        %v558 = vld [vmem:[%s265 + $0x20] sm:$0xff]
        %v559 = vld [vmem:[%s265 + $0x30] sm:$0xff]
        %v560 = vld [vmem:[%s265 + $0x38] sm:$0xff]
        %v561 = vld [vmem:[%s265 + $0x48] sm:$0xff]
        %v562 = vld [vmem:[%s265 + $0x50] sm:$0xff]
        %v563 = vld [vmem:[%s265 + $0x60] sm:$0xff]
        %v564 = vld [vmem:[%s265 + $0x68] sm:$0xff]
        %v565 = vld [vmem:[%s265 + $0x78] sm:$0xff]
        %v566 = vld [vmem:[%s265 + $0x80] sm:$0xff]
        %v567 = vld [vmem:[%s265 + $0x90] sm:$0xff]
        %v568 = vld [vmem:[%s265 + $0x98] sm:$0xff]
        %v569 = vld [vmem:[%s265 + $0xa8] sm:$0xff]
        %v570 = vld [vmem:[%s265 + $0xb0] sm:$0xff]
        %v571 = vld [vmem:[%s265 + $0xc0] sm:$0xff]
        %v572 = vld [vmem:[%s265 + $0xc8] sm:$0xff]
        %v573 = vld [vmem:[%s265 + $0xd8] sm:$0xff]
        %v574 = vld [vmem:[%s265 + $0xe0] sm:$0xff]
        %v575 = vld [vmem:[%s265 + $0xf0] sm:$0xff]
        %v576 = vld [vmem:[%s265 + $0xf8] sm:$0xff]
        %v577 = vld [vmem:[%s265 + $0x108] sm:$0xff]
        %v578 = vld [vmem:[%s265 + $0x110] sm:$0xff]
        %v579 = vld [vmem:[%s265 + $0x120] sm:$0xff]
        %v580 = vld [vmem:[%s265 + $0x128] sm:$0xff]
        %v581 = vld [vmem:[%s265 + $0x138] sm:$0xff]
        %v582 = vld [vmem:[%s265 + $0x140] sm:$0xff]
        %v583 = vld [vmem:[%s265 + $0x150] sm:$0xff]
        %v584 = vld [vmem:[%s265 + $0x158] sm:$0xff]
        %v585 = vld [vmem:[%s265 + $0x168] sm:$0xff]
        %v586 = vld [vmem:[%s265 + $0x170] sm:$0xff]
        %587 = vst [vmem:[#allocation3 + $0x18] sm:$0xff] %v555
        %588 = vst [vmem:[#allocation3 + $0x60] sm:$0xff] %v556
        %589 = vst [vmem:[#allocation3 + $0xa8] sm:$0xff] %v557
        %590 = vst [vmem:[#allocation3 + $0xf0] sm:$0xff] %v558
        %591 = vst [vmem:[#allocation3 + $0x138] sm:$0xff] %v559
        %592 = vst [vmem:[#allocation3 + $0x180] sm:$0xff] %v560
        %593 = vst [vmem:[#allocation3 + $0x1c8] sm:$0xff] %v561
        %594 = vst [vmem:[#allocation3 + $0x210] sm:$0xff] %v562
        %595 = vst [vmem:[#allocation3 + $0x258] sm:$0xff] %v563
        %596 = vst [vmem:[#allocation3 + $0x2a0] sm:$0xff] %v564
        %597 = vst [vmem:[#allocation3 + $0x2e8] sm:$0xff] %v565
        %598 = vst [vmem:[#allocation3 + $0x330] sm:$0xff] %v566
        %599 = vst [vmem:[#allocation3 + $0x378] sm:$0xff] %v567
        %600 = vst [vmem:[#allocation3 + $0x3c0] sm:$0xff] %v568
        %601 = vst [vmem:[#allocation3 + $0x408] sm:$0xff] %v569
        %602 = vst [vmem:[#allocation3 + $0x450] sm:$0xff] %v570
        %603 = vst [vmem:[#allocation3 + $0x498] sm:$0xff] %v571
        %604 = vst [vmem:[#allocation3 + $0x4e0] sm:$0xff] %v572
        %605 = vst [vmem:[#allocation3 + $0x528] sm:$0xff] %v573
        %606 = vst [vmem:[#allocation3 + $0x570] sm:$0xff] %v574
        %607 = vst [vmem:[#allocation3 + $0x5b8] sm:$0xff] %v575
        %608 = vst [vmem:[#allocation3 + $0x600] sm:$0xff] %v576
        %609 = vst [vmem:[#allocation3 + $0x648] sm:$0xff] %v577
        %610 = vst [vmem:[#allocation3 + $0x690] sm:$0xff] %v578
        %611 = vst [vmem:[#allocation3 + $0x6d8] sm:$0xff] %v579
        %612 = vst [vmem:[#allocation3 + $0x720] sm:$0xff] %v580
        %613 = vst [vmem:[#allocation3 + $0x768] sm:$0xff] %v581
        %614 = vst [vmem:[#allocation3 + $0x7b0] sm:$0xff] %v582
        %615 = vst [vmem:[#allocation3 + $0x7f8] sm:$0xff] %v583
        %616 = vst [vmem:[#allocation3 + $0x840] sm:$0xff] %v584
        %617 = vst [vmem:[#allocation3 + $0x888] sm:$0xff] %v585
        %618 = vst [vmem:[#allocation3 + $0x8d0] sm:$0xff] %v586
        %v619 = vld [vmem:[%s265 + $0x1] sm:$0xff]
        %v620 = vld [vmem:[%s265 + $0x9] sm:$0xff]
        %v621 = vld [vmem:[%s265 + $0x19] sm:$0xff]
        %v622 = vld [vmem:[%s265 + $0x21] sm:$0xff]
        %v623 = vld [vmem:[%s265 + $0x31] sm:$0xff]
        %v624 = vld [vmem:[%s265 + $0x39] sm:$0xff]
        %v625 = vld [vmem:[%s265 + $0x49] sm:$0xff]
        %v626 = vld [vmem:[%s265 + $0x51] sm:$0xff]
        %v627 = vld [vmem:[%s265 + $0x61] sm:$0xff]
        %v628 = vld [vmem:[%s265 + $0x69] sm:$0xff]
        %v629 = vld [vmem:[%s265 + $0x79] sm:$0xff]
        %v630 = vld [vmem:[%s265 + $0x81] sm:$0xff]
        %v631 = vld [vmem:[%s265 + $0x91] sm:$0xff]
        %v632 = vld [vmem:[%s265 + $0x99] sm:$0xff]
        %v633 = vld [vmem:[%s265 + $0xa9] sm:$0xff]
        %v634 = vld [vmem:[%s265 + $0xb1] sm:$0xff]
        %v635 = vld [vmem:[%s265 + $0xc1] sm:$0xff]
        %v636 = vld [vmem:[%s265 + $0xc9] sm:$0xff]
        %v637 = vld [vmem:[%s265 + $0xd9] sm:$0xff]
        %v638 = vld [vmem:[%s265 + $0xe1] sm:$0xff]
        %v639 = vld [vmem:[%s265 + $0xf1] sm:$0xff]
        %v640 = vld [vmem:[%s265 + $0xf9] sm:$0xff]
        %v641 = vld [vmem:[%s265 + $0x109] sm:$0xff]
        %v642 = vld [vmem:[%s265 + $0x111] sm:$0xff]
        %v643 = vld [vmem:[%s265 + $0x121] sm:$0xff]
        %v644 = vld [vmem:[%s265 + $0x129] sm:$0xff]
        %v645 = vld [vmem:[%s265 + $0x139] sm:$0xff]
        %v646 = vld [vmem:[%s265 + $0x141] sm:$0xff]
        %v647 = vld [vmem:[%s265 + $0x151] sm:$0xff]
        %v648 = vld [vmem:[%s265 + $0x159] sm:$0xff]
        %v649 = vld [vmem:[%s265 + $0x169] sm:$0xff]
        %v650 = vld [vmem:[%s265 + $0x171] sm:$0xff]
        %651 = vst [vmem:[#allocation3 + $0x20] sm:$0xff] %v619
        %652 = vst [vmem:[#allocation3 + $0x68] sm:$0xff] %v620
        %653 = vst [vmem:[#allocation3 + $0xb0] sm:$0xff] %v621
        %654 = vst [vmem:[#allocation3 + $0xf8] sm:$0xff] %v622
        %655 = vst [vmem:[#allocation3 + $0x140] sm:$0xff] %v623
        %656 = vst [vmem:[#allocation3 + $0x188] sm:$0xff] %v624
        %657 = vst [vmem:[#allocation3 + $0x1d0] sm:$0xff] %v625
        %658 = vst [vmem:[#allocation3 + $0x218] sm:$0xff] %v626
        %659 = vst [vmem:[#allocation3 + $0x260] sm:$0xff] %v627
        %660 = vst [vmem:[#allocation3 + $0x2a8] sm:$0xff] %v628
        %661 = vst [vmem:[#allocation3 + $0x2f0] sm:$0xff] %v629
        %662 = vst [vmem:[#allocation3 + $0x338] sm:$0xff] %v630
        %663 = vst [vmem:[#allocation3 + $0x380] sm:$0xff] %v631
        %664 = vst [vmem:[#allocation3 + $0x3c8] sm:$0xff] %v632
        %665 = vst [vmem:[#allocation3 + $0x410] sm:$0xff] %v633
        %666 = vst [vmem:[#allocation3 + $0x458] sm:$0xff] %v634
        %667 = vst [vmem:[#allocation3 + $0x4a0] sm:$0xff] %v635
        %668 = vst [vmem:[#allocation3 + $0x4e8] sm:$0xff] %v636
        %669 = vst [vmem:[#allocation3 + $0x530] sm:$0xff] %v637
        %670 = vst [vmem:[#allocation3 + $0x578] sm:$0xff] %v638
        %671 = vst [vmem:[#allocation3 + $0x5c0] sm:$0xff] %v639
        %672 = vst [vmem:[#allocation3 + $0x608] sm:$0xff] %v640
        %673 = vst [vmem:[#allocation3 + $0x650] sm:$0xff] %v641
        %674 = vst [vmem:[#allocation3 + $0x698] sm:$0xff] %v642
        %675 = vst [vmem:[#allocation3 + $0x6e0] sm:$0xff] %v643
        %676 = vst [vmem:[#allocation3 + $0x728] sm:$0xff] %v644
        %677 = vst [vmem:[#allocation3 + $0x770] sm:$0xff] %v645
        %678 = vst [vmem:[#allocation3 + $0x7b8] sm:$0xff] %v646
        %679 = vst [vmem:[#allocation3 + $0x800] sm:$0xff] %v647
        %680 = vst [vmem:[#allocation3 + $0x848] sm:$0xff] %v648
        %681 = vst [vmem:[#allocation3 + $0x890] sm:$0xff] %v649
        %682 = vst [vmem:[#allocation3 + $0x8d8] sm:$0xff] %v650
        %v683 = vld [vmem:[%s265 + $0x2] sm:$0xff]
        %v684 = vld [vmem:[%s265 + $0xa] sm:$0xff]
        %v685 = vld [vmem:[%s265 + $0x1a] sm:$0xff]
        %v686 = vld [vmem:[%s265 + $0x22] sm:$0xff]
        %v687 = vld [vmem:[%s265 + $0x32] sm:$0xff]
        %v688 = vld [vmem:[%s265 + $0x3a] sm:$0xff]
        %v689 = vld [vmem:[%s265 + $0x4a] sm:$0xff]
        %v690 = vld [vmem:[%s265 + $0x52] sm:$0xff]
        %v691 = vld [vmem:[%s265 + $0x62] sm:$0xff]
        %v692 = vld [vmem:[%s265 + $0x6a] sm:$0xff]
        %v693 = vld [vmem:[%s265 + $0x7a] sm:$0xff]
        %v694 = vld [vmem:[%s265 + $0x82] sm:$0xff]
        %v695 = vld [vmem:[%s265 + $0x92] sm:$0xff]
        %v696 = vld [vmem:[%s265 + $0x9a] sm:$0xff]
        %v697 = vld [vmem:[%s265 + $0xaa] sm:$0xff]
        %v698 = vld [vmem:[%s265 + $0xb2] sm:$0xff]
        %v699 = vld [vmem:[%s265 + $0xc2] sm:$0xff]
        %v700 = vld [vmem:[%s265 + $0xca] sm:$0xff]
        %v701 = vld [vmem:[%s265 + $0xda] sm:$0xff]
        %v702 = vld [vmem:[%s265 + $0xe2] sm:$0xff]
        %v703 = vld [vmem:[%s265 + $0xf2] sm:$0xff]
        %v704 = vld [vmem:[%s265 + $0xfa] sm:$0xff]
        %v705 = vld [vmem:[%s265 + $0x10a] sm:$0xff]
        %v706 = vld [vmem:[%s265 + $0x112] sm:$0xff]
        %v707 = vld [vmem:[%s265 + $0x122] sm:$0xff]
        %v708 = vld [vmem:[%s265 + $0x12a] sm:$0xff]
        %v709 = vld [vmem:[%s265 + $0x13a] sm:$0xff]
        %v710 = vld [vmem:[%s265 + $0x142] sm:$0xff]
        %v711 = vld [vmem:[%s265 + $0x152] sm:$0xff]
        %v712 = vld [vmem:[%s265 + $0x15a] sm:$0xff]
        %v713 = vld [vmem:[%s265 + $0x16a] sm:$0xff]
        %v714 = vld [vmem:[%s265 + $0x172] sm:$0xff]
        %715 = vst [vmem:[#allocation3 + $0x28] sm:$0xff] %v683
        %716 = vst [vmem:[#allocation3 + $0x70] sm:$0xff] %v684
        %717 = vst [vmem:[#allocation3 + $0xb8] sm:$0xff] %v685
        %718 = vst [vmem:[#allocation3 + $0x100] sm:$0xff] %v686
        %719 = vst [vmem:[#allocation3 + $0x148] sm:$0xff] %v687
        %720 = vst [vmem:[#allocation3 + $0x190] sm:$0xff] %v688
        %721 = vst [vmem:[#allocation3 + $0x1d8] sm:$0xff] %v689
        %722 = vst [vmem:[#allocation3 + $0x220] sm:$0xff] %v690
        %723 = vst [vmem:[#allocation3 + $0x268] sm:$0xff] %v691
        %724 = vst [vmem:[#allocation3 + $0x2b0] sm:$0xff] %v692
        %725 = vst [vmem:[#allocation3 + $0x2f8] sm:$0xff] %v693
        %726 = vst [vmem:[#allocation3 + $0x340] sm:$0xff] %v694
        %727 = vst [vmem:[#allocation3 + $0x388] sm:$0xff] %v695
        %728 = vst [vmem:[#allocation3 + $0x3d0] sm:$0xff] %v696
        %729 = vst [vmem:[#allocation3 + $0x418] sm:$0xff] %v697
        %730 = vst [vmem:[#allocation3 + $0x460] sm:$0xff] %v698
        %731 = vst [vmem:[#allocation3 + $0x4a8] sm:$0xff] %v699
        %732 = vst [vmem:[#allocation3 + $0x4f0] sm:$0xff] %v700
        %733 = vst [vmem:[#allocation3 + $0x538] sm:$0xff] %v701
        %734 = vst [vmem:[#allocation3 + $0x580] sm:$0xff] %v702
        %735 = vst [vmem:[#allocation3 + $0x5c8] sm:$0xff] %v703
        %736 = vst [vmem:[#allocation3 + $0x610] sm:$0xff] %v704
        %737 = vst [vmem:[#allocation3 + $0x658] sm:$0xff] %v705
        %738 = vst [vmem:[#allocation3 + $0x6a0] sm:$0xff] %v706
        %739 = vst [vmem:[#allocation3 + $0x6e8] sm:$0xff] %v707
        %740 = vst [vmem:[#allocation3 + $0x730] sm:$0xff] %v708
        %741 = vst [vmem:[#allocation3 + $0x778] sm:$0xff] %v709
        %742 = vst [vmem:[#allocation3 + $0x7c0] sm:$0xff] %v710
        %743 = vst [vmem:[#allocation3 + $0x808] sm:$0xff] %v711
        %744 = vst [vmem:[#allocation3 + $0x850] sm:$0xff] %v712
        %745 = vst [vmem:[#allocation3 + $0x898] sm:$0xff] %v713
        %746 = vst [vmem:[#allocation3 + $0x8e0] sm:$0xff] %v714
        %s747 = scalar_lea.vmem [#allocation2], 48
        %v748 = vld [vmem:[%s747] sm:$0xff]
        %v749 = vld [vmem:[%s747 + $0x8] sm:$0xff]
        %v750 = vld [vmem:[%s747 + $0x18] sm:$0xff]
        %v751 = vld [vmem:[%s747 + $0x20] sm:$0xff]
        %v752 = vld [vmem:[%s747 + $0x30] sm:$0xff]
        %v753 = vld [vmem:[%s747 + $0x38] sm:$0xff]
        %v754 = vld [vmem:[%s747 + $0x48] sm:$0xff]
        %v755 = vld [vmem:[%s747 + $0x50] sm:$0xff]
        %v756 = vld [vmem:[%s747 + $0x60] sm:$0xff]
        %v757 = vld [vmem:[%s747 + $0x68] sm:$0xff]
        %v758 = vld [vmem:[%s747 + $0x78] sm:$0xff]
        %v759 = vld [vmem:[%s747 + $0x80] sm:$0xff]
        %v760 = vld [vmem:[%s747 + $0x90] sm:$0xff]
        %v761 = vld [vmem:[%s747 + $0x98] sm:$0xff]
        %v762 = vld [vmem:[%s747 + $0xa8] sm:$0xff]
        %v763 = vld [vmem:[%s747 + $0xb0] sm:$0xff]
        %v764 = vld [vmem:[%s747 + $0xc0] sm:$0xff]
        %v765 = vld [vmem:[%s747 + $0xc8] sm:$0xff]
        %v766 = vld [vmem:[%s747 + $0xd8] sm:$0xff]
        %v767 = vld [vmem:[%s747 + $0xe0] sm:$0xff]
        %v768 = vld [vmem:[%s747 + $0xf0] sm:$0xff]
        %v769 = vld [vmem:[%s747 + $0xf8] sm:$0xff]
        %v770 = vld [vmem:[%s747 + $0x108] sm:$0xff]
        %v771 = vld [vmem:[%s747 + $0x110] sm:$0xff]
        %v772 = vld [vmem:[%s747 + $0x120] sm:$0xff]
        %v773 = vld [vmem:[%s747 + $0x128] sm:$0xff]
        %v774 = vld [vmem:[%s747 + $0x138] sm:$0xff]
        %v775 = vld [vmem:[%s747 + $0x140] sm:$0xff]
        %v776 = vld [vmem:[%s747 + $0x150] sm:$0xff]
        %v777 = vld [vmem:[%s747 + $0x158] sm:$0xff]
        %v778 = vld [vmem:[%s747 + $0x168] sm:$0xff]
        %v779 = vld [vmem:[%s747 + $0x170] sm:$0xff]
        %780 = vst [vmem:[#allocation3 + $0x30] sm:$0xff] %v748
        %781 = vst [vmem:[#allocation3 + $0x78] sm:$0xff] %v749
        %782 = vst [vmem:[#allocation3 + $0xc0] sm:$0xff] %v750
        %783 = vst [vmem:[#allocation3 + $0x108] sm:$0xff] %v751
        %784 = vst [vmem:[#allocation3 + $0x150] sm:$0xff] %v752
        %785 = vst [vmem:[#allocation3 + $0x198] sm:$0xff] %v753
        %786 = vst [vmem:[#allocation3 + $0x1e0] sm:$0xff] %v754
        %787 = vst [vmem:[#allocation3 + $0x228] sm:$0xff] %v755
        %788 = vst [vmem:[#allocation3 + $0x270] sm:$0xff] %v756
        %789 = vst [vmem:[#allocation3 + $0x2b8] sm:$0xff] %v757
        %790 = vst [vmem:[#allocation3 + $0x300] sm:$0xff] %v758
        %791 = vst [vmem:[#allocation3 + $0x348] sm:$0xff] %v759
        %792 = vst [vmem:[#allocation3 + $0x390] sm:$0xff] %v760
        %793 = vst [vmem:[#allocation3 + $0x3d8] sm:$0xff] %v761
        %794 = vst [vmem:[#allocation3 + $0x420] sm:$0xff] %v762
        %795 = vst [vmem:[#allocation3 + $0x468] sm:$0xff] %v763
        %796 = vst [vmem:[#allocation3 + $0x4b0] sm:$0xff] %v764
        %797 = vst [vmem:[#allocation3 + $0x4f8] sm:$0xff] %v765
        %798 = vst [vmem:[#allocation3 + $0x540] sm:$0xff] %v766
        %799 = vst [vmem:[#allocation3 + $0x588] sm:$0xff] %v767
        %800 = vst [vmem:[#allocation3 + $0x5d0] sm:$0xff] %v768
        %801 = vst [vmem:[#allocation3 + $0x618] sm:$0xff] %v769
        %802 = vst [vmem:[#allocation3 + $0x660] sm:$0xff] %v770
        %803 = vst [vmem:[#allocation3 + $0x6a8] sm:$0xff] %v771
        %804 = vst [vmem:[#allocation3 + $0x6f0] sm:$0xff] %v772
        %805 = vst [vmem:[#allocation3 + $0x738] sm:$0xff] %v773
        %806 = vst [vmem:[#allocation3 + $0x780] sm:$0xff] %v774
        %807 = vst [vmem:[#allocation3 + $0x7c8] sm:$0xff] %v775
        %808 = vst [vmem:[#allocation3 + $0x810] sm:$0xff] %v776
        %809 = vst [vmem:[#allocation3 + $0x858] sm:$0xff] %v777
        %810 = vst [vmem:[#allocation3 + $0x8a0] sm:$0xff] %v778
        %811 = vst [vmem:[#allocation3 + $0x8e8] sm:$0xff] %v779
        %v812 = vld [vmem:[%s747 + $0x1] sm:$0xff]
        %v813 = vld [vmem:[%s747 + $0x9] sm:$0xff]
        %v814 = vld [vmem:[%s747 + $0x19] sm:$0xff]
        %v815 = vld [vmem:[%s747 + $0x21] sm:$0xff]
        %v816 = vld [vmem:[%s747 + $0x31] sm:$0xff]
        %v817 = vld [vmem:[%s747 + $0x39] sm:$0xff]
        %v818 = vld [vmem:[%s747 + $0x49] sm:$0xff]
        %v819 = vld [vmem:[%s747 + $0x51] sm:$0xff]
        %v820 = vld [vmem:[%s747 + $0x61] sm:$0xff]
        %v821 = vld [vmem:[%s747 + $0x69] sm:$0xff]
        %v822 = vld [vmem:[%s747 + $0x79] sm:$0xff]
        %v823 = vld [vmem:[%s747 + $0x81] sm:$0xff]
        %v824 = vld [vmem:[%s747 + $0x91] sm:$0xff]
        %v825 = vld [vmem:[%s747 + $0x99] sm:$0xff]
        %v826 = vld [vmem:[%s747 + $0xa9] sm:$0xff]
        %v827 = vld [vmem:[%s747 + $0xb1] sm:$0xff]
        %v828 = vld [vmem:[%s747 + $0xc1] sm:$0xff]
        %v829 = vld [vmem:[%s747 + $0xc9] sm:$0xff]
        %v830 = vld [vmem:[%s747 + $0xd9] sm:$0xff]
        %v831 = vld [vmem:[%s747 + $0xe1] sm:$0xff]
        %v832 = vld [vmem:[%s747 + $0xf1] sm:$0xff]
        %v833 = vld [vmem:[%s747 + $0xf9] sm:$0xff]
        %v834 = vld [vmem:[%s747 + $0x109] sm:$0xff]
        %v835 = vld [vmem:[%s747 + $0x111] sm:$0xff]
        %v836 = vld [vmem:[%s747 + $0x121] sm:$0xff]
        %v837 = vld [vmem:[%s747 + $0x129] sm:$0xff]
        %v838 = vld [vmem:[%s747 + $0x139] sm:$0xff]
        %v839 = vld [vmem:[%s747 + $0x141] sm:$0xff]
        %v840 = vld [vmem:[%s747 + $0x151] sm:$0xff]
        %v841 = vld [vmem:[%s747 + $0x159] sm:$0xff]
        %v842 = vld [vmem:[%s747 + $0x169] sm:$0xff]
        %v843 = vld [vmem:[%s747 + $0x171] sm:$0xff]
        %844 = vst [vmem:[#allocation3 + $0x38] sm:$0xff] %v812
        %845 = vst [vmem:[#allocation3 + $0x80] sm:$0xff] %v813
        %846 = vst [vmem:[#allocation3 + $0xc8] sm:$0xff] %v814
        %847 = vst [vmem:[#allocation3 + $0x110] sm:$0xff] %v815
        %848 = vst [vmem:[#allocation3 + $0x158] sm:$0xff] %v816
        %849 = vst [vmem:[#allocation3 + $0x1a0] sm:$0xff] %v817
        %850 = vst [vmem:[#allocation3 + $0x1e8] sm:$0xff] %v818
        %851 = vst [vmem:[#allocation3 + $0x230] sm:$0xff] %v819
        %852 = vst [vmem:[#allocation3 + $0x278] sm:$0xff] %v820
        %853 = vst [vmem:[#allocation3 + $0x2c0] sm:$0xff] %v821
        %854 = vst [vmem:[#allocation3 + $0x308] sm:$0xff] %v822
        %855 = vst [vmem:[#allocation3 + $0x350] sm:$0xff] %v823
        %856 = vst [vmem:[#allocation3 + $0x398] sm:$0xff] %v824
        %857 = vst [vmem:[#allocation3 + $0x3e0] sm:$0xff] %v825
        %858 = vst [vmem:[#allocation3 + $0x428] sm:$0xff] %v826
        %859 = vst [vmem:[#allocation3 + $0x470] sm:$0xff] %v827
        %860 = vst [vmem:[#allocation3 + $0x4b8] sm:$0xff] %v828
        %861 = vst [vmem:[#allocation3 + $0x500] sm:$0xff] %v829
        %862 = vst [vmem:[#allocation3 + $0x548] sm:$0xff] %v830
        %863 = vst [vmem:[#allocation3 + $0x590] sm:$0xff] %v831
        %864 = vst [vmem:[#allocation3 + $0x5d8] sm:$0xff] %v832
        %865 = vst [vmem:[#allocation3 + $0x620] sm:$0xff] %v833
        %866 = vst [vmem:[#allocation3 + $0x668] sm:$0xff] %v834
        %867 = vst [vmem:[#allocation3 + $0x6b0] sm:$0xff] %v835
        %868 = vst [vmem:[#allocation3 + $0x6f8] sm:$0xff] %v836
        %869 = vst [vmem:[#allocation3 + $0x740] sm:$0xff] %v837
        %870 = vst [vmem:[#allocation3 + $0x788] sm:$0xff] %v838
        %871 = vst [vmem:[#allocation3 + $0x7d0] sm:$0xff] %v839
        %872 = vst [vmem:[#allocation3 + $0x818] sm:$0xff] %v840
        %873 = vst [vmem:[#allocation3 + $0x860] sm:$0xff] %v841
        %874 = vst [vmem:[#allocation3 + $0x8a8] sm:$0xff] %v842
        %875 = vst [vmem:[#allocation3 + $0x8f0] sm:$0xff] %v843
        %v876 = vld [vmem:[%s747 + $0x2] sm:$0xff]
        %v877 = vld [vmem:[%s747 + $0xa] sm:$0xff]
        %v878 = vld [vmem:[%s747 + $0x1a] sm:$0xff]
        %v879 = vld [vmem:[%s747 + $0x22] sm:$0xff]
        %v880 = vld [vmem:[%s747 + $0x32] sm:$0xff]
        %v881 = vld [vmem:[%s747 + $0x3a] sm:$0xff]
        %v882 = vld [vmem:[%s747 + $0x4a] sm:$0xff]
        %v883 = vld [vmem:[%s747 + $0x52] sm:$0xff]
        %v884 = vld [vmem:[%s747 + $0x62] sm:$0xff]
        %v885 = vld [vmem:[%s747 + $0x6a] sm:$0xff]
        %v886 = vld [vmem:[%s747 + $0x7a] sm:$0xff]
        %v887 = vld [vmem:[%s747 + $0x82] sm:$0xff]
        %v888 = vld [vmem:[%s747 + $0x92] sm:$0xff]
        %v889 = vld [vmem:[%s747 + $0x9a] sm:$0xff]
        %v890 = vld [vmem:[%s747 + $0xaa] sm:$0xff]
        %v891 = vld [vmem:[%s747 + $0xb2] sm:$0xff]
        %v892 = vld [vmem:[%s747 + $0xc2] sm:$0xff]
        %v893 = vld [vmem:[%s747 + $0xca] sm:$0xff]
        %v894 = vld [vmem:[%s747 + $0xda] sm:$0xff]
        %v895 = vld [vmem:[%s747 + $0xe2] sm:$0xff]
        %v896 = vld [vmem:[%s747 + $0xf2] sm:$0xff]
        %v897 = vld [vmem:[%s747 + $0xfa] sm:$0xff]
        %v898 = vld [vmem:[%s747 + $0x10a] sm:$0xff]
        %v899 = vld [vmem:[%s747 + $0x112] sm:$0xff]
        %v900 = vld [vmem:[%s747 + $0x122] sm:$0xff]
        %v901 = vld [vmem:[%s747 + $0x12a] sm:$0xff]
        %v902 = vld [vmem:[%s747 + $0x13a] sm:$0xff]
        %v903 = vld [vmem:[%s747 + $0x142] sm:$0xff]
        %v904 = vld [vmem:[%s747 + $0x152] sm:$0xff]
        %v905 = vld [vmem:[%s747 + $0x15a] sm:$0xff]
        %v906 = vld [vmem:[%s747 + $0x16a] sm:$0xff]
        %v907 = vld [vmem:[%s747 + $0x172] sm:$0xff]
        %908 = vst [vmem:[#allocation3 + $0x40] sm:$0xff] %v876
        %909 = vst [vmem:[#allocation3 + $0x88] sm:$0xff] %v877
        %910 = vst [vmem:[#allocation3 + $0xd0] sm:$0xff] %v878
        %911 = vst [vmem:[#allocation3 + $0x118] sm:$0xff] %v879
        %912 = vst [vmem:[#allocation3 + $0x160] sm:$0xff] %v880
        %913 = vst [vmem:[#allocation3 + $0x1a8] sm:$0xff] %v881
        %914 = vst [vmem:[#allocation3 + $0x1f0] sm:$0xff] %v882
        %915 = vst [vmem:[#allocation3 + $0x238] sm:$0xff] %v883
        %916 = vst [vmem:[#allocation3 + $0x280] sm:$0xff] %v884
        %917 = vst [vmem:[#allocation3 + $0x2c8] sm:$0xff] %v885
        %918 = vst [vmem:[#allocation3 + $0x310] sm:$0xff] %v886
        %919 = vst [vmem:[#allocation3 + $0x358] sm:$0xff] %v887
        %920 = vst [vmem:[#allocation3 + $0x3a0] sm:$0xff] %v888
        %921 = vst [vmem:[#allocation3 + $0x3e8] sm:$0xff] %v889
        %922 = vst [vmem:[#allocation3 + $0x430] sm:$0xff] %v890
        %923 = vst [vmem:[#allocation3 + $0x478] sm:$0xff] %v891
        %924 = vst [vmem:[#allocation3 + $0x4c0] sm:$0xff] %v892
        %925 = vst [vmem:[#allocation3 + $0x508] sm:$0xff] %v893
        %926 = vst [vmem:[#allocation3 + $0x550] sm:$0xff] %v894
        %927 = vst [vmem:[#allocation3 + $0x598] sm:$0xff] %v895
        %928 = vst [vmem:[#allocation3 + $0x5e0] sm:$0xff] %v896
        %929 = vst [vmem:[#allocation3 + $0x628] sm:$0xff] %v897
        %930 = vst [vmem:[#allocation3 + $0x670] sm:$0xff] %v898
        %931 = vst [vmem:[#allocation3 + $0x6b8] sm:$0xff] %v899
        %932 = vst [vmem:[#allocation3 + $0x700] sm:$0xff] %v900
        %933 = vst [vmem:[#allocation3 + $0x748] sm:$0xff] %v901
        %934 = vst [vmem:[#allocation3 + $0x790] sm:$0xff] %v902
        %935 = vst [vmem:[#allocation3 + $0x7d8] sm:$0xff] %v903
        %936 = vst [vmem:[#allocation3 + $0x820] sm:$0xff] %v904
        %937 = vst [vmem:[#allocation3 + $0x868] sm:$0xff] %v905
        %938 = vst [vmem:[#allocation3 + $0x8b0] sm:$0xff] %v906
        %939 = vst [vmem:[#allocation3 + $0x8f8] sm:$0xff] %v907
        %v940 = vld [vmem:[#allocation3] sm:$0xff]
        %v941 = vld [vmem:[#allocation3 + $0x8] sm:$0xff]
        %v942 = vld [vmem:[#allocation3 + $0x10] sm:$0xff]
        %v943 = vld [vmem:[#allocation3 + $0x18] sm:$0xff]
        %v944 = vld [vmem:[#allocation3 + $0x20] sm:$0xff]
        %v945 = vld [vmem:[#allocation3 + $0x28] sm:$0xff]
        %v946 = vld [vmem:[#allocation3 + $0x30] sm:$0xff]
        %v947 = vld [vmem:[#allocation3 + $0x38] sm:$0xff]
        %v948 = vld [vmem:[#allocation3 + $0x40] sm:$0xff]
        %v949 = vld [vmem:[#allocation3 + $0x48] sm:$0xff]
        %v950 = vld [vmem:[#allocation3 + $0x50] sm:$0xff]
        %v951 = vld [vmem:[#allocation3 + $0x58] sm:$0xff]
        %v952 = vld [vmem:[#allocation3 + $0x60] sm:$0xff]
        %v953 = vld [vmem:[#allocation3 + $0x68] sm:$0xff]
        %v954 = vld [vmem:[#allocation3 + $0x70] sm:$0xff]
        %v955 = vld [vmem:[#allocation3 + $0x78] sm:$0xff]
        %v956 = vld [vmem:[#allocation3 + $0x80] sm:$0xff]
        %v957 = vld [vmem:[#allocation3 + $0x88] sm:$0xff]
        %v958 = vld [vmem:[#allocation3 + $0x90] sm:$0xff]
        %v959 = vld [vmem:[#allocation3 + $0x98] sm:$0xff]
        %v960 = vld [vmem:[#allocation3 + $0xa0] sm:$0xff]
        %v961 = vld [vmem:[#allocation3 + $0xa8] sm:$0xff]
        %v962 = vld [vmem:[#allocation3 + $0xb0] sm:$0xff]
        %v963 = vld [vmem:[#allocation3 + $0xb8] sm:$0xff]
        %v964 = vld [vmem:[#allocation3 + $0xc0] sm:$0xff]
        %v965 = vld [vmem:[#allocation3 + $0xc8] sm:$0xff]
        %v966 = vld [vmem:[#allocation3 + $0xd0] sm:$0xff]
        %v967 = vld [vmem:[#allocation3 + $0xd8] sm:$0xff]
        %v968 = vld [vmem:[#allocation3 + $0xe0] sm:$0xff]
        %v969 = vld [vmem:[#allocation3 + $0xe8] sm:$0xff]
        %v970 = vld [vmem:[#allocation3 + $0xf0] sm:$0xff]
        %v971 = vld [vmem:[#allocation3 + $0xf8] sm:$0xff]
        %v972 = vld [vmem:[#allocation3 + $0x100] sm:$0xff]
        %v973 = vld [vmem:[#allocation3 + $0x108] sm:$0xff]
        %v974 = vld [vmem:[#allocation3 + $0x110] sm:$0xff]
        %v975 = vld [vmem:[#allocation3 + $0x118] sm:$0xff]
        %v976 = vld [vmem:[#allocation3 + $0x120] sm:$0xff]
        %v977 = vld [vmem:[#allocation3 + $0x128] sm:$0xff]
        %v978 = vld [vmem:[#allocation3 + $0x130] sm:$0xff]
        %v979 = vld [vmem:[#allocation3 + $0x138] sm:$0xff]
        %v980 = vld [vmem:[#allocation3 + $0x140] sm:$0xff]
        %v981 = vld [vmem:[#allocation3 + $0x148] sm:$0xff]
        %v982 = vld [vmem:[#allocation3 + $0x150] sm:$0xff]
        %v983 = vld [vmem:[#allocation3 + $0x158] sm:$0xff]
        %v984 = vld [vmem:[#allocation3 + $0x160] sm:$0xff]
        %v985 = vld [vmem:[#allocation3 + $0x168] sm:$0xff]
        %v986 = vld [vmem:[#allocation3 + $0x170] sm:$0xff]
        %v987 = vld [vmem:[#allocation3 + $0x178] sm:$0xff]
        %v988 = vld [vmem:[#allocation3 + $0x180] sm:$0xff]
        %v989 = vld [vmem:[#allocation3 + $0x188] sm:$0xff]
        %v990 = vld [vmem:[#allocation3 + $0x190] sm:$0xff]
        %v991 = vld [vmem:[#allocation3 + $0x198] sm:$0xff]
        %v992 = vld [vmem:[#allocation3 + $0x1a0] sm:$0xff]
        %v993 = vld [vmem:[#allocation3 + $0x1a8] sm:$0xff]
        %v994 = vld [vmem:[#allocation3 + $0x1b0] sm:$0xff]
        %v995 = vld [vmem:[#allocation3 + $0x1b8] sm:$0xff]
        %v996 = vld [vmem:[#allocation3 + $0x1c0] sm:$0xff]
        %v997 = vld [vmem:[#allocation3 + $0x1c8] sm:$0xff]
        %v998 = vld [vmem:[#allocation3 + $0x1d0] sm:$0xff]
        %v999 = vld [vmem:[#allocation3 + $0x1d8] sm:$0xff]
        %v1000 = vld [vmem:[#allocation3 + $0x1e0] sm:$0xff]
        %v1001 = vld [vmem:[#allocation3 + $0x1e8] sm:$0xff]
        %v1002 = vld [vmem:[#allocation3 + $0x1f0] sm:$0xff]
        %v1003 = vld [vmem:[#allocation3 + $0x1f8] sm:$0xff]
        %v1004 = vld [vmem:[#allocation3 + $0x200] sm:$0xff]
        %v1005 = vld [vmem:[#allocation3 + $0x208] sm:$0xff]
        %v1006 = vld [vmem:[#allocation3 + $0x210] sm:$0xff]
        %v1007 = vld [vmem:[#allocation3 + $0x218] sm:$0xff]
        %v1008 = vld [vmem:[#allocation3 + $0x220] sm:$0xff]
        %v1009 = vld [vmem:[#allocation3 + $0x228] sm:$0xff]
        %v1010 = vld [vmem:[#allocation3 + $0x230] sm:$0xff]
        %v1011 = vld [vmem:[#allocation3 + $0x238] sm:$0xff]
        %v1012 = vld [vmem:[#allocation3 + $0x240] sm:$0xff]
        %v1013 = vld [vmem:[#allocation3 + $0x248] sm:$0xff]
        %v1014 = vld [vmem:[#allocation3 + $0x250] sm:$0xff]
        %v1015 = vld [vmem:[#allocation3 + $0x258] sm:$0xff]
        %v1016 = vld [vmem:[#allocation3 + $0x260] sm:$0xff]
        %v1017 = vld [vmem:[#allocation3 + $0x268] sm:$0xff]
        %v1018 = vld [vmem:[#allocation3 + $0x270] sm:$0xff]
        %v1019 = vld [vmem:[#allocation3 + $0x278] sm:$0xff]
        %v1020 = vld [vmem:[#allocation3 + $0x280] sm:$0xff]
        %v1021 = vld [vmem:[#allocation3 + $0x288] sm:$0xff]
        %v1022 = vld [vmem:[#allocation3 + $0x290] sm:$0xff]
        %v1023 = vld [vmem:[#allocation3 + $0x298] sm:$0xff]
        %v1024 = vld [vmem:[#allocation3 + $0x2a0] sm:$0xff]
        %v1025 = vld [vmem:[#allocation3 + $0x2a8] sm:$0xff]
        %v1026 = vld [vmem:[#allocation3 + $0x2b0] sm:$0xff]
        %v1027 = vld [vmem:[#allocation3 + $0x2b8] sm:$0xff]
        %v1028 = vld [vmem:[#allocation3 + $0x2c0] sm:$0xff]
        %v1029 = vld [vmem:[#allocation3 + $0x2c8] sm:$0xff]
        %v1030 = vld [vmem:[#allocation3 + $0x2d0] sm:$0xff]
        %v1031 = vld [vmem:[#allocation3 + $0x2d8] sm:$0xff]
        %v1032 = vld [vmem:[#allocation3 + $0x2e0] sm:$0xff]
        %v1033 = vld [vmem:[#allocation3 + $0x2e8] sm:$0xff]
        %v1034 = vld [vmem:[#allocation3 + $0x2f0] sm:$0xff]
        %v1035 = vld [vmem:[#allocation3 + $0x2f8] sm:$0xff]
        %v1036 = vld [vmem:[#allocation3 + $0x300] sm:$0xff]
        %v1037 = vld [vmem:[#allocation3 + $0x308] sm:$0xff]
        %v1038 = vld [vmem:[#allocation3 + $0x310] sm:$0xff]
        %v1039 = vld [vmem:[#allocation3 + $0x318] sm:$0xff]
        %v1040 = vld [vmem:[#allocation3 + $0x320] sm:$0xff]
        %v1041 = vld [vmem:[#allocation3 + $0x328] sm:$0xff]
        %v1042 = vld [vmem:[#allocation3 + $0x330] sm:$0xff]
        %v1043 = vld [vmem:[#allocation3 + $0x338] sm:$0xff]
        %v1044 = vld [vmem:[#allocation3 + $0x340] sm:$0xff]
        %v1045 = vld [vmem:[#allocation3 + $0x348] sm:$0xff]
        %v1046 = vld [vmem:[#allocation3 + $0x350] sm:$0xff]
        %v1047 = vld [vmem:[#allocation3 + $0x358] sm:$0xff]
        %v1048 = vld [vmem:[#allocation3 + $0x360] sm:$0xff]
        %v1049 = vld [vmem:[#allocation3 + $0x368] sm:$0xff]
        %v1050 = vld [vmem:[#allocation3 + $0x370] sm:$0xff]
        %v1051 = vld [vmem:[#allocation3 + $0x378] sm:$0xff]
        %v1052 = vld [vmem:[#allocation3 + $0x380] sm:$0xff]
        %v1053 = vld [vmem:[#allocation3 + $0x388] sm:$0xff]
        %v1054 = vld [vmem:[#allocation3 + $0x390] sm:$0xff]
        %v1055 = vld [vmem:[#allocation3 + $0x398] sm:$0xff]
        %v1056 = vld [vmem:[#allocation3 + $0x3a0] sm:$0xff]
        %v1057 = vld [vmem:[#allocation3 + $0x3a8] sm:$0xff]
        %v1058 = vld [vmem:[#allocation3 + $0x3b0] sm:$0xff]
        %v1059 = vld [vmem:[#allocation3 + $0x3b8] sm:$0xff]
        %v1060 = vld [vmem:[#allocation3 + $0x3c0] sm:$0xff]
        %v1061 = vld [vmem:[#allocation3 + $0x3c8] sm:$0xff]
        %v1062 = vld [vmem:[#allocation3 + $0x3d0] sm:$0xff]
        %v1063 = vld [vmem:[#allocation3 + $0x3d8] sm:$0xff]
        %v1064 = vld [vmem:[#allocation3 + $0x3e0] sm:$0xff]
        %v1065 = vld [vmem:[#allocation3 + $0x3e8] sm:$0xff]
        %v1066 = vld [vmem:[#allocation3 + $0x3f0] sm:$0xff]
        %v1067 = vld [vmem:[#allocation3 + $0x3f8] sm:$0xff]
        %v1068 = vld [vmem:[#allocation3 + $0x400] sm:$0xff]
        %v1069 = vld [vmem:[#allocation3 + $0x408] sm:$0xff]
        %v1070 = vld [vmem:[#allocation3 + $0x410] sm:$0xff]
        %v1071 = vld [vmem:[#allocation3 + $0x418] sm:$0xff]
        %v1072 = vld [vmem:[#allocation3 + $0x420] sm:$0xff]
        %v1073 = vld [vmem:[#allocation3 + $0x428] sm:$0xff]
        %v1074 = vld [vmem:[#allocation3 + $0x430] sm:$0xff]
        %v1075 = vld [vmem:[#allocation3 + $0x438] sm:$0xff]
        %v1076 = vld [vmem:[#allocation3 + $0x440] sm:$0xff]
        %v1077 = vld [vmem:[#allocation3 + $0x448] sm:$0xff]
        %v1078 = vld [vmem:[#allocation3 + $0x450] sm:$0xff]
        %v1079 = vld [vmem:[#allocation3 + $0x458] sm:$0xff]
        %v1080 = vld [vmem:[#allocation3 + $0x460] sm:$0xff]
        %v1081 = vld [vmem:[#allocation3 + $0x468] sm:$0xff]
        %v1082 = vld [vmem:[#allocation3 + $0x470] sm:$0xff]
        %v1083 = vld [vmem:[#allocation3 + $0x478] sm:$0xff]
        %v1084 = vld [vmem:[#allocation3 + $0x480] sm:$0xff]
        %v1085 = vld [vmem:[#allocation3 + $0x488] sm:$0xff]
        %v1086 = vld [vmem:[#allocation3 + $0x490] sm:$0xff]
        %v1087 = vld [vmem:[#allocation3 + $0x498] sm:$0xff]
        %v1088 = vld [vmem:[#allocation3 + $0x4a0] sm:$0xff]
        %v1089 = vld [vmem:[#allocation3 + $0x4a8] sm:$0xff]
        %v1090 = vld [vmem:[#allocation3 + $0x4b0] sm:$0xff]
        %v1091 = vld [vmem:[#allocation3 + $0x4b8] sm:$0xff]
        %v1092 = vld [vmem:[#allocation3 + $0x4c0] sm:$0xff]
        %v1093 = vld [vmem:[#allocation3 + $0x4c8] sm:$0xff]
        %v1094 = vld [vmem:[#allocation3 + $0x4d0] sm:$0xff]
        %v1095 = vld [vmem:[#allocation3 + $0x4d8] sm:$0xff]
        %v1096 = vld [vmem:[#allocation3 + $0x4e0] sm:$0xff]
        %v1097 = vld [vmem:[#allocation3 + $0x4e8] sm:$0xff]
        %v1098 = vld [vmem:[#allocation3 + $0x4f0] sm:$0xff]
        %v1099 = vld [vmem:[#allocation3 + $0x4f8] sm:$0xff]
        %v1100 = vld [vmem:[#allocation3 + $0x500] sm:$0xff]
        %v1101 = vld [vmem:[#allocation3 + $0x508] sm:$0xff]
        %v1102 = vld [vmem:[#allocation3 + $0x510] sm:$0xff]
        %v1103 = vld [vmem:[#allocation3 + $0x518] sm:$0xff]
        %v1104 = vld [vmem:[#allocation3 + $0x520] sm:$0xff]
        %v1105 = vld [vmem:[#allocation3 + $0x528] sm:$0xff]
        %v1106 = vld [vmem:[#allocation3 + $0x530] sm:$0xff]
        %v1107 = vld [vmem:[#allocation3 + $0x538] sm:$0xff]
        %v1108 = vld [vmem:[#allocation3 + $0x540] sm:$0xff]
        %v1109 = vld [vmem:[#allocation3 + $0x548] sm:$0xff]
        %v1110 = vld [vmem:[#allocation3 + $0x550] sm:$0xff]
        %v1111 = vld [vmem:[#allocation3 + $0x558] sm:$0xff]
        %v1112 = vld [vmem:[#allocation3 + $0x560] sm:$0xff]
        %v1113 = vld [vmem:[#allocation3 + $0x568] sm:$0xff]
        %v1114 = vld [vmem:[#allocation3 + $0x570] sm:$0xff]
        %v1115 = vld [vmem:[#allocation3 + $0x578] sm:$0xff]
        %v1116 = vld [vmem:[#allocation3 + $0x580] sm:$0xff]
        %v1117 = vld [vmem:[#allocation3 + $0x588] sm:$0xff]
        %v1118 = vld [vmem:[#allocation3 + $0x590] sm:$0xff]
        %v1119 = vld [vmem:[#allocation3 + $0x598] sm:$0xff]
        %v1120 = vld [vmem:[#allocation3 + $0x5a0] sm:$0xff]
        %v1121 = vld [vmem:[#allocation3 + $0x5a8] sm:$0xff]
        %v1122 = vld [vmem:[#allocation3 + $0x5b0] sm:$0xff]
        %v1123 = vld [vmem:[#allocation3 + $0x5b8] sm:$0xff]
        %v1124 = vld [vmem:[#allocation3 + $0x5c0] sm:$0xff]
        %v1125 = vld [vmem:[#allocation3 + $0x5c8] sm:$0xff]
        %v1126 = vld [vmem:[#allocation3 + $0x5d0] sm:$0xff]
        %v1127 = vld [vmem:[#allocation3 + $0x5d8] sm:$0xff]
        %v1128 = vld [vmem:[#allocation3 + $0x5e0] sm:$0xff]
        %v1129 = vld [vmem:[#allocation3 + $0x5e8] sm:$0xff]
        %v1130 = vld [vmem:[#allocation3 + $0x5f0] sm:$0xff]
        %v1131 = vld [vmem:[#allocation3 + $0x5f8] sm:$0xff]
        %v1132 = vld [vmem:[#allocation3 + $0x600] sm:$0xff]
        %v1133 = vld [vmem:[#allocation3 + $0x608] sm:$0xff]
        %v1134 = vld [vmem:[#allocation3 + $0x610] sm:$0xff]
        %v1135 = vld [vmem:[#allocation3 + $0x618] sm:$0xff]
        %v1136 = vld [vmem:[#allocation3 + $0x620] sm:$0xff]
        %v1137 = vld [vmem:[#allocation3 + $0x628] sm:$0xff]
        %v1138 = vld [vmem:[#allocation3 + $0x630] sm:$0xff]
        %v1139 = vld [vmem:[#allocation3 + $0x638] sm:$0xff]
        %v1140 = vld [vmem:[#allocation3 + $0x640] sm:$0xff]
        %v1141 = vld [vmem:[#allocation3 + $0x648] sm:$0xff]
        %v1142 = vld [vmem:[#allocation3 + $0x650] sm:$0xff]
        %v1143 = vld [vmem:[#allocation3 + $0x658] sm:$0xff]
        %v1144 = vld [vmem:[#allocation3 + $0x660] sm:$0xff]
        %v1145 = vld [vmem:[#allocation3 + $0x668] sm:$0xff]
        %v1146 = vld [vmem:[#allocation3 + $0x670] sm:$0xff]
        %v1147 = vld [vmem:[#allocation3 + $0x678] sm:$0xff]
        %v1148 = vld [vmem:[#allocation3 + $0x680] sm:$0xff]
        %v1149 = vld [vmem:[#allocation3 + $0x688] sm:$0xff]
        %v1150 = vld [vmem:[#allocation3 + $0x690] sm:$0xff]
        %v1151 = vld [vmem:[#allocation3 + $0x698] sm:$0xff]
        %v1152 = vld [vmem:[#allocation3 + $0x6a0] sm:$0xff]
        %v1153 = vld [vmem:[#allocation3 + $0x6a8] sm:$0xff]
        %v1154 = vld [vmem:[#allocation3 + $0x6b0] sm:$0xff]
        %v1155 = vld [vmem:[#allocation3 + $0x6b8] sm:$0xff]
        %v1156 = vld [vmem:[#allocation3 + $0x6c0] sm:$0xff]
        %v1157 = vld [vmem:[#allocation3 + $0x6c8] sm:$0xff]
        %v1158 = vld [vmem:[#allocation3 + $0x6d0] sm:$0xff]
        %v1159 = vld [vmem:[#allocation3 + $0x6d8] sm:$0xff]
        %v1160 = vld [vmem:[#allocation3 + $0x6e0] sm:$0xff]
        %v1161 = vld [vmem:[#allocation3 + $0x6e8] sm:$0xff]
        %v1162 = vld [vmem:[#allocation3 + $0x6f0] sm:$0xff]
        %v1163 = vld [vmem:[#allocation3 + $0x6f8] sm:$0xff]
        %v1164 = vld [vmem:[#allocation3 + $0x700] sm:$0xff]
        %v1165 = vld [vmem:[#allocation3 + $0x708] sm:$0xff]
        %v1166 = vld [vmem:[#allocation3 + $0x710] sm:$0xff]
        %v1167 = vld [vmem:[#allocation3 + $0x718] sm:$0xff]
        %v1168 = vld [vmem:[#allocation3 + $0x720] sm:$0xff]
        %v1169 = vld [vmem:[#allocation3 + $0x728] sm:$0xff]
        %v1170 = vld [vmem:[#allocation3 + $0x730] sm:$0xff]
        %v1171 = vld [vmem:[#allocation3 + $0x738] sm:$0xff]
        %v1172 = vld [vmem:[#allocation3 + $0x740] sm:$0xff]
        %v1173 = vld [vmem:[#allocation3 + $0x748] sm:$0xff]
        %v1174 = vld [vmem:[#allocation3 + $0x750] sm:$0xff]
        %v1175 = vld [vmem:[#allocation3 + $0x758] sm:$0xff]
        %v1176 = vld [vmem:[#allocation3 + $0x760] sm:$0xff]
        %v1177 = vld [vmem:[#allocation3 + $0x768] sm:$0xff]
        %v1178 = vld [vmem:[#allocation3 + $0x770] sm:$0xff]
        %v1179 = vld [vmem:[#allocation3 + $0x778] sm:$0xff]
        %v1180 = vld [vmem:[#allocation3 + $0x780] sm:$0xff]
        %v1181 = vld [vmem:[#allocation3 + $0x788] sm:$0xff]
        %v1182 = vld [vmem:[#allocation3 + $0x790] sm:$0xff]
        %v1183 = vld [vmem:[#allocation3 + $0x798] sm:$0xff]
        %v1184 = vld [vmem:[#allocation3 + $0x7a0] sm:$0xff]
        %v1185 = vld [vmem:[#allocation3 + $0x7a8] sm:$0xff]
        %v1186 = vld [vmem:[#allocation3 + $0x7b0] sm:$0xff]
        %v1187 = vld [vmem:[#allocation3 + $0x7b8] sm:$0xff]
        %v1188 = vld [vmem:[#allocation3 + $0x7c0] sm:$0xff]
        %v1189 = vld [vmem:[#allocation3 + $0x7c8] sm:$0xff]
        %v1190 = vld [vmem:[#allocation3 + $0x7d0] sm:$0xff]
        %v1191 = vld [vmem:[#allocation3 + $0x7d8] sm:$0xff]
        %v1192 = vld [vmem:[#allocation3 + $0x7e0] sm:$0xff]
        %v1193 = vld [vmem:[#allocation3 + $0x7e8] sm:$0xff]
        %v1194 = vld [vmem:[#allocation3 + $0x7f0] sm:$0xff]
        %v1195 = vld [vmem:[#allocation3 + $0x7f8] sm:$0xff]
        %v1196 = vld [vmem:[#allocation3 + $0x800] sm:$0xff]
        %v1197 = vld [vmem:[#allocation3 + $0x808] sm:$0xff]
        %v1198 = vld [vmem:[#allocation3 + $0x810] sm:$0xff]
        %v1199 = vld [vmem:[#allocation3 + $0x818] sm:$0xff]
        %v1200 = vld [vmem:[#allocation3 + $0x820] sm:$0xff]
        %v1201 = vld [vmem:[#allocation3 + $0x828] sm:$0xff]
        %v1202 = vld [vmem:[#allocation3 + $0x830] sm:$0xff]
        %v1203 = vld [vmem:[#allocation3 + $0x838] sm:$0xff]
        %v1204 = vld [vmem:[#allocation3 + $0x840] sm:$0xff]
        %v1205 = vld [vmem:[#allocation3 + $0x848] sm:$0xff]
        %v1206 = vld [vmem:[#allocation3 + $0x850] sm:$0xff]
        %v1207 = vld [vmem:[#allocation3 + $0x858] sm:$0xff]
        %v1208 = vld [vmem:[#allocation3 + $0x860] sm:$0xff]
        %v1209 = vld [vmem:[#allocation3 + $0x868] sm:$0xff]
        %v1210 = vld [vmem:[#allocation3 + $0x870] sm:$0xff]
        %v1211 = vld [vmem:[#allocation3 + $0x878] sm:$0xff]
        %v1212 = vld [vmem:[#allocation3 + $0x880] sm:$0xff]
        %v1213 = vld [vmem:[#allocation3 + $0x888] sm:$0xff]
        %v1214 = vld [vmem:[#allocation3 + $0x890] sm:$0xff]
        %v1215 = vld [vmem:[#allocation3 + $0x898] sm:$0xff]
        %v1216 = vld [vmem:[#allocation3 + $0x8a0] sm:$0xff]
        %v1217 = vld [vmem:[#allocation3 + $0x8a8] sm:$0xff]
        %v1218 = vld [vmem:[#allocation3 + $0x8b0] sm:$0xff]
        %v1219 = vld [vmem:[#allocation3 + $0x8b8] sm:$0xff]
        %v1220 = vld [vmem:[#allocation3 + $0x8c0] sm:$0xff]
        %v1221 = vld [vmem:[#allocation3 + $0x8c8] sm:$0xff]
        %v1222 = vld [vmem:[#allocation3 + $0x8d0] sm:$0xff]
        %v1223 = vld [vmem:[#allocation3 + $0x8d8] sm:$0xff]
        %v1224 = vld [vmem:[#allocation3 + $0x8e0] sm:$0xff]
        %v1225 = vld [vmem:[#allocation3 + $0x8e8] sm:$0xff]
        %v1226 = vld [vmem:[#allocation3 + $0x8f0] sm:$0xff]
        %v1227 = vld [vmem:[#allocation3 + $0x8f8] sm:$0xff]
        %v1228 = vld [vmem:[#allocation7] sm:$0xff]
        %v1229 = vld [vmem:[#allocation7 + $0x8] sm:$0xff]
        %v1230 = vld [vmem:[#allocation7 + $0x10] sm:$0xff]
        %v1231 = vld [vmem:[#allocation7 + $0x18] sm:$0xff]
        %v1232 = vld [vmem:[#allocation7 + $0x20] sm:$0xff]
        %v1233 = vld [vmem:[#allocation7 + $0x28] sm:$0xff]
        %v1234 = vld [vmem:[#allocation7 + $0x30] sm:$0xff]
        %v1235 = vld [vmem:[#allocation7 + $0x38] sm:$0xff]
        %v1236 = vld [vmem:[#allocation7 + $0x40] sm:$0xff]
        %v1237 = vld [vmem:[#allocation7 + $0x48] sm:$0xff]
        %v1238 = vld [vmem:[#allocation7 + $0x50] sm:$0xff]
        %v1239 = vld [vmem:[#allocation7 + $0x58] sm:$0xff]
        %v1240 = vld [vmem:[#allocation7 + $0x60] sm:$0xff]
        %v1241 = vld [vmem:[#allocation7 + $0x68] sm:$0xff]
        %v1242 = vld [vmem:[#allocation7 + $0x70] sm:$0xff]
        %v1243 = vld [vmem:[#allocation7 + $0x78] sm:$0xff]
        %v1244 = vld [vmem:[#allocation7 + $0x80] sm:$0xff]
        %v1245 = vld [vmem:[#allocation7 + $0x88] sm:$0xff]
        %v1246 = vld [vmem:[#allocation7 + $0x90] sm:$0xff]
        %v1247 = vld [vmem:[#allocation7 + $0x98] sm:$0xff]
        %v1248 = vld [vmem:[#allocation7 + $0xa0] sm:$0xff]
        %v1249 = vld [vmem:[#allocation7 + $0xa8] sm:$0xff]
        %v1250 = vld [vmem:[#allocation7 + $0xb0] sm:$0xff]
        %v1251 = vld [vmem:[#allocation7 + $0xb8] sm:$0xff]
        %v1252 = vld [vmem:[#allocation7 + $0xc0] sm:$0xff]
        %v1253 = vld [vmem:[#allocation7 + $0xc8] sm:$0xff]
        %v1254 = vld [vmem:[#allocation7 + $0xd0] sm:$0xff]
        %v1255 = vld [vmem:[#allocation7 + $0xd8] sm:$0xff]
        %v1256 = vld [vmem:[#allocation7 + $0xe0] sm:$0xff]
        %v1257 = vld [vmem:[#allocation7 + $0xe8] sm:$0xff]
        %v1258 = vld [vmem:[#allocation7 + $0xf0] sm:$0xff]
        %v1259 = vld [vmem:[#allocation7 + $0xf8] sm:$0xff]
        %v1260 = vld [vmem:[#allocation7 + $0x100] sm:$0xff]
        %v1261 = vld [vmem:[#allocation7 + $0x108] sm:$0xff]
        %v1262 = vld [vmem:[#allocation7 + $0x110] sm:$0xff]
        %v1263 = vld [vmem:[#allocation7 + $0x118] sm:$0xff]
        %v1264 = vld [vmem:[#allocation7 + $0x120] sm:$0xff]
        %v1265 = vld [vmem:[#allocation7 + $0x128] sm:$0xff]
        %v1266 = vld [vmem:[#allocation7 + $0x130] sm:$0xff]
        %v1267 = vld [vmem:[#allocation7 + $0x138] sm:$0xff]
        %v1268 = vld [vmem:[#allocation7 + $0x140] sm:$0xff]
        %v1269 = vld [vmem:[#allocation7 + $0x148] sm:$0xff]
        %v1270 = vld [vmem:[#allocation7 + $0x150] sm:$0xff]
        %v1271 = vld [vmem:[#allocation7 + $0x158] sm:$0xff]
        %v1272 = vld [vmem:[#allocation7 + $0x160] sm:$0xff]
        %v1273 = vld [vmem:[#allocation7 + $0x168] sm:$0xff]
        %v1274 = vld [vmem:[#allocation7 + $0x170] sm:$0xff]
        %v1275 = vld [vmem:[#allocation7 + $0x178] sm:$0xff]
        %v1276 = vld [vmem:[#allocation7 + $0x180] sm:$0xff]
        %v1277 = vld [vmem:[#allocation7 + $0x188] sm:$0xff]
        %v1278 = vld [vmem:[#allocation7 + $0x190] sm:$0xff]
        %v1279 = vld [vmem:[#allocation7 + $0x198] sm:$0xff]
        %v1280 = vld [vmem:[#allocation7 + $0x1a0] sm:$0xff]
        %v1281 = vld [vmem:[#allocation7 + $0x1a8] sm:$0xff]
        %v1282 = vld [vmem:[#allocation7 + $0x1b0] sm:$0xff]
        %v1283 = vld [vmem:[#allocation7 + $0x1b8] sm:$0xff]
        %v1284 = vld [vmem:[#allocation7 + $0x1c0] sm:$0xff]
        %v1285 = vld [vmem:[#allocation7 + $0x1c8] sm:$0xff]
        %v1286 = vld [vmem:[#allocation7 + $0x1d0] sm:$0xff]
        %v1287 = vld [vmem:[#allocation7 + $0x1d8] sm:$0xff]
        %v1288 = vld [vmem:[#allocation7 + $0x1e0] sm:$0xff]
        %v1289 = vld [vmem:[#allocation7 + $0x1e8] sm:$0xff]
        %v1290 = vld [vmem:[#allocation7 + $0x1f0] sm:$0xff]
        %v1291 = vld [vmem:[#allocation7 + $0x1f8] sm:$0xff]
        %v1292 = vld [vmem:[#allocation7 + $0x200] sm:$0xff]
        %v1293 = vld [vmem:[#allocation7 + $0x208] sm:$0xff]
        %v1294 = vld [vmem:[#allocation7 + $0x210] sm:$0xff]
        %v1295 = vld [vmem:[#allocation7 + $0x218] sm:$0xff]
        %v1296 = vld [vmem:[#allocation7 + $0x220] sm:$0xff]
        %v1297 = vld [vmem:[#allocation7 + $0x228] sm:$0xff]
        %v1298 = vld [vmem:[#allocation7 + $0x230] sm:$0xff]
        %v1299 = vld [vmem:[#allocation7 + $0x238] sm:$0xff]
        %v1300 = vld [vmem:[#allocation7 + $0x240] sm:$0xff]
        %v1301 = vld [vmem:[#allocation7 + $0x248] sm:$0xff]
        %v1302 = vld [vmem:[#allocation7 + $0x250] sm:$0xff]
        %v1303 = vld [vmem:[#allocation7 + $0x258] sm:$0xff]
        %v1304 = vld [vmem:[#allocation7 + $0x260] sm:$0xff]
        %v1305 = vld [vmem:[#allocation7 + $0x268] sm:$0xff]
        %v1306 = vld [vmem:[#allocation7 + $0x270] sm:$0xff]
        %v1307 = vld [vmem:[#allocation7 + $0x278] sm:$0xff]
        %v1308 = vld [vmem:[#allocation7 + $0x280] sm:$0xff]
        %v1309 = vld [vmem:[#allocation7 + $0x288] sm:$0xff]
        %v1310 = vld [vmem:[#allocation7 + $0x290] sm:$0xff]
        %v1311 = vld [vmem:[#allocation7 + $0x298] sm:$0xff]
        %v1312 = vld [vmem:[#allocation7 + $0x2a0] sm:$0xff]
        %v1313 = vld [vmem:[#allocation7 + $0x2a8] sm:$0xff]
        %v1314 = vld [vmem:[#allocation7 + $0x2b0] sm:$0xff]
        %v1315 = vld [vmem:[#allocation7 + $0x2b8] sm:$0xff]
        %v1316 = vld [vmem:[#allocation7 + $0x2c0] sm:$0xff]
        %v1317 = vld [vmem:[#allocation7 + $0x2c8] sm:$0xff]
        %v1318 = vld [vmem:[#allocation7 + $0x2d0] sm:$0xff]
        %v1319 = vld [vmem:[#allocation7 + $0x2d8] sm:$0xff]
        %v1320 = vld [vmem:[#allocation7 + $0x2e0] sm:$0xff]
        %v1321 = vld [vmem:[#allocation7 + $0x2e8] sm:$0xff]
        %v1322 = vld [vmem:[#allocation7 + $0x2f0] sm:$0xff]
        %v1323 = vld [vmem:[#allocation7 + $0x2f8] sm:$0xff]
        %v1324 = vld [vmem:[#allocation7 + $0x300] sm:$0xff]
        %v1325 = vld [vmem:[#allocation7 + $0x308] sm:$0xff]
        %v1326 = vld [vmem:[#allocation7 + $0x310] sm:$0xff]
        %v1327 = vld [vmem:[#allocation7 + $0x318] sm:$0xff]
        %v1328 = vld [vmem:[#allocation7 + $0x320] sm:$0xff]
        %v1329 = vld [vmem:[#allocation7 + $0x328] sm:$0xff]
        %v1330 = vld [vmem:[#allocation7 + $0x330] sm:$0xff]
        %v1331 = vld [vmem:[#allocation7 + $0x338] sm:$0xff]
        %v1332 = vld [vmem:[#allocation7 + $0x340] sm:$0xff]
        %v1333 = vld [vmem:[#allocation7 + $0x348] sm:$0xff]
        %v1334 = vld [vmem:[#allocation7 + $0x350] sm:$0xff]
        %v1335 = vld [vmem:[#allocation7 + $0x358] sm:$0xff]
        %v1336 = vld [vmem:[#allocation7 + $0x360] sm:$0xff]
        %v1337 = vld [vmem:[#allocation7 + $0x368] sm:$0xff]
        %v1338 = vld [vmem:[#allocation7 + $0x370] sm:$0xff]
        %v1339 = vld [vmem:[#allocation7 + $0x378] sm:$0xff]
        %v1340 = vld [vmem:[#allocation7 + $0x380] sm:$0xff]
        %v1341 = vld [vmem:[#allocation7 + $0x388] sm:$0xff]
        %v1342 = vld [vmem:[#allocation7 + $0x390] sm:$0xff]
        %v1343 = vld [vmem:[#allocation7 + $0x398] sm:$0xff]
        %v1344 = vld [vmem:[#allocation7 + $0x3a0] sm:$0xff]
        %v1345 = vld [vmem:[#allocation7 + $0x3a8] sm:$0xff]
        %v1346 = vld [vmem:[#allocation7 + $0x3b0] sm:$0xff]
        %v1347 = vld [vmem:[#allocation7 + $0x3b8] sm:$0xff]
        %v1348 = vld [vmem:[#allocation7 + $0x3c0] sm:$0xff]
        %v1349 = vld [vmem:[#allocation7 + $0x3c8] sm:$0xff]
        %v1350 = vld [vmem:[#allocation7 + $0x3d0] sm:$0xff]
        %v1351 = vld [vmem:[#allocation7 + $0x3d8] sm:$0xff]
        %v1352 = vld [vmem:[#allocation7 + $0x3e0] sm:$0xff]
        %v1353 = vld [vmem:[#allocation7 + $0x3e8] sm:$0xff]
        %v1354 = vld [vmem:[#allocation7 + $0x3f0] sm:$0xff]
        %v1355 = vld [vmem:[#allocation7 + $0x3f8] sm:$0xff]
        %v1356 = vld [vmem:[#allocation7 + $0x400] sm:$0xff]
        %v1357 = vld [vmem:[#allocation7 + $0x408] sm:$0xff]
        %v1358 = vld [vmem:[#allocation7 + $0x410] sm:$0xff]
        %v1359 = vld [vmem:[#allocation7 + $0x418] sm:$0xff]
        %v1360 = vld [vmem:[#allocation7 + $0x420] sm:$0xff]
        %v1361 = vld [vmem:[#allocation7 + $0x428] sm:$0xff]
        %v1362 = vld [vmem:[#allocation7 + $0x430] sm:$0xff]
        %v1363 = vld [vmem:[#allocation7 + $0x438] sm:$0xff]
        %v1364 = vld [vmem:[#allocation7 + $0x440] sm:$0xff]
        %v1365 = vld [vmem:[#allocation7 + $0x448] sm:$0xff]
        %v1366 = vld [vmem:[#allocation7 + $0x450] sm:$0xff]
        %v1367 = vld [vmem:[#allocation7 + $0x458] sm:$0xff]
        %v1368 = vld [vmem:[#allocation7 + $0x460] sm:$0xff]
        %v1369 = vld [vmem:[#allocation7 + $0x468] sm:$0xff]
        %v1370 = vld [vmem:[#allocation7 + $0x470] sm:$0xff]
        %v1371 = vld [vmem:[#allocation7 + $0x478] sm:$0xff]
        %v1372 = vlaneseq
        %v1373 = vshrl.u32 %v1372, 7
        %v1374 = vsub.s32 0, %v1373
        %v1375 = vrot.slane %v330, %v1374
        %1376 = vmatprep.subr.mxu0 0.0
        %1377 = vmatpush1.msra.mxu0 %v1243
        %1378 = vmatprep.subr.mxu0 0.0
        %1379 = vmatpush1.msra.mxu0 %v1242
        %1380 = vmatprep.subr.mxu0 0.0
        %1381 = vmatpush1.msra.mxu0 %v1241
        %1382 = vmatprep.subr.mxu0 0.0
        %1383 = vmatpush1.msra.mxu0 %v1240
        %1384 = vmatprep.subr.mxu0 0.0
        %1385 = vmatpush1.msra.mxu0 %v1239
        %1386 = vmatprep.subr.mxu0 0.0
        %1387 = vmatpush1.msra.mxu0 %v1238
        %1388 = vmatprep.subr.mxu0 0.0
        %1389 = vmatpush1.msra.mxu0 %v1237
        %1390 = vmatprep.subr.mxu0 0.0
        %1391 = vmatpush1.msra.mxu0 %v1236
        %1392 = vmatprep.subr.mxu0 0.0
        %1393 = vmatpush1.msra.mxu0 %v1235
        %1394 = vmatprep.subr.mxu0 0.0
        %1395 = vmatpush1.msra.mxu0 %v1234
        %1396 = vmatprep.subr.mxu0 0.0
        %1397 = vmatpush1.msra.mxu0 %v1233
        %1398 = vmatprep.subr.mxu0 0.0
        %1399 = vmatpush1.msra.mxu0 %v1232
        %1400 = vmatprep.subr.mxu0 0.0
        %1401 = vmatpush1.msra.mxu0 %v1231
        %1402 = vmatprep.subr.mxu0 0.0
        %1403 = vmatpush1.msra.mxu0 %v1230
        %1404 = vmatprep.subr.mxu0 0.0
        %1405 = vmatpush1.msra.mxu0 %v1229
        %1406 = vmatprep.subr.mxu0 0.0
        %1407 = vmatpush1.msra.mxu0 %v1228
        %1408 = vmatprep.subr.mxu0 0.0
        %1409 = vmatpush2.msra.mxu0 %v1259
        %1410 = vmatprep.subr.mxu0 0.0
        %1411 = vmatpush2.msra.mxu0 %v1258
        %1412 = vmatprep.subr.mxu0 0.0
        %1413 = vmatpush2.msra.mxu0 %v1257
        %1414 = vmatprep.subr.mxu0 0.0
        %1415 = vmatpush2.msra.mxu0 %v1256
        %1416 = vmatprep.subr.mxu0 0.0
        %1417 = vmatpush2.msra.mxu0 %v1255
        %1418 = vmatprep.subr.mxu0 0.0
        %1419 = vmatpush2.msra.mxu0 %v1254
        %1420 = vmatprep.subr.mxu0 0.0
        %1421 = vmatpush2.msra.mxu0 %v1253
        %1422 = vmatprep.subr.mxu0 0.0
        %1423 = vmatpush2.msra.mxu0 %v1252
        %1424 = vmatprep.subr.mxu0 0.0
        %1425 = vmatpush2.msra.mxu0 %v1251
        %1426 = vmatprep.subr.mxu0 0.0
        %1427 = vmatpush2.msra.mxu0 %v1250
        %1428 = vmatprep.subr.mxu0 0.0
        %1429 = vmatpush2.msra.mxu0 %v1249
        %1430 = vmatprep.subr.mxu0 0.0
        %1431 = vmatpush2.msra.mxu0 %v1248
        %1432 = vmatprep.subr.mxu0 0.0
        %1433 = vmatpush2.msra.mxu0 %v1247
        %1434 = vmatprep.subr.mxu0 0.0
        %1435 = vmatpush2.msra.mxu0 %v1246
        %1436 = vmatprep.subr.mxu0 0.0
        %1437 = vmatpush2.msra.mxu0 %v1245
        %1438 = vmatprep.subr.mxu0 0.0
        %1439 = vmatpush2.msra.mxu0 %v1244
        %1440 = vmatprep.mubr.f32.mxu0 %v941
        %1441 = vmatmul.mubr.f32.gmra.mxu0 %v940
        %v1442 = vpop.f32.mrf.mxu0
        %v1443 = vadd.f32 %v1375, %v1442
        %v1444 = vpop.f32.mrf.mxu0
        %1445 = vmatprep.mubr.f32.mxu0 %v950
        %1446 = vmatmul.mubr.f32.gmra.mxu0 %v949
        %v1447 = vpop.f32.mrf.mxu0
        %v1448 = vadd.f32 %v1375, %v1447
        %v1449 = vpop.f32.mrf.mxu0
        %1450 = vmatprep.mubr.f32.mxu0 %v959
        %1451 = vmatmul.mubr.f32.gmra.mxu0 %v958
        %v1452 = vpop.f32.mrf.mxu0
        %v1453 = vadd.f32 %v1375, %v1452
        %v1454 = vpop.f32.mrf.mxu0
        %1455 = vmatprep.mubr.f32.mxu0 %v968
        %1456 = vmatmul.mubr.f32.gmra.mxu0 %v967
        %v1457 = vpop.f32.mrf.mxu0
        %v1458 = vadd.f32 %v1375, %v1457
        %v1459 = vpop.f32.mrf.mxu0
        %1460 = vmatprep.mubr.f32.mxu0 %v977
        %1461 = vmatmul.mubr.f32.gmra.mxu0 %v976
        %v1462 = vpop.f32.mrf.mxu0
        %v1463 = vadd.f32 %v1375, %v1462
        %v1464 = vpop.f32.mrf.mxu0
        %1465 = vmatprep.mubr.f32.mxu0 %v986
        %1466 = vmatmul.mubr.f32.gmra.mxu0 %v985
        %v1467 = vpop.f32.mrf.mxu0
        %v1468 = vadd.f32 %v1375, %v1467
        %v1469 = vpop.f32.mrf.mxu0
        %1470 = vmatprep.mubr.f32.mxu0 %v995
        %1471 = vmatmul.mubr.f32.gmra.mxu0 %v994
        %v1472 = vpop.f32.mrf.mxu0
        %v1473 = vadd.f32 %v1375, %v1472
        %v1474 = vpop.f32.mrf.mxu0
        %1475 = vmatprep.mubr.f32.mxu0 %v1004
        %1476 = vmatmul.mubr.f32.gmra.mxu0 %v1003
        %v1477 = vpop.f32.mrf.mxu0
        %v1478 = vadd.f32 %v1375, %v1477
        %v1479 = vpop.f32.mrf.mxu0
        %1480 = vmatprep.mubr.f32.mxu0 %v1013
        %1481 = vmatmul.mubr.f32.gmra.mxu0 %v1012
        %v1482 = vpop.f32.mrf.mxu0
        %v1483 = vadd.f32 %v1375, %v1482
        %v1484 = vpop.f32.mrf.mxu0
        %1485 = vmatprep.mubr.f32.mxu0 %v1022
        %1486 = vmatmul.mubr.f32.gmra.mxu0 %v1021
        %v1487 = vpop.f32.mrf.mxu0
        %v1488 = vadd.f32 %v1375, %v1487
        %v1489 = vpop.f32.mrf.mxu0
        %1490 = vmatprep.mubr.f32.mxu0 %v1031
        %1491 = vmatmul.mubr.f32.gmra.mxu0 %v1030
        %v1492 = vpop.f32.mrf.mxu0
        %v1493 = vadd.f32 %v1375, %v1492
        %v1494 = vpop.f32.mrf.mxu0
        %1495 = vmatprep.mubr.f32.mxu0 %v1040
        %1496 = vmatmul.mubr.f32.gmra.mxu0 %v1039
        %v1497 = vpop.f32.mrf.mxu0
        %v1498 = vadd.f32 %v1375, %v1497
        %v1499 = vpop.f32.mrf.mxu0
        %1500 = vmatprep.mubr.f32.mxu0 %v1049
        %1501 = vmatmul.mubr.f32.gmra.mxu0 %v1048
        %v1502 = vpop.f32.mrf.mxu0
        %v1503 = vadd.f32 %v1375, %v1502
        %v1504 = vpop.f32.mrf.mxu0
        %1505 = vmatprep.mubr.f32.mxu0 %v1058
        %1506 = vmatmul.mubr.f32.gmra.mxu0 %v1057
        %v1507 = vpop.f32.mrf.mxu0
        %v1508 = vadd.f32 %v1375, %v1507
        %v1509 = vpop.f32.mrf.mxu0
        %1510 = vmatprep.mubr.f32.mxu0 %v1067
        %1511 = vmatmul.mubr.f32.gmra.mxu0 %v1066
        %v1512 = vpop.f32.mrf.mxu0
        %v1513 = vadd.f32 %v1375, %v1512
        %v1514 = vpop.f32.mrf.mxu0
        %1515 = vmatprep.mubr.f32.mxu0 %v1076
        %1516 = vmatmul.mubr.f32.gmra.mxu0 %v1075
        %v1517 = vpop.f32.mrf.mxu0
        %v1518 = vadd.f32 %v1375, %v1517
        %v1519 = vpop.f32.mrf.mxu0
        %1520 = vmatprep.mubr.f32.mxu0 %v1085
        %1521 = vmatmul.mubr.f32.gmra.mxu0 %v1084
        %v1522 = vpop.f32.mrf.mxu0
        %v1523 = vadd.f32 %v1375, %v1522
        %v1524 = vpop.f32.mrf.mxu0
        %1525 = vmatprep.mubr.f32.mxu0 %v1094
        %1526 = vmatmul.mubr.f32.gmra.mxu0 %v1093
        %v1527 = vpop.f32.mrf.mxu0
        %v1528 = vadd.f32 %v1375, %v1527
        %v1529 = vpop.f32.mrf.mxu0
        %1530 = vmatprep.mubr.f32.mxu0 %v1103
        %1531 = vmatmul.mubr.f32.gmra.mxu0 %v1102
        %v1532 = vpop.f32.mrf.mxu0
        %v1533 = vadd.f32 %v1375, %v1532
        %v1534 = vpop.f32.mrf.mxu0
        %1535 = vmatprep.mubr.f32.mxu0 %v1112
        %1536 = vmatmul.mubr.f32.gmra.mxu0 %v1111
        %v1537 = vpop.f32.mrf.mxu0
        %v1538 = vadd.f32 %v1375, %v1537
        %v1539 = vpop.f32.mrf.mxu0
        %1540 = vmatprep.mubr.f32.mxu0 %v1121
        %1541 = vmatmul.mubr.f32.gmra.mxu0 %v1120
        %v1542 = vpop.f32.mrf.mxu0
        %v1543 = vadd.f32 %v1375, %v1542
        %v1544 = vpop.f32.mrf.mxu0
        %1545 = vmatprep.mubr.f32.mxu0 %v1130
        %1546 = vmatmul.mubr.f32.gmra.mxu0 %v1129
        %v1547 = vpop.f32.mrf.mxu0
        %v1548 = vadd.f32 %v1375, %v1547
        %v1549 = vpop.f32.mrf.mxu0
        %1550 = vmatprep.mubr.f32.mxu0 %v1139
        %1551 = vmatmul.mubr.f32.gmra.mxu0 %v1138
        %v1552 = vpop.f32.mrf.mxu0
        %v1553 = vadd.f32 %v1375, %v1552
        %v1554 = vpop.f32.mrf.mxu0
        %1555 = vmatprep.mubr.f32.mxu0 %v1148
        %1556 = vmatmul.mubr.f32.gmra.mxu0 %v1147
        %v1557 = vpop.f32.mrf.mxu0
        %v1558 = vadd.f32 %v1375, %v1557
        %v1559 = vpop.f32.mrf.mxu0
        %1560 = vmatprep.mubr.f32.mxu0 %v1157
        %1561 = vmatmul.mubr.f32.gmra.mxu0 %v1156
        %v1562 = vpop.f32.mrf.mxu0
        %v1563 = vadd.f32 %v1375, %v1562
        %v1564 = vpop.f32.mrf.mxu0
        %1565 = vmatprep.mubr.f32.mxu0 %v1166
        %1566 = vmatmul.mubr.f32.gmra.mxu0 %v1165
        %v1567 = vpop.f32.mrf.mxu0
        %v1568 = vadd.f32 %v1375, %v1567
        %v1569 = vpop.f32.mrf.mxu0
        %1570 = vmatprep.mubr.f32.mxu0 %v1175
        %1571 = vmatmul.mubr.f32.gmra.mxu0 %v1174
        %v1572 = vpop.f32.mrf.mxu0
        %v1573 = vadd.f32 %v1375, %v1572
        %v1574 = vpop.f32.mrf.mxu0
        %1575 = vmatprep.mubr.f32.mxu0 %v1184
        %1576 = vmatmul.mubr.f32.gmra.mxu0 %v1183
        %v1577 = vpop.f32.mrf.mxu0
        %v1578 = vadd.f32 %v1375, %v1577
        %v1579 = vpop.f32.mrf.mxu0
        %1580 = vmatprep.mubr.f32.mxu0 %v1193
        %1581 = vmatmul.mubr.f32.gmra.mxu0 %v1192
        %v1582 = vpop.f32.mrf.mxu0
        %v1583 = vadd.f32 %v1375, %v1582
        %v1584 = vpop.f32.mrf.mxu0
        %1585 = vmatprep.mubr.f32.mxu0 %v1202
        %1586 = vmatmul.mubr.f32.gmra.mxu0 %v1201
        %v1587 = vpop.f32.mrf.mxu0
        %v1588 = vadd.f32 %v1375, %v1587
        %v1589 = vpop.f32.mrf.mxu0
        %1590 = vmatprep.mubr.f32.mxu0 %v1211
        %1591 = vmatmul.mubr.f32.gmra.mxu0 %v1210
        %v1592 = vpop.f32.mrf.mxu0
        %v1593 = vadd.f32 %v1375, %v1592
        %v1594 = vpop.f32.mrf.mxu0
        %1595 = vmatprep.mubr.f32.mxu0 %v1220
        %1596 = vmatmul.mubr.f32.gmra.mxu0 %v1219
        %v1597 = vpop.f32.mrf.mxu0
        %v1598 = vadd.f32 %v1375, %v1597
        %v1599 = vpop.f32.mrf.mxu0
        %1600 = vdwg.mxu0
        %1601 = vmatprep.subr.mxu0 0.0
        %1602 = vmatpush1.msra.mxu0 %v1275
        %1603 = vmatprep.subr.mxu0 0.0
        %1604 = vmatpush1.msra.mxu0 %v1274
        %1605 = vmatprep.subr.mxu0 0.0
        %1606 = vmatpush1.msra.mxu0 %v1273
        %1607 = vmatprep.subr.mxu0 0.0
        %1608 = vmatpush1.msra.mxu0 %v1272
        %1609 = vmatprep.subr.mxu0 0.0
        %1610 = vmatpush1.msra.mxu0 %v1271
        %1611 = vmatprep.subr.mxu0 0.0
        %1612 = vmatpush1.msra.mxu0 %v1270
        %1613 = vmatprep.subr.mxu0 0.0
        %1614 = vmatpush1.msra.mxu0 %v1269
        %1615 = vmatprep.subr.mxu0 0.0
        %1616 = vmatpush1.msra.mxu0 %v1268
        %1617 = vmatprep.subr.mxu0 0.0
        %1618 = vmatpush1.msra.mxu0 %v1267
        %1619 = vmatprep.subr.mxu0 0.0
        %1620 = vmatpush1.msra.mxu0 %v1266
        %1621 = vmatprep.subr.mxu0 0.0
        %1622 = vmatpush1.msra.mxu0 %v1265
        %1623 = vmatprep.subr.mxu0 0.0
        %1624 = vmatpush1.msra.mxu0 %v1264
        %1625 = vmatprep.subr.mxu0 0.0
        %1626 = vmatpush1.msra.mxu0 %v1263
        %1627 = vmatprep.subr.mxu0 0.0
        %1628 = vmatpush1.msra.mxu0 %v1262
        %1629 = vmatprep.subr.mxu0 0.0
        %1630 = vmatpush1.msra.mxu0 %v1261
        %1631 = vmatprep.subr.mxu0 0.0
        %1632 = vmatpush1.msra.mxu0 %v1260
        %1633 = vmatprep.subr.mxu0 0.0
        %1634 = vmatpush2.msra.mxu0 %v1291
        %1635 = vmatprep.subr.mxu0 0.0
        %1636 = vmatpush2.msra.mxu0 %v1290
        %1637 = vmatprep.subr.mxu0 0.0
        %1638 = vmatpush2.msra.mxu0 %v1289
        %1639 = vmatprep.subr.mxu0 0.0
        %1640 = vmatpush2.msra.mxu0 %v1288
        %1641 = vmatprep.subr.mxu0 0.0
        %1642 = vmatpush2.msra.mxu0 %v1287
        %1643 = vmatprep.subr.mxu0 0.0
        %1644 = vmatpush2.msra.mxu0 %v1286
        %1645 = vmatprep.subr.mxu0 0.0
        %1646 = vmatpush2.msra.mxu0 %v1285
        %1647 = vmatprep.subr.mxu0 0.0
        %1648 = vmatpush2.msra.mxu0 %v1284
        %1649 = vmatprep.subr.mxu0 0.0
        %1650 = vmatpush2.msra.mxu0 %v1283
        %1651 = vmatprep.subr.mxu0 0.0
        %1652 = vmatpush2.msra.mxu0 %v1282
        %1653 = vmatprep.subr.mxu0 0.0
        %1654 = vmatpush2.msra.mxu0 %v1281
        %1655 = vmatprep.subr.mxu0 0.0
        %1656 = vmatpush2.msra.mxu0 %v1280
        %1657 = vmatprep.subr.mxu0 0.0
        %1658 = vmatpush2.msra.mxu0 %v1279
        %1659 = vmatprep.subr.mxu0 0.0
        %1660 = vmatpush2.msra.mxu0 %v1278
        %1661 = vmatprep.subr.mxu0 0.0
        %1662 = vmatpush2.msra.mxu0 %v1277
        %1663 = vmatprep.subr.mxu0 0.0
        %1664 = vmatpush2.msra.mxu0 %v1276
        %1665 = vmatprep.mubr.f32.mxu0 %v943
        %1666 = vmatmul.mubr.f32.gmra.mxu0 %v942
        %v1667 = vpop.f32.mrf.mxu0
        %v1668 = vadd.f32 %v1443, %v1667
        %v1669 = vpop.f32.mrf.mxu0
        %1670 = vmatprep.mubr.f32.mxu0 %v952
        %1671 = vmatmul.mubr.f32.gmra.mxu0 %v951
        %v1672 = vpop.f32.mrf.mxu0
        %v1673 = vadd.f32 %v1448, %v1672
        %v1674 = vpop.f32.mrf.mxu0
        %1675 = vmatprep.mubr.f32.mxu0 %v961
        %1676 = vmatmul.mubr.f32.gmra.mxu0 %v960
        %v1677 = vpop.f32.mrf.mxu0
        %v1678 = vadd.f32 %v1453, %v1677
        %v1679 = vpop.f32.mrf.mxu0
        %1680 = vmatprep.mubr.f32.mxu0 %v970
        %1681 = vmatmul.mubr.f32.gmra.mxu0 %v969
        %v1682 = vpop.f32.mrf.mxu0
        %v1683 = vadd.f32 %v1458, %v1682
        %v1684 = vpop.f32.mrf.mxu0
        %1685 = vmatprep.mubr.f32.mxu0 %v979
        %1686 = vmatmul.mubr.f32.gmra.mxu0 %v978
        %v1687 = vpop.f32.mrf.mxu0
        %v1688 = vadd.f32 %v1463, %v1687
        %v1689 = vpop.f32.mrf.mxu0
        %1690 = vmatprep.mubr.f32.mxu0 %v988
        %1691 = vmatmul.mubr.f32.gmra.mxu0 %v987
        %v1692 = vpop.f32.mrf.mxu0
        %v1693 = vadd.f32 %v1468, %v1692
        %v1694 = vpop.f32.mrf.mxu0
        %1695 = vmatprep.mubr.f32.mxu0 %v997
        %1696 = vmatmul.mubr.f32.gmra.mxu0 %v996
        %v1697 = vpop.f32.mrf.mxu0
        %v1698 = vadd.f32 %v1473, %v1697
        %v1699 = vpop.f32.mrf.mxu0
        %1700 = vmatprep.mubr.f32.mxu0 %v1006
        %1701 = vmatmul.mubr.f32.gmra.mxu0 %v1005
        %v1702 = vpop.f32.mrf.mxu0
        %v1703 = vadd.f32 %v1478, %v1702
        %v1704 = vpop.f32.mrf.mxu0
        %1705 = vmatprep.mubr.f32.mxu0 %v1015
        %1706 = vmatmul.mubr.f32.gmra.mxu0 %v1014
        %v1707 = vpop.f32.mrf.mxu0
        %v1708 = vadd.f32 %v1483, %v1707
        %v1709 = vpop.f32.mrf.mxu0
        %1710 = vmatprep.mubr.f32.mxu0 %v1024
        %1711 = vmatmul.mubr.f32.gmra.mxu0 %v1023
        %v1712 = vpop.f32.mrf.mxu0
        %v1713 = vadd.f32 %v1488, %v1712
        %v1714 = vpop.f32.mrf.mxu0
        %1715 = vmatprep.mubr.f32.mxu0 %v1033
        %1716 = vmatmul.mubr.f32.gmra.mxu0 %v1032
        %v1717 = vpop.f32.mrf.mxu0
        %v1718 = vadd.f32 %v1493, %v1717
        %v1719 = vpop.f32.mrf.mxu0
        %1720 = vmatprep.mubr.f32.mxu0 %v1042
        %1721 = vmatmul.mubr.f32.gmra.mxu0 %v1041
        %v1722 = vpop.f32.mrf.mxu0
        %v1723 = vadd.f32 %v1498, %v1722
        %v1724 = vpop.f32.mrf.mxu0
        %1725 = vmatprep.mubr.f32.mxu0 %v1051
        %1726 = vmatmul.mubr.f32.gmra.mxu0 %v1050
        %v1727 = vpop.f32.mrf.mxu0
        %v1728 = vadd.f32 %v1503, %v1727
        %v1729 = vpop.f32.mrf.mxu0
        %1730 = vmatprep.mubr.f32.mxu0 %v1060
        %1731 = vmatmul.mubr.f32.gmra.mxu0 %v1059
        %v1732 = vpop.f32.mrf.mxu0
        %v1733 = vadd.f32 %v1508, %v1732
        %v1734 = vpop.f32.mrf.mxu0
        %1735 = vmatprep.mubr.f32.mxu0 %v1069
        %1736 = vmatmul.mubr.f32.gmra.mxu0 %v1068
        %v1737 = vpop.f32.mrf.mxu0
        %v1738 = vadd.f32 %v1513, %v1737
        %v1739 = vpop.f32.mrf.mxu0
        %1740 = vmatprep.mubr.f32.mxu0 %v1078
        %1741 = vmatmul.mubr.f32.gmra.mxu0 %v1077
        %v1742 = vpop.f32.mrf.mxu0
        %v1743 = vadd.f32 %v1518, %v1742
        %v1744 = vpop.f32.mrf.mxu0
        %1745 = vmatprep.mubr.f32.mxu0 %v1087
        %1746 = vmatmul.mubr.f32.gmra.mxu0 %v1086
        %v1747 = vpop.f32.mrf.mxu0
        %v1748 = vadd.f32 %v1523, %v1747
        %v1749 = vpop.f32.mrf.mxu0
        %1750 = vmatprep.mubr.f32.mxu0 %v1096
        %1751 = vmatmul.mubr.f32.gmra.mxu0 %v1095
        %v1752 = vpop.f32.mrf.mxu0
        %v1753 = vadd.f32 %v1528, %v1752
        %v1754 = vpop.f32.mrf.mxu0
        %1755 = vmatprep.mubr.f32.mxu0 %v1105
        %1756 = vmatmul.mubr.f32.gmra.mxu0 %v1104
        %v1757 = vpop.f32.mrf.mxu0
        %v1758 = vadd.f32 %v1533, %v1757
        %v1759 = vpop.f32.mrf.mxu0
        %1760 = vmatprep.mubr.f32.mxu0 %v1114
        %1761 = vmatmul.mubr.f32.gmra.mxu0 %v1113
        %v1762 = vpop.f32.mrf.mxu0
        %v1763 = vadd.f32 %v1538, %v1762
        %v1764 = vpop.f32.mrf.mxu0
        %1765 = vmatprep.mubr.f32.mxu0 %v1123
        %1766 = vmatmul.mubr.f32.gmra.mxu0 %v1122
        %v1767 = vpop.f32.mrf.mxu0
        %v1768 = vadd.f32 %v1543, %v1767
        %v1769 = vpop.f32.mrf.mxu0
        %1770 = vmatprep.mubr.f32.mxu0 %v1132
        %1771 = vmatmul.mubr.f32.gmra.mxu0 %v1131
        %v1772 = vpop.f32.mrf.mxu0
        %v1773 = vadd.f32 %v1548, %v1772
        %v1774 = vpop.f32.mrf.mxu0
        %1775 = vmatprep.mubr.f32.mxu0 %v1141
        %1776 = vmatmul.mubr.f32.gmra.mxu0 %v1140
        %v1777 = vpop.f32.mrf.mxu0
        %v1778 = vadd.f32 %v1553, %v1777
        %v1779 = vpop.f32.mrf.mxu0
        %1780 = vmatprep.mubr.f32.mxu0 %v1150
        %1781 = vmatmul.mubr.f32.gmra.mxu0 %v1149
        %v1782 = vpop.f32.mrf.mxu0
        %v1783 = vadd.f32 %v1558, %v1782
        %v1784 = vpop.f32.mrf.mxu0
        %1785 = vmatprep.mubr.f32.mxu0 %v1159
        %1786 = vmatmul.mubr.f32.gmra.mxu0 %v1158
        %v1787 = vpop.f32.mrf.mxu0
        %v1788 = vadd.f32 %v1563, %v1787
        %v1789 = vpop.f32.mrf.mxu0
        %1790 = vmatprep.mubr.f32.mxu0 %v1168
        %1791 = vmatmul.mubr.f32.gmra.mxu0 %v1167
        %v1792 = vpop.f32.mrf.mxu0
        %v1793 = vadd.f32 %v1568, %v1792
        %v1794 = vpop.f32.mrf.mxu0
        %1795 = vmatprep.mubr.f32.mxu0 %v1177
        %1796 = vmatmul.mubr.f32.gmra.mxu0 %v1176
        %v1797 = vpop.f32.mrf.mxu0
        %v1798 = vadd.f32 %v1573, %v1797
        %v1799 = vpop.f32.mrf.mxu0
        %1800 = vmatprep.mubr.f32.mxu0 %v1186
        %1801 = vmatmul.mubr.f32.gmra.mxu0 %v1185
        %v1802 = vpop.f32.mrf.mxu0
        %v1803 = vadd.f32 %v1578, %v1802
        %v1804 = vpop.f32.mrf.mxu0
        %1805 = vmatprep.mubr.f32.mxu0 %v1195
        %1806 = vmatmul.mubr.f32.gmra.mxu0 %v1194
        %v1807 = vpop.f32.mrf.mxu0
        %v1808 = vadd.f32 %v1583, %v1807
        %v1809 = vpop.f32.mrf.mxu0
        %1810 = vmatprep.mubr.f32.mxu0 %v1204
        %1811 = vmatmul.mubr.f32.gmra.mxu0 %v1203
        %v1812 = vpop.f32.mrf.mxu0
        %v1813 = vadd.f32 %v1588, %v1812
        %v1814 = vpop.f32.mrf.mxu0
        %1815 = vmatprep.mubr.f32.mxu0 %v1213
        %1816 = vmatmul.mubr.f32.gmra.mxu0 %v1212
        %v1817 = vpop.f32.mrf.mxu0
        %v1818 = vadd.f32 %v1593, %v1817
        %v1819 = vpop.f32.mrf.mxu0
        %1820 = vmatprep.mubr.f32.mxu0 %v1222
        %1821 = vmatmul.mubr.f32.gmra.mxu0 %v1221
        %v1822 = vpop.f32.mrf.mxu0
        %v1823 = vadd.f32 %v1598, %v1822
        %v1824 = vpop.f32.mrf.mxu0
        %1825 = vdwg.mxu0
        %1826 = vmatprep.subr.mxu0 0.0
        %1827 = vmatpush1.msra.mxu0 %v1307
        %1828 = vmatprep.subr.mxu0 0.0
        %1829 = vmatpush1.msra.mxu0 %v1306
        %1830 = vmatprep.subr.mxu0 0.0
        %1831 = vmatpush1.msra.mxu0 %v1305
        %1832 = vmatprep.subr.mxu0 0.0
        %1833 = vmatpush1.msra.mxu0 %v1304
        %1834 = vmatprep.subr.mxu0 0.0
        %1835 = vmatpush1.msra.mxu0 %v1303
        %1836 = vmatprep.subr.mxu0 0.0
        %1837 = vmatpush1.msra.mxu0 %v1302
        %1838 = vmatprep.subr.mxu0 0.0
        %1839 = vmatpush1.msra.mxu0 %v1301
        %1840 = vmatprep.subr.mxu0 0.0
        %1841 = vmatpush1.msra.mxu0 %v1300
        %1842 = vmatprep.subr.mxu0 0.0
        %1843 = vmatpush1.msra.mxu0 %v1299
        %1844 = vmatprep.subr.mxu0 0.0
        %1845 = vmatpush1.msra.mxu0 %v1298
        %1846 = vmatprep.subr.mxu0 0.0
        %1847 = vmatpush1.msra.mxu0 %v1297
        %1848 = vmatprep.subr.mxu0 0.0
        %1849 = vmatpush1.msra.mxu0 %v1296
        %1850 = vmatprep.subr.mxu0 0.0
        %1851 = vmatpush1.msra.mxu0 %v1295
        %1852 = vmatprep.subr.mxu0 0.0
        %1853 = vmatpush1.msra.mxu0 %v1294
        %1854 = vmatprep.subr.mxu0 0.0
        %1855 = vmatpush1.msra.mxu0 %v1293
        %1856 = vmatprep.subr.mxu0 0.0
        %1857 = vmatpush1.msra.mxu0 %v1292
        %1858 = vmatprep.subr.mxu0 0.0
        %1859 = vmatpush2.msra.mxu0 %v1323
        %1860 = vmatprep.subr.mxu0 0.0
        %1861 = vmatpush2.msra.mxu0 %v1322
        %1862 = vmatprep.subr.mxu0 0.0
        %1863 = vmatpush2.msra.mxu0 %v1321
        %1864 = vmatprep.subr.mxu0 0.0
        %1865 = vmatpush2.msra.mxu0 %v1320
        %1866 = vmatprep.subr.mxu0 0.0
        %1867 = vmatpush2.msra.mxu0 %v1319
        %1868 = vmatprep.subr.mxu0 0.0
        %1869 = vmatpush2.msra.mxu0 %v1318
        %1870 = vmatprep.subr.mxu0 0.0
        %1871 = vmatpush2.msra.mxu0 %v1317
        %1872 = vmatprep.subr.mxu0 0.0
        %1873 = vmatpush2.msra.mxu0 %v1316
        %1874 = vmatprep.subr.mxu0 0.0
        %1875 = vmatpush2.msra.mxu0 %v1315
        %1876 = vmatprep.subr.mxu0 0.0
        %1877 = vmatpush2.msra.mxu0 %v1314
        %1878 = vmatprep.subr.mxu0 0.0
        %1879 = vmatpush2.msra.mxu0 %v1313
        %1880 = vmatprep.subr.mxu0 0.0
        %1881 = vmatpush2.msra.mxu0 %v1312
        %1882 = vmatprep.subr.mxu0 0.0
        %1883 = vmatpush2.msra.mxu0 %v1311
        %1884 = vmatprep.subr.mxu0 0.0
        %1885 = vmatpush2.msra.mxu0 %v1310
        %1886 = vmatprep.subr.mxu0 0.0
        %1887 = vmatpush2.msra.mxu0 %v1309
        %1888 = vmatprep.subr.mxu0 0.0
        %1889 = vmatpush2.msra.mxu0 %v1308
        %1890 = vmatprep.mubr.f32.mxu0 %v945
        %1891 = vmatmul.mubr.f32.gmra.mxu0 %v944
        %v1892 = vpop.f32.mrf.mxu0
        %v1893 = vadd.f32 %v1668, %v1892
        %v1894 = vpop.f32.mrf.mxu0
        %1895 = vmatprep.mubr.f32.mxu0 %v954
        %1896 = vmatmul.mubr.f32.gmra.mxu0 %v953
        %v1897 = vpop.f32.mrf.mxu0
        %v1898 = vadd.f32 %v1673, %v1897
        %v1899 = vpop.f32.mrf.mxu0
        %1900 = vmatprep.mubr.f32.mxu0 %v963
        %1901 = vmatmul.mubr.f32.gmra.mxu0 %v962
        %v1902 = vpop.f32.mrf.mxu0
        %v1903 = vadd.f32 %v1678, %v1902
        %v1904 = vpop.f32.mrf.mxu0
        %1905 = vmatprep.mubr.f32.mxu0 %v972
        %1906 = vmatmul.mubr.f32.gmra.mxu0 %v971
        %v1907 = vpop.f32.mrf.mxu0
        %v1908 = vadd.f32 %v1683, %v1907
        %v1909 = vpop.f32.mrf.mxu0
        %1910 = vmatprep.mubr.f32.mxu0 %v981
        %1911 = vmatmul.mubr.f32.gmra.mxu0 %v980
        %v1912 = vpop.f32.mrf.mxu0
        %v1913 = vadd.f32 %v1688, %v1912
        %v1914 = vpop.f32.mrf.mxu0
        %1915 = vmatprep.mubr.f32.mxu0 %v990
        %1916 = vmatmul.mubr.f32.gmra.mxu0 %v989
        %v1917 = vpop.f32.mrf.mxu0
        %v1918 = vadd.f32 %v1693, %v1917
        %v1919 = vpop.f32.mrf.mxu0
        %1920 = vmatprep.mubr.f32.mxu0 %v999
        %1921 = vmatmul.mubr.f32.gmra.mxu0 %v998
        %v1922 = vpop.f32.mrf.mxu0
        %v1923 = vadd.f32 %v1698, %v1922
        %v1924 = vpop.f32.mrf.mxu0
        %1925 = vmatprep.mubr.f32.mxu0 %v1008
        %1926 = vmatmul.mubr.f32.gmra.mxu0 %v1007
        %v1927 = vpop.f32.mrf.mxu0
        %v1928 = vadd.f32 %v1703, %v1927
        %v1929 = vpop.f32.mrf.mxu0
        %1930 = vmatprep.mubr.f32.mxu0 %v1017
        %1931 = vmatmul.mubr.f32.gmra.mxu0 %v1016
        %v1932 = vpop.f32.mrf.mxu0
        %v1933 = vadd.f32 %v1708, %v1932
        %v1934 = vpop.f32.mrf.mxu0
        %1935 = vmatprep.mubr.f32.mxu0 %v1026
        %1936 = vmatmul.mubr.f32.gmra.mxu0 %v1025
        %v1937 = vpop.f32.mrf.mxu0
        %v1938 = vadd.f32 %v1713, %v1937
        %v1939 = vpop.f32.mrf.mxu0
        %1940 = vmatprep.mubr.f32.mxu0 %v1035
        %1941 = vmatmul.mubr.f32.gmra.mxu0 %v1034
        %v1942 = vpop.f32.mrf.mxu0
        %v1943 = vadd.f32 %v1718, %v1942
        %v1944 = vpop.f32.mrf.mxu0
        %1945 = vmatprep.mubr.f32.mxu0 %v1044
        %1946 = vmatmul.mubr.f32.gmra.mxu0 %v1043
        %v1947 = vpop.f32.mrf.mxu0
        %v1948 = vadd.f32 %v1723, %v1947
        %v1949 = vpop.f32.mrf.mxu0
        %1950 = vmatprep.mubr.f32.mxu0 %v1053
        %1951 = vmatmul.mubr.f32.gmra.mxu0 %v1052
        %v1952 = vpop.f32.mrf.mxu0
        %v1953 = vadd.f32 %v1728, %v1952
        %v1954 = vpop.f32.mrf.mxu0
        %1955 = vmatprep.mubr.f32.mxu0 %v1062
        %1956 = vmatmul.mubr.f32.gmra.mxu0 %v1061
        %v1957 = vpop.f32.mrf.mxu0
        %v1958 = vadd.f32 %v1733, %v1957
        %v1959 = vpop.f32.mrf.mxu0
        %1960 = vmatprep.mubr.f32.mxu0 %v1071
        %1961 = vmatmul.mubr.f32.gmra.mxu0 %v1070
        %v1962 = vpop.f32.mrf.mxu0
        %v1963 = vadd.f32 %v1738, %v1962
        %v1964 = vpop.f32.mrf.mxu0
        %1965 = vmatprep.mubr.f32.mxu0 %v1080
        %1966 = vmatmul.mubr.f32.gmra.mxu0 %v1079
        %v1967 = vpop.f32.mrf.mxu0
        %v1968 = vadd.f32 %v1743, %v1967
        %v1969 = vpop.f32.mrf.mxu0
        %1970 = vmatprep.mubr.f32.mxu0 %v1089
        %1971 = vmatmul.mubr.f32.gmra.mxu0 %v1088
        %v1972 = vpop.f32.mrf.mxu0
        %v1973 = vadd.f32 %v1748, %v1972
        %v1974 = vpop.f32.mrf.mxu0
        %1975 = vmatprep.mubr.f32.mxu0 %v1098
        %1976 = vmatmul.mubr.f32.gmra.mxu0 %v1097
        %v1977 = vpop.f32.mrf.mxu0
        %v1978 = vadd.f32 %v1753, %v1977
        %v1979 = vpop.f32.mrf.mxu0
        %1980 = vmatprep.mubr.f32.mxu0 %v1107
        %1981 = vmatmul.mubr.f32.gmra.mxu0 %v1106
        %v1982 = vpop.f32.mrf.mxu0
        %v1983 = vadd.f32 %v1758, %v1982
        %v1984 = vpop.f32.mrf.mxu0
        %1985 = vmatprep.mubr.f32.mxu0 %v1116
        %1986 = vmatmul.mubr.f32.gmra.mxu0 %v1115
        %v1987 = vpop.f32.mrf.mxu0
        %v1988 = vadd.f32 %v1763, %v1987
        %v1989 = vpop.f32.mrf.mxu0
        %1990 = vmatprep.mubr.f32.mxu0 %v1125
        %1991 = vmatmul.mubr.f32.gmra.mxu0 %v1124
        %v1992 = vpop.f32.mrf.mxu0
        %v1993 = vadd.f32 %v1768, %v1992
        %v1994 = vpop.f32.mrf.mxu0
        %1995 = vmatprep.mubr.f32.mxu0 %v1134
        %1996 = vmatmul.mubr.f32.gmra.mxu0 %v1133
        %v1997 = vpop.f32.mrf.mxu0
        %v1998 = vadd.f32 %v1773, %v1997
        %v1999 = vpop.f32.mrf.mxu0
        %2000 = vmatprep.mubr.f32.mxu0 %v1143
        %2001 = vmatmul.mubr.f32.gmra.mxu0 %v1142
        %v2002 = vpop.f32.mrf.mxu0
        %v2003 = vadd.f32 %v1778, %v2002
        %v2004 = vpop.f32.mrf.mxu0
        %2005 = vmatprep.mubr.f32.mxu0 %v1152
        %2006 = vmatmul.mubr.f32.gmra.mxu0 %v1151
        %v2007 = vpop.f32.mrf.mxu0
        %v2008 = vadd.f32 %v1783, %v2007
        %v2009 = vpop.f32.mrf.mxu0
        %2010 = vmatprep.mubr.f32.mxu0 %v1161
        %2011 = vmatmul.mubr.f32.gmra.mxu0 %v1160
        %v2012 = vpop.f32.mrf.mxu0
        %v2013 = vadd.f32 %v1788, %v2012
        %v2014 = vpop.f32.mrf.mxu0
        %2015 = vmatprep.mubr.f32.mxu0 %v1170
        %2016 = vmatmul.mubr.f32.gmra.mxu0 %v1169
        %v2017 = vpop.f32.mrf.mxu0
        %v2018 = vadd.f32 %v1793, %v2017
        %v2019 = vpop.f32.mrf.mxu0
        %2020 = vmatprep.mubr.f32.mxu0 %v1179
        %2021 = vmatmul.mubr.f32.gmra.mxu0 %v1178
        %v2022 = vpop.f32.mrf.mxu0
        %v2023 = vadd.f32 %v1798, %v2022
        %v2024 = vpop.f32.mrf.mxu0
        %2025 = vmatprep.mubr.f32.mxu0 %v1188
        %2026 = vmatmul.mubr.f32.gmra.mxu0 %v1187
        %v2027 = vpop.f32.mrf.mxu0
        %v2028 = vadd.f32 %v1803, %v2027
        %v2029 = vpop.f32.mrf.mxu0
        %2030 = vmatprep.mubr.f32.mxu0 %v1197
        %2031 = vmatmul.mubr.f32.gmra.mxu0 %v1196
        %v2032 = vpop.f32.mrf.mxu0
        %v2033 = vadd.f32 %v1808, %v2032
        %v2034 = vpop.f32.mrf.mxu0
        %2035 = vmatprep.mubr.f32.mxu0 %v1206
        %2036 = vmatmul.mubr.f32.gmra.mxu0 %v1205
        %v2037 = vpop.f32.mrf.mxu0
        %v2038 = vadd.f32 %v1813, %v2037
        %v2039 = vpop.f32.mrf.mxu0
        %2040 = vmatprep.mubr.f32.mxu0 %v1215
        %2041 = vmatmul.mubr.f32.gmra.mxu0 %v1214
        %v2042 = vpop.f32.mrf.mxu0
        %v2043 = vadd.f32 %v1818, %v2042
        %v2044 = vpop.f32.mrf.mxu0
        %2045 = vmatprep.mubr.f32.mxu0 %v1224
        %2046 = vmatmul.mubr.f32.gmra.mxu0 %v1223
        %v2047 = vpop.f32.mrf.mxu0
        %v2048 = vadd.f32 %v1823, %v2047
        %v2049 = vpop.f32.mrf.mxu0
        %2050 = vdwg.mxu0
        %2051 = vmatprep.subr.mxu0 0.0
        %2052 = vmatpush1.msra.mxu0 %v1339
        %2053 = vmatprep.subr.mxu0 0.0
        %2054 = vmatpush1.msra.mxu0 %v1338
        %2055 = vmatprep.subr.mxu0 0.0
        %2056 = vmatpush1.msra.mxu0 %v1337
        %2057 = vmatprep.subr.mxu0 0.0
        %2058 = vmatpush1.msra.mxu0 %v1336
        %2059 = vmatprep.subr.mxu0 0.0
        %2060 = vmatpush1.msra.mxu0 %v1335
        %2061 = vmatprep.subr.mxu0 0.0
        %2062 = vmatpush1.msra.mxu0 %v1334
        %2063 = vmatprep.subr.mxu0 0.0
        %2064 = vmatpush1.msra.mxu0 %v1333
        %2065 = vmatprep.subr.mxu0 0.0
        %2066 = vmatpush1.msra.mxu0 %v1332
        %2067 = vmatprep.subr.mxu0 0.0
        %2068 = vmatpush1.msra.mxu0 %v1331
        %2069 = vmatprep.subr.mxu0 0.0
        %2070 = vmatpush1.msra.mxu0 %v1330
        %2071 = vmatprep.subr.mxu0 0.0
        %2072 = vmatpush1.msra.mxu0 %v1329
        %2073 = vmatprep.subr.mxu0 0.0
        %2074 = vmatpush1.msra.mxu0 %v1328
        %2075 = vmatprep.subr.mxu0 0.0
        %2076 = vmatpush1.msra.mxu0 %v1327
        %2077 = vmatprep.subr.mxu0 0.0
        %2078 = vmatpush1.msra.mxu0 %v1326
        %2079 = vmatprep.subr.mxu0 0.0
        %2080 = vmatpush1.msra.mxu0 %v1325
        %2081 = vmatprep.subr.mxu0 0.0
        %2082 = vmatpush1.msra.mxu0 %v1324
        %2083 = vmatprep.subr.mxu0 0.0
        %2084 = vmatpush2.msra.mxu0 %v1355
        %2085 = vmatprep.subr.mxu0 0.0
        %2086 = vmatpush2.msra.mxu0 %v1354
        %2087 = vmatprep.subr.mxu0 0.0
        %2088 = vmatpush2.msra.mxu0 %v1353
        %2089 = vmatprep.subr.mxu0 0.0
        %2090 = vmatpush2.msra.mxu0 %v1352
        %2091 = vmatprep.subr.mxu0 0.0
        %2092 = vmatpush2.msra.mxu0 %v1351
        %2093 = vmatprep.subr.mxu0 0.0
        %2094 = vmatpush2.msra.mxu0 %v1350
        %2095 = vmatprep.subr.mxu0 0.0
        %2096 = vmatpush2.msra.mxu0 %v1349
        %2097 = vmatprep.subr.mxu0 0.0
        %2098 = vmatpush2.msra.mxu0 %v1348
        %2099 = vmatprep.subr.mxu0 0.0
        %2100 = vmatpush2.msra.mxu0 %v1347
        %2101 = vmatprep.subr.mxu0 0.0
        %2102 = vmatpush2.msra.mxu0 %v1346
        %2103 = vmatprep.subr.mxu0 0.0
        %2104 = vmatpush2.msra.mxu0 %v1345
        %2105 = vmatprep.subr.mxu0 0.0
        %2106 = vmatpush2.msra.mxu0 %v1344
        %2107 = vmatprep.subr.mxu0 0.0
        %2108 = vmatpush2.msra.mxu0 %v1343
        %2109 = vmatprep.subr.mxu0 0.0
        %2110 = vmatpush2.msra.mxu0 %v1342
        %2111 = vmatprep.subr.mxu0 0.0
        %2112 = vmatpush2.msra.mxu0 %v1341
        %2113 = vmatprep.subr.mxu0 0.0
        %2114 = vmatpush2.msra.mxu0 %v1340
        %2115 = vmatprep.mubr.f32.mxu0 %v947
        %2116 = vmatmul.mubr.f32.gmra.mxu0 %v946
        %v2117 = vpop.f32.mrf.mxu0
        %v2118 = vadd.f32 %v1893, %v2117
        %v2119 = vpop.f32.mrf.mxu0
        %2120 = vmatprep.mubr.f32.mxu0 %v956
        %2121 = vmatmul.mubr.f32.gmra.mxu0 %v955
        %v2122 = vpop.f32.mrf.mxu0
        %v2123 = vadd.f32 %v1898, %v2122
        %v2124 = vpop.f32.mrf.mxu0
        %2125 = vmatprep.mubr.f32.mxu0 %v965
        %2126 = vmatmul.mubr.f32.gmra.mxu0 %v964
        %v2127 = vpop.f32.mrf.mxu0
        %v2128 = vadd.f32 %v1903, %v2127
        %v2129 = vpop.f32.mrf.mxu0
        %2130 = vmatprep.mubr.f32.mxu0 %v974
        %2131 = vmatmul.mubr.f32.gmra.mxu0 %v973
        %v2132 = vpop.f32.mrf.mxu0
        %v2133 = vadd.f32 %v1908, %v2132
        %v2134 = vpop.f32.mrf.mxu0
        %2135 = vmatprep.mubr.f32.mxu0 %v983
        %2136 = vmatmul.mubr.f32.gmra.mxu0 %v982
        %v2137 = vpop.f32.mrf.mxu0
        %v2138 = vadd.f32 %v1913, %v2137
        %v2139 = vpop.f32.mrf.mxu0
        %2140 = vmatprep.mubr.f32.mxu0 %v992
        %2141 = vmatmul.mubr.f32.gmra.mxu0 %v991
        %v2142 = vpop.f32.mrf.mxu0
        %v2143 = vadd.f32 %v1918, %v2142
        %v2144 = vpop.f32.mrf.mxu0
        %2145 = vmatprep.mubr.f32.mxu0 %v1001
        %2146 = vmatmul.mubr.f32.gmra.mxu0 %v1000
        %v2147 = vpop.f32.mrf.mxu0
        %v2148 = vadd.f32 %v1923, %v2147
        %v2149 = vpop.f32.mrf.mxu0
        %2150 = vmatprep.mubr.f32.mxu0 %v1010
        %2151 = vmatmul.mubr.f32.gmra.mxu0 %v1009
        %v2152 = vpop.f32.mrf.mxu0
        %v2153 = vadd.f32 %v1928, %v2152
        %v2154 = vpop.f32.mrf.mxu0
        %2155 = vmatprep.mubr.f32.mxu0 %v1019
        %2156 = vmatmul.mubr.f32.gmra.mxu0 %v1018
        %v2157 = vpop.f32.mrf.mxu0
        %v2158 = vadd.f32 %v1933, %v2157
        %v2159 = vpop.f32.mrf.mxu0
        %2160 = vmatprep.mubr.f32.mxu0 %v1028
        %2161 = vmatmul.mubr.f32.gmra.mxu0 %v1027
        %v2162 = vpop.f32.mrf.mxu0
        %v2163 = vadd.f32 %v1938, %v2162
        %v2164 = vpop.f32.mrf.mxu0
        %2165 = vmatprep.mubr.f32.mxu0 %v1037
        %2166 = vmatmul.mubr.f32.gmra.mxu0 %v1036
        %v2167 = vpop.f32.mrf.mxu0
        %v2168 = vadd.f32 %v1943, %v2167
        %v2169 = vpop.f32.mrf.mxu0
        %2170 = vmatprep.mubr.f32.mxu0 %v1046
        %2171 = vmatmul.mubr.f32.gmra.mxu0 %v1045
        %v2172 = vpop.f32.mrf.mxu0
        %v2173 = vadd.f32 %v1948, %v2172
        %v2174 = vpop.f32.mrf.mxu0
        %2175 = vmatprep.mubr.f32.mxu0 %v1055
        %2176 = vmatmul.mubr.f32.gmra.mxu0 %v1054
        %v2177 = vpop.f32.mrf.mxu0
        %v2178 = vadd.f32 %v1953, %v2177
        %v2179 = vpop.f32.mrf.mxu0
        %2180 = vmatprep.mubr.f32.mxu0 %v1064
        %2181 = vmatmul.mubr.f32.gmra.mxu0 %v1063
        %v2182 = vpop.f32.mrf.mxu0
        %v2183 = vadd.f32 %v1958, %v2182
        %v2184 = vpop.f32.mrf.mxu0
        %2185 = vmatprep.mubr.f32.mxu0 %v1073
        %2186 = vmatmul.mubr.f32.gmra.mxu0 %v1072
        %v2187 = vpop.f32.mrf.mxu0
        %v2188 = vadd.f32 %v1963, %v2187
        %v2189 = vpop.f32.mrf.mxu0
        %2190 = vmatprep.mubr.f32.mxu0 %v1082
        %2191 = vmatmul.mubr.f32.gmra.mxu0 %v1081
        %v2192 = vpop.f32.mrf.mxu0
        %v2193 = vadd.f32 %v1968, %v2192
        %v2194 = vpop.f32.mrf.mxu0
        %2195 = vmatprep.mubr.f32.mxu0 %v1091
        %2196 = vmatmul.mubr.f32.gmra.mxu0 %v1090
        %v2197 = vpop.f32.mrf.mxu0
        %v2198 = vadd.f32 %v1973, %v2197
        %v2199 = vpop.f32.mrf.mxu0
        %2200 = vmatprep.mubr.f32.mxu0 %v1100
        %2201 = vmatmul.mubr.f32.gmra.mxu0 %v1099
        %v2202 = vpop.f32.mrf.mxu0
        %v2203 = vadd.f32 %v1978, %v2202
        %v2204 = vpop.f32.mrf.mxu0
        %2205 = vmatprep.mubr.f32.mxu0 %v1109
        %2206 = vmatmul.mubr.f32.gmra.mxu0 %v1108
        %v2207 = vpop.f32.mrf.mxu0
        %v2208 = vadd.f32 %v1983, %v2207
        %v2209 = vpop.f32.mrf.mxu0
        %2210 = vmatprep.mubr.f32.mxu0 %v1118
        %2211 = vmatmul.mubr.f32.gmra.mxu0 %v1117
        %v2212 = vpop.f32.mrf.mxu0
        %v2213 = vadd.f32 %v1988, %v2212
        %v2214 = vpop.f32.mrf.mxu0
        %2215 = vmatprep.mubr.f32.mxu0 %v1127
        %2216 = vmatmul.mubr.f32.gmra.mxu0 %v1126
        %v2217 = vpop.f32.mrf.mxu0
        %v2218 = vadd.f32 %v1993, %v2217
        %v2219 = vpop.f32.mrf.mxu0
        %2220 = vmatprep.mubr.f32.mxu0 %v1136
        %2221 = vmatmul.mubr.f32.gmra.mxu0 %v1135
        %v2222 = vpop.f32.mrf.mxu0
        %v2223 = vadd.f32 %v1998, %v2222
        %v2224 = vpop.f32.mrf.mxu0
        %2225 = vmatprep.mubr.f32.mxu0 %v1145
        %2226 = vmatmul.mubr.f32.gmra.mxu0 %v1144
        %v2227 = vpop.f32.mrf.mxu0
        %v2228 = vadd.f32 %v2003, %v2227
        %v2229 = vpop.f32.mrf.mxu0
        %2230 = vmatprep.mubr.f32.mxu0 %v1154
        %2231 = vmatmul.mubr.f32.gmra.mxu0 %v1153
        %v2232 = vpop.f32.mrf.mxu0
        %v2233 = vadd.f32 %v2008, %v2232
        %v2234 = vpop.f32.mrf.mxu0
        %2235 = vmatprep.mubr.f32.mxu0 %v1163
        %2236 = vmatmul.mubr.f32.gmra.mxu0 %v1162
        %v2237 = vpop.f32.mrf.mxu0
        %v2238 = vadd.f32 %v2013, %v2237
        %v2239 = vpop.f32.mrf.mxu0
        %2240 = vmatprep.mubr.f32.mxu0 %v1172
        %2241 = vmatmul.mubr.f32.gmra.mxu0 %v1171
        %v2242 = vpop.f32.mrf.mxu0
        %v2243 = vadd.f32 %v2018, %v2242
        %v2244 = vpop.f32.mrf.mxu0
        %2245 = vmatprep.mubr.f32.mxu0 %v1181
        %2246 = vmatmul.mubr.f32.gmra.mxu0 %v1180
        %v2247 = vpop.f32.mrf.mxu0
        %v2248 = vadd.f32 %v2023, %v2247
        %v2249 = vpop.f32.mrf.mxu0
        %2250 = vmatprep.mubr.f32.mxu0 %v1190
        %2251 = vmatmul.mubr.f32.gmra.mxu0 %v1189
        %v2252 = vpop.f32.mrf.mxu0
        %v2253 = vadd.f32 %v2028, %v2252
        %v2254 = vpop.f32.mrf.mxu0
        %2255 = vmatprep.mubr.f32.mxu0 %v1199
        %2256 = vmatmul.mubr.f32.gmra.mxu0 %v1198
        %v2257 = vpop.f32.mrf.mxu0
        %v2258 = vadd.f32 %v2033, %v2257
        %v2259 = vpop.f32.mrf.mxu0
        %2260 = vmatprep.mubr.f32.mxu0 %v1208
        %2261 = vmatmul.mubr.f32.gmra.mxu0 %v1207
        %v2262 = vpop.f32.mrf.mxu0
        %v2263 = vadd.f32 %v2038, %v2262
        %v2264 = vpop.f32.mrf.mxu0
        %2265 = vmatprep.mubr.f32.mxu0 %v1217
        %2266 = vmatmul.mubr.f32.gmra.mxu0 %v1216
        %v2267 = vpop.f32.mrf.mxu0
        %v2268 = vadd.f32 %v2043, %v2267
        %v2269 = vpop.f32.mrf.mxu0
        %2270 = vmatprep.mubr.f32.mxu0 %v1226
        %2271 = vmatmul.mubr.f32.gmra.mxu0 %v1225
        %v2272 = vpop.f32.mrf.mxu0
        %v2273 = vadd.f32 %v2048, %v2272
        %v2274 = vpop.f32.mrf.mxu0
        %2275 = vdwg.mxu0
        %2276 = vmatprep.subr.mxu0 0.0
        %2277 = vmatpush1.msra.mxu0 %v1371
        %2278 = vmatprep.subr.mxu0 0.0
        %2279 = vmatpush1.msra.mxu0 %v1370
        %2280 = vmatprep.subr.mxu0 0.0
        %2281 = vmatpush1.msra.mxu0 %v1369
        %2282 = vmatprep.subr.mxu0 0.0
        %2283 = vmatpush1.msra.mxu0 %v1368
        %2284 = vmatprep.subr.mxu0 0.0
        %2285 = vmatpush1.msra.mxu0 %v1367
        %2286 = vmatprep.subr.mxu0 0.0
        %2287 = vmatpush1.msra.mxu0 %v1366
        %2288 = vmatprep.subr.mxu0 0.0
        %2289 = vmatpush1.msra.mxu0 %v1365
        %2290 = vmatprep.subr.mxu0 0.0
        %2291 = vmatpush1.msra.mxu0 %v1364
        %2292 = vmatprep.subr.mxu0 0.0
        %2293 = vmatpush1.msra.mxu0 %v1363
        %2294 = vmatprep.subr.mxu0 0.0
        %2295 = vmatpush1.msra.mxu0 %v1362
        %2296 = vmatprep.subr.mxu0 0.0
        %2297 = vmatpush1.msra.mxu0 %v1361
        %2298 = vmatprep.subr.mxu0 0.0
        %2299 = vmatpush1.msra.mxu0 %v1360
        %2300 = vmatprep.subr.mxu0 0.0
        %2301 = vmatpush1.msra.mxu0 %v1359
        %2302 = vmatprep.subr.mxu0 0.0
        %2303 = vmatpush1.msra.mxu0 %v1358
        %2304 = vmatprep.subr.mxu0 0.0
        %2305 = vmatpush1.msra.mxu0 %v1357
        %2306 = vmatprep.subr.mxu0 0.0
        %2307 = vmatpush1.msra.mxu0 %v1356
        %2308 = vmatprep.subr.mxu0 0.0
        %2309 = vmatpush2.msra.mxu0 0.0
        %2310 = vmatprep.subr.mxu0 0.0
        %2311 = vmatpush2.msra.mxu0 0.0
        %2312 = vmatprep.subr.mxu0 0.0
        %2313 = vmatpush2.msra.mxu0 0.0
        %2314 = vmatprep.subr.mxu0 0.0
        %2315 = vmatpush2.msra.mxu0 0.0
        %2316 = vmatprep.subr.mxu0 0.0
        %2317 = vmatpush2.msra.mxu0 0.0
        %2318 = vmatprep.subr.mxu0 0.0
        %2319 = vmatpush2.msra.mxu0 0.0
        %2320 = vmatprep.subr.mxu0 0.0
        %2321 = vmatpush2.msra.mxu0 0.0
        %2322 = vmatprep.subr.mxu0 0.0
        %2323 = vmatpush2.msra.mxu0 0.0
        %2324 = vmatprep.subr.mxu0 0.0
        %2325 = vmatpush2.msra.mxu0 0.0
        %2326 = vmatprep.subr.mxu0 0.0
        %2327 = vmatpush2.msra.mxu0 0.0
        %2328 = vmatprep.subr.mxu0 0.0
        %2329 = vmatpush2.msra.mxu0 0.0
        %2330 = vmatprep.subr.mxu0 0.0
        %2331 = vmatpush2.msra.mxu0 0.0
        %2332 = vmatprep.subr.mxu0 0.0
        %2333 = vmatpush2.msra.mxu0 0.0
        %2334 = vmatprep.subr.mxu0 0.0
        %2335 = vmatpush2.msra.mxu0 0.0
        %2336 = vmatprep.subr.mxu0 0.0
        %2337 = vmatpush2.msra.mxu0 0.0
        %2338 = vmatprep.subr.mxu0 0.0
        %2339 = vmatpush2.msra.mxu0 0.0
        %2340 = vmatprep.mubr.f32.mxu0 0.0
        %2341 = vmatmul.mubr.f32.gmra.mxu0 %v948
        %v2342 = vpop.f32.mrf.mxu0
        %v2343 = vadd.f32 %v2118, %v2342
        %v2344 = vpop.f32.mrf.mxu0
        %2345 = vmatprep.mubr.f32.mxu0 0.0
        %2346 = vmatmul.mubr.f32.gmra.mxu0 %v957
        %v2347 = vpop.f32.mrf.mxu0
        %v2348 = vadd.f32 %v2123, %v2347
        %v2349 = vpop.f32.mrf.mxu0
        %2350 = vmatprep.mubr.f32.mxu0 0.0
        %2351 = vmatmul.mubr.f32.gmra.mxu0 %v966
        %v2352 = vpop.f32.mrf.mxu0
        %v2353 = vadd.f32 %v2128, %v2352
        %v2354 = vpop.f32.mrf.mxu0
        %2355 = vmatprep.mubr.f32.mxu0 0.0
        %2356 = vmatmul.mubr.f32.gmra.mxu0 %v975
        %v2357 = vpop.f32.mrf.mxu0
        %v2358 = vadd.f32 %v2133, %v2357
        %v2359 = vpop.f32.mrf.mxu0
        %2360 = vmatprep.mubr.f32.mxu0 0.0
        %2361 = vmatmul.mubr.f32.gmra.mxu0 %v984
        %v2362 = vpop.f32.mrf.mxu0
        %v2363 = vadd.f32 %v2138, %v2362
        %v2364 = vpop.f32.mrf.mxu0
        %2365 = vmatprep.mubr.f32.mxu0 0.0
        %2366 = vmatmul.mubr.f32.gmra.mxu0 %v993
        %v2367 = vpop.f32.mrf.mxu0
        %v2368 = vadd.f32 %v2143, %v2367
        %v2369 = vpop.f32.mrf.mxu0
        %2370 = vmatprep.mubr.f32.mxu0 0.0
        %2371 = vmatmul.mubr.f32.gmra.mxu0 %v1002
        %v2372 = vpop.f32.mrf.mxu0
        %v2373 = vadd.f32 %v2148, %v2372
        %v2374 = vpop.f32.mrf.mxu0
        %2375 = vmatprep.mubr.f32.mxu0 0.0
        %2376 = vmatmul.mubr.f32.gmra.mxu0 %v1011
        %v2377 = vpop.f32.mrf.mxu0
        %v2378 = vadd.f32 %v2153, %v2377
        %v2379 = vpop.f32.mrf.mxu0
        %2380 = vmatprep.mubr.f32.mxu0 0.0
        %2381 = vmatmul.mubr.f32.gmra.mxu0 %v1020
        %v2382 = vpop.f32.mrf.mxu0
        %v2383 = vadd.f32 %v2158, %v2382
        %v2384 = vpop.f32.mrf.mxu0
        %2385 = vmatprep.mubr.f32.mxu0 0.0
        %2386 = vmatmul.mubr.f32.gmra.mxu0 %v1029
        %v2387 = vpop.f32.mrf.mxu0
        %v2388 = vadd.f32 %v2163, %v2387
        %v2389 = vpop.f32.mrf.mxu0
        %2390 = vmatprep.mubr.f32.mxu0 0.0
        %2391 = vmatmul.mubr.f32.gmra.mxu0 %v1038
        %v2392 = vpop.f32.mrf.mxu0
        %v2393 = vadd.f32 %v2168, %v2392
        %v2394 = vpop.f32.mrf.mxu0
        %2395 = vmatprep.mubr.f32.mxu0 0.0
        %2396 = vmatmul.mubr.f32.gmra.mxu0 %v1047
        %v2397 = vpop.f32.mrf.mxu0
        %v2398 = vadd.f32 %v2173, %v2397
        %v2399 = vpop.f32.mrf.mxu0
        %2400 = vmatprep.mubr.f32.mxu0 0.0
        %2401 = vmatmul.mubr.f32.gmra.mxu0 %v1056
        %v2402 = vpop.f32.mrf.mxu0
        %v2403 = vadd.f32 %v2178, %v2402
        %v2404 = vpop.f32.mrf.mxu0
        %2405 = vmatprep.mubr.f32.mxu0 0.0
        %2406 = vmatmul.mubr.f32.gmra.mxu0 %v1065
        %v2407 = vpop.f32.mrf.mxu0
        %v2408 = vadd.f32 %v2183, %v2407
        %v2409 = vpop.f32.mrf.mxu0
        %2410 = vmatprep.mubr.f32.mxu0 0.0
        %2411 = vmatmul.mubr.f32.gmra.mxu0 %v1074
        %v2412 = vpop.f32.mrf.mxu0
        %v2413 = vadd.f32 %v2188, %v2412
        %v2414 = vpop.f32.mrf.mxu0
        %2415 = vmatprep.mubr.f32.mxu0 0.0
        %2416 = vmatmul.mubr.f32.gmra.mxu0 %v1083
        %v2417 = vpop.f32.mrf.mxu0
        %v2418 = vadd.f32 %v2193, %v2417
        %v2419 = vpop.f32.mrf.mxu0
        %2420 = vmatprep.mubr.f32.mxu0 0.0
        %2421 = vmatmul.mubr.f32.gmra.mxu0 %v1092
        %v2422 = vpop.f32.mrf.mxu0
        %v2423 = vadd.f32 %v2198, %v2422
        %v2424 = vpop.f32.mrf.mxu0
        %2425 = vmatprep.mubr.f32.mxu0 0.0
        %2426 = vmatmul.mubr.f32.gmra.mxu0 %v1101
        %v2427 = vpop.f32.mrf.mxu0
        %v2428 = vadd.f32 %v2203, %v2427
        %v2429 = vpop.f32.mrf.mxu0
        %2430 = vmatprep.mubr.f32.mxu0 0.0
        %2431 = vmatmul.mubr.f32.gmra.mxu0 %v1110
        %v2432 = vpop.f32.mrf.mxu0
        %v2433 = vadd.f32 %v2208, %v2432
        %v2434 = vpop.f32.mrf.mxu0
        %2435 = vmatprep.mubr.f32.mxu0 0.0
        %2436 = vmatmul.mubr.f32.gmra.mxu0 %v1119
        %v2437 = vpop.f32.mrf.mxu0
        %v2438 = vadd.f32 %v2213, %v2437
        %v2439 = vpop.f32.mrf.mxu0
        %2440 = vmatprep.mubr.f32.mxu0 0.0
        %2441 = vmatmul.mubr.f32.gmra.mxu0 %v1128
        %v2442 = vpop.f32.mrf.mxu0
        %v2443 = vadd.f32 %v2218, %v2442
        %v2444 = vpop.f32.mrf.mxu0
        %2445 = vmatprep.mubr.f32.mxu0 0.0
        %2446 = vmatmul.mubr.f32.gmra.mxu0 %v1137
        %v2447 = vpop.f32.mrf.mxu0
        %v2448 = vadd.f32 %v2223, %v2447
        %v2449 = vpop.f32.mrf.mxu0
        %2450 = vmatprep.mubr.f32.mxu0 0.0
        %2451 = vmatmul.mubr.f32.gmra.mxu0 %v1146
        %v2452 = vpop.f32.mrf.mxu0
        %v2453 = vadd.f32 %v2228, %v2452
        %v2454 = vpop.f32.mrf.mxu0
        %2455 = vmatprep.mubr.f32.mxu0 0.0
        %2456 = vmatmul.mubr.f32.gmra.mxu0 %v1155
        %v2457 = vpop.f32.mrf.mxu0
        %v2458 = vadd.f32 %v2233, %v2457
        %v2459 = vpop.f32.mrf.mxu0
        %2460 = vmatprep.mubr.f32.mxu0 0.0
        %2461 = vmatmul.mubr.f32.gmra.mxu0 %v1164
        %v2462 = vpop.f32.mrf.mxu0
        %v2463 = vadd.f32 %v2238, %v2462
        %v2464 = vpop.f32.mrf.mxu0
        %2465 = vmatprep.mubr.f32.mxu0 0.0
        %2466 = vmatmul.mubr.f32.gmra.mxu0 %v1173
        %v2467 = vpop.f32.mrf.mxu0
        %v2468 = vadd.f32 %v2243, %v2467
        %v2469 = vpop.f32.mrf.mxu0
        %2470 = vmatprep.mubr.f32.mxu0 0.0
        %2471 = vmatmul.mubr.f32.gmra.mxu0 %v1182
        %v2472 = vpop.f32.mrf.mxu0
        %v2473 = vadd.f32 %v2248, %v2472
        %v2474 = vpop.f32.mrf.mxu0
        %2475 = vmatprep.mubr.f32.mxu0 0.0
        %2476 = vmatmul.mubr.f32.gmra.mxu0 %v1191
        %v2477 = vpop.f32.mrf.mxu0
        %v2478 = vadd.f32 %v2253, %v2477
        %v2479 = vpop.f32.mrf.mxu0
        %2480 = vmatprep.mubr.f32.mxu0 0.0
        %2481 = vmatmul.mubr.f32.gmra.mxu0 %v1200
        %v2482 = vpop.f32.mrf.mxu0
        %v2483 = vadd.f32 %v2258, %v2482
        %v2484 = vpop.f32.mrf.mxu0
        %2485 = vmatprep.mubr.f32.mxu0 0.0
        %2486 = vmatmul.mubr.f32.gmra.mxu0 %v1209
        %v2487 = vpop.f32.mrf.mxu0
        %v2488 = vadd.f32 %v2263, %v2487
        %v2489 = vpop.f32.mrf.mxu0
        %2490 = vmatprep.mubr.f32.mxu0 0.0
        %2491 = vmatmul.mubr.f32.gmra.mxu0 %v1218
        %v2492 = vpop.f32.mrf.mxu0
        %v2493 = vadd.f32 %v2268, %v2492
        %v2494 = vpop.f32.mrf.mxu0
        %2495 = vmatprep.mubr.f32.mxu0 0.0
        %2496 = vmatmul.mubr.f32.gmra.mxu0 %v1227
        %v2497 = vpop.f32.mrf.mxu0
        %v2498 = vadd.f32 %v2273, %v2497
        %v2499 = vpop.f32.mrf.mxu0
        %2500 = vdwg.mxu0
        %v2501 = vadd.f32 %v2343, %v2348
        %v2502 = vadd.f32 %v2501, %v2353
        %v2503 = vadd.f32 %v2502, %v2358
        %v2504 = vadd.f32 %v2503, %v2363
        %v2505 = vadd.f32 %v2504, %v2368
        %v2506 = vadd.f32 %v2505, %v2373
        %v2507 = vadd.f32 %v2506, %v2378
        %v2508 = vadd.f32 %v2507, %v2383
        %v2509 = vadd.f32 %v2508, %v2388
        %v2510 = vadd.f32 %v2509, %v2393
        %v2511 = vadd.f32 %v2510, %v2398
        %v2512 = vadd.f32 %v2511, %v2403
        %v2513 = vadd.f32 %v2512, %v2408
        %v2514 = vadd.f32 %v2513, %v2413
        %v2515 = vadd.f32 %v2514, %v2418
        %v2516 = vadd.f32 %v2515, %v2423
        %v2517 = vadd.f32 %v2516, %v2428
        %v2518 = vadd.f32 %v2517, %v2433
        %v2519 = vadd.f32 %v2518, %v2438
        %v2520 = vadd.f32 %v2519, %v2443
        %v2521 = vadd.f32 %v2520, %v2448
        %v2522 = vadd.f32 %v2521, %v2453
        %v2523 = vadd.f32 %v2522, %v2458
        %v2524 = vadd.f32 %v2523, %v2463
        %v2525 = vadd.f32 %v2524, %v2468
        %v2526 = vadd.f32 %v2525, %v2473
        %v2527 = vadd.f32 %v2526, %v2478
        %v2528 = vadd.f32 %v2527, %v2483
        %v2529 = vadd.f32 %v2528, %v2488
        %v2530 = vadd.f32 %v2529, %v2493
        %v2531 = vadd.f32 %v2530, %v2498
        %v2532 = vrot.slane %v2531, 4
        %v2533 = vadd.f32 %v2531, %v2532
        %v2534 = vrot.slane %v2533, 2
        %v2535 = vadd.f32 %v2533, %v2534
        %v2536 = vrot.slane %v2535, 1
        %v2537 = vadd.f32 %v2535, %v2536
        %v2538 = vrcp.pop 256.0
        %v2539 = vmul.f32 %v2537, %v2538
        %v2540 = vsub.f32 %v2343, %v2539
        %v2541 = vsub.f32 %v2348, %v2539
        %v2542 = vsub.f32 %v2353, %v2539
        %v2543 = vsub.f32 %v2358, %v2539
        %v2544 = vsub.f32 %v2363, %v2539
        %v2545 = vsub.f32 %v2368, %v2539
        %v2546 = vsub.f32 %v2373, %v2539
        %v2547 = vsub.f32 %v2378, %v2539
        %v2548 = vsub.f32 %v2383, %v2539
        %v2549 = vsub.f32 %v2388, %v2539
        %v2550 = vsub.f32 %v2393, %v2539
        %v2551 = vsub.f32 %v2398, %v2539
        %v2552 = vsub.f32 %v2403, %v2539
        %v2553 = vsub.f32 %v2408, %v2539
        %v2554 = vsub.f32 %v2413, %v2539
        %v2555 = vsub.f32 %v2418, %v2539
        %v2556 = vsub.f32 %v2423, %v2539
        %v2557 = vsub.f32 %v2428, %v2539
        %v2558 = vsub.f32 %v2433, %v2539
        %v2559 = vsub.f32 %v2438, %v2539
        %v2560 = vsub.f32 %v2443, %v2539
        %v2561 = vsub.f32 %v2448, %v2539
        %v2562 = vsub.f32 %v2453, %v2539
        %v2563 = vsub.f32 %v2458, %v2539
        %v2564 = vsub.f32 %v2463, %v2539
        %v2565 = vsub.f32 %v2468, %v2539
        %v2566 = vsub.f32 %v2473, %v2539
        %v2567 = vsub.f32 %v2478, %v2539
        %v2568 = vsub.f32 %v2483, %v2539
        %v2569 = vsub.f32 %v2488, %v2539
        %v2570 = vsub.f32 %v2493, %v2539
        %v2571 = vsub.f32 %v2498, %v2539
        %v2572 = vmul.f32 %v2540, %v2540
        %v2573 = vmul.f32 %v2541, %v2541
        %v2574 = vmul.f32 %v2542, %v2542
        %v2575 = vmul.f32 %v2543, %v2543
        %v2576 = vmul.f32 %v2544, %v2544
        %v2577 = vmul.f32 %v2545, %v2545
        %v2578 = vmul.f32 %v2546, %v2546
        %v2579 = vmul.f32 %v2547, %v2547
        %v2580 = vmul.f32 %v2548, %v2548
        %v2581 = vmul.f32 %v2549, %v2549
        %v2582 = vmul.f32 %v2550, %v2550
        %v2583 = vmul.f32 %v2551, %v2551
        %v2584 = vmul.f32 %v2552, %v2552
        %v2585 = vmul.f32 %v2553, %v2553
        %v2586 = vmul.f32 %v2554, %v2554
        %v2587 = vmul.f32 %v2555, %v2555
        %v2588 = vmul.f32 %v2556, %v2556
        %v2589 = vmul.f32 %v2557, %v2557
        %v2590 = vmul.f32 %v2558, %v2558
        %v2591 = vmul.f32 %v2559, %v2559
        %v2592 = vmul.f32 %v2560, %v2560
        %v2593 = vmul.f32 %v2561, %v2561
        %v2594 = vmul.f32 %v2562, %v2562
        %v2595 = vmul.f32 %v2563, %v2563
        %v2596 = vmul.f32 %v2564, %v2564
        %v2597 = vmul.f32 %v2565, %v2565
        %v2598 = vmul.f32 %v2566, %v2566
        %v2599 = vmul.f32 %v2567, %v2567
        %v2600 = vmul.f32 %v2568, %v2568
        %v2601 = vmul.f32 %v2569, %v2569
        %v2602 = vmul.f32 %v2570, %v2570
        %v2603 = vmul.f32 %v2571, %v2571
        %v2604 = vadd.f32 %v2572, %v2573
        %v2605 = vadd.f32 %v2604, %v2574
        %v2606 = vadd.f32 %v2605, %v2575
        %v2607 = vadd.f32 %v2606, %v2576
        %v2608 = vadd.f32 %v2607, %v2577
        %v2609 = vadd.f32 %v2608, %v2578
        %v2610 = vadd.f32 %v2609, %v2579
        %v2611 = vadd.f32 %v2610, %v2580
        %v2612 = vadd.f32 %v2611, %v2581
        %v2613 = vadd.f32 %v2612, %v2582
        %v2614 = vadd.f32 %v2613, %v2583
        %v2615 = vadd.f32 %v2614, %v2584
        %v2616 = vadd.f32 %v2615, %v2585
        %v2617 = vadd.f32 %v2616, %v2586
        %v2618 = vadd.f32 %v2617, %v2587
        %v2619 = vadd.f32 %v2618, %v2588
        %v2620 = vadd.f32 %v2619, %v2589
        %v2621 = vadd.f32 %v2620, %v2590
        %v2622 = vadd.f32 %v2621, %v2591
        %v2623 = vadd.f32 %v2622, %v2592
        %v2624 = vadd.f32 %v2623, %v2593
        %v2625 = vadd.f32 %v2624, %v2594
        %v2626 = vadd.f32 %v2625, %v2595
        %v2627 = vadd.f32 %v2626, %v2596
        %v2628 = vadd.f32 %v2627, %v2597
        %v2629 = vadd.f32 %v2628, %v2598
        %v2630 = vadd.f32 %v2629, %v2599
        %v2631 = vadd.f32 %v2630, %v2600
        %v2632 = vadd.f32 %v2631, %v2601
        %v2633 = vadd.f32 %v2632, %v2602
        %v2634 = vadd.f32 %v2633, %v2603
        %v2635 = vrot.slane %v2634, 4
        %v2636 = vadd.f32 %v2634, %v2635
        %v2637 = vrot.slane %v2636, 2
        %v2638 = vadd.f32 %v2636, %v2637
        %v2639 = vrot.slane %v2638, 1
        %v2640 = vadd.f32 %v2638, %v2639
        %v2641 = vmul.f32 %v2640, %v2538
        %v2642 = vadd.f32 %v2641, 1e-05
        %v2643 = vrsqrt.pop %v2642
        %v2644 = vmul.f32 %v2540, %v2643
        %v2645 = vmul.f32 %v2541, %v2643
        %v2646 = vmul.f32 %v2542, %v2643
        %v2647 = vmul.f32 %v2543, %v2643
        %v2648 = vmul.f32 %v2544, %v2643
        %v2649 = vmul.f32 %v2545, %v2643
        %v2650 = vmul.f32 %v2546, %v2643
        %v2651 = vmul.f32 %v2547, %v2643
        %v2652 = vmul.f32 %v2548, %v2643
        %v2653 = vmul.f32 %v2549, %v2643
        %v2654 = vmul.f32 %v2550, %v2643
        %v2655 = vmul.f32 %v2551, %v2643
        %v2656 = vmul.f32 %v2552, %v2643
        %v2657 = vmul.f32 %v2553, %v2643
        %v2658 = vmul.f32 %v2554, %v2643
        %v2659 = vmul.f32 %v2555, %v2643
        %v2660 = vmul.f32 %v2556, %v2643
        %v2661 = vmul.f32 %v2557, %v2643
        %v2662 = vmul.f32 %v2558, %v2643
        %v2663 = vmul.f32 %v2559, %v2643
        %v2664 = vmul.f32 %v2560, %v2643
        %v2665 = vmul.f32 %v2561, %v2643
        %v2666 = vmul.f32 %v2562, %v2643
        %v2667 = vmul.f32 %v2563, %v2643
        %v2668 = vmul.f32 %v2564, %v2643
        %v2669 = vmul.f32 %v2565, %v2643
        %v2670 = vmul.f32 %v2566, %v2643
        %v2671 = vmul.f32 %v2567, %v2643
        %v2672 = vmul.f32 %v2568, %v2643
        %v2673 = vmul.f32 %v2569, %v2643
        %v2674 = vmul.f32 %v2570, %v2643
        %v2675 = vmul.f32 %v2571, %v2643
        %v2676 = vlaneseq
        %v2677 = vshrl.u32 %v2676, 7
        %v2678 = vsub.s32 1, %v2677
        %v2679 = vrot.slane %v330, %v2678
        %v2680 = vmul.f32 %v2644, %v2679
        %v2681 = vmul.f32 %v2645, %v2679
        %v2682 = vmul.f32 %v2646, %v2679
        %v2683 = vmul.f32 %v2647, %v2679
        %v2684 = vmul.f32 %v2648, %v2679
        %v2685 = vmul.f32 %v2649, %v2679
        %v2686 = vmul.f32 %v2650, %v2679
        %v2687 = vmul.f32 %v2651, %v2679
        %v2688 = vmul.f32 %v2652, %v2679
        %v2689 = vmul.f32 %v2653, %v2679
        %v2690 = vmul.f32 %v2654, %v2679
        %v2691 = vmul.f32 %v2655, %v2679
        %v2692 = vmul.f32 %v2656, %v2679
        %v2693 = vmul.f32 %v2657, %v2679
        %v2694 = vmul.f32 %v2658, %v2679
        %v2695 = vmul.f32 %v2659, %v2679
        %v2696 = vmul.f32 %v2660, %v2679
        %v2697 = vmul.f32 %v2661, %v2679
        %v2698 = vmul.f32 %v2662, %v2679
        %v2699 = vmul.f32 %v2663, %v2679
        %v2700 = vmul.f32 %v2664, %v2679
        %v2701 = vmul.f32 %v2665, %v2679
        %v2702 = vmul.f32 %v2666, %v2679
        %v2703 = vmul.f32 %v2667, %v2679
        %v2704 = vmul.f32 %v2668, %v2679
        %v2705 = vmul.f32 %v2669, %v2679
        %v2706 = vmul.f32 %v2670, %v2679
        %v2707 = vmul.f32 %v2671, %v2679
        %v2708 = vmul.f32 %v2672, %v2679
        %v2709 = vmul.f32 %v2673, %v2679
        %v2710 = vmul.f32 %v2674, %v2679
        %v2711 = vmul.f32 %v2675, %v2679
        %v2712 = vlaneseq
        %v2713 = vshrl.u32 %v2712, 7
        %v2714 = vsub.s32 2, %v2713
        %v2715 = vrot.slane %v330, %v2714
        %v2716 = vadd.f32 %v2680, %v2715
        %v2717 = vadd.f32 %v2681, %v2715
        %v2718 = vadd.f32 %v2682, %v2715
        %v2719 = vadd.f32 %v2683, %v2715
        %v2720 = vadd.f32 %v2684, %v2715
        %v2721 = vadd.f32 %v2685, %v2715
        %v2722 = vadd.f32 %v2686, %v2715
        %v2723 = vadd.f32 %v2687, %v2715
        %v2724 = vadd.f32 %v2688, %v2715
        %v2725 = vadd.f32 %v2689, %v2715
        %v2726 = vadd.f32 %v2690, %v2715
        %v2727 = vadd.f32 %v2691, %v2715
        %v2728 = vadd.f32 %v2692, %v2715
        %v2729 = vadd.f32 %v2693, %v2715
        %v2730 = vadd.f32 %v2694, %v2715
        %v2731 = vadd.f32 %v2695, %v2715
        %v2732 = vadd.f32 %v2696, %v2715
        %v2733 = vadd.f32 %v2697, %v2715
        %v2734 = vadd.f32 %v2698, %v2715
        %v2735 = vadd.f32 %v2699, %v2715
        %v2736 = vadd.f32 %v2700, %v2715
        %v2737 = vadd.f32 %v2701, %v2715
        %v2738 = vadd.f32 %v2702, %v2715
        %v2739 = vadd.f32 %v2703, %v2715
        %v2740 = vadd.f32 %v2704, %v2715
        %v2741 = vadd.f32 %v2705, %v2715
        %v2742 = vadd.f32 %v2706, %v2715
        %v2743 = vadd.f32 %v2707, %v2715
        %v2744 = vadd.f32 %v2708, %v2715
        %v2745 = vadd.f32 %v2709, %v2715
        %v2746 = vadd.f32 %v2710, %v2715
        %v2747 = vadd.f32 %v2711, %v2715
        %v2748 = vsub.f32 %v2716, %v2343
        %v2749 = vsub.f32 %v2717, %v2348
        %v2750 = vsub.f32 %v2718, %v2353
        %v2751 = vsub.f32 %v2719, %v2358
        %v2752 = vsub.f32 %v2720, %v2363
        %v2753 = vsub.f32 %v2721, %v2368
        %v2754 = vsub.f32 %v2722, %v2373
        %v2755 = vsub.f32 %v2723, %v2378
        %v2756 = vsub.f32 %v2724, %v2383
        %v2757 = vsub.f32 %v2725, %v2388
        %v2758 = vsub.f32 %v2726, %v2393
        %v2759 = vsub.f32 %v2727, %v2398
        %v2760 = vsub.f32 %v2728, %v2403
        %v2761 = vsub.f32 %v2729, %v2408
        %v2762 = vsub.f32 %v2730, %v2413
        %v2763 = vsub.f32 %v2731, %v2418
        %v2764 = vsub.f32 %v2732, %v2423
        %v2765 = vsub.f32 %v2733, %v2428
        %v2766 = vsub.f32 %v2734, %v2433
        %v2767 = vsub.f32 %v2735, %v2438
        %v2768 = vsub.f32 %v2736, %v2443
        %v2769 = vsub.f32 %v2737, %v2448
        %v2770 = vsub.f32 %v2738, %v2453
        %v2771 = vsub.f32 %v2739, %v2458
        %v2772 = vsub.f32 %v2740, %v2463
        %v2773 = vsub.f32 %v2741, %v2468
        %v2774 = vsub.f32 %v2742, %v2473
        %v2775 = vsub.f32 %v2743, %v2478
        %v2776 = vsub.f32 %v2744, %v2483
        %v2777 = vsub.f32 %v2745, %v2488
        %v2778 = vsub.f32 %v2746, %v2493
        %v2779 = vsub.f32 %v2747, %v2498
        %v2780 = vlaneseq
        %v2781 = vshrl.u32 %v2780, 7
        %v2782 = vsub.s32 3, %v2781
        %v2783 = vrot.slane %v330, %v2782
        %v2784 = vmul.f32 %v2783, %v2748
        %v2785 = vmul.f32 %v2783, %v2749
        %v2786 = vmul.f32 %v2783, %v2750
        %v2787 = vmul.f32 %v2783, %v2751
        %v2788 = vmul.f32 %v2783, %v2752
        %v2789 = vmul.f32 %v2783, %v2753
        %v2790 = vmul.f32 %v2783, %v2754
        %v2791 = vmul.f32 %v2783, %v2755
        %v2792 = vmul.f32 %v2783, %v2756
        %v2793 = vmul.f32 %v2783, %v2757
        %v2794 = vmul.f32 %v2783, %v2758
        %v2795 = vmul.f32 %v2783, %v2759
        %v2796 = vmul.f32 %v2783, %v2760
        %v2797 = vmul.f32 %v2783, %v2761
        %v2798 = vmul.f32 %v2783, %v2762
        %v2799 = vmul.f32 %v2783, %v2763
        %v2800 = vmul.f32 %v2783, %v2764
        %v2801 = vmul.f32 %v2783, %v2765
        %v2802 = vmul.f32 %v2783, %v2766
        %v2803 = vmul.f32 %v2783, %v2767
        %v2804 = vmul.f32 %v2783, %v2768
        %v2805 = vmul.f32 %v2783, %v2769
        %v2806 = vmul.f32 %v2783, %v2770
        %v2807 = vmul.f32 %v2783, %v2771
        %v2808 = vmul.f32 %v2783, %v2772
        %v2809 = vmul.f32 %v2783, %v2773
        %v2810 = vmul.f32 %v2783, %v2774
        %v2811 = vmul.f32 %v2783, %v2775
        %v2812 = vmul.f32 %v2783, %v2776
        %v2813 = vmul.f32 %v2783, %v2777
        %v2814 = vmul.f32 %v2783, %v2778
        %v2815 = vmul.f32 %v2783, %v2779
        %v2816 = vadd.f32 %v2343, %v2784
        %v2817 = vadd.f32 %v2348, %v2785
        %v2818 = vadd.f32 %v2353, %v2786
        %v2819 = vadd.f32 %v2358, %v2787
        %v2820 = vadd.f32 %v2363, %v2788
        %v2821 = vadd.f32 %v2368, %v2789
        %v2822 = vadd.f32 %v2373, %v2790
        %v2823 = vadd.f32 %v2378, %v2791
        %v2824 = vadd.f32 %v2383, %v2792
        %v2825 = vadd.f32 %v2388, %v2793
        %v2826 = vadd.f32 %v2393, %v2794
        %v2827 = vadd.f32 %v2398, %v2795
        %v2828 = vadd.f32 %v2403, %v2796
        %v2829 = vadd.f32 %v2408, %v2797
        %v2830 = vadd.f32 %v2413, %v2798
        %v2831 = vadd.f32 %v2418, %v2799
        %v2832 = vadd.f32 %v2423, %v2800
        %v2833 = vadd.f32 %v2428, %v2801
        %v2834 = vadd.f32 %v2433, %v2802
        %v2835 = vadd.f32 %v2438, %v2803
        %v2836 = vadd.f32 %v2443, %v2804
        %v2837 = vadd.f32 %v2448, %v2805
        %v2838 = vadd.f32 %v2453, %v2806
        %v2839 = vadd.f32 %v2458, %v2807
        %v2840 = vadd.f32 %v2463, %v2808
        %v2841 = vadd.f32 %v2468, %v2809
        %v2842 = vadd.f32 %v2473, %v2810
        %v2843 = vadd.f32 %v2478, %v2811
        %v2844 = vadd.f32 %v2483, %v2812
        %v2845 = vadd.f32 %v2488, %v2813
        %v2846 = vadd.f32 %v2493, %v2814
        %v2847 = vadd.f32 %v2498, %v2815
        %v2848 = vmax.f32 %v2816, 0.0
        %v2849 = vmax.f32 %v2817, 0.0
        %v2850 = vmax.f32 %v2818, 0.0
        %v2851 = vmax.f32 %v2819, 0.0
        %v2852 = vmax.f32 %v2820, 0.0
        %v2853 = vmax.f32 %v2821, 0.0
        %v2854 = vmax.f32 %v2822, 0.0
        %v2855 = vmax.f32 %v2823, 0.0
        %v2856 = vmax.f32 %v2824, 0.0
        %v2857 = vmax.f32 %v2825, 0.0
        %v2858 = vmax.f32 %v2826, 0.0
        %v2859 = vmax.f32 %v2827, 0.0
        %v2860 = vmax.f32 %v2828, 0.0
        %v2861 = vmax.f32 %v2829, 0.0
        %v2862 = vmax.f32 %v2830, 0.0
        %v2863 = vmax.f32 %v2831, 0.0
        %v2864 = vmax.f32 %v2832, 0.0
        %v2865 = vmax.f32 %v2833, 0.0
        %v2866 = vmax.f32 %v2834, 0.0
        %v2867 = vmax.f32 %v2835, 0.0
        %v2868 = vmax.f32 %v2836, 0.0
        %v2869 = vmax.f32 %v2837, 0.0
        %v2870 = vmax.f32 %v2838, 0.0
        %v2871 = vmax.f32 %v2839, 0.0
        %v2872 = vmax.f32 %v2840, 0.0
        %v2873 = vmax.f32 %v2841, 0.0
        %v2874 = vmax.f32 %v2842, 0.0
        %v2875 = vmax.f32 %v2843, 0.0
        %v2876 = vmax.f32 %v2844, 0.0
        %v2877 = vmax.f32 %v2845, 0.0
        %v2878 = vmax.f32 %v2846, 0.0
        %v2879 = vmax.f32 %v2847, 0.0
        %2880 = vst [vmem:[%s265 + $0x1] sm:$0xff] %v2848
        %2881 = vst [vmem:[%s265 + $0x9] sm:$0xff] %v2849
        %2882 = vst [vmem:[%s265 + $0x19] sm:$0xff] %v2850
        %2883 = vst [vmem:[%s265 + $0x21] sm:$0xff] %v2851
        %2884 = vst [vmem:[%s265 + $0x31] sm:$0xff] %v2852
        %2885 = vst [vmem:[%s265 + $0x39] sm:$0xff] %v2853
        %2886 = vst [vmem:[%s265 + $0x49] sm:$0xff] %v2854
        %2887 = vst [vmem:[%s265 + $0x51] sm:$0xff] %v2855
        %2888 = vst [vmem:[%s265 + $0x61] sm:$0xff] %v2856
        %2889 = vst [vmem:[%s265 + $0x69] sm:$0xff] %v2857
        %2890 = vst [vmem:[%s265 + $0x79] sm:$0xff] %v2858
        %2891 = vst [vmem:[%s265 + $0x81] sm:$0xff] %v2859
        %2892 = vst [vmem:[%s265 + $0x91] sm:$0xff] %v2860
        %2893 = vst [vmem:[%s265 + $0x99] sm:$0xff] %v2861
        %2894 = vst [vmem:[%s265 + $0xa9] sm:$0xff] %v2862
        %2895 = vst [vmem:[%s265 + $0xb1] sm:$0xff] %v2863
        %2896 = vst [vmem:[%s265 + $0xc1] sm:$0xff] %v2864
        %2897 = vst [vmem:[%s265 + $0xc9] sm:$0xff] %v2865
        %2898 = vst [vmem:[%s265 + $0xd9] sm:$0xff] %v2866
        %2899 = vst [vmem:[%s265 + $0xe1] sm:$0xff] %v2867
        %2900 = vst [vmem:[%s265 + $0xf1] sm:$0xff] %v2868
        %2901 = vst [vmem:[%s265 + $0xf9] sm:$0xff] %v2869
        %2902 = vst [vmem:[%s265 + $0x109] sm:$0xff] %v2870
        %2903 = vst [vmem:[%s265 + $0x111] sm:$0xff] %v2871
        %2904 = vst [vmem:[%s265 + $0x121] sm:$0xff] %v2872
        %2905 = vst [vmem:[%s265 + $0x129] sm:$0xff] %v2873
        %2906 = vst [vmem:[%s265 + $0x139] sm:$0xff] %v2874
        %2907 = vst [vmem:[%s265 + $0x141] sm:$0xff] %v2875
        %2908 = vst [vmem:[%s265 + $0x151] sm:$0xff] %v2876
        %2909 = vst [vmem:[%s265 + $0x159] sm:$0xff] %v2877
        %2910 = vst [vmem:[%s265 + $0x169] sm:$0xff] %v2878
        %2911 = vst [vmem:[%s265 + $0x171] sm:$0xff] %v2879
        %v2912 = vld [vmem:[#allocation2] sm:$0xff]
        %v2913 = vld [vmem:[#allocation2 + $0x8] sm:$0xff]
        %v2914 = vld [vmem:[#allocation2 + $0x18] sm:$0xff]
        %v2915 = vld [vmem:[#allocation2 + $0x20] sm:$0xff]
        %v2916 = vld [vmem:[#allocation2 + $0x30] sm:$0xff]
        %v2917 = vld [vmem:[#allocation2 + $0x38] sm:$0xff]
        %v2918 = vld [vmem:[#allocation2 + $0x48] sm:$0xff]
        %v2919 = vld [vmem:[#allocation2 + $0x50] sm:$0xff]
        %v2920 = vld [vmem:[#allocation2 + $0x60] sm:$0xff]
        %v2921 = vld [vmem:[#allocation2 + $0x68] sm:$0xff]
        %v2922 = vld [vmem:[#allocation2 + $0x78] sm:$0xff]
        %v2923 = vld [vmem:[#allocation2 + $0x80] sm:$0xff]
        %v2924 = vld [vmem:[#allocation2 + $0x90] sm:$0xff]
        %v2925 = vld [vmem:[#allocation2 + $0x98] sm:$0xff]
        %v2926 = vld [vmem:[#allocation2 + $0xa8] sm:$0xff]
        %v2927 = vld [vmem:[#allocation2 + $0xb0] sm:$0xff]
        %v2928 = vld [vmem:[#allocation2 + $0xc0] sm:$0xff]
        %v2929 = vld [vmem:[#allocation2 + $0xc8] sm:$0xff]
        %v2930 = vld [vmem:[#allocation2 + $0xd8] sm:$0xff]
        %v2931 = vld [vmem:[#allocation2 + $0xe0] sm:$0xff]
        %v2932 = vld [vmem:[#allocation2 + $0xf0] sm:$0xff]
        %v2933 = vld [vmem:[#allocation2 + $0xf8] sm:$0xff]
        %v2934 = vld [vmem:[#allocation2 + $0x108] sm:$0xff]
        %v2935 = vld [vmem:[#allocation2 + $0x110] sm:$0xff]
        %v2936 = vld [vmem:[#allocation2 + $0x120] sm:$0xff]
        %v2937 = vld [vmem:[#allocation2 + $0x128] sm:$0xff]
        %v2938 = vld [vmem:[#allocation2 + $0x138] sm:$0xff]
        %v2939 = vld [vmem:[#allocation2 + $0x140] sm:$0xff]
        %v2940 = vld [vmem:[#allocation2 + $0x150] sm:$0xff]
        %v2941 = vld [vmem:[#allocation2 + $0x158] sm:$0xff]
        %v2942 = vld [vmem:[#allocation2 + $0x168] sm:$0xff]
        %v2943 = vld [vmem:[#allocation2 + $0x170] sm:$0xff]
        %2944 = vst [vmem:[#allocation3] sm:$0xff] %v2912
        %2945 = vst [vmem:[#allocation3 + $0x48] sm:$0xff] %v2913
        %2946 = vst [vmem:[#allocation3 + $0x90] sm:$0xff] %v2914
        %2947 = vst [vmem:[#allocation3 + $0xd8] sm:$0xff] %v2915
        %2948 = vst [vmem:[#allocation3 + $0x120] sm:$0xff] %v2916
        %2949 = vst [vmem:[#allocation3 + $0x168] sm:$0xff] %v2917
        %2950 = vst [vmem:[#allocation3 + $0x1b0] sm:$0xff] %v2918
        %2951 = vst [vmem:[#allocation3 + $0x1f8] sm:$0xff] %v2919
        %2952 = vst [vmem:[#allocation3 + $0x240] sm:$0xff] %v2920
        %2953 = vst [vmem:[#allocation3 + $0x288] sm:$0xff] %v2921
        %2954 = vst [vmem:[#allocation3 + $0x2d0] sm:$0xff] %v2922
        %2955 = vst [vmem:[#allocation3 + $0x318] sm:$0xff] %v2923
        %2956 = vst [vmem:[#allocation3 + $0x360] sm:$0xff] %v2924
        %2957 = vst [vmem:[#allocation3 + $0x3a8] sm:$0xff] %v2925
        %2958 = vst [vmem:[#allocation3 + $0x3f0] sm:$0xff] %v2926
        %2959 = vst [vmem:[#allocation3 + $0x438] sm:$0xff] %v2927
        %2960 = vst [vmem:[#allocation3 + $0x480] sm:$0xff] %v2928
        %2961 = vst [vmem:[#allocation3 + $0x4c8] sm:$0xff] %v2929
        %2962 = vst [vmem:[#allocation3 + $0x510] sm:$0xff] %v2930
        %2963 = vst [vmem:[#allocation3 + $0x558] sm:$0xff] %v2931
        %2964 = vst [vmem:[#allocation3 + $0x5a0] sm:$0xff] %v2932
        %2965 = vst [vmem:[#allocation3 + $0x5e8] sm:$0xff] %v2933
        %2966 = vst [vmem:[#allocation3 + $0x630] sm:$0xff] %v2934
        %2967 = vst [vmem:[#allocation3 + $0x678] sm:$0xff] %v2935
        %2968 = vst [vmem:[#allocation3 + $0x6c0] sm:$0xff] %v2936
        %2969 = vst [vmem:[#allocation3 + $0x708] sm:$0xff] %v2937
        %2970 = vst [vmem:[#allocation3 + $0x750] sm:$0xff] %v2938
        %2971 = vst [vmem:[#allocation3 + $0x798] sm:$0xff] %v2939
        %2972 = vst [vmem:[#allocation3 + $0x7e0] sm:$0xff] %v2940
        %2973 = vst [vmem:[#allocation3 + $0x828] sm:$0xff] %v2941
        %2974 = vst [vmem:[#allocation3 + $0x870] sm:$0xff] %v2942
        %2975 = vst [vmem:[#allocation3 + $0x8b8] sm:$0xff] %v2943
        %v2976 = vld [vmem:[#allocation2 + $0x1] sm:$0xff]
        %v2977 = vld [vmem:[#allocation2 + $0x9] sm:$0xff]
        %v2978 = vld [vmem:[#allocation2 + $0x19] sm:$0xff]
        %v2979 = vld [vmem:[#allocation2 + $0x21] sm:$0xff]
        %v2980 = vld [vmem:[#allocation2 + $0x31] sm:$0xff]
        %v2981 = vld [vmem:[#allocation2 + $0x39] sm:$0xff]
        %v2982 = vld [vmem:[#allocation2 + $0x49] sm:$0xff]
        %v2983 = vld [vmem:[#allocation2 + $0x51] sm:$0xff]
        %v2984 = vld [vmem:[#allocation2 + $0x61] sm:$0xff]
        %v2985 = vld [vmem:[#allocation2 + $0x69] sm:$0xff]
        %v2986 = vld [vmem:[#allocation2 + $0x79] sm:$0xff]
        %v2987 = vld [vmem:[#allocation2 + $0x81] sm:$0xff]
        %v2988 = vld [vmem:[#allocation2 + $0x91] sm:$0xff]
        %v2989 = vld [vmem:[#allocation2 + $0x99] sm:$0xff]
        %v2990 = vld [vmem:[#allocation2 + $0xa9] sm:$0xff]
        %v2991 = vld [vmem:[#allocation2 + $0xb1] sm:$0xff]
        %v2992 = vld [vmem:[#allocation2 + $0xc1] sm:$0xff]
        %v2993 = vld [vmem:[#allocation2 + $0xc9] sm:$0xff]
        %v2994 = vld [vmem:[#allocation2 + $0xd9] sm:$0xff]
        %v2995 = vld [vmem:[#allocation2 + $0xe1] sm:$0xff]
        %v2996 = vld [vmem:[#allocation2 + $0xf1] sm:$0xff]
        %v2997 = vld [vmem:[#allocation2 + $0xf9] sm:$0xff]
        %v2998 = vld [vmem:[#allocation2 + $0x109] sm:$0xff]
        %v2999 = vld [vmem:[#allocation2 + $0x111] sm:$0xff]
        %v3000 = vld [vmem:[#allocation2 + $0x121] sm:$0xff]
        %v3001 = vld [vmem:[#allocation2 + $0x129] sm:$0xff]
        %v3002 = vld [vmem:[#allocation2 + $0x139] sm:$0xff]
        %v3003 = vld [vmem:[#allocation2 + $0x141] sm:$0xff]
        %v3004 = vld [vmem:[#allocation2 + $0x151] sm:$0xff]
        %v3005 = vld [vmem:[#allocation2 + $0x159] sm:$0xff]
        %v3006 = vld [vmem:[#allocation2 + $0x169] sm:$0xff]
        %v3007 = vld [vmem:[#allocation2 + $0x171] sm:$0xff]
        %3008 = vst [vmem:[#allocation3 + $0x8] sm:$0xff] %v2976
        %3009 = vst [vmem:[#allocation3 + $0x50] sm:$0xff] %v2977
        %3010 = vst [vmem:[#allocation3 + $0x98] sm:$0xff] %v2978
        %3011 = vst [vmem:[#allocation3 + $0xe0] sm:$0xff] %v2979
        %3012 = vst [vmem:[#allocation3 + $0x128] sm:$0xff] %v2980
        %3013 = vst [vmem:[#allocation3 + $0x170] sm:$0xff] %v2981
        %3014 = vst [vmem:[#allocation3 + $0x1b8] sm:$0xff] %v2982
        %3015 = vst [vmem:[#allocation3 + $0x200] sm:$0xff] %v2983
        %3016 = vst [vmem:[#allocation3 + $0x248] sm:$0xff] %v2984
        %3017 = vst [vmem:[#allocation3 + $0x290] sm:$0xff] %v2985
        %3018 = vst [vmem:[#allocation3 + $0x2d8] sm:$0xff] %v2986
        %3019 = vst [vmem:[#allocation3 + $0x320] sm:$0xff] %v2987
        %3020 = vst [vmem:[#allocation3 + $0x368] sm:$0xff] %v2988
        %3021 = vst [vmem:[#allocation3 + $0x3b0] sm:$0xff] %v2989
        %3022 = vst [vmem:[#allocation3 + $0x3f8] sm:$0xff] %v2990
        %3023 = vst [vmem:[#allocation3 + $0x440] sm:$0xff] %v2991
        %3024 = vst [vmem:[#allocation3 + $0x488] sm:$0xff] %v2992
        %3025 = vst [vmem:[#allocation3 + $0x4d0] sm:$0xff] %v2993
        %3026 = vst [vmem:[#allocation3 + $0x518] sm:$0xff] %v2994
        %3027 = vst [vmem:[#allocation3 + $0x560] sm:$0xff] %v2995
        %3028 = vst [vmem:[#allocation3 + $0x5a8] sm:$0xff] %v2996
        %3029 = vst [vmem:[#allocation3 + $0x5f0] sm:$0xff] %v2997
        %3030 = vst [vmem:[#allocation3 + $0x638] sm:$0xff] %v2998
        %3031 = vst [vmem:[#allocation3 + $0x680] sm:$0xff] %v2999
        %3032 = vst [vmem:[#allocation3 + $0x6c8] sm:$0xff] %v3000
        %3033 = vst [vmem:[#allocation3 + $0x710] sm:$0xff] %v3001
        %3034 = vst [vmem:[#allocation3 + $0x758] sm:$0xff] %v3002
        %3035 = vst [vmem:[#allocation3 + $0x7a0] sm:$0xff] %v3003
        %3036 = vst [vmem:[#allocation3 + $0x7e8] sm:$0xff] %v3004
        %3037 = vst [vmem:[#allocation3 + $0x830] sm:$0xff] %v3005
        %3038 = vst [vmem:[#allocation3 + $0x878] sm:$0xff] %v3006
        %3039 = vst [vmem:[#allocation3 + $0x8c0] sm:$0xff] %v3007
        %v3040 = vld [vmem:[#allocation2 + $0x2] sm:$0xff]
        %v3041 = vld [vmem:[#allocation2 + $0xa] sm:$0xff]
        %v3042 = vld [vmem:[#allocation2 + $0x1a] sm:$0xff]
        %v3043 = vld [vmem:[#allocation2 + $0x22] sm:$0xff]
        %v3044 = vld [vmem:[#allocation2 + $0x32] sm:$0xff]
        %v3045 = vld [vmem:[#allocation2 + $0x3a] sm:$0xff]
        %v3046 = vld [vmem:[#allocation2 + $0x4a] sm:$0xff]
        %v3047 = vld [vmem:[#allocation2 + $0x52] sm:$0xff]
        %v3048 = vld [vmem:[#allocation2 + $0x62] sm:$0xff]
        %v3049 = vld [vmem:[#allocation2 + $0x6a] sm:$0xff]
        %v3050 = vld [vmem:[#allocation2 + $0x7a] sm:$0xff]
        %v3051 = vld [vmem:[#allocation2 + $0x82] sm:$0xff]
        %v3052 = vld [vmem:[#allocation2 + $0x92] sm:$0xff]
        %v3053 = vld [vmem:[#allocation2 + $0x9a] sm:$0xff]
        %v3054 = vld [vmem:[#allocation2 + $0xaa] sm:$0xff]
        %v3055 = vld [vmem:[#allocation2 + $0xb2] sm:$0xff]
        %v3056 = vld [vmem:[#allocation2 + $0xc2] sm:$0xff]
        %v3057 = vld [vmem:[#allocation2 + $0xca] sm:$0xff]
        %v3058 = vld [vmem:[#allocation2 + $0xda] sm:$0xff]
        %v3059 = vld [vmem:[#allocation2 + $0xe2] sm:$0xff]
        %v3060 = vld [vmem:[#allocation2 + $0xf2] sm:$0xff]
        %v3061 = vld [vmem:[#allocation2 + $0xfa] sm:$0xff]
        %v3062 = vld [vmem:[#allocation2 + $0x10a] sm:$0xff]
        %v3063 = vld [vmem:[#allocation2 + $0x112] sm:$0xff]
        %v3064 = vld [vmem:[#allocation2 + $0x122] sm:$0xff]
        %v3065 = vld [vmem:[#allocation2 + $0x12a] sm:$0xff]
        %v3066 = vld [vmem:[#allocation2 + $0x13a] sm:$0xff]
        %v3067 = vld [vmem:[#allocation2 + $0x142] sm:$0xff]
        %v3068 = vld [vmem:[#allocation2 + $0x152] sm:$0xff]
        %v3069 = vld [vmem:[#allocation2 + $0x15a] sm:$0xff]
        %v3070 = vld [vmem:[#allocation2 + $0x16a] sm:$0xff]
        %v3071 = vld [vmem:[#allocation2 + $0x172] sm:$0xff]
        %3072 = vst [vmem:[#allocation3 + $0x10] sm:$0xff] %v3040
        %3073 = vst [vmem:[#allocation3 + $0x58] sm:$0xff] %v3041
        %3074 = vst [vmem:[#allocation3 + $0xa0] sm:$0xff] %v3042
        %3075 = vst [vmem:[#allocation3 + $0xe8] sm:$0xff] %v3043
        %3076 = vst [vmem:[#allocation3 + $0x130] sm:$0xff] %v3044
        %3077 = vst [vmem:[#allocation3 + $0x178] sm:$0xff] %v3045
        %3078 = vst [vmem:[#allocation3 + $0x1c0] sm:$0xff] %v3046
        %3079 = vst [vmem:[#allocation3 + $0x208] sm:$0xff] %v3047
        %3080 = vst [vmem:[#allocation3 + $0x250] sm:$0xff] %v3048
        %3081 = vst [vmem:[#allocation3 + $0x298] sm:$0xff] %v3049
        %3082 = vst [vmem:[#allocation3 + $0x2e0] sm:$0xff] %v3050
        %3083 = vst [vmem:[#allocation3 + $0x328] sm:$0xff] %v3051
        %3084 = vst [vmem:[#allocation3 + $0x370] sm:$0xff] %v3052
        %3085 = vst [vmem:[#allocation3 + $0x3b8] sm:$0xff] %v3053
        %3086 = vst [vmem:[#allocation3 + $0x400] sm:$0xff] %v3054
        %3087 = vst [vmem:[#allocation3 + $0x448] sm:$0xff] %v3055
        %3088 = vst [vmem:[#allocation3 + $0x490] sm:$0xff] %v3056
        %3089 = vst [vmem:[#allocation3 + $0x4d8] sm:$0xff] %v3057
        %3090 = vst [vmem:[#allocation3 + $0x520] sm:$0xff] %v3058
        %3091 = vst [vmem:[#allocation3 + $0x568] sm:$0xff] %v3059
        %3092 = vst [vmem:[#allocation3 + $0x5b0] sm:$0xff] %v3060
        %3093 = vst [vmem:[#allocation3 + $0x5f8] sm:$0xff] %v3061
        %3094 = vst [vmem:[#allocation3 + $0x640] sm:$0xff] %v3062
        %3095 = vst [vmem:[#allocation3 + $0x688] sm:$0xff] %v3063
        %3096 = vst [vmem:[#allocation3 + $0x6d0] sm:$0xff] %v3064
        %3097 = vst [vmem:[#allocation3 + $0x718] sm:$0xff] %v3065
        %3098 = vst [vmem:[#allocation3 + $0x760] sm:$0xff] %v3066
        %3099 = vst [vmem:[#allocation3 + $0x7a8] sm:$0xff] %v3067
        %3100 = vst [vmem:[#allocation3 + $0x7f0] sm:$0xff] %v3068
        %3101 = vst [vmem:[#allocation3 + $0x838] sm:$0xff] %v3069
        %3102 = vst [vmem:[#allocation3 + $0x880] sm:$0xff] %v3070
        %3103 = vst [vmem:[#allocation3 + $0x8c8] sm:$0xff] %v3071
        %v3104 = vld [vmem:[%s265] sm:$0xff]
        %v3105 = vld [vmem:[%s265 + $0x8] sm:$0xff]
        %v3106 = vld [vmem:[%s265 + $0x18] sm:$0xff]
        %v3107 = vld [vmem:[%s265 + $0x20] sm:$0xff]
        %v3108 = vld [vmem:[%s265 + $0x30] sm:$0xff]
        %v3109 = vld [vmem:[%s265 + $0x38] sm:$0xff]
        %v3110 = vld [vmem:[%s265 + $0x48] sm:$0xff]
        %v3111 = vld [vmem:[%s265 + $0x50] sm:$0xff]
        %v3112 = vld [vmem:[%s265 + $0x60] sm:$0xff]
        %v3113 = vld [vmem:[%s265 + $0x68] sm:$0xff]
        %v3114 = vld [vmem:[%s265 + $0x78] sm:$0xff]
        %v3115 = vld [vmem:[%s265 + $0x80] sm:$0xff]
        %v3116 = vld [vmem:[%s265 + $0x90] sm:$0xff]
        %v3117 = vld [vmem:[%s265 + $0x98] sm:$0xff]
        %v3118 = vld [vmem:[%s265 + $0xa8] sm:$0xff]
        %v3119 = vld [vmem:[%s265 + $0xb0] sm:$0xff]
        %v3120 = vld [vmem:[%s265 + $0xc0] sm:$0xff]
        %v3121 = vld [vmem:[%s265 + $0xc8] sm:$0xff]
        %v3122 = vld [vmem:[%s265 + $0xd8] sm:$0xff]
        %v3123 = vld [vmem:[%s265 + $0xe0] sm:$0xff]
        %v3124 = vld [vmem:[%s265 + $0xf0] sm:$0xff]
        %v3125 = vld [vmem:[%s265 + $0xf8] sm:$0xff]
        %v3126 = vld [vmem:[%s265 + $0x108] sm:$0xff]
        %v3127 = vld [vmem:[%s265 + $0x110] sm:$0xff]
        %v3128 = vld [vmem:[%s265 + $0x120] sm:$0xff]
        %v3129 = vld [vmem:[%s265 + $0x128] sm:$0xff]
        %v3130 = vld [vmem:[%s265 + $0x138] sm:$0xff]
        %v3131 = vld [vmem:[%s265 + $0x140] sm:$0xff]
        %v3132 = vld [vmem:[%s265 + $0x150] sm:$0xff]
        %v3133 = vld [vmem:[%s265 + $0x158] sm:$0xff]
        %v3134 = vld [vmem:[%s265 + $0x168] sm:$0xff]
        %v3135 = vld [vmem:[%s265 + $0x170] sm:$0xff]
        %3136 = vst [vmem:[#allocation3 + $0x18] sm:$0xff] %v3104
        %3137 = vst [vmem:[#allocation3 + $0x60] sm:$0xff] %v3105
        %3138 = vst [vmem:[#allocation3 + $0xa8] sm:$0xff] %v3106
        %3139 = vst [vmem:[#allocation3 + $0xf0] sm:$0xff] %v3107
        %3140 = vst [vmem:[#allocation3 + $0x138] sm:$0xff] %v3108
        %3141 = vst [vmem:[#allocation3 + $0x180] sm:$0xff] %v3109
        %3142 = vst [vmem:[#allocation3 + $0x1c8] sm:$0xff] %v3110
        %3143 = vst [vmem:[#allocation3 + $0x210] sm:$0xff] %v3111
        %3144 = vst [vmem:[#allocation3 + $0x258] sm:$0xff] %v3112
        %3145 = vst [vmem:[#allocation3 + $0x2a0] sm:$0xff] %v3113
        %3146 = vst [vmem:[#allocation3 + $0x2e8] sm:$0xff] %v3114
        %3147 = vst [vmem:[#allocation3 + $0x330] sm:$0xff] %v3115
        %3148 = vst [vmem:[#allocation3 + $0x378] sm:$0xff] %v3116
        %3149 = vst [vmem:[#allocation3 + $0x3c0] sm:$0xff] %v3117
        %3150 = vst [vmem:[#allocation3 + $0x408] sm:$0xff] %v3118
        %3151 = vst [vmem:[#allocation3 + $0x450] sm:$0xff] %v3119
        %3152 = vst [vmem:[#allocation3 + $0x498] sm:$0xff] %v3120
        %3153 = vst [vmem:[#allocation3 + $0x4e0] sm:$0xff] %v3121
        %3154 = vst [vmem:[#allocation3 + $0x528] sm:$0xff] %v3122
        %3155 = vst [vmem:[#allocation3 + $0x570] sm:$0xff] %v3123
        %3156 = vst [vmem:[#allocation3 + $0x5b8] sm:$0xff] %v3124
        %3157 = vst [vmem:[#allocation3 + $0x600] sm:$0xff] %v3125
        %3158 = vst [vmem:[#allocation3 + $0x648] sm:$0xff] %v3126
        %3159 = vst [vmem:[#allocation3 + $0x690] sm:$0xff] %v3127
        %3160 = vst [vmem:[#allocation3 + $0x6d8] sm:$0xff] %v3128
        %3161 = vst [vmem:[#allocation3 + $0x720] sm:$0xff] %v3129
        %3162 = vst [vmem:[#allocation3 + $0x768] sm:$0xff] %v3130
        %3163 = vst [vmem:[#allocation3 + $0x7b0] sm:$0xff] %v3131
        %3164 = vst [vmem:[#allocation3 + $0x7f8] sm:$0xff] %v3132
        %3165 = vst [vmem:[#allocation3 + $0x840] sm:$0xff] %v3133
        %3166 = vst [vmem:[#allocation3 + $0x888] sm:$0xff] %v3134
        %3167 = vst [vmem:[#allocation3 + $0x8d0] sm:$0xff] %v3135
        %v3168 = vld [vmem:[%s265 + $0x1] sm:$0xff]
        %v3169 = vld [vmem:[%s265 + $0x9] sm:$0xff]
        %v3170 = vld [vmem:[%s265 + $0x19] sm:$0xff]
        %v3171 = vld [vmem:[%s265 + $0x21] sm:$0xff]
        %v3172 = vld [vmem:[%s265 + $0x31] sm:$0xff]
        %v3173 = vld [vmem:[%s265 + $0x39] sm:$0xff]
        %v3174 = vld [vmem:[%s265 + $0x49] sm:$0xff]
        %v3175 = vld [vmem:[%s265 + $0x51] sm:$0xff]
        %v3176 = vld [vmem:[%s265 + $0x61] sm:$0xff]
        %v3177 = vld [vmem:[%s265 + $0x69] sm:$0xff]
        %v3178 = vld [vmem:[%s265 + $0x79] sm:$0xff]
        %v3179 = vld [vmem:[%s265 + $0x81] sm:$0xff]
        %v3180 = vld [vmem:[%s265 + $0x91] sm:$0xff]
        %v3181 = vld [vmem:[%s265 + $0x99] sm:$0xff]
        %v3182 = vld [vmem:[%s265 + $0xa9] sm:$0xff]
        %v3183 = vld [vmem:[%s265 + $0xb1] sm:$0xff]
        %v3184 = vld [vmem:[%s265 + $0xc1] sm:$0xff]
        %v3185 = vld [vmem:[%s265 + $0xc9] sm:$0xff]
        %v3186 = vld [vmem:[%s265 + $0xd9] sm:$0xff]
        %v3187 = vld [vmem:[%s265 + $0xe1] sm:$0xff]
        %v3188 = vld [vmem:[%s265 + $0xf1] sm:$0xff]
        %v3189 = vld [vmem:[%s265 + $0xf9] sm:$0xff]
        %v3190 = vld [vmem:[%s265 + $0x109] sm:$0xff]
        %v3191 = vld [vmem:[%s265 + $0x111] sm:$0xff]
        %v3192 = vld [vmem:[%s265 + $0x121] sm:$0xff]
        %v3193 = vld [vmem:[%s265 + $0x129] sm:$0xff]
        %v3194 = vld [vmem:[%s265 + $0x139] sm:$0xff]
        %v3195 = vld [vmem:[%s265 + $0x141] sm:$0xff]
        %v3196 = vld [vmem:[%s265 + $0x151] sm:$0xff]
        %v3197 = vld [vmem:[%s265 + $0x159] sm:$0xff]
        %v3198 = vld [vmem:[%s265 + $0x169] sm:$0xff]
        %v3199 = vld [vmem:[%s265 + $0x171] sm:$0xff]
        %3200 = vst [vmem:[#allocation3 + $0x20] sm:$0xff] %v3168
        %3201 = vst [vmem:[#allocation3 + $0x68] sm:$0xff] %v3169
        %3202 = vst [vmem:[#allocation3 + $0xb0] sm:$0xff] %v3170
        %3203 = vst [vmem:[#allocation3 + $0xf8] sm:$0xff] %v3171
        %3204 = vst [vmem:[#allocation3 + $0x140] sm:$0xff] %v3172
        %3205 = vst [vmem:[#allocation3 + $0x188] sm:$0xff] %v3173
        %3206 = vst [vmem:[#allocation3 + $0x1d0] sm:$0xff] %v3174
        %3207 = vst [vmem:[#allocation3 + $0x218] sm:$0xff] %v3175
        %3208 = vst [vmem:[#allocation3 + $0x260] sm:$0xff] %v3176
        %3209 = vst [vmem:[#allocation3 + $0x2a8] sm:$0xff] %v3177
        %3210 = vst [vmem:[#allocation3 + $0x2f0] sm:$0xff] %v3178
        %3211 = vst [vmem:[#allocation3 + $0x338] sm:$0xff] %v3179
        %3212 = vst [vmem:[#allocation3 + $0x380] sm:$0xff] %v3180
        %3213 = vst [vmem:[#allocation3 + $0x3c8] sm:$0xff] %v3181
        %3214 = vst [vmem:[#allocation3 + $0x410] sm:$0xff] %v3182
        %3215 = vst [vmem:[#allocation3 + $0x458] sm:$0xff] %v3183
        %3216 = vst [vmem:[#allocation3 + $0x4a0] sm:$0xff] %v3184
        %3217 = vst [vmem:[#allocation3 + $0x4e8] sm:$0xff] %v3185
        %3218 = vst [vmem:[#allocation3 + $0x530] sm:$0xff] %v3186
        %3219 = vst [vmem:[#allocation3 + $0x578] sm:$0xff] %v3187
        %3220 = vst [vmem:[#allocation3 + $0x5c0] sm:$0xff] %v3188
        %3221 = vst [vmem:[#allocation3 + $0x608] sm:$0xff] %v3189
        %3222 = vst [vmem:[#allocation3 + $0x650] sm:$0xff] %v3190
        %3223 = vst [vmem:[#allocation3 + $0x698] sm:$0xff] %v3191
        %3224 = vst [vmem:[#allocation3 + $0x6e0] sm:$0xff] %v3192
        %3225 = vst [vmem:[#allocation3 + $0x728] sm:$0xff] %v3193
        %3226 = vst [vmem:[#allocation3 + $0x770] sm:$0xff] %v3194
        %3227 = vst [vmem:[#allocation3 + $0x7b8] sm:$0xff] %v3195
        %3228 = vst [vmem:[#allocation3 + $0x800] sm:$0xff] %v3196
        %3229 = vst [vmem:[#allocation3 + $0x848] sm:$0xff] %v3197
        %3230 = vst [vmem:[#allocation3 + $0x890] sm:$0xff] %v3198
        %3231 = vst [vmem:[#allocation3 + $0x8d8] sm:$0xff] %v3199
        %v3232 = vld [vmem:[%s265 + $0x2] sm:$0xff]
        %v3233 = vld [vmem:[%s265 + $0xa] sm:$0xff]
        %v3234 = vld [vmem:[%s265 + $0x1a] sm:$0xff]
        %v3235 = vld [vmem:[%s265 + $0x22] sm:$0xff]
        %v3236 = vld [vmem:[%s265 + $0x32] sm:$0xff]
        %v3237 = vld [vmem:[%s265 + $0x3a] sm:$0xff]
        %v3238 = vld [vmem:[%s265 + $0x4a] sm:$0xff]
        %v3239 = vld [vmem:[%s265 + $0x52] sm:$0xff]
        %v3240 = vld [vmem:[%s265 + $0x62] sm:$0xff]
        %v3241 = vld [vmem:[%s265 + $0x6a] sm:$0xff]
        %v3242 = vld [vmem:[%s265 + $0x7a] sm:$0xff]
        %v3243 = vld [vmem:[%s265 + $0x82] sm:$0xff]
        %v3244 = vld [vmem:[%s265 + $0x92] sm:$0xff]
        %v3245 = vld [vmem:[%s265 + $0x9a] sm:$0xff]
        %v3246 = vld [vmem:[%s265 + $0xaa] sm:$0xff]
        %v3247 = vld [vmem:[%s265 + $0xb2] sm:$0xff]
        %v3248 = vld [vmem:[%s265 + $0xc2] sm:$0xff]
        %v3249 = vld [vmem:[%s265 + $0xca] sm:$0xff]
        %v3250 = vld [vmem:[%s265 + $0xda] sm:$0xff]
        %v3251 = vld [vmem:[%s265 + $0xe2] sm:$0xff]
        %v3252 = vld [vmem:[%s265 + $0xf2] sm:$0xff]
        %v3253 = vld [vmem:[%s265 + $0xfa] sm:$0xff]
        %v3254 = vld [vmem:[%s265 + $0x10a] sm:$0xff]
        %v3255 = vld [vmem:[%s265 + $0x112] sm:$0xff]
        %v3256 = vld [vmem:[%s265 + $0x122] sm:$0xff]
        %v3257 = vld [vmem:[%s265 + $0x12a] sm:$0xff]
        %v3258 = vld [vmem:[%s265 + $0x13a] sm:$0xff]
        %v3259 = vld [vmem:[%s265 + $0x142] sm:$0xff]
        %v3260 = vld [vmem:[%s265 + $0x152] sm:$0xff]
        %v3261 = vld [vmem:[%s265 + $0x15a] sm:$0xff]
        %v3262 = vld [vmem:[%s265 + $0x16a] sm:$0xff]
        %v3263 = vld [vmem:[%s265 + $0x172] sm:$0xff]
        %3264 = vst [vmem:[#allocation3 + $0x28] sm:$0xff] %v3232
        %3265 = vst [vmem:[#allocation3 + $0x70] sm:$0xff] %v3233
        %3266 = vst [vmem:[#allocation3 + $0xb8] sm:$0xff] %v3234
        %3267 = vst [vmem:[#allocation3 + $0x100] sm:$0xff] %v3235
        %3268 = vst [vmem:[#allocation3 + $0x148] sm:$0xff] %v3236
        %3269 = vst [vmem:[#allocation3 + $0x190] sm:$0xff] %v3237
        %3270 = vst [vmem:[#allocation3 + $0x1d8] sm:$0xff] %v3238
        %3271 = vst [vmem:[#allocation3 + $0x220] sm:$0xff] %v3239
        %3272 = vst [vmem:[#allocation3 + $0x268] sm:$0xff] %v3240
        %3273 = vst [vmem:[#allocation3 + $0x2b0] sm:$0xff] %v3241
        %3274 = vst [vmem:[#allocation3 + $0x2f8] sm:$0xff] %v3242
        %3275 = vst [vmem:[#allocation3 + $0x340] sm:$0xff] %v3243
        %3276 = vst [vmem:[#allocation3 + $0x388] sm:$0xff] %v3244
        %3277 = vst [vmem:[#allocation3 + $0x3d0] sm:$0xff] %v3245
        %3278 = vst [vmem:[#allocation3 + $0x418] sm:$0xff] %v3246
        %3279 = vst [vmem:[#allocation3 + $0x460] sm:$0xff] %v3247
        %3280 = vst [vmem:[#allocation3 + $0x4a8] sm:$0xff] %v3248
        %3281 = vst [vmem:[#allocation3 + $0x4f0] sm:$0xff] %v3249
        %3282 = vst [vmem:[#allocation3 + $0x538] sm:$0xff] %v3250
        %3283 = vst [vmem:[#allocation3 + $0x580] sm:$0xff] %v3251
        %3284 = vst [vmem:[#allocation3 + $0x5c8] sm:$0xff] %v3252
        %3285 = vst [vmem:[#allocation3 + $0x610] sm:$0xff] %v3253
        %3286 = vst [vmem:[#allocation3 + $0x658] sm:$0xff] %v3254
        %3287 = vst [vmem:[#allocation3 + $0x6a0] sm:$0xff] %v3255
        %3288 = vst [vmem:[#allocation3 + $0x6e8] sm:$0xff] %v3256
        %3289 = vst [vmem:[#allocation3 + $0x730] sm:$0xff] %v3257
        %3290 = vst [vmem:[#allocation3 + $0x778] sm:$0xff] %v3258
        %3291 = vst [vmem:[#allocation3 + $0x7c0] sm:$0xff] %v3259
        %3292 = vst [vmem:[#allocation3 + $0x808] sm:$0xff] %v3260
        %3293 = vst [vmem:[#allocation3 + $0x850] sm:$0xff] %v3261
        %3294 = vst [vmem:[#allocation3 + $0x898] sm:$0xff] %v3262
        %3295 = vst [vmem:[#allocation3 + $0x8e0] sm:$0xff] %v3263
        %v3296 = vld [vmem:[%s747] sm:$0xff]
        %v3297 = vld [vmem:[%s747 + $0x8] sm:$0xff]
        %v3298 = vld [vmem:[%s747 + $0x18] sm:$0xff]
        %v3299 = vld [vmem:[%s747 + $0x20] sm:$0xff]
        %v3300 = vld [vmem:[%s747 + $0x30] sm:$0xff]
        %v3301 = vld [vmem:[%s747 + $0x38] sm:$0xff]
        %v3302 = vld [vmem:[%s747 + $0x48] sm:$0xff]
        %v3303 = vld [vmem:[%s747 + $0x50] sm:$0xff]
        %v3304 = vld [vmem:[%s747 + $0x60] sm:$0xff]
        %v3305 = vld [vmem:[%s747 + $0x68] sm:$0xff]
        %v3306 = vld [vmem:[%s747 + $0x78] sm:$0xff]
        %v3307 = vld [vmem:[%s747 + $0x80] sm:$0xff]
        %v3308 = vld [vmem:[%s747 + $0x90] sm:$0xff]
        %v3309 = vld [vmem:[%s747 + $0x98] sm:$0xff]
        %v3310 = vld [vmem:[%s747 + $0xa8] sm:$0xff]
        %v3311 = vld [vmem:[%s747 + $0xb0] sm:$0xff]
        %v3312 = vld [vmem:[%s747 + $0xc0] sm:$0xff]
        %v3313 = vld [vmem:[%s747 + $0xc8] sm:$0xff]
        %v3314 = vld [vmem:[%s747 + $0xd8] sm:$0xff]
        %v3315 = vld [vmem:[%s747 + $0xe0] sm:$0xff]
        %v3316 = vld [vmem:[%s747 + $0xf0] sm:$0xff]
        %v3317 = vld [vmem:[%s747 + $0xf8] sm:$0xff]
        %v3318 = vld [vmem:[%s747 + $0x108] sm:$0xff]
        %v3319 = vld [vmem:[%s747 + $0x110] sm:$0xff]
        %v3320 = vld [vmem:[%s747 + $0x120] sm:$0xff]
        %v3321 = vld [vmem:[%s747 + $0x128] sm:$0xff]
        %v3322 = vld [vmem:[%s747 + $0x138] sm:$0xff]
        %v3323 = vld [vmem:[%s747 + $0x140] sm:$0xff]
        %v3324 = vld [vmem:[%s747 + $0x150] sm:$0xff]
        %v3325 = vld [vmem:[%s747 + $0x158] sm:$0xff]
        %v3326 = vld [vmem:[%s747 + $0x168] sm:$0xff]
        %v3327 = vld [vmem:[%s747 + $0x170] sm:$0xff]
        %3328 = vst [vmem:[#allocation3 + $0x30] sm:$0xff] %v3296
        %3329 = vst [vmem:[#allocation3 + $0x78] sm:$0xff] %v3297
        %3330 = vst [vmem:[#allocation3 + $0xc0] sm:$0xff] %v3298
        %3331 = vst [vmem:[#allocation3 + $0x108] sm:$0xff] %v3299
        %3332 = vst [vmem:[#allocation3 + $0x150] sm:$0xff] %v3300
        %3333 = vst [vmem:[#allocation3 + $0x198] sm:$0xff] %v3301
        %3334 = vst [vmem:[#allocation3 + $0x1e0] sm:$0xff] %v3302
        %3335 = vst [vmem:[#allocation3 + $0x228] sm:$0xff] %v3303
        %3336 = vst [vmem:[#allocation3 + $0x270] sm:$0xff] %v3304
        %3337 = vst [vmem:[#allocation3 + $0x2b8] sm:$0xff] %v3305
        %3338 = vst [vmem:[#allocation3 + $0x300] sm:$0xff] %v3306
        %3339 = vst [vmem:[#allocation3 + $0x348] sm:$0xff] %v3307
        %3340 = vst [vmem:[#allocation3 + $0x390] sm:$0xff] %v3308
        %3341 = vst [vmem:[#allocation3 + $0x3d8] sm:$0xff] %v3309
        %3342 = vst [vmem:[#allocation3 + $0x420] sm:$0xff] %v3310
        %3343 = vst [vmem:[#allocation3 + $0x468] sm:$0xff] %v3311
        %3344 = vst [vmem:[#allocation3 + $0x4b0] sm:$0xff] %v3312
        %3345 = vst [vmem:[#allocation3 + $0x4f8] sm:$0xff] %v3313
        %3346 = vst [vmem:[#allocation3 + $0x540] sm:$0xff] %v3314
        %3347 = vst [vmem:[#allocation3 + $0x588] sm:$0xff] %v3315
        %3348 = vst [vmem:[#allocation3 + $0x5d0] sm:$0xff] %v3316
        %3349 = vst [vmem:[#allocation3 + $0x618] sm:$0xff] %v3317
        %3350 = vst [vmem:[#allocation3 + $0x660] sm:$0xff] %v3318
        %3351 = vst [vmem:[#allocation3 + $0x6a8] sm:$0xff] %v3319
        %3352 = vst [vmem:[#allocation3 + $0x6f0] sm:$0xff] %v3320
        %3353 = vst [vmem:[#allocation3 + $0x738] sm:$0xff] %v3321
        %3354 = vst [vmem:[#allocation3 + $0x780] sm:$0xff] %v3322
        %3355 = vst [vmem:[#allocation3 + $0x7c8] sm:$0xff] %v3323
        %3356 = vst [vmem:[#allocation3 + $0x810] sm:$0xff] %v3324
        %3357 = vst [vmem:[#allocation3 + $0x858] sm:$0xff] %v3325
        %3358 = vst [vmem:[#allocation3 + $0x8a0] sm:$0xff] %v3326
        %3359 = vst [vmem:[#allocation3 + $0x8e8] sm:$0xff] %v3327
        %v3360 = vld [vmem:[%s747 + $0x1] sm:$0xff]
        %v3361 = vld [vmem:[%s747 + $0x9] sm:$0xff]
        %v3362 = vld [vmem:[%s747 + $0x19] sm:$0xff]
        %v3363 = vld [vmem:[%s747 + $0x21] sm:$0xff]
        %v3364 = vld [vmem:[%s747 + $0x31] sm:$0xff]
        %v3365 = vld [vmem:[%s747 + $0x39] sm:$0xff]
        %v3366 = vld [vmem:[%s747 + $0x49] sm:$0xff]
        %v3367 = vld [vmem:[%s747 + $0x51] sm:$0xff]
        %v3368 = vld [vmem:[%s747 + $0x61] sm:$0xff]
        %v3369 = vld [vmem:[%s747 + $0x69] sm:$0xff]
        %v3370 = vld [vmem:[%s747 + $0x79] sm:$0xff]
        %v3371 = vld [vmem:[%s747 + $0x81] sm:$0xff]
        %v3372 = vld [vmem:[%s747 + $0x91] sm:$0xff]
        %v3373 = vld [vmem:[%s747 + $0x99] sm:$0xff]
        %v3374 = vld [vmem:[%s747 + $0xa9] sm:$0xff]
        %v3375 = vld [vmem:[%s747 + $0xb1] sm:$0xff]
        %v3376 = vld [vmem:[%s747 + $0xc1] sm:$0xff]
        %v3377 = vld [vmem:[%s747 + $0xc9] sm:$0xff]
        %v3378 = vld [vmem:[%s747 + $0xd9] sm:$0xff]
        %v3379 = vld [vmem:[%s747 + $0xe1] sm:$0xff]
        %v3380 = vld [vmem:[%s747 + $0xf1] sm:$0xff]
        %v3381 = vld [vmem:[%s747 + $0xf9] sm:$0xff]
        %v3382 = vld [vmem:[%s747 + $0x109] sm:$0xff]
        %v3383 = vld [vmem:[%s747 + $0x111] sm:$0xff]
        %v3384 = vld [vmem:[%s747 + $0x121] sm:$0xff]
        %v3385 = vld [vmem:[%s747 + $0x129] sm:$0xff]
        %v3386 = vld [vmem:[%s747 + $0x139] sm:$0xff]
        %v3387 = vld [vmem:[%s747 + $0x141] sm:$0xff]
        %v3388 = vld [vmem:[%s747 + $0x151] sm:$0xff]
        %v3389 = vld [vmem:[%s747 + $0x159] sm:$0xff]
        %v3390 = vld [vmem:[%s747 + $0x169] sm:$0xff]
        %v3391 = vld [vmem:[%s747 + $0x171] sm:$0xff]
        %3392 = vst [vmem:[#allocation3 + $0x38] sm:$0xff] %v3360
        %3393 = vst [vmem:[#allocation3 + $0x80] sm:$0xff] %v3361
        %3394 = vst [vmem:[#allocation3 + $0xc8] sm:$0xff] %v3362
        %3395 = vst [vmem:[#allocation3 + $0x110] sm:$0xff] %v3363
        %3396 = vst [vmem:[#allocation3 + $0x158] sm:$0xff] %v3364
        %3397 = vst [vmem:[#allocation3 + $0x1a0] sm:$0xff] %v3365
        %3398 = vst [vmem:[#allocation3 + $0x1e8] sm:$0xff] %v3366
        %3399 = vst [vmem:[#allocation3 + $0x230] sm:$0xff] %v3367
        %3400 = vst [vmem:[#allocation3 + $0x278] sm:$0xff] %v3368
        %3401 = vst [vmem:[#allocation3 + $0x2c0] sm:$0xff] %v3369
        %3402 = vst [vmem:[#allocation3 + $0x308] sm:$0xff] %v3370
        %3403 = vst [vmem:[#allocation3 + $0x350] sm:$0xff] %v3371
        %3404 = vst [vmem:[#allocation3 + $0x398] sm:$0xff] %v3372
        %3405 = vst [vmem:[#allocation3 + $0x3e0] sm:$0xff] %v3373
        %3406 = vst [vmem:[#allocation3 + $0x428] sm:$0xff] %v3374
        %3407 = vst [vmem:[#allocation3 + $0x470] sm:$0xff] %v3375
        %3408 = vst [vmem:[#allocation3 + $0x4b8] sm:$0xff] %v3376
        %3409 = vst [vmem:[#allocation3 + $0x500] sm:$0xff] %v3377
        %3410 = vst [vmem:[#allocation3 + $0x548] sm:$0xff] %v3378
        %3411 = vst [vmem:[#allocation3 + $0x590] sm:$0xff] %v3379
        %3412 = vst [vmem:[#allocation3 + $0x5d8] sm:$0xff] %v3380
        %3413 = vst [vmem:[#allocation3 + $0x620] sm:$0xff] %v3381
        %3414 = vst [vmem:[#allocation3 + $0x668] sm:$0xff] %v3382
        %3415 = vst [vmem:[#allocation3 + $0x6b0] sm:$0xff] %v3383
        %3416 = vst [vmem:[#allocation3 + $0x6f8] sm:$0xff] %v3384
        %3417 = vst [vmem:[#allocation3 + $0x740] sm:$0xff] %v3385
        %3418 = vst [vmem:[#allocation3 + $0x788] sm:$0xff] %v3386
        %3419 = vst [vmem:[#allocation3 + $0x7d0] sm:$0xff] %v3387
        %3420 = vst [vmem:[#allocation3 + $0x818] sm:$0xff] %v3388
        %3421 = vst [vmem:[#allocation3 + $0x860] sm:$0xff] %v3389
        %3422 = vst [vmem:[#allocation3 + $0x8a8] sm:$0xff] %v3390
        %3423 = vst [vmem:[#allocation3 + $0x8f0] sm:$0xff] %v3391
        %v3424 = vld [vmem:[%s747 + $0x2] sm:$0xff]
        %v3425 = vld [vmem:[%s747 + $0xa] sm:$0xff]
        %v3426 = vld [vmem:[%s747 + $0x1a] sm:$0xff]
        %v3427 = vld [vmem:[%s747 + $0x22] sm:$0xff]
        %v3428 = vld [vmem:[%s747 + $0x32] sm:$0xff]
        %v3429 = vld [vmem:[%s747 + $0x3a] sm:$0xff]
        %v3430 = vld [vmem:[%s747 + $0x4a] sm:$0xff]
        %v3431 = vld [vmem:[%s747 + $0x52] sm:$0xff]
        %v3432 = vld [vmem:[%s747 + $0x62] sm:$0xff]
        %v3433 = vld [vmem:[%s747 + $0x6a] sm:$0xff]
        %v3434 = vld [vmem:[%s747 + $0x7a] sm:$0xff]
        %v3435 = vld [vmem:[%s747 + $0x82] sm:$0xff]
        %v3436 = vld [vmem:[%s747 + $0x92] sm:$0xff]
        %v3437 = vld [vmem:[%s747 + $0x9a] sm:$0xff]
        %v3438 = vld [vmem:[%s747 + $0xaa] sm:$0xff]
        %v3439 = vld [vmem:[%s747 + $0xb2] sm:$0xff]
        %v3440 = vld [vmem:[%s747 + $0xc2] sm:$0xff]
        %v3441 = vld [vmem:[%s747 + $0xca] sm:$0xff]
        %v3442 = vld [vmem:[%s747 + $0xda] sm:$0xff]
        %v3443 = vld [vmem:[%s747 + $0xe2] sm:$0xff]
        %v3444 = vld [vmem:[%s747 + $0xf2] sm:$0xff]
        %v3445 = vld [vmem:[%s747 + $0xfa] sm:$0xff]
        %v3446 = vld [vmem:[%s747 + $0x10a] sm:$0xff]
        %v3447 = vld [vmem:[%s747 + $0x112] sm:$0xff]
        %v3448 = vld [vmem:[%s747 + $0x122] sm:$0xff]
        %v3449 = vld [vmem:[%s747 + $0x12a] sm:$0xff]
        %v3450 = vld [vmem:[%s747 + $0x13a] sm:$0xff]
        %v3451 = vld [vmem:[%s747 + $0x142] sm:$0xff]
        %v3452 = vld [vmem:[%s747 + $0x152] sm:$0xff]
        %v3453 = vld [vmem:[%s747 + $0x15a] sm:$0xff]
        %v3454 = vld [vmem:[%s747 + $0x16a] sm:$0xff]
        %v3455 = vld [vmem:[%s747 + $0x172] sm:$0xff]
        %3456 = vst [vmem:[#allocation3 + $0x40] sm:$0xff] %v3424
        %3457 = vst [vmem:[#allocation3 + $0x88] sm:$0xff] %v3425
        %3458 = vst [vmem:[#allocation3 + $0xd0] sm:$0xff] %v3426
        %3459 = vst [vmem:[#allocation3 + $0x118] sm:$0xff] %v3427
        %3460 = vst [vmem:[#allocation3 + $0x160] sm:$0xff] %v3428
        %3461 = vst [vmem:[#allocation3 + $0x1a8] sm:$0xff] %v3429
        %3462 = vst [vmem:[#allocation3 + $0x1f0] sm:$0xff] %v3430
        %3463 = vst [vmem:[#allocation3 + $0x238] sm:$0xff] %v3431
        %3464 = vst [vmem:[#allocation3 + $0x280] sm:$0xff] %v3432
        %3465 = vst [vmem:[#allocation3 + $0x2c8] sm:$0xff] %v3433
        %3466 = vst [vmem:[#allocation3 + $0x310] sm:$0xff] %v3434
        %3467 = vst [vmem:[#allocation3 + $0x358] sm:$0xff] %v3435
        %3468 = vst [vmem:[#allocation3 + $0x3a0] sm:$0xff] %v3436
        %3469 = vst [vmem:[#allocation3 + $0x3e8] sm:$0xff] %v3437
        %3470 = vst [vmem:[#allocation3 + $0x430] sm:$0xff] %v3438
        %3471 = vst [vmem:[#allocation3 + $0x478] sm:$0xff] %v3439
        %3472 = vst [vmem:[#allocation3 + $0x4c0] sm:$0xff] %v3440
        %3473 = vst [vmem:[#allocation3 + $0x508] sm:$0xff] %v3441
        %3474 = vst [vmem:[#allocation3 + $0x550] sm:$0xff] %v3442
        %3475 = vst [vmem:[#allocation3 + $0x598] sm:$0xff] %v3443
        %3476 = vst [vmem:[#allocation3 + $0x5e0] sm:$0xff] %v3444
        %3477 = vst [vmem:[#allocation3 + $0x628] sm:$0xff] %v3445
        %3478 = vst [vmem:[#allocation3 + $0x670] sm:$0xff] %v3446
        %3479 = vst [vmem:[#allocation3 + $0x6b8] sm:$0xff] %v3447
        %3480 = vst [vmem:[#allocation3 + $0x700] sm:$0xff] %v3448
        %3481 = vst [vmem:[#allocation3 + $0x748] sm:$0xff] %v3449
        %3482 = vst [vmem:[#allocation3 + $0x790] sm:$0xff] %v3450
        %3483 = vst [vmem:[#allocation3 + $0x7d8] sm:$0xff] %v3451
        %3484 = vst [vmem:[#allocation3 + $0x820] sm:$0xff] %v3452
        %3485 = vst [vmem:[#allocation3 + $0x868] sm:$0xff] %v3453
        %3486 = vst [vmem:[#allocation3 + $0x8b0] sm:$0xff] %v3454
        %3487 = vst [vmem:[#allocation3 + $0x8f8] sm:$0xff] %v3455
        %v3488 = vld [vmem:[#allocation3] sm:$0xff]
        %v3489 = vld [vmem:[#allocation3 + $0x8] sm:$0xff]
        %v3490 = vld [vmem:[#allocation3 + $0x10] sm:$0xff]
        %v3491 = vld [vmem:[#allocation3 + $0x18] sm:$0xff]
        %v3492 = vld [vmem:[#allocation3 + $0x20] sm:$0xff]
        %v3493 = vld [vmem:[#allocation3 + $0x28] sm:$0xff]
        %v3494 = vld [vmem:[#allocation3 + $0x30] sm:$0xff]
        %v3495 = vld [vmem:[#allocation3 + $0x38] sm:$0xff]
        %v3496 = vld [vmem:[#allocation3 + $0x40] sm:$0xff]
        %v3497 = vld [vmem:[#allocation3 + $0x48] sm:$0xff]
        %v3498 = vld [vmem:[#allocation3 + $0x50] sm:$0xff]
        %v3499 = vld [vmem:[#allocation3 + $0x58] sm:$0xff]
        %v3500 = vld [vmem:[#allocation3 + $0x60] sm:$0xff]
        %v3501 = vld [vmem:[#allocation3 + $0x68] sm:$0xff]
        %v3502 = vld [vmem:[#allocation3 + $0x70] sm:$0xff]
        %v3503 = vld [vmem:[#allocation3 + $0x78] sm:$0xff]
        %v3504 = vld [vmem:[#allocation3 + $0x80] sm:$0xff]
        %v3505 = vld [vmem:[#allocation3 + $0x88] sm:$0xff]
        %v3506 = vld [vmem:[#allocation3 + $0x90] sm:$0xff]
        %v3507 = vld [vmem:[#allocation3 + $0x98] sm:$0xff]
        %v3508 = vld [vmem:[#allocation3 + $0xa0] sm:$0xff]
        %v3509 = vld [vmem:[#allocation3 + $0xa8] sm:$0xff]
        %v3510 = vld [vmem:[#allocation3 + $0xb0] sm:$0xff]
        %v3511 = vld [vmem:[#allocation3 + $0xb8] sm:$0xff]
        %v3512 = vld [vmem:[#allocation3 + $0xc0] sm:$0xff]
        %v3513 = vld [vmem:[#allocation3 + $0xc8] sm:$0xff]
        %v3514 = vld [vmem:[#allocation3 + $0xd0] sm:$0xff]
        %v3515 = vld [vmem:[#allocation3 + $0xd8] sm:$0xff]
        %v3516 = vld [vmem:[#allocation3 + $0xe0] sm:$0xff]
        %v3517 = vld [vmem:[#allocation3 + $0xe8] sm:$0xff]
        %v3518 = vld [vmem:[#allocation3 + $0xf0] sm:$0xff]
        %v3519 = vld [vmem:[#allocation3 + $0xf8] sm:$0xff]
        %v3520 = vld [vmem:[#allocation3 + $0x100] sm:$0xff]
        %v3521 = vld [vmem:[#allocation3 + $0x108] sm:$0xff]
        %v3522 = vld [vmem:[#allocation3 + $0x110] sm:$0xff]
        %v3523 = vld [vmem:[#allocation3 + $0x118] sm:$0xff]
        %v3524 = vld [vmem:[#allocation3 + $0x120] sm:$0xff]
        %v3525 = vld [vmem:[#allocation3 + $0x128] sm:$0xff]
        %v3526 = vld [vmem:[#allocation3 + $0x130] sm:$0xff]
        %v3527 = vld [vmem:[#allocation3 + $0x138] sm:$0xff]
        %v3528 = vld [vmem:[#allocation3 + $0x140] sm:$0xff]
        %v3529 = vld [vmem:[#allocation3 + $0x148] sm:$0xff]
        %v3530 = vld [vmem:[#allocation3 + $0x150] sm:$0xff]
        %v3531 = vld [vmem:[#allocation3 + $0x158] sm:$0xff]
        %v3532 = vld [vmem:[#allocation3 + $0x160] sm:$0xff]
        %v3533 = vld [vmem:[#allocation3 + $0x168] sm:$0xff]
        %v3534 = vld [vmem:[#allocation3 + $0x170] sm:$0xff]
        %v3535 = vld [vmem:[#allocation3 + $0x178] sm:$0xff]
        %v3536 = vld [vmem:[#allocation3 + $0x180] sm:$0xff]
        %v3537 = vld [vmem:[#allocation3 + $0x188] sm:$0xff]
        %v3538 = vld [vmem:[#allocation3 + $0x190] sm:$0xff]
        %v3539 = vld [vmem:[#allocation3 + $0x198] sm:$0xff]
        %v3540 = vld [vmem:[#allocation3 + $0x1a0] sm:$0xff]
        %v3541 = vld [vmem:[#allocation3 + $0x1a8] sm:$0xff]
        %v3542 = vld [vmem:[#allocation3 + $0x1b0] sm:$0xff]
        %v3543 = vld [vmem:[#allocation3 + $0x1b8] sm:$0xff]
        %v3544 = vld [vmem:[#allocation3 + $0x1c0] sm:$0xff]
        %v3545 = vld [vmem:[#allocation3 + $0x1c8] sm:$0xff]
        %v3546 = vld [vmem:[#allocation3 + $0x1d0] sm:$0xff]
        %v3547 = vld [vmem:[#allocation3 + $0x1d8] sm:$0xff]
        %v3548 = vld [vmem:[#allocation3 + $0x1e0] sm:$0xff]
        %v3549 = vld [vmem:[#allocation3 + $0x1e8] sm:$0xff]
        %v3550 = vld [vmem:[#allocation3 + $0x1f0] sm:$0xff]
        %v3551 = vld [vmem:[#allocation3 + $0x1f8] sm:$0xff]
        %v3552 = vld [vmem:[#allocation3 + $0x200] sm:$0xff]
        %v3553 = vld [vmem:[#allocation3 + $0x208] sm:$0xff]
        %v3554 = vld [vmem:[#allocation3 + $0x210] sm:$0xff]
        %v3555 = vld [vmem:[#allocation3 + $0x218] sm:$0xff]
        %v3556 = vld [vmem:[#allocation3 + $0x220] sm:$0xff]
        %v3557 = vld [vmem:[#allocation3 + $0x228] sm:$0xff]
        %v3558 = vld [vmem:[#allocation3 + $0x230] sm:$0xff]
        %v3559 = vld [vmem:[#allocation3 + $0x238] sm:$0xff]
        %v3560 = vld [vmem:[#allocation3 + $0x240] sm:$0xff]
        %v3561 = vld [vmem:[#allocation3 + $0x248] sm:$0xff]
        %v3562 = vld [vmem:[#allocation3 + $0x250] sm:$0xff]
        %v3563 = vld [vmem:[#allocation3 + $0x258] sm:$0xff]
        %v3564 = vld [vmem:[#allocation3 + $0x260] sm:$0xff]
        %v3565 = vld [vmem:[#allocation3 + $0x268] sm:$0xff]
        %v3566 = vld [vmem:[#allocation3 + $0x270] sm:$0xff]
        %v3567 = vld [vmem:[#allocation3 + $0x278] sm:$0xff]
        %v3568 = vld [vmem:[#allocation3 + $0x280] sm:$0xff]
        %v3569 = vld [vmem:[#allocation3 + $0x288] sm:$0xff]
        %v3570 = vld [vmem:[#allocation3 + $0x290] sm:$0xff]
        %v3571 = vld [vmem:[#allocation3 + $0x298] sm:$0xff]
        %v3572 = vld [vmem:[#allocation3 + $0x2a0] sm:$0xff]
        %v3573 = vld [vmem:[#allocation3 + $0x2a8] sm:$0xff]
        %v3574 = vld [vmem:[#allocation3 + $0x2b0] sm:$0xff]
        %v3575 = vld [vmem:[#allocation3 + $0x2b8] sm:$0xff]
        %v3576 = vld [vmem:[#allocation3 + $0x2c0] sm:$0xff]
        %v3577 = vld [vmem:[#allocation3 + $0x2c8] sm:$0xff]
        %v3578 = vld [vmem:[#allocation3 + $0x2d0] sm:$0xff]
        %v3579 = vld [vmem:[#allocation3 + $0x2d8] sm:$0xff]
        %v3580 = vld [vmem:[#allocation3 + $0x2e0] sm:$0xff]
        %v3581 = vld [vmem:[#allocation3 + $0x2e8] sm:$0xff]
        %v3582 = vld [vmem:[#allocation3 + $0x2f0] sm:$0xff]
        %v3583 = vld [vmem:[#allocation3 + $0x2f8] sm:$0xff]
        %v3584 = vld [vmem:[#allocation3 + $0x300] sm:$0xff]
        %v3585 = vld [vmem:[#allocation3 + $0x308] sm:$0xff]
        %v3586 = vld [vmem:[#allocation3 + $0x310] sm:$0xff]
        %v3587 = vld [vmem:[#allocation3 + $0x318] sm:$0xff]
        %v3588 = vld [vmem:[#allocation3 + $0x320] sm:$0xff]
        %v3589 = vld [vmem:[#allocation3 + $0x328] sm:$0xff]
        %v3590 = vld [vmem:[#allocation3 + $0x330] sm:$0xff]
        %v3591 = vld [vmem:[#allocation3 + $0x338] sm:$0xff]
        %v3592 = vld [vmem:[#allocation3 + $0x340] sm:$0xff]
        %v3593 = vld [vmem:[#allocation3 + $0x348] sm:$0xff]
        %v3594 = vld [vmem:[#allocation3 + $0x350] sm:$0xff]
        %v3595 = vld [vmem:[#allocation3 + $0x358] sm:$0xff]
        %v3596 = vld [vmem:[#allocation3 + $0x360] sm:$0xff]
        %v3597 = vld [vmem:[#allocation3 + $0x368] sm:$0xff]
        %v3598 = vld [vmem:[#allocation3 + $0x370] sm:$0xff]
        %v3599 = vld [vmem:[#allocation3 + $0x378] sm:$0xff]
        %v3600 = vld [vmem:[#allocation3 + $0x380] sm:$0xff]
        %v3601 = vld [vmem:[#allocation3 + $0x388] sm:$0xff]
        %v3602 = vld [vmem:[#allocation3 + $0x390] sm:$0xff]
        %v3603 = vld [vmem:[#allocation3 + $0x398] sm:$0xff]
        %v3604 = vld [vmem:[#allocation3 + $0x3a0] sm:$0xff]
        %v3605 = vld [vmem:[#allocation3 + $0x3a8] sm:$0xff]
        %v3606 = vld [vmem:[#allocation3 + $0x3b0] sm:$0xff]
        %v3607 = vld [vmem:[#allocation3 + $0x3b8] sm:$0xff]
        %v3608 = vld [vmem:[#allocation3 + $0x3c0] sm:$0xff]
        %v3609 = vld [vmem:[#allocation3 + $0x3c8] sm:$0xff]
        %v3610 = vld [vmem:[#allocation3 + $0x3d0] sm:$0xff]
        %v3611 = vld [vmem:[#allocation3 + $0x3d8] sm:$0xff]
        %v3612 = vld [vmem:[#allocation3 + $0x3e0] sm:$0xff]
        %v3613 = vld [vmem:[#allocation3 + $0x3e8] sm:$0xff]
        %v3614 = vld [vmem:[#allocation3 + $0x3f0] sm:$0xff]
        %v3615 = vld [vmem:[#allocation3 + $0x3f8] sm:$0xff]
        %v3616 = vld [vmem:[#allocation3 + $0x400] sm:$0xff]
        %v3617 = vld [vmem:[#allocation3 + $0x408] sm:$0xff]
        %v3618 = vld [vmem:[#allocation3 + $0x410] sm:$0xff]
        %v3619 = vld [vmem:[#allocation3 + $0x418] sm:$0xff]
        %v3620 = vld [vmem:[#allocation3 + $0x420] sm:$0xff]
        %v3621 = vld [vmem:[#allocation3 + $0x428] sm:$0xff]
        %v3622 = vld [vmem:[#allocation3 + $0x430] sm:$0xff]
        %v3623 = vld [vmem:[#allocation3 + $0x438] sm:$0xff]
        %v3624 = vld [vmem:[#allocation3 + $0x440] sm:$0xff]
        %v3625 = vld [vmem:[#allocation3 + $0x448] sm:$0xff]
        %v3626 = vld [vmem:[#allocation3 + $0x450] sm:$0xff]
        %v3627 = vld [vmem:[#allocation3 + $0x458] sm:$0xff]
        %v3628 = vld [vmem:[#allocation3 + $0x460] sm:$0xff]
        %v3629 = vld [vmem:[#allocation3 + $0x468] sm:$0xff]
        %v3630 = vld [vmem:[#allocation3 + $0x470] sm:$0xff]
        %v3631 = vld [vmem:[#allocation3 + $0x478] sm:$0xff]
        %v3632 = vld [vmem:[#allocation3 + $0x480] sm:$0xff]
        %v3633 = vld [vmem:[#allocation3 + $0x488] sm:$0xff]
        %v3634 = vld [vmem:[#allocation3 + $0x490] sm:$0xff]
        %v3635 = vld [vmem:[#allocation3 + $0x498] sm:$0xff]
        %v3636 = vld [vmem:[#allocation3 + $0x4a0] sm:$0xff]
        %v3637 = vld [vmem:[#allocation3 + $0x4a8] sm:$0xff]
        %v3638 = vld [vmem:[#allocation3 + $0x4b0] sm:$0xff]
        %v3639 = vld [vmem:[#allocation3 + $0x4b8] sm:$0xff]
        %v3640 = vld [vmem:[#allocation3 + $0x4c0] sm:$0xff]
        %v3641 = vld [vmem:[#allocation3 + $0x4c8] sm:$0xff]
        %v3642 = vld [vmem:[#allocation3 + $0x4d0] sm:$0xff]
        %v3643 = vld [vmem:[#allocation3 + $0x4d8] sm:$0xff]
        %v3644 = vld [vmem:[#allocation3 + $0x4e0] sm:$0xff]
        %v3645 = vld [vmem:[#allocation3 + $0x4e8] sm:$0xff]
        %v3646 = vld [vmem:[#allocation3 + $0x4f0] sm:$0xff]
        %v3647 = vld [vmem:[#allocation3 + $0x4f8] sm:$0xff]
        %v3648 = vld [vmem:[#allocation3 + $0x500] sm:$0xff]
        %v3649 = vld [vmem:[#allocation3 + $0x508] sm:$0xff]
        %v3650 = vld [vmem:[#allocation3 + $0x510] sm:$0xff]
        %v3651 = vld [vmem:[#allocation3 + $0x518] sm:$0xff]
        %v3652 = vld [vmem:[#allocation3 + $0x520] sm:$0xff]
        %v3653 = vld [vmem:[#allocation3 + $0x528] sm:$0xff]
        %v3654 = vld [vmem:[#allocation3 + $0x530] sm:$0xff]
        %v3655 = vld [vmem:[#allocation3 + $0x538] sm:$0xff]
        %v3656 = vld [vmem:[#allocation3 + $0x540] sm:$0xff]
        %v3657 = vld [vmem:[#allocation3 + $0x548] sm:$0xff]
        %v3658 = vld [vmem:[#allocation3 + $0x550] sm:$0xff]
        %v3659 = vld [vmem:[#allocation3 + $0x558] sm:$0xff]
        %v3660 = vld [vmem:[#allocation3 + $0x560] sm:$0xff]
        %v3661 = vld [vmem:[#allocation3 + $0x568] sm:$0xff]
        %v3662 = vld [vmem:[#allocation3 + $0x570] sm:$0xff]
        %v3663 = vld [vmem:[#allocation3 + $0x578] sm:$0xff]
        %v3664 = vld [vmem:[#allocation3 + $0x580] sm:$0xff]
        %v3665 = vld [vmem:[#allocation3 + $0x588] sm:$0xff]
        %v3666 = vld [vmem:[#allocation3 + $0x590] sm:$0xff]
        %v3667 = vld [vmem:[#allocation3 + $0x598] sm:$0xff]
        %v3668 = vld [vmem:[#allocation3 + $0x5a0] sm:$0xff]
        %v3669 = vld [vmem:[#allocation3 + $0x5a8] sm:$0xff]
        %v3670 = vld [vmem:[#allocation3 + $0x5b0] sm:$0xff]
        %v3671 = vld [vmem:[#allocation3 + $0x5b8] sm:$0xff]
        %v3672 = vld [vmem:[#allocation3 + $0x5c0] sm:$0xff]
        %v3673 = vld [vmem:[#allocation3 + $0x5c8] sm:$0xff]
        %v3674 = vld [vmem:[#allocation3 + $0x5d0] sm:$0xff]
        %v3675 = vld [vmem:[#allocation3 + $0x5d8] sm:$0xff]
        %v3676 = vld [vmem:[#allocation3 + $0x5e0] sm:$0xff]
        %v3677 = vld [vmem:[#allocation3 + $0x5e8] sm:$0xff]
        %v3678 = vld [vmem:[#allocation3 + $0x5f0] sm:$0xff]
        %v3679 = vld [vmem:[#allocation3 + $0x5f8] sm:$0xff]
        %v3680 = vld [vmem:[#allocation3 + $0x600] sm:$0xff]
        %v3681 = vld [vmem:[#allocation3 + $0x608] sm:$0xff]
        %v3682 = vld [vmem:[#allocation3 + $0x610] sm:$0xff]
        %v3683 = vld [vmem:[#allocation3 + $0x618] sm:$0xff]
        %v3684 = vld [vmem:[#allocation3 + $0x620] sm:$0xff]
        %v3685 = vld [vmem:[#allocation3 + $0x628] sm:$0xff]
        %v3686 = vld [vmem:[#allocation3 + $0x630] sm:$0xff]
        %v3687 = vld [vmem:[#allocation3 + $0x638] sm:$0xff]
        %v3688 = vld [vmem:[#allocation3 + $0x640] sm:$0xff]
        %v3689 = vld [vmem:[#allocation3 + $0x648] sm:$0xff]
        %v3690 = vld [vmem:[#allocation3 + $0x650] sm:$0xff]
        %v3691 = vld [vmem:[#allocation3 + $0x658] sm:$0xff]
        %v3692 = vld [vmem:[#allocation3 + $0x660] sm:$0xff]
        %v3693 = vld [vmem:[#allocation3 + $0x668] sm:$0xff]
        %v3694 = vld [vmem:[#allocation3 + $0x670] sm:$0xff]
        %v3695 = vld [vmem:[#allocation3 + $0x678] sm:$0xff]
        %v3696 = vld [vmem:[#allocation3 + $0x680] sm:$0xff]
        %v3697 = vld [vmem:[#allocation3 + $0x688] sm:$0xff]
        %v3698 = vld [vmem:[#allocation3 + $0x690] sm:$0xff]
        %v3699 = vld [vmem:[#allocation3 + $0x698] sm:$0xff]
        %v3700 = vld [vmem:[#allocation3 + $0x6a0] sm:$0xff]
        %v3701 = vld [vmem:[#allocation3 + $0x6a8] sm:$0xff]
        %v3702 = vld [vmem:[#allocation3 + $0x6b0] sm:$0xff]
        %v3703 = vld [vmem:[#allocation3 + $0x6b8] sm:$0xff]
        %v3704 = vld [vmem:[#allocation3 + $0x6c0] sm:$0xff]
        %v3705 = vld [vmem:[#allocation3 + $0x6c8] sm:$0xff]
        %v3706 = vld [vmem:[#allocation3 + $0x6d0] sm:$0xff]
        %v3707 = vld [vmem:[#allocation3 + $0x6d8] sm:$0xff]
        %v3708 = vld [vmem:[#allocation3 + $0x6e0] sm:$0xff]
        %v3709 = vld [vmem:[#allocation3 + $0x6e8] sm:$0xff]
        %v3710 = vld [vmem:[#allocation3 + $0x6f0] sm:$0xff]
        %v3711 = vld [vmem:[#allocation3 + $0x6f8] sm:$0xff]
        %v3712 = vld [vmem:[#allocation3 + $0x700] sm:$0xff]
        %v3713 = vld [vmem:[#allocation3 + $0x708] sm:$0xff]
        %v3714 = vld [vmem:[#allocation3 + $0x710] sm:$0xff]
        %v3715 = vld [vmem:[#allocation3 + $0x718] sm:$0xff]
        %v3716 = vld [vmem:[#allocation3 + $0x720] sm:$0xff]
        %v3717 = vld [vmem:[#allocation3 + $0x728] sm:$0xff]
        %v3718 = vld [vmem:[#allocation3 + $0x730] sm:$0xff]
        %v3719 = vld [vmem:[#allocation3 + $0x738] sm:$0xff]
        %v3720 = vld [vmem:[#allocation3 + $0x740] sm:$0xff]
        %v3721 = vld [vmem:[#allocation3 + $0x748] sm:$0xff]
        %v3722 = vld [vmem:[#allocation3 + $0x750] sm:$0xff]
        %v3723 = vld [vmem:[#allocation3 + $0x758] sm:$0xff]
        %v3724 = vld [vmem:[#allocation3 + $0x760] sm:$0xff]
        %v3725 = vld [vmem:[#allocation3 + $0x768] sm:$0xff]
        %v3726 = vld [vmem:[#allocation3 + $0x770] sm:$0xff]
        %v3727 = vld [vmem:[#allocation3 + $0x778] sm:$0xff]
        %v3728 = vld [vmem:[#allocation3 + $0x780] sm:$0xff]
        %v3729 = vld [vmem:[#allocation3 + $0x788] sm:$0xff]
        %v3730 = vld [vmem:[#allocation3 + $0x790] sm:$0xff]
        %v3731 = vld [vmem:[#allocation3 + $0x798] sm:$0xff]
        %v3732 = vld [vmem:[#allocation3 + $0x7a0] sm:$0xff]
        %v3733 = vld [vmem:[#allocation3 + $0x7a8] sm:$0xff]
        %v3734 = vld [vmem:[#allocation3 + $0x7b0] sm:$0xff]
        %v3735 = vld [vmem:[#allocation3 + $0x7b8] sm:$0xff]
        %v3736 = vld [vmem:[#allocation3 + $0x7c0] sm:$0xff]
        %v3737 = vld [vmem:[#allocation3 + $0x7c8] sm:$0xff]
        %v3738 = vld [vmem:[#allocation3 + $0x7d0] sm:$0xff]
        %v3739 = vld [vmem:[#allocation3 + $0x7d8] sm:$0xff]
        %v3740 = vld [vmem:[#allocation3 + $0x7e0] sm:$0xff]
        %v3741 = vld [vmem:[#allocation3 + $0x7e8] sm:$0xff]
        %v3742 = vld [vmem:[#allocation3 + $0x7f0] sm:$0xff]
        %v3743 = vld [vmem:[#allocation3 + $0x7f8] sm:$0xff]
        %v3744 = vld [vmem:[#allocation3 + $0x800] sm:$0xff]
        %v3745 = vld [vmem:[#allocation3 + $0x808] sm:$0xff]
        %v3746 = vld [vmem:[#allocation3 + $0x810] sm:$0xff]
        %v3747 = vld [vmem:[#allocation3 + $0x818] sm:$0xff]
        %v3748 = vld [vmem:[#allocation3 + $0x820] sm:$0xff]
        %v3749 = vld [vmem:[#allocation3 + $0x828] sm:$0xff]
        %v3750 = vld [vmem:[#allocation3 + $0x830] sm:$0xff]
        %v3751 = vld [vmem:[#allocation3 + $0x838] sm:$0xff]
        %v3752 = vld [vmem:[#allocation3 + $0x840] sm:$0xff]
        %v3753 = vld [vmem:[#allocation3 + $0x848] sm:$0xff]
        %v3754 = vld [vmem:[#allocation3 + $0x850] sm:$0xff]
        %v3755 = vld [vmem:[#allocation3 + $0x858] sm:$0xff]
        %v3756 = vld [vmem:[#allocation3 + $0x860] sm:$0xff]
        %v3757 = vld [vmem:[#allocation3 + $0x868] sm:$0xff]
        %v3758 = vld [vmem:[#allocation3 + $0x870] sm:$0xff]
        %v3759 = vld [vmem:[#allocation3 + $0x878] sm:$0xff]
        %v3760 = vld [vmem:[#allocation3 + $0x880] sm:$0xff]
        %v3761 = vld [vmem:[#allocation3 + $0x888] sm:$0xff]
        %v3762 = vld [vmem:[#allocation3 + $0x890] sm:$0xff]
        %v3763 = vld [vmem:[#allocation3 + $0x898] sm:$0xff]
        %v3764 = vld [vmem:[#allocation3 + $0x8a0] sm:$0xff]
        %v3765 = vld [vmem:[#allocation3 + $0x8a8] sm:$0xff]
        %v3766 = vld [vmem:[#allocation3 + $0x8b0] sm:$0xff]
        %v3767 = vld [vmem:[#allocation3 + $0x8b8] sm:$0xff]
        %v3768 = vld [vmem:[#allocation3 + $0x8c0] sm:$0xff]
        %v3769 = vld [vmem:[#allocation3 + $0x8c8] sm:$0xff]
        %v3770 = vld [vmem:[#allocation3 + $0x8d0] sm:$0xff]
        %v3771 = vld [vmem:[#allocation3 + $0x8d8] sm:$0xff]
        %v3772 = vld [vmem:[#allocation3 + $0x8e0] sm:$0xff]
        %v3773 = vld [vmem:[#allocation3 + $0x8e8] sm:$0xff]
        %v3774 = vld [vmem:[#allocation3 + $0x8f0] sm:$0xff]
        %v3775 = vld [vmem:[#allocation3 + $0x8f8] sm:$0xff]
        %v3776 = vld [vmem:[#allocation9] sm:$0xff]
        %v3777 = vld [vmem:[#allocation9 + $0x8] sm:$0xff]
        %v3778 = vld [vmem:[#allocation9 + $0x10] sm:$0xff]
        %v3779 = vld [vmem:[#allocation9 + $0x18] sm:$0xff]
        %v3780 = vld [vmem:[#allocation9 + $0x20] sm:$0xff]
        %v3781 = vld [vmem:[#allocation9 + $0x28] sm:$0xff]
        %v3782 = vld [vmem:[#allocation9 + $0x30] sm:$0xff]
        %v3783 = vld [vmem:[#allocation9 + $0x38] sm:$0xff]
        %v3784 = vld [vmem:[#allocation9 + $0x40] sm:$0xff]
        %v3785 = vld [vmem:[#allocation9 + $0x48] sm:$0xff]
        %v3786 = vld [vmem:[#allocation9 + $0x50] sm:$0xff]
        %v3787 = vld [vmem:[#allocation9 + $0x58] sm:$0xff]
        %v3788 = vld [vmem:[#allocation9 + $0x60] sm:$0xff]
        %v3789 = vld [vmem:[#allocation9 + $0x68] sm:$0xff]
        %v3790 = vld [vmem:[#allocation9 + $0x70] sm:$0xff]
        %v3791 = vld [vmem:[#allocation9 + $0x78] sm:$0xff]
        %v3792 = vld [vmem:[#allocation9 + $0x80] sm:$0xff]
        %v3793 = vld [vmem:[#allocation9 + $0x88] sm:$0xff]
        %v3794 = vld [vmem:[#allocation9 + $0x90] sm:$0xff]
        %v3795 = vld [vmem:[#allocation9 + $0x98] sm:$0xff]
        %v3796 = vld [vmem:[#allocation9 + $0xa0] sm:$0xff]
        %v3797 = vld [vmem:[#allocation9 + $0xa8] sm:$0xff]
        %v3798 = vld [vmem:[#allocation9 + $0xb0] sm:$0xff]
        %v3799 = vld [vmem:[#allocation9 + $0xb8] sm:$0xff]
        %v3800 = vld [vmem:[#allocation9 + $0xc0] sm:$0xff]
        %v3801 = vld [vmem:[#allocation9 + $0xc8] sm:$0xff]
        %v3802 = vld [vmem:[#allocation9 + $0xd0] sm:$0xff]
        %v3803 = vld [vmem:[#allocation9 + $0xd8] sm:$0xff]
        %v3804 = vld [vmem:[#allocation9 + $0xe0] sm:$0xff]
        %v3805 = vld [vmem:[#allocation9 + $0xe8] sm:$0xff]
        %v3806 = vld [vmem:[#allocation9 + $0xf0] sm:$0xff]
        %v3807 = vld [vmem:[#allocation9 + $0xf8] sm:$0xff]
        %v3808 = vld [vmem:[#allocation9 + $0x100] sm:$0xff]
        %v3809 = vld [vmem:[#allocation9 + $0x108] sm:$0xff]
        %v3810 = vld [vmem:[#allocation9 + $0x110] sm:$0xff]
        %v3811 = vld [vmem:[#allocation9 + $0x118] sm:$0xff]
        %v3812 = vld [vmem:[#allocation9 + $0x120] sm:$0xff]
        %v3813 = vld [vmem:[#allocation9 + $0x128] sm:$0xff]
        %v3814 = vld [vmem:[#allocation9 + $0x130] sm:$0xff]
        %v3815 = vld [vmem:[#allocation9 + $0x138] sm:$0xff]
        %v3816 = vld [vmem:[#allocation9 + $0x140] sm:$0xff]
        %v3817 = vld [vmem:[#allocation9 + $0x148] sm:$0xff]
        %v3818 = vld [vmem:[#allocation9 + $0x150] sm:$0xff]
        %v3819 = vld [vmem:[#allocation9 + $0x158] sm:$0xff]
        %v3820 = vld [vmem:[#allocation9 + $0x160] sm:$0xff]
        %v3821 = vld [vmem:[#allocation9 + $0x168] sm:$0xff]
        %v3822 = vld [vmem:[#allocation9 + $0x170] sm:$0xff]
        %v3823 = vld [vmem:[#allocation9 + $0x178] sm:$0xff]
        %v3824 = vld [vmem:[#allocation9 + $0x180] sm:$0xff]
        %v3825 = vld [vmem:[#allocation9 + $0x188] sm:$0xff]
        %v3826 = vld [vmem:[#allocation9 + $0x190] sm:$0xff]
        %v3827 = vld [vmem:[#allocation9 + $0x198] sm:$0xff]
        %v3828 = vld [vmem:[#allocation9 + $0x1a0] sm:$0xff]
        %v3829 = vld [vmem:[#allocation9 + $0x1a8] sm:$0xff]
        %v3830 = vld [vmem:[#allocation9 + $0x1b0] sm:$0xff]
        %v3831 = vld [vmem:[#allocation9 + $0x1b8] sm:$0xff]
        %v3832 = vld [vmem:[#allocation9 + $0x1c0] sm:$0xff]
        %v3833 = vld [vmem:[#allocation9 + $0x1c8] sm:$0xff]
        %v3834 = vld [vmem:[#allocation9 + $0x1d0] sm:$0xff]
        %v3835 = vld [vmem:[#allocation9 + $0x1d8] sm:$0xff]
        %v3836 = vld [vmem:[#allocation9 + $0x1e0] sm:$0xff]
        %v3837 = vld [vmem:[#allocation9 + $0x1e8] sm:$0xff]
        %v3838 = vld [vmem:[#allocation9 + $0x1f0] sm:$0xff]
        %v3839 = vld [vmem:[#allocation9 + $0x1f8] sm:$0xff]
        %v3840 = vld [vmem:[#allocation9 + $0x200] sm:$0xff]
        %v3841 = vld [vmem:[#allocation9 + $0x208] sm:$0xff]
        %v3842 = vld [vmem:[#allocation9 + $0x210] sm:$0xff]
        %v3843 = vld [vmem:[#allocation9 + $0x218] sm:$0xff]
        %v3844 = vld [vmem:[#allocation9 + $0x220] sm:$0xff]
        %v3845 = vld [vmem:[#allocation9 + $0x228] sm:$0xff]
        %v3846 = vld [vmem:[#allocation9 + $0x230] sm:$0xff]
        %v3847 = vld [vmem:[#allocation9 + $0x238] sm:$0xff]
        %v3848 = vld [vmem:[#allocation9 + $0x240] sm:$0xff]
        %v3849 = vld [vmem:[#allocation9 + $0x248] sm:$0xff]
        %v3850 = vld [vmem:[#allocation9 + $0x250] sm:$0xff]
        %v3851 = vld [vmem:[#allocation9 + $0x258] sm:$0xff]
        %v3852 = vld [vmem:[#allocation9 + $0x260] sm:$0xff]
        %v3853 = vld [vmem:[#allocation9 + $0x268] sm:$0xff]
        %v3854 = vld [vmem:[#allocation9 + $0x270] sm:$0xff]
        %v3855 = vld [vmem:[#allocation9 + $0x278] sm:$0xff]
        %v3856 = vld [vmem:[#allocation9 + $0x280] sm:$0xff]
        %v3857 = vld [vmem:[#allocation9 + $0x288] sm:$0xff]
        %v3858 = vld [vmem:[#allocation9 + $0x290] sm:$0xff]
        %v3859 = vld [vmem:[#allocation9 + $0x298] sm:$0xff]
        %v3860 = vld [vmem:[#allocation9 + $0x2a0] sm:$0xff]
        %v3861 = vld [vmem:[#allocation9 + $0x2a8] sm:$0xff]
        %v3862 = vld [vmem:[#allocation9 + $0x2b0] sm:$0xff]
        %v3863 = vld [vmem:[#allocation9 + $0x2b8] sm:$0xff]
        %v3864 = vld [vmem:[#allocation9 + $0x2c0] sm:$0xff]
        %v3865 = vld [vmem:[#allocation9 + $0x2c8] sm:$0xff]
        %v3866 = vld [vmem:[#allocation9 + $0x2d0] sm:$0xff]
        %v3867 = vld [vmem:[#allocation9 + $0x2d8] sm:$0xff]
        %v3868 = vld [vmem:[#allocation9 + $0x2e0] sm:$0xff]
        %v3869 = vld [vmem:[#allocation9 + $0x2e8] sm:$0xff]
        %v3870 = vld [vmem:[#allocation9 + $0x2f0] sm:$0xff]
        %v3871 = vld [vmem:[#allocation9 + $0x2f8] sm:$0xff]
        %v3872 = vld [vmem:[#allocation9 + $0x300] sm:$0xff]
        %v3873 = vld [vmem:[#allocation9 + $0x308] sm:$0xff]
        %v3874 = vld [vmem:[#allocation9 + $0x310] sm:$0xff]
        %v3875 = vld [vmem:[#allocation9 + $0x318] sm:$0xff]
        %v3876 = vld [vmem:[#allocation9 + $0x320] sm:$0xff]
        %v3877 = vld [vmem:[#allocation9 + $0x328] sm:$0xff]
        %v3878 = vld [vmem:[#allocation9 + $0x330] sm:$0xff]
        %v3879 = vld [vmem:[#allocation9 + $0x338] sm:$0xff]
        %v3880 = vld [vmem:[#allocation9 + $0x340] sm:$0xff]
        %v3881 = vld [vmem:[#allocation9 + $0x348] sm:$0xff]
        %v3882 = vld [vmem:[#allocation9 + $0x350] sm:$0xff]
        %v3883 = vld [vmem:[#allocation9 + $0x358] sm:$0xff]
        %v3884 = vld [vmem:[#allocation9 + $0x360] sm:$0xff]
        %v3885 = vld [vmem:[#allocation9 + $0x368] sm:$0xff]
        %v3886 = vld [vmem:[#allocation9 + $0x370] sm:$0xff]
        %v3887 = vld [vmem:[#allocation9 + $0x378] sm:$0xff]
        %v3888 = vld [vmem:[#allocation9 + $0x380] sm:$0xff]
        %v3889 = vld [vmem:[#allocation9 + $0x388] sm:$0xff]
        %v3890 = vld [vmem:[#allocation9 + $0x390] sm:$0xff]
        %v3891 = vld [vmem:[#allocation9 + $0x398] sm:$0xff]
        %v3892 = vld [vmem:[#allocation9 + $0x3a0] sm:$0xff]
        %v3893 = vld [vmem:[#allocation9 + $0x3a8] sm:$0xff]
        %v3894 = vld [vmem:[#allocation9 + $0x3b0] sm:$0xff]
        %v3895 = vld [vmem:[#allocation9 + $0x3b8] sm:$0xff]
        %v3896 = vld [vmem:[#allocation9 + $0x3c0] sm:$0xff]
        %v3897 = vld [vmem:[#allocation9 + $0x3c8] sm:$0xff]
        %v3898 = vld [vmem:[#allocation9 + $0x3d0] sm:$0xff]
        %v3899 = vld [vmem:[#allocation9 + $0x3d8] sm:$0xff]
        %v3900 = vld [vmem:[#allocation9 + $0x3e0] sm:$0xff]
        %v3901 = vld [vmem:[#allocation9 + $0x3e8] sm:$0xff]
        %v3902 = vld [vmem:[#allocation9 + $0x3f0] sm:$0xff]
        %v3903 = vld [vmem:[#allocation9 + $0x3f8] sm:$0xff]
        %v3904 = vld [vmem:[#allocation9 + $0x400] sm:$0xff]
        %v3905 = vld [vmem:[#allocation9 + $0x408] sm:$0xff]
        %v3906 = vld [vmem:[#allocation9 + $0x410] sm:$0xff]
        %v3907 = vld [vmem:[#allocation9 + $0x418] sm:$0xff]
        %v3908 = vld [vmem:[#allocation9 + $0x420] sm:$0xff]
        %v3909 = vld [vmem:[#allocation9 + $0x428] sm:$0xff]
        %v3910 = vld [vmem:[#allocation9 + $0x430] sm:$0xff]
        %v3911 = vld [vmem:[#allocation9 + $0x438] sm:$0xff]
        %v3912 = vld [vmem:[#allocation9 + $0x440] sm:$0xff]
        %v3913 = vld [vmem:[#allocation9 + $0x448] sm:$0xff]
        %v3914 = vld [vmem:[#allocation9 + $0x450] sm:$0xff]
        %v3915 = vld [vmem:[#allocation9 + $0x458] sm:$0xff]
        %v3916 = vld [vmem:[#allocation9 + $0x460] sm:$0xff]
        %v3917 = vld [vmem:[#allocation9 + $0x468] sm:$0xff]
        %v3918 = vld [vmem:[#allocation9 + $0x470] sm:$0xff]
        %v3919 = vld [vmem:[#allocation9 + $0x478] sm:$0xff]
        %v3920 = vlaneseq
        %v3921 = vshrl.u32 %v3920, 7
        %v3922 = vsub.s32 4, %v3921
        %v3923 = vrot.slane %v330, %v3922
        %3924 = vmatprep.subr.mxu0 0.0
        %3925 = vmatpush1.msra.mxu0 %v3791
        %3926 = vmatprep.subr.mxu0 0.0
        %3927 = vmatpush1.msra.mxu0 %v3790
        %3928 = vmatprep.subr.mxu0 0.0
        %3929 = vmatpush1.msra.mxu0 %v3789
        %3930 = vmatprep.subr.mxu0 0.0
        %3931 = vmatpush1.msra.mxu0 %v3788
        %3932 = vmatprep.subr.mxu0 0.0
        %3933 = vmatpush1.msra.mxu0 %v3787
        %3934 = vmatprep.subr.mxu0 0.0
        %3935 = vmatpush1.msra.mxu0 %v3786
        %3936 = vmatprep.subr.mxu0 0.0
        %3937 = vmatpush1.msra.mxu0 %v3785
        %3938 = vmatprep.subr.mxu0 0.0
        %3939 = vmatpush1.msra.mxu0 %v3784
        %3940 = vmatprep.subr.mxu0 0.0
        %3941 = vmatpush1.msra.mxu0 %v3783
        %3942 = vmatprep.subr.mxu0 0.0
        %3943 = vmatpush1.msra.mxu0 %v3782
        %3944 = vmatprep.subr.mxu0 0.0
        %3945 = vmatpush1.msra.mxu0 %v3781
        %3946 = vmatprep.subr.mxu0 0.0
        %3947 = vmatpush1.msra.mxu0 %v3780
        %3948 = vmatprep.subr.mxu0 0.0
        %3949 = vmatpush1.msra.mxu0 %v3779
        %3950 = vmatprep.subr.mxu0 0.0
        %3951 = vmatpush1.msra.mxu0 %v3778
        %3952 = vmatprep.subr.mxu0 0.0
        %3953 = vmatpush1.msra.mxu0 %v3777
        %3954 = vmatprep.subr.mxu0 0.0
        %3955 = vmatpush1.msra.mxu0 %v3776
        %3956 = vmatprep.subr.mxu0 0.0
        %3957 = vmatpush2.msra.mxu0 %v3807
        %3958 = vmatprep.subr.mxu0 0.0
        %3959 = vmatpush2.msra.mxu0 %v3806
        %3960 = vmatprep.subr.mxu0 0.0
        %3961 = vmatpush2.msra.mxu0 %v3805
        %3962 = vmatprep.subr.mxu0 0.0
        %3963 = vmatpush2.msra.mxu0 %v3804
        %3964 = vmatprep.subr.mxu0 0.0
        %3965 = vmatpush2.msra.mxu0 %v3803
        %3966 = vmatprep.subr.mxu0 0.0
        %3967 = vmatpush2.msra.mxu0 %v3802
        %3968 = vmatprep.subr.mxu0 0.0
        %3969 = vmatpush2.msra.mxu0 %v3801
        %3970 = vmatprep.subr.mxu0 0.0
        %3971 = vmatpush2.msra.mxu0 %v3800
        %3972 = vmatprep.subr.mxu0 0.0
        %3973 = vmatpush2.msra.mxu0 %v3799
        %3974 = vmatprep.subr.mxu0 0.0
        %3975 = vmatpush2.msra.mxu0 %v3798
        %3976 = vmatprep.subr.mxu0 0.0
        %3977 = vmatpush2.msra.mxu0 %v3797
        %3978 = vmatprep.subr.mxu0 0.0
        %3979 = vmatpush2.msra.mxu0 %v3796
        %3980 = vmatprep.subr.mxu0 0.0
        %3981 = vmatpush2.msra.mxu0 %v3795
        %3982 = vmatprep.subr.mxu0 0.0
        %3983 = vmatpush2.msra.mxu0 %v3794
        %3984 = vmatprep.subr.mxu0 0.0
        %3985 = vmatpush2.msra.mxu0 %v3793
        %3986 = vmatprep.subr.mxu0 0.0
        %3987 = vmatpush2.msra.mxu0 %v3792
        %3988 = vmatprep.mubr.f32.mxu0 %v3489
        %3989 = vmatmul.mubr.f32.gmra.mxu0 %v3488
        %v3990 = vpop.f32.mrf.mxu0
        %v3991 = vadd.f32 %v3923, %v3990
        %v3992 = vpop.f32.mrf.mxu0
        %3993 = vmatprep.mubr.f32.mxu0 %v3498
        %3994 = vmatmul.mubr.f32.gmra.mxu0 %v3497
        %v3995 = vpop.f32.mrf.mxu0
        %v3996 = vadd.f32 %v3923, %v3995
        %v3997 = vpop.f32.mrf.mxu0
        %3998 = vmatprep.mubr.f32.mxu0 %v3507
        %3999 = vmatmul.mubr.f32.gmra.mxu0 %v3506
        %v4000 = vpop.f32.mrf.mxu0
        %v4001 = vadd.f32 %v3923, %v4000
        %v4002 = vpop.f32.mrf.mxu0
        %4003 = vmatprep.mubr.f32.mxu0 %v3516
        %4004 = vmatmul.mubr.f32.gmra.mxu0 %v3515
        %v4005 = vpop.f32.mrf.mxu0
        %v4006 = vadd.f32 %v3923, %v4005
        %v4007 = vpop.f32.mrf.mxu0
        %4008 = vmatprep.mubr.f32.mxu0 %v3525
        %4009 = vmatmul.mubr.f32.gmra.mxu0 %v3524
        %v4010 = vpop.f32.mrf.mxu0
        %v4011 = vadd.f32 %v3923, %v4010
        %v4012 = vpop.f32.mrf.mxu0
        %4013 = vmatprep.mubr.f32.mxu0 %v3534
        %4014 = vmatmul.mubr.f32.gmra.mxu0 %v3533
        %v4015 = vpop.f32.mrf.mxu0
        %v4016 = vadd.f32 %v3923, %v4015
        %v4017 = vpop.f32.mrf.mxu0
        %4018 = vmatprep.mubr.f32.mxu0 %v3543
        %4019 = vmatmul.mubr.f32.gmra.mxu0 %v3542
        %v4020 = vpop.f32.mrf.mxu0
        %v4021 = vadd.f32 %v3923, %v4020
        %v4022 = vpop.f32.mrf.mxu0
        %4023 = vmatprep.mubr.f32.mxu0 %v3552
        %4024 = vmatmul.mubr.f32.gmra.mxu0 %v3551
        %v4025 = vpop.f32.mrf.mxu0
        %v4026 = vadd.f32 %v3923, %v4025
        %v4027 = vpop.f32.mrf.mxu0
        %4028 = vmatprep.mubr.f32.mxu0 %v3561
        %4029 = vmatmul.mubr.f32.gmra.mxu0 %v3560
        %v4030 = vpop.f32.mrf.mxu0
        %v4031 = vadd.f32 %v3923, %v4030
        %v4032 = vpop.f32.mrf.mxu0
        %4033 = vmatprep.mubr.f32.mxu0 %v3570
        %4034 = vmatmul.mubr.f32.gmra.mxu0 %v3569
        %v4035 = vpop.f32.mrf.mxu0
        %v4036 = vadd.f32 %v3923, %v4035
        %v4037 = vpop.f32.mrf.mxu0
        %4038 = vmatprep.mubr.f32.mxu0 %v3579
        %4039 = vmatmul.mubr.f32.gmra.mxu0 %v3578
        %v4040 = vpop.f32.mrf.mxu0
        %v4041 = vadd.f32 %v3923, %v4040
        %v4042 = vpop.f32.mrf.mxu0
        %4043 = vmatprep.mubr.f32.mxu0 %v3588
        %4044 = vmatmul.mubr.f32.gmra.mxu0 %v3587
        %v4045 = vpop.f32.mrf.mxu0
        %v4046 = vadd.f32 %v3923, %v4045
        %v4047 = vpop.f32.mrf.mxu0
        %4048 = vmatprep.mubr.f32.mxu0 %v3597
        %4049 = vmatmul.mubr.f32.gmra.mxu0 %v3596
        %v4050 = vpop.f32.mrf.mxu0
        %v4051 = vadd.f32 %v3923, %v4050
        %v4052 = vpop.f32.mrf.mxu0
        %4053 = vmatprep.mubr.f32.mxu0 %v3606
        %4054 = vmatmul.mubr.f32.gmra.mxu0 %v3605
        %v4055 = vpop.f32.mrf.mxu0
        %v4056 = vadd.f32 %v3923, %v4055
        %v4057 = vpop.f32.mrf.mxu0
        %4058 = vmatprep.mubr.f32.mxu0 %v3615
        %4059 = vmatmul.mubr.f32.gmra.mxu0 %v3614
        %v4060 = vpop.f32.mrf.mxu0
        %v4061 = vadd.f32 %v3923, %v4060
        %v4062 = vpop.f32.mrf.mxu0
        %4063 = vmatprep.mubr.f32.mxu0 %v3624
        %4064 = vmatmul.mubr.f32.gmra.mxu0 %v3623
        %v4065 = vpop.f32.mrf.mxu0
        %v4066 = vadd.f32 %v3923, %v4065
        %v4067 = vpop.f32.mrf.mxu0
        %4068 = vmatprep.mubr.f32.mxu0 %v3633
        %4069 = vmatmul.mubr.f32.gmra.mxu0 %v3632
        %v4070 = vpop.f32.mrf.mxu0
        %v4071 = vadd.f32 %v3923, %v4070
        %v4072 = vpop.f32.mrf.mxu0
        %4073 = vmatprep.mubr.f32.mxu0 %v3642
        %4074 = vmatmul.mubr.f32.gmra.mxu0 %v3641
        %v4075 = vpop.f32.mrf.mxu0
        %v4076 = vadd.f32 %v3923, %v4075
        %v4077 = vpop.f32.mrf.mxu0
        %4078 = vmatprep.mubr.f32.mxu0 %v3651
        %4079 = vmatmul.mubr.f32.gmra.mxu0 %v3650
        %v4080 = vpop.f32.mrf.mxu0
        %v4081 = vadd.f32 %v3923, %v4080
        %v4082 = vpop.f32.mrf.mxu0
        %4083 = vmatprep.mubr.f32.mxu0 %v3660
        %4084 = vmatmul.mubr.f32.gmra.mxu0 %v3659
        %v4085 = vpop.f32.mrf.mxu0
        %v4086 = vadd.f32 %v3923, %v4085
        %v4087 = vpop.f32.mrf.mxu0
        %4088 = vmatprep.mubr.f32.mxu0 %v3669
        %4089 = vmatmul.mubr.f32.gmra.mxu0 %v3668
        %v4090 = vpop.f32.mrf.mxu0
        %v4091 = vadd.f32 %v3923, %v4090
        %v4092 = vpop.f32.mrf.mxu0
        %4093 = vmatprep.mubr.f32.mxu0 %v3678
        %4094 = vmatmul.mubr.f32.gmra.mxu0 %v3677
        %v4095 = vpop.f32.mrf.mxu0
        %v4096 = vadd.f32 %v3923, %v4095
        %v4097 = vpop.f32.mrf.mxu0
        %4098 = vmatprep.mubr.f32.mxu0 %v3687
        %4099 = vmatmul.mubr.f32.gmra.mxu0 %v3686
        %v4100 = vpop.f32.mrf.mxu0
        %v4101 = vadd.f32 %v3923, %v4100
        %v4102 = vpop.f32.mrf.mxu0
        %4103 = vmatprep.mubr.f32.mxu0 %v3696
        %4104 = vmatmul.mubr.f32.gmra.mxu0 %v3695
        %v4105 = vpop.f32.mrf.mxu0
        %v4106 = vadd.f32 %v3923, %v4105
        %v4107 = vpop.f32.mrf.mxu0
        %4108 = vmatprep.mubr.f32.mxu0 %v3705
        %4109 = vmatmul.mubr.f32.gmra.mxu0 %v3704
        %v4110 = vpop.f32.mrf.mxu0
        %v4111 = vadd.f32 %v3923, %v4110
        %v4112 = vpop.f32.mrf.mxu0
        %4113 = vmatprep.mubr.f32.mxu0 %v3714
        %4114 = vmatmul.mubr.f32.gmra.mxu0 %v3713
        %v4115 = vpop.f32.mrf.mxu0
        %v4116 = vadd.f32 %v3923, %v4115
        %v4117 = vpop.f32.mrf.mxu0
        %4118 = vmatprep.mubr.f32.mxu0 %v3723
        %4119 = vmatmul.mubr.f32.gmra.mxu0 %v3722
        %v4120 = vpop.f32.mrf.mxu0
        %v4121 = vadd.f32 %v3923, %v4120
        %v4122 = vpop.f32.mrf.mxu0
        %4123 = vmatprep.mubr.f32.mxu0 %v3732
        %4124 = vmatmul.mubr.f32.gmra.mxu0 %v3731
        %v4125 = vpop.f32.mrf.mxu0
        %v4126 = vadd.f32 %v3923, %v4125
        %v4127 = vpop.f32.mrf.mxu0
        %4128 = vmatprep.mubr.f32.mxu0 %v3741
        %4129 = vmatmul.mubr.f32.gmra.mxu0 %v3740
        %v4130 = vpop.f32.mrf.mxu0
        %v4131 = vadd.f32 %v3923, %v4130
        %v4132 = vpop.f32.mrf.mxu0
        %4133 = vmatprep.mubr.f32.mxu0 %v3750
        %4134 = vmatmul.mubr.f32.gmra.mxu0 %v3749
        %v4135 = vpop.f32.mrf.mxu0
        %v4136 = vadd.f32 %v3923, %v4135
        %v4137 = vpop.f32.mrf.mxu0
        %4138 = vmatprep.mubr.f32.mxu0 %v3759
        %4139 = vmatmul.mubr.f32.gmra.mxu0 %v3758
        %v4140 = vpop.f32.mrf.mxu0
        %v4141 = vadd.f32 %v3923, %v4140
        %v4142 = vpop.f32.mrf.mxu0
        %4143 = vmatprep.mubr.f32.mxu0 %v3768
        %4144 = vmatmul.mubr.f32.gmra.mxu0 %v3767
        %v4145 = vpop.f32.mrf.mxu0
        %v4146 = vadd.f32 %v3923, %v4145
        %v4147 = vpop.f32.mrf.mxu0
        %4148 = vdwg.mxu0
        %4149 = vmatprep.subr.mxu0 0.0
        %4150 = vmatpush1.msra.mxu0 %v3823
        %4151 = vmatprep.subr.mxu0 0.0
        %4152 = vmatpush1.msra.mxu0 %v3822
        %4153 = vmatprep.subr.mxu0 0.0
        %4154 = vmatpush1.msra.mxu0 %v3821
        %4155 = vmatprep.subr.mxu0 0.0
        %4156 = vmatpush1.msra.mxu0 %v3820
        %4157 = vmatprep.subr.mxu0 0.0
        %4158 = vmatpush1.msra.mxu0 %v3819
        %4159 = vmatprep.subr.mxu0 0.0
        %4160 = vmatpush1.msra.mxu0 %v3818
        %4161 = vmatprep.subr.mxu0 0.0
        %4162 = vmatpush1.msra.mxu0 %v3817
        %4163 = vmatprep.subr.mxu0 0.0
        %4164 = vmatpush1.msra.mxu0 %v3816
        %4165 = vmatprep.subr.mxu0 0.0
        %4166 = vmatpush1.msra.mxu0 %v3815
        %4167 = vmatprep.subr.mxu0 0.0
        %4168 = vmatpush1.msra.mxu0 %v3814
        %4169 = vmatprep.subr.mxu0 0.0
        %4170 = vmatpush1.msra.mxu0 %v3813
        %4171 = vmatprep.subr.mxu0 0.0
        %4172 = vmatpush1.msra.mxu0 %v3812
        %4173 = vmatprep.subr.mxu0 0.0
        %4174 = vmatpush1.msra.mxu0 %v3811
        %4175 = vmatprep.subr.mxu0 0.0
        %4176 = vmatpush1.msra.mxu0 %v3810
        %4177 = vmatprep.subr.mxu0 0.0
        %4178 = vmatpush1.msra.mxu0 %v3809
        %4179 = vmatprep.subr.mxu0 0.0
        %4180 = vmatpush1.msra.mxu0 %v3808
        %4181 = vmatprep.subr.mxu0 0.0
        %4182 = vmatpush2.msra.mxu0 %v3839
        %4183 = vmatprep.subr.mxu0 0.0
        %4184 = vmatpush2.msra.mxu0 %v3838
        %4185 = vmatprep.subr.mxu0 0.0
        %4186 = vmatpush2.msra.mxu0 %v3837
        %4187 = vmatprep.subr.mxu0 0.0
        %4188 = vmatpush2.msra.mxu0 %v3836
        %4189 = vmatprep.subr.mxu0 0.0
        %4190 = vmatpush2.msra.mxu0 %v3835
        %4191 = vmatprep.subr.mxu0 0.0
        %4192 = vmatpush2.msra.mxu0 %v3834
        %4193 = vmatprep.subr.mxu0 0.0
        %4194 = vmatpush2.msra.mxu0 %v3833
        %4195 = vmatprep.subr.mxu0 0.0
        %4196 = vmatpush2.msra.mxu0 %v3832
        %4197 = vmatprep.subr.mxu0 0.0
        %4198 = vmatpush2.msra.mxu0 %v3831
        %4199 = vmatprep.subr.mxu0 0.0
        %4200 = vmatpush2.msra.mxu0 %v3830
        %4201 = vmatprep.subr.mxu0 0.0
        %4202 = vmatpush2.msra.mxu0 %v3829
        %4203 = vmatprep.subr.mxu0 0.0
        %4204 = vmatpush2.msra.mxu0 %v3828
        %4205 = vmatprep.subr.mxu0 0.0
        %4206 = vmatpush2.msra.mxu0 %v3827
        %4207 = vmatprep.subr.mxu0 0.0
        %4208 = vmatpush2.msra.mxu0 %v3826
        %4209 = vmatprep.subr.mxu0 0.0
        %4210 = vmatpush2.msra.mxu0 %v3825
        %4211 = vmatprep.subr.mxu0 0.0
        %4212 = vmatpush2.msra.mxu0 %v3824
        %4213 = vmatprep.mubr.f32.mxu0 %v3491
        %4214 = vmatmul.mubr.f32.gmra.mxu0 %v3490
        %v4215 = vpop.f32.mrf.mxu0
        %v4216 = vadd.f32 %v3991, %v4215
        %v4217 = vpop.f32.mrf.mxu0
        %4218 = vmatprep.mubr.f32.mxu0 %v3500
        %4219 = vmatmul.mubr.f32.gmra.mxu0 %v3499
        %v4220 = vpop.f32.mrf.mxu0
        %v4221 = vadd.f32 %v3996, %v4220
        %v4222 = vpop.f32.mrf.mxu0
        %4223 = vmatprep.mubr.f32.mxu0 %v3509
        %4224 = vmatmul.mubr.f32.gmra.mxu0 %v3508
        %v4225 = vpop.f32.mrf.mxu0
        %v4226 = vadd.f32 %v4001, %v4225
        %v4227 = vpop.f32.mrf.mxu0
        %4228 = vmatprep.mubr.f32.mxu0 %v3518
        %4229 = vmatmul.mubr.f32.gmra.mxu0 %v3517
        %v4230 = vpop.f32.mrf.mxu0
        %v4231 = vadd.f32 %v4006, %v4230
        %v4232 = vpop.f32.mrf.mxu0
        %4233 = vmatprep.mubr.f32.mxu0 %v3527
        %4234 = vmatmul.mubr.f32.gmra.mxu0 %v3526
        %v4235 = vpop.f32.mrf.mxu0
        %v4236 = vadd.f32 %v4011, %v4235
        %v4237 = vpop.f32.mrf.mxu0
        %4238 = vmatprep.mubr.f32.mxu0 %v3536
        %4239 = vmatmul.mubr.f32.gmra.mxu0 %v3535
        %v4240 = vpop.f32.mrf.mxu0
        %v4241 = vadd.f32 %v4016, %v4240
        %v4242 = vpop.f32.mrf.mxu0
        %4243 = vmatprep.mubr.f32.mxu0 %v3545
        %4244 = vmatmul.mubr.f32.gmra.mxu0 %v3544
        %v4245 = vpop.f32.mrf.mxu0
        %v4246 = vadd.f32 %v4021, %v4245
        %v4247 = vpop.f32.mrf.mxu0
        %4248 = vmatprep.mubr.f32.mxu0 %v3554
        %4249 = vmatmul.mubr.f32.gmra.mxu0 %v3553
        %v4250 = vpop.f32.mrf.mxu0
        %v4251 = vadd.f32 %v4026, %v4250
        %v4252 = vpop.f32.mrf.mxu0
        %4253 = vmatprep.mubr.f32.mxu0 %v3563
        %4254 = vmatmul.mubr.f32.gmra.mxu0 %v3562
        %v4255 = vpop.f32.mrf.mxu0
        %v4256 = vadd.f32 %v4031, %v4255
        %v4257 = vpop.f32.mrf.mxu0
        %4258 = vmatprep.mubr.f32.mxu0 %v3572
        %4259 = vmatmul.mubr.f32.gmra.mxu0 %v3571
        %v4260 = vpop.f32.mrf.mxu0
        %v4261 = vadd.f32 %v4036, %v4260
        %v4262 = vpop.f32.mrf.mxu0
        %4263 = vmatprep.mubr.f32.mxu0 %v3581
        %4264 = vmatmul.mubr.f32.gmra.mxu0 %v3580
        %v4265 = vpop.f32.mrf.mxu0
        %v4266 = vadd.f32 %v4041, %v4265
        %v4267 = vpop.f32.mrf.mxu0
        %4268 = vmatprep.mubr.f32.mxu0 %v3590
        %4269 = vmatmul.mubr.f32.gmra.mxu0 %v3589
        %v4270 = vpop.f32.mrf.mxu0
        %v4271 = vadd.f32 %v4046, %v4270
        %v4272 = vpop.f32.mrf.mxu0
        %4273 = vmatprep.mubr.f32.mxu0 %v3599
        %4274 = vmatmul.mubr.f32.gmra.mxu0 %v3598
        %v4275 = vpop.f32.mrf.mxu0
        %v4276 = vadd.f32 %v4051, %v4275
        %v4277 = vpop.f32.mrf.mxu0
        %4278 = vmatprep.mubr.f32.mxu0 %v3608
        %4279 = vmatmul.mubr.f32.gmra.mxu0 %v3607
        %v4280 = vpop.f32.mrf.mxu0
        %v4281 = vadd.f32 %v4056, %v4280
        %v4282 = vpop.f32.mrf.mxu0
        %4283 = vmatprep.mubr.f32.mxu0 %v3617
        %4284 = vmatmul.mubr.f32.gmra.mxu0 %v3616
        %v4285 = vpop.f32.mrf.mxu0
        %v4286 = vadd.f32 %v4061, %v4285
        %v4287 = vpop.f32.mrf.mxu0
        %4288 = vmatprep.mubr.f32.mxu0 %v3626
        %4289 = vmatmul.mubr.f32.gmra.mxu0 %v3625
        %v4290 = vpop.f32.mrf.mxu0
        %v4291 = vadd.f32 %v4066, %v4290
        %v4292 = vpop.f32.mrf.mxu0
        %4293 = vmatprep.mubr.f32.mxu0 %v3635
        %4294 = vmatmul.mubr.f32.gmra.mxu0 %v3634
        %v4295 = vpop.f32.mrf.mxu0
        %v4296 = vadd.f32 %v4071, %v4295
        %v4297 = vpop.f32.mrf.mxu0
        %4298 = vmatprep.mubr.f32.mxu0 %v3644
        %4299 = vmatmul.mubr.f32.gmra.mxu0 %v3643
        %v4300 = vpop.f32.mrf.mxu0
        %v4301 = vadd.f32 %v4076, %v4300
        %v4302 = vpop.f32.mrf.mxu0
        %4303 = vmatprep.mubr.f32.mxu0 %v3653
        %4304 = vmatmul.mubr.f32.gmra.mxu0 %v3652
        %v4305 = vpop.f32.mrf.mxu0
        %v4306 = vadd.f32 %v4081, %v4305
        %v4307 = vpop.f32.mrf.mxu0
        %4308 = vmatprep.mubr.f32.mxu0 %v3662
        %4309 = vmatmul.mubr.f32.gmra.mxu0 %v3661
        %v4310 = vpop.f32.mrf.mxu0
        %v4311 = vadd.f32 %v4086, %v4310
        %v4312 = vpop.f32.mrf.mxu0
        %4313 = vmatprep.mubr.f32.mxu0 %v3671
        %4314 = vmatmul.mubr.f32.gmra.mxu0 %v3670
        %v4315 = vpop.f32.mrf.mxu0
        %v4316 = vadd.f32 %v4091, %v4315
        %v4317 = vpop.f32.mrf.mxu0
        %4318 = vmatprep.mubr.f32.mxu0 %v3680
        %4319 = vmatmul.mubr.f32.gmra.mxu0 %v3679
        %v4320 = vpop.f32.mrf.mxu0
        %v4321 = vadd.f32 %v4096, %v4320
        %v4322 = vpop.f32.mrf.mxu0
        %4323 = vmatprep.mubr.f32.mxu0 %v3689
        %4324 = vmatmul.mubr.f32.gmra.mxu0 %v3688
        %v4325 = vpop.f32.mrf.mxu0
        %v4326 = vadd.f32 %v4101, %v4325
        %v4327 = vpop.f32.mrf.mxu0
        %4328 = vmatprep.mubr.f32.mxu0 %v3698
        %4329 = vmatmul.mubr.f32.gmra.mxu0 %v3697
        %v4330 = vpop.f32.mrf.mxu0
        %v4331 = vadd.f32 %v4106, %v4330
        %v4332 = vpop.f32.mrf.mxu0
        %4333 = vmatprep.mubr.f32.mxu0 %v3707
        %4334 = vmatmul.mubr.f32.gmra.mxu0 %v3706
        %v4335 = vpop.f32.mrf.mxu0
        %v4336 = vadd.f32 %v4111, %v4335
        %v4337 = vpop.f32.mrf.mxu0
        %4338 = vmatprep.mubr.f32.mxu0 %v3716
        %4339 = vmatmul.mubr.f32.gmra.mxu0 %v3715
        %v4340 = vpop.f32.mrf.mxu0
        %v4341 = vadd.f32 %v4116, %v4340
        %v4342 = vpop.f32.mrf.mxu0
        %4343 = vmatprep.mubr.f32.mxu0 %v3725
        %4344 = vmatmul.mubr.f32.gmra.mxu0 %v3724
        %v4345 = vpop.f32.mrf.mxu0
        %v4346 = vadd.f32 %v4121, %v4345
        %v4347 = vpop.f32.mrf.mxu0
        %4348 = vmatprep.mubr.f32.mxu0 %v3734
        %4349 = vmatmul.mubr.f32.gmra.mxu0 %v3733
        %v4350 = vpop.f32.mrf.mxu0
        %v4351 = vadd.f32 %v4126, %v4350
        %v4352 = vpop.f32.mrf.mxu0
        %4353 = vmatprep.mubr.f32.mxu0 %v3743
        %4354 = vmatmul.mubr.f32.gmra.mxu0 %v3742
        %v4355 = vpop.f32.mrf.mxu0
        %v4356 = vadd.f32 %v4131, %v4355
        %v4357 = vpop.f32.mrf.mxu0
        %4358 = vmatprep.mubr.f32.mxu0 %v3752
        %4359 = vmatmul.mubr.f32.gmra.mxu0 %v3751
        %v4360 = vpop.f32.mrf.mxu0
        %v4361 = vadd.f32 %v4136, %v4360
        %v4362 = vpop.f32.mrf.mxu0
        %4363 = vmatprep.mubr.f32.mxu0 %v3761
        %4364 = vmatmul.mubr.f32.gmra.mxu0 %v3760
        %v4365 = vpop.f32.mrf.mxu0
        %v4366 = vadd.f32 %v4141, %v4365
        %v4367 = vpop.f32.mrf.mxu0
        %4368 = vmatprep.mubr.f32.mxu0 %v3770
        %4369 = vmatmul.mubr.f32.gmra.mxu0 %v3769
        %v4370 = vpop.f32.mrf.mxu0
        %v4371 = vadd.f32 %v4146, %v4370
        %v4372 = vpop.f32.mrf.mxu0
        %4373 = vdwg.mxu0
        %4374 = vmatprep.subr.mxu0 0.0
        %4375 = vmatpush1.msra.mxu0 %v3855
        %4376 = vmatprep.subr.mxu0 0.0
        %4377 = vmatpush1.msra.mxu0 %v3854
        %4378 = vmatprep.subr.mxu0 0.0
        %4379 = vmatpush1.msra.mxu0 %v3853
        %4380 = vmatprep.subr.mxu0 0.0
        %4381 = vmatpush1.msra.mxu0 %v3852
        %4382 = vmatprep.subr.mxu0 0.0
        %4383 = vmatpush1.msra.mxu0 %v3851
        %4384 = vmatprep.subr.mxu0 0.0
        %4385 = vmatpush1.msra.mxu0 %v3850
        %4386 = vmatprep.subr.mxu0 0.0
        %4387 = vmatpush1.msra.mxu0 %v3849
        %4388 = vmatprep.subr.mxu0 0.0
        %4389 = vmatpush1.msra.mxu0 %v3848
        %4390 = vmatprep.subr.mxu0 0.0
        %4391 = vmatpush1.msra.mxu0 %v3847
        %4392 = vmatprep.subr.mxu0 0.0
        %4393 = vmatpush1.msra.mxu0 %v3846
        %4394 = vmatprep.subr.mxu0 0.0
        %4395 = vmatpush1.msra.mxu0 %v3845
        %4396 = vmatprep.subr.mxu0 0.0
        %4397 = vmatpush1.msra.mxu0 %v3844
        %4398 = vmatprep.subr.mxu0 0.0
        %4399 = vmatpush1.msra.mxu0 %v3843
        %4400 = vmatprep.subr.mxu0 0.0
        %4401 = vmatpush1.msra.mxu0 %v3842
        %4402 = vmatprep.subr.mxu0 0.0
        %4403 = vmatpush1.msra.mxu0 %v3841
        %4404 = vmatprep.subr.mxu0 0.0
        %4405 = vmatpush1.msra.mxu0 %v3840
        %4406 = vmatprep.subr.mxu0 0.0
        %4407 = vmatpush2.msra.mxu0 %v3871
        %4408 = vmatprep.subr.mxu0 0.0
        %4409 = vmatpush2.msra.mxu0 %v3870
        %4410 = vmatprep.subr.mxu0 0.0
        %4411 = vmatpush2.msra.mxu0 %v3869
        %4412 = vmatprep.subr.mxu0 0.0
        %4413 = vmatpush2.msra.mxu0 %v3868
        %4414 = vmatprep.subr.mxu0 0.0
        %4415 = vmatpush2.msra.mxu0 %v3867
        %4416 = vmatprep.subr.mxu0 0.0
        %4417 = vmatpush2.msra.mxu0 %v3866
        %4418 = vmatprep.subr.mxu0 0.0
        %4419 = vmatpush2.msra.mxu0 %v3865
        %4420 = vmatprep.subr.mxu0 0.0
        %4421 = vmatpush2.msra.mxu0 %v3864
        %4422 = vmatprep.subr.mxu0 0.0
        %4423 = vmatpush2.msra.mxu0 %v3863
        %4424 = vmatprep.subr.mxu0 0.0
        %4425 = vmatpush2.msra.mxu0 %v3862
        %4426 = vmatprep.subr.mxu0 0.0
        %4427 = vmatpush2.msra.mxu0 %v3861
        %4428 = vmatprep.subr.mxu0 0.0
        %4429 = vmatpush2.msra.mxu0 %v3860
        %4430 = vmatprep.subr.mxu0 0.0
        %4431 = vmatpush2.msra.mxu0 %v3859
        %4432 = vmatprep.subr.mxu0 0.0
        %4433 = vmatpush2.msra.mxu0 %v3858
        %4434 = vmatprep.subr.mxu0 0.0
        %4435 = vmatpush2.msra.mxu0 %v3857
        %4436 = vmatprep.subr.mxu0 0.0
        %4437 = vmatpush2.msra.mxu0 %v3856
        %4438 = vmatprep.mubr.f32.mxu0 %v3493
        %4439 = vmatmul.mubr.f32.gmra.mxu0 %v3492
        %v4440 = vpop.f32.mrf.mxu0
        %v4441 = vadd.f32 %v4216, %v4440
        %v4442 = vpop.f32.mrf.mxu0
        %4443 = vmatprep.mubr.f32.mxu0 %v3502
        %4444 = vmatmul.mubr.f32.gmra.mxu0 %v3501
        %v4445 = vpop.f32.mrf.mxu0
        %v4446 = vadd.f32 %v4221, %v4445
        %v4447 = vpop.f32.mrf.mxu0
        %4448 = vmatprep.mubr.f32.mxu0 %v3511
        %4449 = vmatmul.mubr.f32.gmra.mxu0 %v3510
        %v4450 = vpop.f32.mrf.mxu0
        %v4451 = vadd.f32 %v4226, %v4450
        %v4452 = vpop.f32.mrf.mxu0
        %4453 = vmatprep.mubr.f32.mxu0 %v3520
        %4454 = vmatmul.mubr.f32.gmra.mxu0 %v3519
        %v4455 = vpop.f32.mrf.mxu0
        %v4456 = vadd.f32 %v4231, %v4455
        %v4457 = vpop.f32.mrf.mxu0
        %4458 = vmatprep.mubr.f32.mxu0 %v3529
        %4459 = vmatmul.mubr.f32.gmra.mxu0 %v3528
        %v4460 = vpop.f32.mrf.mxu0
        %v4461 = vadd.f32 %v4236, %v4460
        %v4462 = vpop.f32.mrf.mxu0
        %4463 = vmatprep.mubr.f32.mxu0 %v3538
        %4464 = vmatmul.mubr.f32.gmra.mxu0 %v3537
        %v4465 = vpop.f32.mrf.mxu0
        %v4466 = vadd.f32 %v4241, %v4465
        %v4467 = vpop.f32.mrf.mxu0
        %4468 = vmatprep.mubr.f32.mxu0 %v3547
        %4469 = vmatmul.mubr.f32.gmra.mxu0 %v3546
        %v4470 = vpop.f32.mrf.mxu0
        %v4471 = vadd.f32 %v4246, %v4470
        %v4472 = vpop.f32.mrf.mxu0
        %4473 = vmatprep.mubr.f32.mxu0 %v3556
        %4474 = vmatmul.mubr.f32.gmra.mxu0 %v3555
        %v4475 = vpop.f32.mrf.mxu0
        %v4476 = vadd.f32 %v4251, %v4475
        %v4477 = vpop.f32.mrf.mxu0
        %4478 = vmatprep.mubr.f32.mxu0 %v3565
        %4479 = vmatmul.mubr.f32.gmra.mxu0 %v3564
        %v4480 = vpop.f32.mrf.mxu0
        %v4481 = vadd.f32 %v4256, %v4480
        %v4482 = vpop.f32.mrf.mxu0
        %4483 = vmatprep.mubr.f32.mxu0 %v3574
        %4484 = vmatmul.mubr.f32.gmra.mxu0 %v3573
        %v4485 = vpop.f32.mrf.mxu0
        %v4486 = vadd.f32 %v4261, %v4485
        %v4487 = vpop.f32.mrf.mxu0
        %4488 = vmatprep.mubr.f32.mxu0 %v3583
        %4489 = vmatmul.mubr.f32.gmra.mxu0 %v3582
        %v4490 = vpop.f32.mrf.mxu0
        %v4491 = vadd.f32 %v4266, %v4490
        %v4492 = vpop.f32.mrf.mxu0
        %4493 = vmatprep.mubr.f32.mxu0 %v3592
        %4494 = vmatmul.mubr.f32.gmra.mxu0 %v3591
        %v4495 = vpop.f32.mrf.mxu0
        %v4496 = vadd.f32 %v4271, %v4495
        %v4497 = vpop.f32.mrf.mxu0
        %4498 = vmatprep.mubr.f32.mxu0 %v3601
        %4499 = vmatmul.mubr.f32.gmra.mxu0 %v3600
        %v4500 = vpop.f32.mrf.mxu0
        %v4501 = vadd.f32 %v4276, %v4500
        %v4502 = vpop.f32.mrf.mxu0
        %4503 = vmatprep.mubr.f32.mxu0 %v3610
        %4504 = vmatmul.mubr.f32.gmra.mxu0 %v3609
        %v4505 = vpop.f32.mrf.mxu0
        %v4506 = vadd.f32 %v4281, %v4505
        %v4507 = vpop.f32.mrf.mxu0
        %4508 = vmatprep.mubr.f32.mxu0 %v3619
        %4509 = vmatmul.mubr.f32.gmra.mxu0 %v3618
        %v4510 = vpop.f32.mrf.mxu0
        %v4511 = vadd.f32 %v4286, %v4510
        %v4512 = vpop.f32.mrf.mxu0
        %4513 = vmatprep.mubr.f32.mxu0 %v3628
        %4514 = vmatmul.mubr.f32.gmra.mxu0 %v3627
        %v4515 = vpop.f32.mrf.mxu0
        %v4516 = vadd.f32 %v4291, %v4515
        %v4517 = vpop.f32.mrf.mxu0
        %4518 = vmatprep.mubr.f32.mxu0 %v3637
        %4519 = vmatmul.mubr.f32.gmra.mxu0 %v3636
        %v4520 = vpop.f32.mrf.mxu0
        %v4521 = vadd.f32 %v4296, %v4520
        %v4522 = vpop.f32.mrf.mxu0
        %4523 = vmatprep.mubr.f32.mxu0 %v3646
        %4524 = vmatmul.mubr.f32.gmra.mxu0 %v3645
        %v4525 = vpop.f32.mrf.mxu0
        %v4526 = vadd.f32 %v4301, %v4525
        %v4527 = vpop.f32.mrf.mxu0
        %4528 = vmatprep.mubr.f32.mxu0 %v3655
        %4529 = vmatmul.mubr.f32.gmra.mxu0 %v3654
        %v4530 = vpop.f32.mrf.mxu0
        %v4531 = vadd.f32 %v4306, %v4530
        %v4532 = vpop.f32.mrf.mxu0
        %4533 = vmatprep.mubr.f32.mxu0 %v3664
        %4534 = vmatmul.mubr.f32.gmra.mxu0 %v3663
        %v4535 = vpop.f32.mrf.mxu0
        %v4536 = vadd.f32 %v4311, %v4535
        %v4537 = vpop.f32.mrf.mxu0
        %4538 = vmatprep.mubr.f32.mxu0 %v3673
        %4539 = vmatmul.mubr.f32.gmra.mxu0 %v3672
        %v4540 = vpop.f32.mrf.mxu0
        %v4541 = vadd.f32 %v4316, %v4540
        %v4542 = vpop.f32.mrf.mxu0
        %4543 = vmatprep.mubr.f32.mxu0 %v3682
        %4544 = vmatmul.mubr.f32.gmra.mxu0 %v3681
        %v4545 = vpop.f32.mrf.mxu0
        %v4546 = vadd.f32 %v4321, %v4545
        %v4547 = vpop.f32.mrf.mxu0
        %4548 = vmatprep.mubr.f32.mxu0 %v3691
        %4549 = vmatmul.mubr.f32.gmra.mxu0 %v3690
        %v4550 = vpop.f32.mrf.mxu0
        %v4551 = vadd.f32 %v4326, %v4550
        %v4552 = vpop.f32.mrf.mxu0
        %4553 = vmatprep.mubr.f32.mxu0 %v3700
        %4554 = vmatmul.mubr.f32.gmra.mxu0 %v3699
        %v4555 = vpop.f32.mrf.mxu0
        %v4556 = vadd.f32 %v4331, %v4555
        %v4557 = vpop.f32.mrf.mxu0
        %4558 = vmatprep.mubr.f32.mxu0 %v3709
        %4559 = vmatmul.mubr.f32.gmra.mxu0 %v3708
        %v4560 = vpop.f32.mrf.mxu0
        %v4561 = vadd.f32 %v4336, %v4560
        %v4562 = vpop.f32.mrf.mxu0
        %4563 = vmatprep.mubr.f32.mxu0 %v3718
        %4564 = vmatmul.mubr.f32.gmra.mxu0 %v3717
        %v4565 = vpop.f32.mrf.mxu0
        %v4566 = vadd.f32 %v4341, %v4565
        %v4567 = vpop.f32.mrf.mxu0
        %4568 = vmatprep.mubr.f32.mxu0 %v3727
        %4569 = vmatmul.mubr.f32.gmra.mxu0 %v3726
        %v4570 = vpop.f32.mrf.mxu0
        %v4571 = vadd.f32 %v4346, %v4570
        %v4572 = vpop.f32.mrf.mxu0
        %4573 = vmatprep.mubr.f32.mxu0 %v3736
        %4574 = vmatmul.mubr.f32.gmra.mxu0 %v3735
        %v4575 = vpop.f32.mrf.mxu0
        %v4576 = vadd.f32 %v4351, %v4575
        %v4577 = vpop.f32.mrf.mxu0
        %4578 = vmatprep.mubr.f32.mxu0 %v3745
        %4579 = vmatmul.mubr.f32.gmra.mxu0 %v3744
        %v4580 = vpop.f32.mrf.mxu0
        %v4581 = vadd.f32 %v4356, %v4580
        %v4582 = vpop.f32.mrf.mxu0
        %4583 = vmatprep.mubr.f32.mxu0 %v3754
        %4584 = vmatmul.mubr.f32.gmra.mxu0 %v3753
        %v4585 = vpop.f32.mrf.mxu0
        %v4586 = vadd.f32 %v4361, %v4585
        %v4587 = vpop.f32.mrf.mxu0
        %4588 = vmatprep.mubr.f32.mxu0 %v3763
        %4589 = vmatmul.mubr.f32.gmra.mxu0 %v3762
        %v4590 = vpop.f32.mrf.mxu0
        %v4591 = vadd.f32 %v4366, %v4590
        %v4592 = vpop.f32.mrf.mxu0
        %4593 = vmatprep.mubr.f32.mxu0 %v3772
        %4594 = vmatmul.mubr.f32.gmra.mxu0 %v3771
        %v4595 = vpop.f32.mrf.mxu0
        %v4596 = vadd.f32 %v4371, %v4595
        %v4597 = vpop.f32.mrf.mxu0
        %4598 = vdwg.mxu0
        %4599 = vmatprep.subr.mxu0 0.0
        %4600 = vmatpush1.msra.mxu0 %v3887
        %4601 = vmatprep.subr.mxu0 0.0
        %4602 = vmatpush1.msra.mxu0 %v3886
        %4603 = vmatprep.subr.mxu0 0.0
        %4604 = vmatpush1.msra.mxu0 %v3885
        %4605 = vmatprep.subr.mxu0 0.0
        %4606 = vmatpush1.msra.mxu0 %v3884
        %4607 = vmatprep.subr.mxu0 0.0
        %4608 = vmatpush1.msra.mxu0 %v3883
        %4609 = vmatprep.subr.mxu0 0.0
        %4610 = vmatpush1.msra.mxu0 %v3882
        %4611 = vmatprep.subr.mxu0 0.0
        %4612 = vmatpush1.msra.mxu0 %v3881
        %4613 = vmatprep.subr.mxu0 0.0
        %4614 = vmatpush1.msra.mxu0 %v3880
        %4615 = vmatprep.subr.mxu0 0.0
        %4616 = vmatpush1.msra.mxu0 %v3879
        %4617 = vmatprep.subr.mxu0 0.0
        %4618 = vmatpush1.msra.mxu0 %v3878
        %4619 = vmatprep.subr.mxu0 0.0
        %4620 = vmatpush1.msra.mxu0 %v3877
        %4621 = vmatprep.subr.mxu0 0.0
        %4622 = vmatpush1.msra.mxu0 %v3876
        %4623 = vmatprep.subr.mxu0 0.0
        %4624 = vmatpush1.msra.mxu0 %v3875
        %4625 = vmatprep.subr.mxu0 0.0
        %4626 = vmatpush1.msra.mxu0 %v3874
        %4627 = vmatprep.subr.mxu0 0.0
        %4628 = vmatpush1.msra.mxu0 %v3873
        %4629 = vmatprep.subr.mxu0 0.0
        %4630 = vmatpush1.msra.mxu0 %v3872
        %4631 = vmatprep.subr.mxu0 0.0
        %4632 = vmatpush2.msra.mxu0 %v3903
        %4633 = vmatprep.subr.mxu0 0.0
        %4634 = vmatpush2.msra.mxu0 %v3902
        %4635 = vmatprep.subr.mxu0 0.0
        %4636 = vmatpush2.msra.mxu0 %v3901
        %4637 = vmatprep.subr.mxu0 0.0
        %4638 = vmatpush2.msra.mxu0 %v3900
        %4639 = vmatprep.subr.mxu0 0.0
        %4640 = vmatpush2.msra.mxu0 %v3899
        %4641 = vmatprep.subr.mxu0 0.0
        %4642 = vmatpush2.msra.mxu0 %v3898
        %4643 = vmatprep.subr.mxu0 0.0
        %4644 = vmatpush2.msra.mxu0 %v3897
        %4645 = vmatprep.subr.mxu0 0.0
        %4646 = vmatpush2.msra.mxu0 %v3896
        %4647 = vmatprep.subr.mxu0 0.0
        %4648 = vmatpush2.msra.mxu0 %v3895
        %4649 = vmatprep.subr.mxu0 0.0
        %4650 = vmatpush2.msra.mxu0 %v3894
        %4651 = vmatprep.subr.mxu0 0.0
        %4652 = vmatpush2.msra.mxu0 %v3893
        %4653 = vmatprep.subr.mxu0 0.0
        %4654 = vmatpush2.msra.mxu0 %v3892
        %4655 = vmatprep.subr.mxu0 0.0
        %4656 = vmatpush2.msra.mxu0 %v3891
        %4657 = vmatprep.subr.mxu0 0.0
        %4658 = vmatpush2.msra.mxu0 %v3890
        %4659 = vmatprep.subr.mxu0 0.0
        %4660 = vmatpush2.msra.mxu0 %v3889
        %4661 = vmatprep.subr.mxu0 0.0
        %4662 = vmatpush2.msra.mxu0 %v3888
        %4663 = vmatprep.mubr.f32.mxu0 %v3495
        %4664 = vmatmul.mubr.f32.gmra.mxu0 %v3494
        %v4665 = vpop.f32.mrf.mxu0
        %v4666 = vadd.f32 %v4441, %v4665
        %v4667 = vpop.f32.mrf.mxu0
        %4668 = vmatprep.mubr.f32.mxu0 %v3504
        %4669 = vmatmul.mubr.f32.gmra.mxu0 %v3503
        %v4670 = vpop.f32.mrf.mxu0
        %v4671 = vadd.f32 %v4446, %v4670
        %v4672 = vpop.f32.mrf.mxu0
        %4673 = vmatprep.mubr.f32.mxu0 %v3513
        %4674 = vmatmul.mubr.f32.gmra.mxu0 %v3512
        %v4675 = vpop.f32.mrf.mxu0
        %v4676 = vadd.f32 %v4451, %v4675
        %v4677 = vpop.f32.mrf.mxu0
        %4678 = vmatprep.mubr.f32.mxu0 %v3522
        %4679 = vmatmul.mubr.f32.gmra.mxu0 %v3521
        %v4680 = vpop.f32.mrf.mxu0
        %v4681 = vadd.f32 %v4456, %v4680
        %v4682 = vpop.f32.mrf.mxu0
        %4683 = vmatprep.mubr.f32.mxu0 %v3531
        %4684 = vmatmul.mubr.f32.gmra.mxu0 %v3530
        %v4685 = vpop.f32.mrf.mxu0
        %v4686 = vadd.f32 %v4461, %v4685
        %v4687 = vpop.f32.mrf.mxu0
        %4688 = vmatprep.mubr.f32.mxu0 %v3540
        %4689 = vmatmul.mubr.f32.gmra.mxu0 %v3539
        %v4690 = vpop.f32.mrf.mxu0
        %v4691 = vadd.f32 %v4466, %v4690
        %v4692 = vpop.f32.mrf.mxu0
        %4693 = vmatprep.mubr.f32.mxu0 %v3549
        %4694 = vmatmul.mubr.f32.gmra.mxu0 %v3548
        %v4695 = vpop.f32.mrf.mxu0
        %v4696 = vadd.f32 %v4471, %v4695
        %v4697 = vpop.f32.mrf.mxu0
        %4698 = vmatprep.mubr.f32.mxu0 %v3558
        %4699 = vmatmul.mubr.f32.gmra.mxu0 %v3557
        %v4700 = vpop.f32.mrf.mxu0
        %v4701 = vadd.f32 %v4476, %v4700
        %v4702 = vpop.f32.mrf.mxu0
        %4703 = vmatprep.mubr.f32.mxu0 %v3567
        %4704 = vmatmul.mubr.f32.gmra.mxu0 %v3566
        %v4705 = vpop.f32.mrf.mxu0
        %v4706 = vadd.f32 %v4481, %v4705
        %v4707 = vpop.f32.mrf.mxu0
        %4708 = vmatprep.mubr.f32.mxu0 %v3576
        %4709 = vmatmul.mubr.f32.gmra.mxu0 %v3575
        %v4710 = vpop.f32.mrf.mxu0
        %v4711 = vadd.f32 %v4486, %v4710
        %v4712 = vpop.f32.mrf.mxu0
        %4713 = vmatprep.mubr.f32.mxu0 %v3585
        %4714 = vmatmul.mubr.f32.gmra.mxu0 %v3584
        %v4715 = vpop.f32.mrf.mxu0
        %v4716 = vadd.f32 %v4491, %v4715
        %v4717 = vpop.f32.mrf.mxu0
        %4718 = vmatprep.mubr.f32.mxu0 %v3594
        %4719 = vmatmul.mubr.f32.gmra.mxu0 %v3593
        %v4720 = vpop.f32.mrf.mxu0
        %v4721 = vadd.f32 %v4496, %v4720
        %v4722 = vpop.f32.mrf.mxu0
        %4723 = vmatprep.mubr.f32.mxu0 %v3603
        %4724 = vmatmul.mubr.f32.gmra.mxu0 %v3602
        %v4725 = vpop.f32.mrf.mxu0
        %v4726 = vadd.f32 %v4501, %v4725
        %v4727 = vpop.f32.mrf.mxu0
        %4728 = vmatprep.mubr.f32.mxu0 %v3612
        %4729 = vmatmul.mubr.f32.gmra.mxu0 %v3611
        %v4730 = vpop.f32.mrf.mxu0
        %v4731 = vadd.f32 %v4506, %v4730
        %v4732 = vpop.f32.mrf.mxu0
        %4733 = vmatprep.mubr.f32.mxu0 %v3621
        %4734 = vmatmul.mubr.f32.gmra.mxu0 %v3620
        %v4735 = vpop.f32.mrf.mxu0
        %v4736 = vadd.f32 %v4511, %v4735
        %v4737 = vpop.f32.mrf.mxu0
        %4738 = vmatprep.mubr.f32.mxu0 %v3630
        %4739 = vmatmul.mubr.f32.gmra.mxu0 %v3629
        %v4740 = vpop.f32.mrf.mxu0
        %v4741 = vadd.f32 %v4516, %v4740
        %v4742 = vpop.f32.mrf.mxu0
        %4743 = vmatprep.mubr.f32.mxu0 %v3639
        %4744 = vmatmul.mubr.f32.gmra.mxu0 %v3638
        %v4745 = vpop.f32.mrf.mxu0
        %v4746 = vadd.f32 %v4521, %v4745
        %v4747 = vpop.f32.mrf.mxu0
        %4748 = vmatprep.mubr.f32.mxu0 %v3648
        %4749 = vmatmul.mubr.f32.gmra.mxu0 %v3647
        %v4750 = vpop.f32.mrf.mxu0
        %v4751 = vadd.f32 %v4526, %v4750
        %v4752 = vpop.f32.mrf.mxu0
        %4753 = vmatprep.mubr.f32.mxu0 %v3657
        %4754 = vmatmul.mubr.f32.gmra.mxu0 %v3656
        %v4755 = vpop.f32.mrf.mxu0
        %v4756 = vadd.f32 %v4531, %v4755
        %v4757 = vpop.f32.mrf.mxu0
        %4758 = vmatprep.mubr.f32.mxu0 %v3666
        %4759 = vmatmul.mubr.f32.gmra.mxu0 %v3665
        %v4760 = vpop.f32.mrf.mxu0
        %v4761 = vadd.f32 %v4536, %v4760
        %v4762 = vpop.f32.mrf.mxu0
        %4763 = vmatprep.mubr.f32.mxu0 %v3675
        %4764 = vmatmul.mubr.f32.gmra.mxu0 %v3674
        %v4765 = vpop.f32.mrf.mxu0
        %v4766 = vadd.f32 %v4541, %v4765
        %v4767 = vpop.f32.mrf.mxu0
        %4768 = vmatprep.mubr.f32.mxu0 %v3684
        %4769 = vmatmul.mubr.f32.gmra.mxu0 %v3683
        %v4770 = vpop.f32.mrf.mxu0
        %v4771 = vadd.f32 %v4546, %v4770
        %v4772 = vpop.f32.mrf.mxu0
        %4773 = vmatprep.mubr.f32.mxu0 %v3693
        %4774 = vmatmul.mubr.f32.gmra.mxu0 %v3692
        %v4775 = vpop.f32.mrf.mxu0
        %v4776 = vadd.f32 %v4551, %v4775
        %v4777 = vpop.f32.mrf.mxu0
        %4778 = vmatprep.mubr.f32.mxu0 %v3702
        %4779 = vmatmul.mubr.f32.gmra.mxu0 %v3701
        %v4780 = vpop.f32.mrf.mxu0
        %v4781 = vadd.f32 %v4556, %v4780
        %v4782 = vpop.f32.mrf.mxu0
        %4783 = vmatprep.mubr.f32.mxu0 %v3711
        %4784 = vmatmul.mubr.f32.gmra.mxu0 %v3710
        %v4785 = vpop.f32.mrf.mxu0
        %v4786 = vadd.f32 %v4561, %v4785
        %v4787 = vpop.f32.mrf.mxu0
        %4788 = vmatprep.mubr.f32.mxu0 %v3720
        %4789 = vmatmul.mubr.f32.gmra.mxu0 %v3719
        %v4790 = vpop.f32.mrf.mxu0
        %v4791 = vadd.f32 %v4566, %v4790
        %v4792 = vpop.f32.mrf.mxu0
        %4793 = vmatprep.mubr.f32.mxu0 %v3729
        %4794 = vmatmul.mubr.f32.gmra.mxu0 %v3728
        %v4795 = vpop.f32.mrf.mxu0
        %v4796 = vadd.f32 %v4571, %v4795
        %v4797 = vpop.f32.mrf.mxu0
        %4798 = vmatprep.mubr.f32.mxu0 %v3738
        %4799 = vmatmul.mubr.f32.gmra.mxu0 %v3737
        %v4800 = vpop.f32.mrf.mxu0
        %v4801 = vadd.f32 %v4576, %v4800
        %v4802 = vpop.f32.mrf.mxu0
        %4803 = vmatprep.mubr.f32.mxu0 %v3747
        %4804 = vmatmul.mubr.f32.gmra.mxu0 %v3746
        %v4805 = vpop.f32.mrf.mxu0
        %v4806 = vadd.f32 %v4581, %v4805
        %v4807 = vpop.f32.mrf.mxu0
        %4808 = vmatprep.mubr.f32.mxu0 %v3756
        %4809 = vmatmul.mubr.f32.gmra.mxu0 %v3755
        %v4810 = vpop.f32.mrf.mxu0
        %v4811 = vadd.f32 %v4586, %v4810
        %v4812 = vpop.f32.mrf.mxu0
        %4813 = vmatprep.mubr.f32.mxu0 %v3765
        %4814 = vmatmul.mubr.f32.gmra.mxu0 %v3764
        %v4815 = vpop.f32.mrf.mxu0
        %v4816 = vadd.f32 %v4591, %v4815
        %v4817 = vpop.f32.mrf.mxu0
        %4818 = vmatprep.mubr.f32.mxu0 %v3774
        %4819 = vmatmul.mubr.f32.gmra.mxu0 %v3773
        %v4820 = vpop.f32.mrf.mxu0
        %v4821 = vadd.f32 %v4596, %v4820
        %v4822 = vpop.f32.mrf.mxu0
        %4823 = vdwg.mxu0
        %4824 = vmatprep.subr.mxu0 0.0
        %4825 = vmatpush1.msra.mxu0 %v3919
        %4826 = vmatprep.subr.mxu0 0.0
        %4827 = vmatpush1.msra.mxu0 %v3918
        %4828 = vmatprep.subr.mxu0 0.0
        %4829 = vmatpush1.msra.mxu0 %v3917
        %4830 = vmatprep.subr.mxu0 0.0
        %4831 = vmatpush1.msra.mxu0 %v3916
        %4832 = vmatprep.subr.mxu0 0.0
        %4833 = vmatpush1.msra.mxu0 %v3915
        %4834 = vmatprep.subr.mxu0 0.0
        %4835 = vmatpush1.msra.mxu0 %v3914
        %4836 = vmatprep.subr.mxu0 0.0
        %4837 = vmatpush1.msra.mxu0 %v3913
        %4838 = vmatprep.subr.mxu0 0.0
        %4839 = vmatpush1.msra.mxu0 %v3912
        %4840 = vmatprep.subr.mxu0 0.0
        %4841 = vmatpush1.msra.mxu0 %v3911
        %4842 = vmatprep.subr.mxu0 0.0
        %4843 = vmatpush1.msra.mxu0 %v3910
        %4844 = vmatprep.subr.mxu0 0.0
        %4845 = vmatpush1.msra.mxu0 %v3909
        %4846 = vmatprep.subr.mxu0 0.0
        %4847 = vmatpush1.msra.mxu0 %v3908
        %4848 = vmatprep.subr.mxu0 0.0
        %4849 = vmatpush1.msra.mxu0 %v3907
        %4850 = vmatprep.subr.mxu0 0.0
        %4851 = vmatpush1.msra.mxu0 %v3906
        %4852 = vmatprep.subr.mxu0 0.0
        %4853 = vmatpush1.msra.mxu0 %v3905
        %4854 = vmatprep.subr.mxu0 0.0
        %4855 = vmatpush1.msra.mxu0 %v3904
        %4856 = vmatprep.subr.mxu0 0.0
        %4857 = vmatpush2.msra.mxu0 0.0
        %4858 = vmatprep.subr.mxu0 0.0
        %4859 = vmatpush2.msra.mxu0 0.0
        %4860 = vmatprep.subr.mxu0 0.0
        %4861 = vmatpush2.msra.mxu0 0.0
        %4862 = vmatprep.subr.mxu0 0.0
        %4863 = vmatpush2.msra.mxu0 0.0
        %4864 = vmatprep.subr.mxu0 0.0
        %4865 = vmatpush2.msra.mxu0 0.0
        %4866 = vmatprep.subr.mxu0 0.0
        %4867 = vmatpush2.msra.mxu0 0.0
        %4868 = vmatprep.subr.mxu0 0.0
        %4869 = vmatpush2.msra.mxu0 0.0
        %4870 = vmatprep.subr.mxu0 0.0
        %4871 = vmatpush2.msra.mxu0 0.0
        %4872 = vmatprep.subr.mxu0 0.0
        %4873 = vmatpush2.msra.mxu0 0.0
        %4874 = vmatprep.subr.mxu0 0.0
        %4875 = vmatpush2.msra.mxu0 0.0
        %4876 = vmatprep.subr.mxu0 0.0
        %4877 = vmatpush2.msra.mxu0 0.0
        %4878 = vmatprep.subr.mxu0 0.0
        %4879 = vmatpush2.msra.mxu0 0.0
        %4880 = vmatprep.subr.mxu0 0.0
        %4881 = vmatpush2.msra.mxu0 0.0
        %4882 = vmatprep.subr.mxu0 0.0
        %4883 = vmatpush2.msra.mxu0 0.0
        %4884 = vmatprep.subr.mxu0 0.0
        %4885 = vmatpush2.msra.mxu0 0.0
        %4886 = vmatprep.subr.mxu0 0.0
        %4887 = vmatpush2.msra.mxu0 0.0
        %4888 = vmatprep.mubr.f32.mxu0 0.0
        %4889 = vmatmul.mubr.f32.gmra.mxu0 %v3496
        %v4890 = vpop.f32.mrf.mxu0
        %v4891 = vadd.f32 %v4666, %v4890
        %v4892 = vpop.f32.mrf.mxu0
        %4893 = vmatprep.mubr.f32.mxu0 0.0
        %4894 = vmatmul.mubr.f32.gmra.mxu0 %v3505
        %v4895 = vpop.f32.mrf.mxu0
        %v4896 = vadd.f32 %v4671, %v4895
        %v4897 = vpop.f32.mrf.mxu0
        %4898 = vmatprep.mubr.f32.mxu0 0.0
        %4899 = vmatmul.mubr.f32.gmra.mxu0 %v3514
        %v4900 = vpop.f32.mrf.mxu0
        %v4901 = vadd.f32 %v4676, %v4900
        %v4902 = vpop.f32.mrf.mxu0
        %4903 = vmatprep.mubr.f32.mxu0 0.0
        %4904 = vmatmul.mubr.f32.gmra.mxu0 %v3523
        %v4905 = vpop.f32.mrf.mxu0
        %v4906 = vadd.f32 %v4681, %v4905
        %v4907 = vpop.f32.mrf.mxu0
        %4908 = vmatprep.mubr.f32.mxu0 0.0
        %4909 = vmatmul.mubr.f32.gmra.mxu0 %v3532
        %v4910 = vpop.f32.mrf.mxu0
        %v4911 = vadd.f32 %v4686, %v4910
        %v4912 = vpop.f32.mrf.mxu0
        %4913 = vmatprep.mubr.f32.mxu0 0.0
        %4914 = vmatmul.mubr.f32.gmra.mxu0 %v3541
        %v4915 = vpop.f32.mrf.mxu0
        %v4916 = vadd.f32 %v4691, %v4915
        %v4917 = vpop.f32.mrf.mxu0
        %4918 = vmatprep.mubr.f32.mxu0 0.0
        %4919 = vmatmul.mubr.f32.gmra.mxu0 %v3550
        %v4920 = vpop.f32.mrf.mxu0
        %v4921 = vadd.f32 %v4696, %v4920
        %v4922 = vpop.f32.mrf.mxu0
        %4923 = vmatprep.mubr.f32.mxu0 0.0
        %4924 = vmatmul.mubr.f32.gmra.mxu0 %v3559
        %v4925 = vpop.f32.mrf.mxu0
        %v4926 = vadd.f32 %v4701, %v4925
        %v4927 = vpop.f32.mrf.mxu0
        %4928 = vmatprep.mubr.f32.mxu0 0.0
        %4929 = vmatmul.mubr.f32.gmra.mxu0 %v3568
        %v4930 = vpop.f32.mrf.mxu0
        %v4931 = vadd.f32 %v4706, %v4930
        %v4932 = vpop.f32.mrf.mxu0
        %4933 = vmatprep.mubr.f32.mxu0 0.0
        %4934 = vmatmul.mubr.f32.gmra.mxu0 %v3577
        %v4935 = vpop.f32.mrf.mxu0
        %v4936 = vadd.f32 %v4711, %v4935
        %v4937 = vpop.f32.mrf.mxu0
        %4938 = vmatprep.mubr.f32.mxu0 0.0
        %4939 = vmatmul.mubr.f32.gmra.mxu0 %v3586
        %v4940 = vpop.f32.mrf.mxu0
        %v4941 = vadd.f32 %v4716, %v4940
        %v4942 = vpop.f32.mrf.mxu0
        %4943 = vmatprep.mubr.f32.mxu0 0.0
        %4944 = vmatmul.mubr.f32.gmra.mxu0 %v3595
        %v4945 = vpop.f32.mrf.mxu0
        %v4946 = vadd.f32 %v4721, %v4945
        %v4947 = vpop.f32.mrf.mxu0
        %4948 = vmatprep.mubr.f32.mxu0 0.0
        %4949 = vmatmul.mubr.f32.gmra.mxu0 %v3604
        %v4950 = vpop.f32.mrf.mxu0
        %v4951 = vadd.f32 %v4726, %v4950
        %v4952 = vpop.f32.mrf.mxu0
        %4953 = vmatprep.mubr.f32.mxu0 0.0
        %4954 = vmatmul.mubr.f32.gmra.mxu0 %v3613
        %v4955 = vpop.f32.mrf.mxu0
        %v4956 = vadd.f32 %v4731, %v4955
        %v4957 = vpop.f32.mrf.mxu0
        %4958 = vmatprep.mubr.f32.mxu0 0.0
        %4959 = vmatmul.mubr.f32.gmra.mxu0 %v3622
        %v4960 = vpop.f32.mrf.mxu0
        %v4961 = vadd.f32 %v4736, %v4960
        %v4962 = vpop.f32.mrf.mxu0
        %4963 = vmatprep.mubr.f32.mxu0 0.0
        %4964 = vmatmul.mubr.f32.gmra.mxu0 %v3631
        %v4965 = vpop.f32.mrf.mxu0
        %v4966 = vadd.f32 %v4741, %v4965
        %v4967 = vpop.f32.mrf.mxu0
        %4968 = vmatprep.mubr.f32.mxu0 0.0
        %4969 = vmatmul.mubr.f32.gmra.mxu0 %v3640
        %v4970 = vpop.f32.mrf.mxu0
        %v4971 = vadd.f32 %v4746, %v4970
        %v4972 = vpop.f32.mrf.mxu0
        %4973 = vmatprep.mubr.f32.mxu0 0.0
        %4974 = vmatmul.mubr.f32.gmra.mxu0 %v3649
        %v4975 = vpop.f32.mrf.mxu0
        %v4976 = vadd.f32 %v4751, %v4975
        %v4977 = vpop.f32.mrf.mxu0
        %4978 = vmatprep.mubr.f32.mxu0 0.0
        %4979 = vmatmul.mubr.f32.gmra.mxu0 %v3658
        %v4980 = vpop.f32.mrf.mxu0
        %v4981 = vadd.f32 %v4756, %v4980
        %v4982 = vpop.f32.mrf.mxu0
        %4983 = vmatprep.mubr.f32.mxu0 0.0
        %4984 = vmatmul.mubr.f32.gmra.mxu0 %v3667
        %v4985 = vpop.f32.mrf.mxu0
        %v4986 = vadd.f32 %v4761, %v4985
        %v4987 = vpop.f32.mrf.mxu0
        %4988 = vmatprep.mubr.f32.mxu0 0.0
        %4989 = vmatmul.mubr.f32.gmra.mxu0 %v3676
        %v4990 = vpop.f32.mrf.mxu0
        %v4991 = vadd.f32 %v4766, %v4990
        %v4992 = vpop.f32.mrf.mxu0
        %4993 = vmatprep.mubr.f32.mxu0 0.0
        %4994 = vmatmul.mubr.f32.gmra.mxu0 %v3685
        %v4995 = vpop.f32.mrf.mxu0
        %v4996 = vadd.f32 %v4771, %v4995
        %v4997 = vpop.f32.mrf.mxu0
        %4998 = vmatprep.mubr.f32.mxu0 0.0
        %4999 = vmatmul.mubr.f32.gmra.mxu0 %v3694
        %v5000 = vpop.f32.mrf.mxu0
        %v5001 = vadd.f32 %v4776, %v5000
        %v5002 = vpop.f32.mrf.mxu0
        %5003 = vmatprep.mubr.f32.mxu0 0.0
        %5004 = vmatmul.mubr.f32.gmra.mxu0 %v3703
        %v5005 = vpop.f32.mrf.mxu0
        %v5006 = vadd.f32 %v4781, %v5005
        %v5007 = vpop.f32.mrf.mxu0
        %5008 = vmatprep.mubr.f32.mxu0 0.0
        %5009 = vmatmul.mubr.f32.gmra.mxu0 %v3712
        %v5010 = vpop.f32.mrf.mxu0
        %v5011 = vadd.f32 %v4786, %v5010
        %v5012 = vpop.f32.mrf.mxu0
        %5013 = vmatprep.mubr.f32.mxu0 0.0
        %5014 = vmatmul.mubr.f32.gmra.mxu0 %v3721
        %v5015 = vpop.f32.mrf.mxu0
        %v5016 = vadd.f32 %v4791, %v5015
        %v5017 = vpop.f32.mrf.mxu0
        %5018 = vmatprep.mubr.f32.mxu0 0.0
        %5019 = vmatmul.mubr.f32.gmra.mxu0 %v3730
        %v5020 = vpop.f32.mrf.mxu0
        %v5021 = vadd.f32 %v4796, %v5020
        %v5022 = vpop.f32.mrf.mxu0
        %5023 = vmatprep.mubr.f32.mxu0 0.0
        %5024 = vmatmul.mubr.f32.gmra.mxu0 %v3739
        %v5025 = vpop.f32.mrf.mxu0
        %v5026 = vadd.f32 %v4801, %v5025
        %v5027 = vpop.f32.mrf.mxu0
        %5028 = vmatprep.mubr.f32.mxu0 0.0
        %5029 = vmatmul.mubr.f32.gmra.mxu0 %v3748
        %v5030 = vpop.f32.mrf.mxu0
        %v5031 = vadd.f32 %v4806, %v5030
        %v5032 = vpop.f32.mrf.mxu0
        %5033 = vmatprep.mubr.f32.mxu0 0.0
        %5034 = vmatmul.mubr.f32.gmra.mxu0 %v3757
        %v5035 = vpop.f32.mrf.mxu0
        %v5036 = vadd.f32 %v4811, %v5035
        %v5037 = vpop.f32.mrf.mxu0
        %5038 = vmatprep.mubr.f32.mxu0 0.0
        %5039 = vmatmul.mubr.f32.gmra.mxu0 %v3766
        %v5040 = vpop.f32.mrf.mxu0
        %v5041 = vadd.f32 %v4816, %v5040
        %v5042 = vpop.f32.mrf.mxu0
        %5043 = vmatprep.mubr.f32.mxu0 0.0
        %5044 = vmatmul.mubr.f32.gmra.mxu0 %v3775
        %v5045 = vpop.f32.mrf.mxu0
        %v5046 = vadd.f32 %v4821, %v5045
        %v5047 = vpop.f32.mrf.mxu0
        %5048 = vdwg.mxu0
        %v5049 = vadd.f32 %v4891, %v298
        %v5050 = vadd.f32 %v4896, %v299
        %v5051 = vadd.f32 %v4901, %v300
        %v5052 = vadd.f32 %v4906, %v301
        %v5053 = vadd.f32 %v4911, %v302
        %v5054 = vadd.f32 %v4916, %v303
        %v5055 = vadd.f32 %v4921, %v304
        %v5056 = vadd.f32 %v4926, %v305
        %v5057 = vadd.f32 %v4931, %v306
        %v5058 = vadd.f32 %v4936, %v307
        %v5059 = vadd.f32 %v4941, %v308
        %v5060 = vadd.f32 %v4946, %v309
        %v5061 = vadd.f32 %v4951, %v310
        %v5062 = vadd.f32 %v4956, %v311
        %v5063 = vadd.f32 %v4961, %v312
        %v5064 = vadd.f32 %v4966, %v313
        %v5065 = vadd.f32 %v4971, %v314
        %v5066 = vadd.f32 %v4976, %v315
        %v5067 = vadd.f32 %v4981, %v316
        %v5068 = vadd.f32 %v4986, %v317
        %v5069 = vadd.f32 %v4991, %v318
        %v5070 = vadd.f32 %v4996, %v319
        %v5071 = vadd.f32 %v5001, %v320
        %v5072 = vadd.f32 %v5006, %v321
        %v5073 = vadd.f32 %v5011, %v322
        %v5074 = vadd.f32 %v5016, %v323
        %v5075 = vadd.f32 %v5021, %v324
        %v5076 = vadd.f32 %v5026, %v325
        %v5077 = vadd.f32 %v5031, %v326
        %v5078 = vadd.f32 %v5036, %v327
        %v5079 = vadd.f32 %v5041, %v328
        %v5080 = vadd.f32 %v5046, %v329
        %v5081 = vmax.f32 %v5049, 0.0
        %v5082 = vmax.f32 %v5050, 0.0
        %v5083 = vmax.f32 %v5051, 0.0
        %v5084 = vmax.f32 %v5052, 0.0
        %v5085 = vmax.f32 %v5053, 0.0
        %v5086 = vmax.f32 %v5054, 0.0
        %v5087 = vmax.f32 %v5055, 0.0
        %v5088 = vmax.f32 %v5056, 0.0
        %v5089 = vmax.f32 %v5057, 0.0
        %v5090 = vmax.f32 %v5058, 0.0
        %v5091 = vmax.f32 %v5059, 0.0
        %v5092 = vmax.f32 %v5060, 0.0
        %v5093 = vmax.f32 %v5061, 0.0
        %v5094 = vmax.f32 %v5062, 0.0
        %v5095 = vmax.f32 %v5063, 0.0
        %v5096 = vmax.f32 %v5064, 0.0
        %v5097 = vmax.f32 %v5065, 0.0
        %v5098 = vmax.f32 %v5066, 0.0
        %v5099 = vmax.f32 %v5067, 0.0
        %v5100 = vmax.f32 %v5068, 0.0
        %v5101 = vmax.f32 %v5069, 0.0
        %v5102 = vmax.f32 %v5070, 0.0
        %v5103 = vmax.f32 %v5071, 0.0
        %v5104 = vmax.f32 %v5072, 0.0
        %v5105 = vmax.f32 %v5073, 0.0
        %v5106 = vmax.f32 %v5074, 0.0
        %v5107 = vmax.f32 %v5075, 0.0
        %v5108 = vmax.f32 %v5076, 0.0
        %v5109 = vmax.f32 %v5077, 0.0
        %v5110 = vmax.f32 %v5078, 0.0
        %v5111 = vmax.f32 %v5079, 0.0
        %v5112 = vmax.f32 %v5080, 0.0
        %5113 = vst [vmem:[%s257] sm:$0xff] %v5081
        %5114 = vst [vmem:[%s257 + $0x8] sm:$0xff] %v5082
        %5115 = vst [vmem:[%s257 + $0x10] sm:$0xff] %v5083
        %5116 = vst [vmem:[%s257 + $0x18] sm:$0xff] %v5084
        %5117 = vst [vmem:[%s257 + $0x20] sm:$0xff] %v5085
        %5118 = vst [vmem:[%s257 + $0x28] sm:$0xff] %v5086
        %5119 = vst [vmem:[%s257 + $0x30] sm:$0xff] %v5087
        %5120 = vst [vmem:[%s257 + $0x38] sm:$0xff] %v5088
        %5121 = vst [vmem:[%s257 + $0x40] sm:$0xff] %v5089
        %5122 = vst [vmem:[%s257 + $0x48] sm:$0xff] %v5090
        %5123 = vst [vmem:[%s257 + $0x50] sm:$0xff] %v5091
        %5124 = vst [vmem:[%s257 + $0x58] sm:$0xff] %v5092
        %5125 = vst [vmem:[%s257 + $0x60] sm:$0xff] %v5093
        %5126 = vst [vmem:[%s257 + $0x68] sm:$0xff] %v5094
        %5127 = vst [vmem:[%s257 + $0x70] sm:$0xff] %v5095
        %5128 = vst [vmem:[%s257 + $0x78] sm:$0xff] %v5096
        %5129 = vst [vmem:[%s257 + $0x80] sm:$0xff] %v5097
        %5130 = vst [vmem:[%s257 + $0x88] sm:$0xff] %v5098
        %5131 = vst [vmem:[%s257 + $0x90] sm:$0xff] %v5099
        %5132 = vst [vmem:[%s257 + $0x98] sm:$0xff] %v5100
        %5133 = vst [vmem:[%s257 + $0xa0] sm:$0xff] %v5101
        %5134 = vst [vmem:[%s257 + $0xa8] sm:$0xff] %v5102
        %5135 = vst [vmem:[%s257 + $0xb0] sm:$0xff] %v5103
        %5136 = vst [vmem:[%s257 + $0xb8] sm:$0xff] %v5104
        %5137 = vst [vmem:[%s257 + $0xc0] sm:$0xff] %v5105
        %5138 = vst [vmem:[%s257 + $0xc8] sm:$0xff] %v5106
        %5139 = vst [vmem:[%s257 + $0xd0] sm:$0xff] %v5107
        %5140 = vst [vmem:[%s257 + $0xd8] sm:$0xff] %v5108
        %5141 = vst [vmem:[%s257 + $0xe0] sm:$0xff] %v5109
        %5142 = vst [vmem:[%s257 + $0xe8] sm:$0xff] %v5110
        %5143 = vst [vmem:[%s257 + $0xf0] sm:$0xff] %v5111
        %5144 = vst [vmem:[%s257 + $0xf8] sm:$0xff] %v5112
        %s5145 = sand.u32 %s120, 1
        %s5146 = scalar_lea.sflag [#allocation6], %s5145
        %s5147 = sand.u32 %s120, 1
        %s5148 = smul.addr %s5147, 256
        %s5149 = scalar_lea.vmem [#allocation12], %s5148
        // Predicated region
        $region53: #{tpu_custom_call.1} parent=35 // pred_check
          %p5150 = pneg %p130
        $region54: #{tpu_custom_call.1} parent=35 // pred_check_branch
          %5152 = sbr.rel (%p5150) target = $region56
        $region55: #{tpu_custom_call.1} parent=35 // pred_region
          %s5154 = ssub.s32 4096, 4096
          %5155 = vsyncadd %s5146, %s5154
          %s5156 = smul.addr %s23, 32
          %s5157 = smul.addr %s5156, 128
          %s5158 = scalar_lea.hbm %s4, %s5157
          %s5159 = sshll.u32 %s5149, 4
          %s5160 = int_to_ptr.vmem [resolvable:$true] %s5159
          %5165 = dma.vmem_to_hbm [thread:$0]  %s5160, 4096, %s5158, %s5146, 128, 128, 8
        $region56: #{tpu_custom_call.1} parent=35 // pred_fallthru
          _
      $region36: #{tpu_custom_call.1} parent=5 // pred_fallthru
        _
      %p5166 = scmp.le.s32.totalorder 2, %s18
      // Predicated region
      $region57: #{tpu_custom_call.1} parent=5 // pred_check
        %p5167 = pneg %p5166
      $region58: #{tpu_custom_call.1} parent=5 // pred_check_branch
        %5169 = sbr.rel (%p5167) target = $region60
      $region59: #{tpu_custom_call.1} parent=5 // pred_region
        %s5170 = ssub.s32 %s18, 2
        // Predicated region
        $region61: #{tpu_custom_call.1} parent=59 // pred_check
          %p5171 = pneg %p136
        $region62: #{tpu_custom_call.1} parent=59 // pred_check_branch
          %5173 = sbr.rel (%p5171) target = $region64
        $region63: #{tpu_custom_call.1} parent=59 // pred_region
          %s5174 = sand.u32 %s121, 1
          %s5175 = scalar_lea.sflag [#allocation6], %s5174
          %s5176 = sand.u32 %s121, 1
          %s5177 = smul.addr %s5176, 256
          %s5178 = scalar_lea.vmem [#allocation12], %s5177
          %5179 = dma.done %s5175, 4096
        $region64: #{tpu_custom_call.1} parent=59 // pred_fallthru
          _
      $region60: #{tpu_custom_call.1} parent=5 // pred_fallthru
        _
    $region6: #{tpu_custom_call.1} parent=1 // loop_footer
      %s22 = sadd.s32 1, %s18
    $region7: #{tpu_custom_call.1} parent=1 // loop_footer_branch
      %17 = sbr.rel target = $region3
    $region8: #{tpu_custom_call.1} parent=1 // loop_exit
      _
    %5180 = vsyncpa [#allocation5], 1
    %s5181 = scalar_lea.sflag [#allocation5], 1
    %5182 = vsyncpa %s5181, 1
    %5183 = vsyncpa [#allocation8], 1
    %5184 = vsyncpa [#allocation11], 1
    %5185 = vsyncpa [#allocation6], 1
    %s5186 = scalar_lea.sflag [#allocation6], 1
    %5187 = vsyncpa %s5186, 1

</llo_original>
